<compile_context>
chip_gen: v6e
topology: v6e:2x2x1
jax: 0.10.0
libtpu: 0.0.40
codegen_flags: <defaults>
</compile_context>

<pallas_src>
import functools

import jax
import jax.numpy as jnp
from jax.experimental import pallas as pl
from jax.experimental.pallas import tpu as pltpu


def _codebook_kernel(x_ref, et_ref, ecat_ref, e2h_ref, q_ref, ind_ref):
    """One tile of rows: nearest-codebook lookup + gather-via-onehot-matmul.

    x_ref    : (TN, D)  f32   flattened input tile
    et_ref   : (D, K)   bf16  codebook hi component, pre-transposed (resident)
    ecat_ref : (K, 2D)  bf16  [hi | lo] codebook split, concat along D (resident)
    e2h_ref  : (1, K)   f32   0.5 * ||embed||^2 (precomputed, resident)
    q_ref    : (TN, D)  f32   quantized output tile
    ind_ref  : (1, TN)  i32   argmax indices, lane-dense row
    """
    d = q_ref.shape[-1]
    x_bf16 = x_ref[...].astype(jnp.bfloat16)                       # (TN, D)

    # score = x . e - 0.5*||e||^2   (argmax-equivalent to the reference
    # dist = -(||x||^2 - 2 x.e + ||e||^2)).  The codebook operand arrives
    # pre-transposed as (D, K): a plain (TN,D)@(D,K) contraction, so Mosaic
    # never re-transposes a grid-invariant operand per step.
    score = jnp.dot(x_bf16, et_ref[...],
                    preferred_element_type=jnp.float32) - e2h_ref[...]  # (TN, K)

    # temperature == 0 gumbel_sample -> plain argmax along the codebook axis.
    ind = jnp.argmax(score, axis=-1).astype(jnp.int32)             # (TN,)

    # Lane-dense index store: one (1, TN) row -> full-lane stores instead of
    # the 1/128-lane masked stores a (TN, 1) column layout would produce.
    ind_ref[...] = ind[None, :]

    # quantize = embed[ind] as one-hot @ codebook.  The one-hot is exactly
    # representable in bf16, so a SINGLE fused (TN,K)x(K,2D) bf16 MXU pass
    # against the [hi | lo] split reproduces the f32 gather to ~2^-16
    # relative; the two D-halves are summed on the VPU.
    onehot = (jax.lax.broadcasted_iota(jnp.int32, score.shape, 1)
              == ind[:, None]).astype(jnp.bfloat16)                # (TN, K)
    g = jnp.dot(onehot, ecat_ref[...], preferred_element_type=jnp.float32)
    q_ref[...] = g[:, :d] + g[:, d:]


def _vmem_capacity_bytes():
    """Physical per-core VMEM capacity, with a conservative (v7x) fallback."""
    try:
        return int(pltpu.get_tpu_info().vmem_capacity_bytes)
    except Exception:   # older jax / query unavailable at trace site
        return 64 * 1024 * 1024


def _resident_spec(block_shape, nbytes):
    """BlockSpec for a grid-invariant operand (constant index_map).

    Double-buffering a loop-invariant block only wastes VMEM, so request a
    single buffer when the operand is big enough for the saving to matter
    (small operands keep the default, which costs nothing).
    """
    index_map = lambda i: (0, 0)
    buffered = getattr(pl, "Buffered", None)
    if buffered is not None and nbytes >= (1 << 20):
        try:
            return pl.BlockSpec(block_shape, index_map, pipeline_mode=buffered(1))
        except TypeError:   # pipeline_mode kwarg not supported by this jax
            pass
    return pl.BlockSpec(block_shape, index_map)


def _choose_tile_n(n_rows, codebook_size, dim, requested, budget):
    """Pick the row tile (multiple of 128) under a VMEM budget (bytes)."""
    # Resident codebook operands: (D,K) + (K,2D) bf16 + padded (1,K) f32 norms.
    # Counted double-buffered as a safety margin (single-buffering is best
    # effort, see _resident_spec).
    codebook_bytes = 2 * (6 * codebook_size * dim
                          + 8 * max(codebook_size, 128) * 4)
    # Per-row: f32 score + bf16 one-hot + i32 iota ((TN,K) each), bf16 x copy,
    # (TN,2D) f32 gather result, double-buffered f32 x/q tiles and index row.
    row_bytes = 16 * codebook_size + 32 * dim + 64
    cap = max(128, (budget - codebook_bytes) // row_bytes)
    # TODO(synk): when the resident codebook alone blows the budget (huge K*D,
    # especially on v7x's 64 MiB VMEM), add a K-tiled 'arbitrary' grid axis
    # with a running (max-score, argmax, q) scratch instead of keeping the
    # whole codebook resident.
    tn = int(min(requested, cap))
    # Never tile past the (rounded-up) row count.
    tn = min(tn, -(-n_rows // 128) * 128)
    # Split into >= 2 grid steps only when each half keeps >= 512 rows:
    # per-step overhead stays negligible and dual-TensorCore chips (v7x) can
    # shard the 'parallel' axis; on 1-TC chips (v5e/v6e) a forced split of a
    # small input is pure overhead, so it stays in one step.
    half = (n_rows // 2 // 128) * 128
    if half >= 512:
        tn = min(tn, half)
    return max(128, (tn // 128) * 128)


@functools.partial(jax.jit, static_argnames=("tile_n", "vmem_limit_bytes"))
def _codebook_forward_impl(x, embed, *, tile_n, vmem_limit_bytes):
    x = x.astype(jnp.float32)                    # matches reference x.float()
    orig_shape = x.shape
    D = orig_shape[-1]
    K = embed.shape[0]

    flat = x.reshape(-1, D)                      # (N, D)
    N = flat.shape[0]
    tn = tile_n
    # Partial last block when tn does not divide N: OOB input rows only feed
    # their own discarded outputs; OOB writes are masked.  No jnp.pad pass.
    grid = (pl.cdiv(N, tn),)

    # Grid-invariant codebook terms, hoisted out of the kernel:
    e_f32 = embed.astype(jnp.float32)
    e_hi = e_f32.astype(jnp.bfloat16)                               # (K, D)
    e_lo = (e_f32 - e_hi.astype(jnp.float32)).astype(jnp.bfloat16)  # (K, D)
    e_hi_t = e_hi.T                                                 # (D, K) score operand
    e_cat = jnp.concatenate([e_hi, e_lo], axis=1)                   # (K, 2D) gather operand
    e2h = 0.5 * jnp.sum(e_f32 * e_f32, axis=1)[None, :]             # (1, K) f32

    quant, ind = pl.pallas_call(
        _codebook_kernel,
        out_shape=(
            jax.ShapeDtypeStruct((N, D), jnp.float32),
            jax.ShapeDtypeStruct((1, N), jnp.int32),
        ),
        grid_spec=pltpu.PrefetchScalarGridSpec(
            num_scalar_prefetch=0,
            grid=grid,
            in_specs=[
                pl.BlockSpec((tn, D), lambda i: (i, 0)),      # x row tile
                _resident_spec((D, K), 2 * D * K),            # codebook hi^T
                _resident_spec((K, 2 * D), 4 * K * D),        # [hi | lo] codebook
                _resident_spec((1, K), 4 * K),                # 0.5*||e||^2
            ],
            out_specs=[
                pl.BlockSpec((tn, D), lambda i: (i, 0)),      # quantized rows
                pl.BlockSpec((1, tn), lambda i: (0, i)),      # lane-dense indices
            ],
        ),
        compiler_params=pltpu.CompilerParams(
            dimension_semantics=("parallel",),
            vmem_limit_bytes=vmem_limit_bytes,
        ),
    )(flat, e_hi_t, e_cat, e2h)

    # TODO(synk): for D < 128 a lane-dense (N*D/128, 128) quant out_spec could
    # further cut masked stores on v5e; needs a measured in-kernel relayout
    # cost comparison first.
    quant = quant.reshape(orig_shape)
    ind = ind[0].reshape(orig_shape[:-1])
    return quant, ind


def euclidean_codebook_forward(x, embed, *, tile_n=1024):
    """x: (..., D) float ; embed: (K, D) float.

    Returns (quantize: x.shape float32, embed_ind: x.shape[:-1] int32) — same
    dtypes as the reference module (x is upcast to f32; embed buffer is f32).
    """
    D = x.shape[-1]
    K = embed.shape[0]
    n_rows = 1
    for s in x.shape[:-1]:
        n_rows *= int(s)

    # Generation-aware VMEM sizing: ~3/4 of physical per-core VMEM as the
    # Mosaic scoped limit (96 MiB on v5e/v6e's 128 MiB, 48 MiB on v7x's
    # 64 MiB), with extra headroom subtracted when sizing the row tile.
    cap = _vmem_capacity_bytes()
    vmem_limit = max(32 << 20, min((cap * 3) // 4, cap - (8 << 20)))
    budget = max(16 << 20, vmem_limit - (6 << 20))
    tn = _choose_tile_n(n_rows, K, D, tile_n, budget)
    return _codebook_forward_impl(x, embed, tile_n=tn,
                                  vmem_limit_bytes=vmem_limit)


if __name__ == "__main__":
    # Small shapes: B=2, H=W=16, dim=32, codebook_size=256 (channel-last).
    B, H, W, D = 2, 16, 16, 32
    K = 256

    key = jax.random.PRNGKey(0)
    kx, ke = jax.random.split(key)

    # Deterministic kaiming_uniform-style codebook init:
    # bound = sqrt(2) * sqrt(3 / fan_in), fan_in = dim.
    bound = (2.0 ** 0.5) * (3.0 / D) ** 0.5
    embed = jax.random.uniform(ke, (K, D), jnp.float32, minval=-bound, maxval=bound)
    x = jax.random.normal(kx, (B, H, W, D), jnp.float32)

    quant, ind = euclidean_codebook_forward(x, embed)
    quant, ind = jax.block_until_ready((quant, ind))

    assert quant.shape == (B, H, W, D)
    assert ind.shape == (B, H, W)
    assert quant.dtype == jnp.float32 and ind.dtype == jnp.int32

    # ---------------- correctness checks ----------------
    flat = x.reshape(-1, D)
    ind_flat = ind.reshape(-1)

    # (1) Gather path: quantize must reproduce embed[ind] for the kernel's own
    #     indices (hi/lo bf16 split is exact to ~2^-16 relative).
    gathered = jnp.take(embed, ind_flat, axis=0).reshape(quant.shape)
    assert jnp.allclose(quant, gathered, atol=1e-5, rtol=1e-5)

    # (2) Index path: compare against full-precision f32 scores.  The bf16
    #     distance matmul may only change the winner when the true score gap
    #     is inside the provable bf16 perturbation bound.
    score_ref = jnp.dot(flat, embed.T, precision=jax.lax.Precision.HIGHEST) \
        - 0.5 * jnp.sum(embed * embed, axis=1)[None, :]
    i_ref = jnp.argmax(score_ref, axis=-1)
    best = jnp.max(score_ref, axis=-1)
    chosen = jnp.take_along_axis(score_ref, ind_flat[:, None], axis=1)[:, 0]
    exact = ind_flat == i_ref
    tol = (2.0 ** -6) * jnp.linalg.norm(flat, axis=1) * \
        jnp.max(jnp.linalg.norm(embed, axis=1)) + 1e-5
    near_tie = (best - chosen) <= tol
    assert bool(jnp.all(exact | near_tie))
    # The overwhelming majority of rows must match the exact f32 argmax.
    assert float(jnp.mean(exact.astype(jnp.float32))) >= 0.95

    print("KERNEL_OK")
</pallas_src>

<mosaic_0001>
module attributes {stable_mosaic.version = 11 : i64} {
  func.func @_codebook_kernel(%arg0: i32, %arg1: memref<512x32xf32, #tpu.memory_space<vmem>>, %arg2: memref<32x256xbf16, #tpu.memory_space<vmem>>, %arg3: memref<256x64xbf16, #tpu.memory_space<vmem>>, %arg4: memref<1x256xf32, #tpu.memory_space<vmem>>, %arg5: memref<512x32xf32, #tpu.memory_space<vmem>>, %arg6: memref<1x512xi32, #tpu.memory_space<vmem>>) attributes {dimension_semantics = [#tpu.dimension_semantics<parallel>], iteration_bounds = array<i64: 1>, scalar_prefetch = 0 : i64, scratch_operands = 0 : i64, tpu.core_type = #tpu.core_type<tc>, window_params = [{transform_indices = @transform_0, window_bounds = array<i64: 512, 32>}, {pipeline_mode = #tpu.pipeline_mode<synchronous>, transform_indices = @transform_1, window_bounds = array<i64: 32, 256>}, {pipeline_mode = #tpu.pipeline_mode<synchronous>, transform_indices = @transform_2, window_bounds = array<i64: 256, 64>}, {pipeline_mode = #tpu.pipeline_mode<synchronous>, transform_indices = @transform_3, window_bounds = array<i64: 1, 256>}, {transform_indices = @transform_4, window_bounds = array<i64: 512, 32>}, {transform_indices = @transform_5, window_bounds = array<i64: 1, 512>}]} {
    %c0 = arith.constant 0 : index
    %c0_0 = arith.constant 0 : index
    %0 = vector.load %arg1[%c0, %c0_0] : memref<512x32xf32, #tpu.memory_space<vmem>>, vector<512x32xf32>
    %1 = arith.truncf %0 : vector<512x32xf32> to vector<512x32xbf16>
    %c0_1 = arith.constant 0 : index
    %c0_2 = arith.constant 0 : index
    %2 = vector.load %arg2[%c0_1, %c0_2] : memref<32x256xbf16, #tpu.memory_space<vmem>>, vector<32x256xbf16>
    %cst = arith.constant dense<0.000000e+00> : vector<512x256xf32>
    %3 = tpu.matmul %1, %2, %cst {dimension_numbers = #tpu.dot_dimension_numbers<[1], [0], [0], [1], [0, 0, 1, 1], [], []>} : vector<512x32xbf16>, vector<32x256xbf16>, vector<512x256xf32> -> vector<512x256xf32>
    %c0_3 = arith.constant 0 : index
    %c0_4 = arith.constant 0 : index
    %4 = vector.load %arg4[%c0_3, %c0_4] : memref<1x256xf32, #tpu.memory_space<vmem>>, vector<1x256xf32>
    %5 = vector.broadcast %4 : vector<1x256xf32> to vector<512x256xf32>
    %6 = arith.subf %3, %5 : vector<512x256xf32>
    %7 = tpu.reduce_index %6 {axis = 1 : i32, kind = #tpu.reduction_kind<arg_max>} : vector<512x256xf32> -> vector<512xi32>
    %8 = vector.shape_cast %7 : vector<512xi32> to vector<1x512xi32>
    %c0_5 = arith.constant 0 : index
    %c0_6 = arith.constant 0 : index
    %9 = vector.load %arg6[%c0_5, %c0_6] : memref<1x512xi32, #tpu.memory_space<vmem>>, vector<1x512xi32>
    tpu.vector_store %arg6[%c0_5, %c0_6], %8 {strides = array<i32>} : memref<1x512xi32, #tpu.memory_space<vmem>>, vector<1x512xi32>,
    %10 = tpu.iota {dimensions = array<i32: 1>} : vector<512x256xi32>
    %11 = vector.shape_cast %7 : vector<512xi32> to vector<512x1xi32>
    %12 = vector.broadcast %11 : vector<512x1xi32> to vector<512x256xi32>
    %13 = arith.cmpi eq, %10, %12 : vector<512x256xi32>
    %14 = arith.extui %13 : vector<512x256xi1> to vector<512x256xi32>
    %15 = arith.sitofp %14 : vector<512x256xi32> to vector<512x256xf32>
    %16 = arith.truncf %15 : vector<512x256xf32> to vector<512x256xbf16>
    %c0_7 = arith.constant 0 : index
    %c0_8 = arith.constant 0 : index
    %17 = vector.load %arg3[%c0_7, %c0_8] : memref<256x64xbf16, #tpu.memory_space<vmem>>, vector<256x64xbf16>
    %cst_9 = arith.constant dense<0.000000e+00> : vector<512x64xf32>
    %18 = tpu.matmul %16, %17, %cst_9 {dimension_numbers = #tpu.dot_dimension_numbers<[1], [0], [0], [1], [0, 0, 1, 1], [], []>} : vector<512x256xbf16>, vector<256x64xbf16>, vector<512x64xf32> -> vector<512x64xf32>
    %19 = vector.extract_strided_slice %18 {offsets = [0, 0], sizes = [512, 32], strides = [1, 1]} : vector<512x64xf32> to vector<512x32xf32>
    %20 = vector.extract_strided_slice %18 {offsets = [0, 32], sizes = [512, 32], strides = [1, 1]} : vector<512x64xf32> to vector<512x32xf32>
    %21 = arith.addf %19, %20 : vector<512x32xf32>
    %c0_10 = arith.constant 0 : index
    %c0_11 = arith.constant 0 : index
    %22 = vector.load %arg5[%c0_10, %c0_11] : memref<512x32xf32, #tpu.memory_space<vmem>>, vector<512x32xf32>
    tpu.vector_store %arg5[%c0_10, %c0_11], %21 {strides = array<i32>} : memref<512x32xf32, #tpu.memory_space<vmem>>, vector<512x32xf32>,
    return
  }
  func.func @transform_0(%arg0: i32) -> (i32, i32) {
    %c0_i32 = arith.constant 0 : i32
    %c0_i32_0 = arith.constant 0 : i32
    return %arg0, %c0_i32 : i32, i32
  }
  func.func @transform_1(%arg0: i32) -> (i32, i32) {
    %c0_i32 = arith.constant 0 : i32
    %c0_i32_0 = arith.constant 0 : i32
    %c0_i32_1 = arith.constant 0 : i32
    return %c0_i32, %c0_i32_0 : i32, i32
  }
  func.func @transform_2(%arg0: i32) -> (i32, i32) {
    %c0_i32 = arith.constant 0 : i32
    %c0_i32_0 = arith.constant 0 : i32
    %c0_i32_1 = arith.constant 0 : i32
    return %c0_i32, %c0_i32_0 : i32, i32
  }
  func.func @transform_3(%arg0: i32) -> (i32, i32) {
    %c0_i32 = arith.constant 0 : i32
    %c0_i32_0 = arith.constant 0 : i32
    %c0_i32_1 = arith.constant 0 : i32
    return %c0_i32, %c0_i32_0 : i32, i32
  }
  func.func @transform_4(%arg0: i32) -> (i32, i32) {
    %c0_i32 = arith.constant 0 : i32
    %c0_i32_0 = arith.constant 0 : i32
    return %arg0, %c0_i32 : i32, i32
  }
  func.func @transform_5(%arg0: i32) -> (i32, i32) {
    %c0_i32 = arith.constant 0 : i32
    %c0_i32_0 = arith.constant 0 : i32
    return %c0_i32, %arg0 : i32, i32
  }
}

</mosaic_0001>

<llo_original>
// kernel: squeeze.1
$region0: #{squeeze.1}
  %s0 = inlined_call_operand.vmem [shape: s32[512], index: 0, kind: input, shape index: {}]
  %s1 = inlined_call_operand.hbm [shape: s32[2,16,16], index: 1, kind: output, shape index: {}]
  $region1: #{squeeze.1} parent=0
    #allocation0 [shape = 'u8[16384]{0}', space=vmem, size = 0x4000, scoped, tag = 'operand span for operand 1']
    #allocation1 [shape = 's32[1]{0}', space=sflag, size = 0x4, scoped, tag = 'scoped memory for squeeze.1']
    #allocation2 [shape = 'u8[4096]{0}', space=vmem, size = 0x1000, scoped, tag = 'scoped mem for input reshape']
    %2 = vsyncpa [#allocation1], 0
    %s4 = sshll.u32 1, 4
    %s5 = ssub.s32 %s4, 1
    %v6 = vld [vmem:[%s0] sm:%s5]
    %7 = vst [vmem:[#allocation2] sm:%s5] %v6
    %v8 = vld [vmem:[#allocation2] sm:$0xf]
    %vm9 = vcmask 130048
    %10 = vst.msk [vmem:[#allocation0] ss:$8 sm:$0xf] %vm9, %v8
    %v11 = vld [vmem:[#allocation2] sm:$0xf]
    %12 = vrot.lane.b32.xlu0 %v11, 112
    %v13 = vpop.permute.xlu0 %12
    %vm14 = vcmask 130048
    %s15 = scalar_lea.vmem [#allocation0], 1
    %16 = vst.msk [vmem:[%s15] ss:$8 sm:$0xf] %vm14, %v13
    %v17 = vld [vmem:[#allocation2] sm:$0xf]
    %18 = vrot.lane.b32.xlu0 %v17, 96
    %v19 = vpop.permute.xlu0 %18
    %vm20 = vcmask 130048
    %s21 = scalar_lea.vmem [#allocation0], 2
    %22 = vst.msk [vmem:[%s21] ss:$8 sm:$0xf] %vm20, %v19
    %v23 = vld [vmem:[#allocation2] sm:$0xf]
    %24 = vrot.lane.b32.xlu0 %v23, 80
    %v25 = vpop.permute.xlu0 %24
    %vm26 = vcmask 130048
    %s27 = scalar_lea.vmem [#allocation0], 3
    %28 = vst.msk [vmem:[%s27] ss:$8 sm:$0xf] %vm26, %v25
    %v29 = vld [vmem:[#allocation2] sm:$0xf]
    %30 = vrot.lane.b32.xlu0 %v29, 64
    %v31 = vpop.permute.xlu0 %30
    %vm32 = vcmask 130048
    %s33 = scalar_lea.vmem [#allocation0], 4
    %34 = vst.msk [vmem:[%s33] ss:$8 sm:$0xf] %vm32, %v31
    %v35 = vld [vmem:[#allocation2] sm:$0xf]
    %36 = vrot.lane.b32.xlu0 %v35, 48
    %v37 = vpop.permute.xlu0 %36
    %vm38 = vcmask 130048
    %s39 = scalar_lea.vmem [#allocation0], 5
    %40 = vst.msk [vmem:[%s39] ss:$8 sm:$0xf] %vm38, %v37
    %v41 = vld [vmem:[#allocation2] sm:$0xf]
    %42 = vrot.lane.b32.xlu0 %v41, 32
    %v43 = vpop.permute.xlu0 %42
    %vm44 = vcmask 130048
    %s45 = scalar_lea.vmem [#allocation0], 6
    %46 = vst.msk [vmem:[%s45] ss:$8 sm:$0xf] %vm44, %v43
    %v47 = vld [vmem:[#allocation2] sm:$0xf]
    %48 = vrot.lane.b32.xlu0 %v47, 16
    %v49 = vpop.permute.xlu0 %48
    %vm50 = vcmask 130048
    %s51 = scalar_lea.vmem [#allocation0], 7
    %52 = vst.msk [vmem:[%s51] ss:$8 sm:$0xf] %vm50, %v49
    %s54 = ssub.s32 512, 512
    %55 = vsyncadd [#allocation1], %s54
    %s57 = sshll.u32 [#allocation0], 4
    %s58 = int_to_ptr.vmem [resolvable:$true] %s57
    %60 = dma.vmem_to_hbm [thread:$0]  %s58, 512, %s1, [#allocation1]
    %61 = dma.done [#allocation1], 512
    %62 = vsyncpa [#allocation1], 1

// kernel: _codebook_forward_impl.1
$region0: #{_codebook_forward_impl.1}
  #allocation0 [shape = 'u32[]', space=smem, size = 0x4, offset = 0x4, fixed_abs, tag = 'smem constant byte address 0x4 - core index']
  #allocation1 [shape = 'u32[144,128]{1,0:T(1,128)}', space=vmem, size = 0x12000, scoped, tag = 'internal scratch']
  %s0 = inlined_call_operand.vmem [shape: f32[512,32], index: 0, kind: input, shape index: {}]
  %s1 = inlined_call_operand.vmem [shape: bf16[32,256], index: 1, kind: input, shape index: {}]
  %s2 = inlined_call_operand.vmem [shape: bf16[256,64], index: 2, kind: input, shape index: {}]
  %s3 = inlined_call_operand.vmem [shape: f32[1,256], index: 3, kind: input, shape index: {}]
  %s4 = inlined_call_operand.hbm [shape: f32[512,32], index: 4, kind: output, shape index: {0}]
  %s5 = inlined_call_operand.vmem [shape: s32[1,512], index: 5, kind: output, shape index: {1}]
  %6 = xla_tuple %s4, %s5
  %s7 = sld [smem:[#allocation0]]
  $region34: #{_codebook_forward_impl.1} parent=0
    _
  %s9 = ssub.s32 1, %s7
  %s10 = scalar_select 0, %s9, %s7
  $region1: #{_codebook_forward_impl.1} parent=0
    #allocation2 [shape = 'u8[262144]{0}', space=vmem, size = 0x40000, scoped, tag = 'output window, operand 0, single buffered']
    #allocation3 [shape = 's32[1]{0}', space=sflag, size = 0x4, scoped, tag = 'scoped memory for _codebook_forward_impl.1']
    %11 = vsyncpa [#allocation3], 0
    // Predicated region
    $region2: #{_codebook_forward_impl.1} parent=1 // pred_check
      _
    $region3: #{_codebook_forward_impl.1} parent=1 // pred_check_branch
      %13 = sbr.rel (0) target = $region5
    $region4: #{_codebook_forward_impl.1} parent=1 // pred_region
      _
    $region5: #{_codebook_forward_impl.1} parent=1 // pred_fallthru
      _
    // Predicated region
    $region6: #{_codebook_forward_impl.1} parent=1 // pred_check
      _
    $region7: #{_codebook_forward_impl.1} parent=1 // pred_check_branch
      %15 = sbr.rel (0) target = $region9
    $region8: #{_codebook_forward_impl.1} parent=1 // pred_region
      _
    $region9: #{_codebook_forward_impl.1} parent=1 // pred_fallthru
      _
    // Predicated region
    $region10: #{_codebook_forward_impl.1} parent=1 // pred_check
      _
    $region11: #{_codebook_forward_impl.1} parent=1 // pred_check_branch
      %17 = sbr.rel (0) target = $region13
    $region12: #{_codebook_forward_impl.1} parent=1 // pred_region
      _
    $region13: #{_codebook_forward_impl.1} parent=1 // pred_fallthru
      _
    // Predicated region
    $region14: #{_codebook_forward_impl.1} parent=1 // pred_check
      _
    $region15: #{_codebook_forward_impl.1} parent=1 // pred_check_branch
      %19 = sbr.rel (0) target = $region17
    $region16: #{_codebook_forward_impl.1} parent=1 // pred_region
      _
    $region17: #{_codebook_forward_impl.1} parent=1 // pred_fallthru
      _
    %v21 = vld [vmem:[%s0] sm:$0xff]
    %v22 = vld [vmem:[%s0 + $0x8] sm:$0xff]
    %v23 = vld [vmem:[%s0 + $0x10] sm:$0xff]
    %v24 = vld [vmem:[%s0 + $0x18] sm:$0xff]
    %v25 = vld [vmem:[%s0 + $0x20] sm:$0xff]
    %v26 = vld [vmem:[%s0 + $0x28] sm:$0xff]
    %v27 = vld [vmem:[%s0 + $0x30] sm:$0xff]
    %v28 = vld [vmem:[%s0 + $0x38] sm:$0xff]
    %v29 = vld [vmem:[%s0 + $0x40] sm:$0xff]
    %v30 = vld [vmem:[%s0 + $0x48] sm:$0xff]
    %v31 = vld [vmem:[%s0 + $0x50] sm:$0xff]
    %v32 = vld [vmem:[%s0 + $0x58] sm:$0xff]
    %v33 = vld [vmem:[%s0 + $0x60] sm:$0xff]
    %v34 = vld [vmem:[%s0 + $0x68] sm:$0xff]
    %v35 = vld [vmem:[%s0 + $0x70] sm:$0xff]
    %v36 = vld [vmem:[%s0 + $0x78] sm:$0xff]
    %v37 = vld [vmem:[%s0 + $0x80] sm:$0xff]
    %v38 = vld [vmem:[%s0 + $0x88] sm:$0xff]
    %v39 = vld [vmem:[%s0 + $0x90] sm:$0xff]
    %v40 = vld [vmem:[%s0 + $0x98] sm:$0xff]
    %v41 = vld [vmem:[%s0 + $0xa0] sm:$0xff]
    %v42 = vld [vmem:[%s0 + $0xa8] sm:$0xff]
    %v43 = vld [vmem:[%s0 + $0xb0] sm:$0xff]
    %v44 = vld [vmem:[%s0 + $0xb8] sm:$0xff]
    %v45 = vld [vmem:[%s0 + $0xc0] sm:$0xff]
    %v46 = vld [vmem:[%s0 + $0xc8] sm:$0xff]
    %v47 = vld [vmem:[%s0 + $0xd0] sm:$0xff]
    %v48 = vld [vmem:[%s0 + $0xd8] sm:$0xff]
    %v49 = vld [vmem:[%s0 + $0xe0] sm:$0xff]
    %v50 = vld [vmem:[%s0 + $0xe8] sm:$0xff]
    %v51 = vld [vmem:[%s0 + $0xf0] sm:$0xff]
    %v52 = vld [vmem:[%s0 + $0xf8] sm:$0xff]
    %v53 = vld [vmem:[%s0 + $0x100] sm:$0xff]
    %v54 = vld [vmem:[%s0 + $0x108] sm:$0xff]
    %v55 = vld [vmem:[%s0 + $0x110] sm:$0xff]
    %v56 = vld [vmem:[%s0 + $0x118] sm:$0xff]
    %v57 = vld [vmem:[%s0 + $0x120] sm:$0xff]
    %v58 = vld [vmem:[%s0 + $0x128] sm:$0xff]
    %v59 = vld [vmem:[%s0 + $0x130] sm:$0xff]
    %v60 = vld [vmem:[%s0 + $0x138] sm:$0xff]
    %v61 = vld [vmem:[%s0 + $0x140] sm:$0xff]
    %v62 = vld [vmem:[%s0 + $0x148] sm:$0xff]
    %v63 = vld [vmem:[%s0 + $0x150] sm:$0xff]
    %v64 = vld [vmem:[%s0 + $0x158] sm:$0xff]
    %v65 = vld [vmem:[%s0 + $0x160] sm:$0xff]
    %v66 = vld [vmem:[%s0 + $0x168] sm:$0xff]
    %v67 = vld [vmem:[%s0 + $0x170] sm:$0xff]
    %v68 = vld [vmem:[%s0 + $0x178] sm:$0xff]
    %v69 = vld [vmem:[%s0 + $0x180] sm:$0xff]
    %v70 = vld [vmem:[%s0 + $0x188] sm:$0xff]
    %v71 = vld [vmem:[%s0 + $0x190] sm:$0xff]
    %v72 = vld [vmem:[%s0 + $0x198] sm:$0xff]
    %v73 = vld [vmem:[%s0 + $0x1a0] sm:$0xff]
    %v74 = vld [vmem:[%s0 + $0x1a8] sm:$0xff]
    %v75 = vld [vmem:[%s0 + $0x1b0] sm:$0xff]
    %v76 = vld [vmem:[%s0 + $0x1b8] sm:$0xff]
    %v77 = vld [vmem:[%s0 + $0x1c0] sm:$0xff]
    %v78 = vld [vmem:[%s0 + $0x1c8] sm:$0xff]
    %v79 = vld [vmem:[%s0 + $0x1d0] sm:$0xff]
    %v80 = vld [vmem:[%s0 + $0x1d8] sm:$0xff]
    %v81 = vld [vmem:[%s0 + $0x1e0] sm:$0xff]
    %v82 = vld [vmem:[%s0 + $0x1e8] sm:$0xff]
    %v83 = vld [vmem:[%s0 + $0x1f0] sm:$0xff]
    %v84 = vld [vmem:[%s0 + $0x1f8] sm:$0xff]
    %v85 = vpack.c.bf16 %v22, %v21
    %v86 = vpack.c.bf16 %v24, %v23
    %v87 = vpack.c.bf16 %v26, %v25
    %v88 = vpack.c.bf16 %v28, %v27
    %v89 = vpack.c.bf16 %v30, %v29
    %v90 = vpack.c.bf16 %v32, %v31
    %v91 = vpack.c.bf16 %v34, %v33
    %v92 = vpack.c.bf16 %v36, %v35
    %v93 = vpack.c.bf16 %v38, %v37
    %v94 = vpack.c.bf16 %v40, %v39
    %v95 = vpack.c.bf16 %v42, %v41
    %v96 = vpack.c.bf16 %v44, %v43
    %v97 = vpack.c.bf16 %v46, %v45
    %v98 = vpack.c.bf16 %v48, %v47
    %v99 = vpack.c.bf16 %v50, %v49
    %v100 = vpack.c.bf16 %v52, %v51
    %v101 = vpack.c.bf16 %v54, %v53
    %v102 = vpack.c.bf16 %v56, %v55
    %v103 = vpack.c.bf16 %v58, %v57
    %v104 = vpack.c.bf16 %v60, %v59
    %v105 = vpack.c.bf16 %v62, %v61
    %v106 = vpack.c.bf16 %v64, %v63
    %v107 = vpack.c.bf16 %v66, %v65
    %v108 = vpack.c.bf16 %v68, %v67
    %v109 = vpack.c.bf16 %v70, %v69
    %v110 = vpack.c.bf16 %v72, %v71
    %v111 = vpack.c.bf16 %v74, %v73
    %v112 = vpack.c.bf16 %v76, %v75
    %v113 = vpack.c.bf16 %v78, %v77
    %v114 = vpack.c.bf16 %v80, %v79
    %v115 = vpack.c.bf16 %v82, %v81
    %v116 = vpack.c.bf16 %v84, %v83
    %v117 = vld [vmem:[%s1] sm:$0xff]
    %v118 = vld [vmem:[%s1 + $0x8] sm:$0xff]
    %v119 = vld [vmem:[%s1 + $0x10] sm:$0xff]
    %v120 = vld [vmem:[%s1 + $0x18] sm:$0xff]
    %v125 = vunpack.c.l.b16 %v117
    %v126 = vunpack.c.h.b16 %v117
    %v127 = vunpack.c.l.b16 %v118
    %v128 = vunpack.c.h.b16 %v118
    %v129 = vunpack.c.l.b16 %v119
    %v130 = vunpack.c.h.b16 %v119
    %v131 = vunpack.c.l.b16 %v120
    %v132 = vunpack.c.h.b16 %v120
    %v133 = vpack.c.b16 %v127, %v125
    %v134 = vpack.c.b16 %v128, %v126
    %v135 = vpack.c.b16 %v131, %v129
    %v136 = vpack.c.b16 %v132, %v130
    %vm141 = vcmask 261120
    %v143 = vsel %vm141, %v85, 0
    %v146 = vsel %vm141, %v86, 0
    %v149 = vsel %vm141, %v87, 0
    %v152 = vsel %vm141, %v88, 0
    %v155 = vsel %vm141, %v89, 0
    %v158 = vsel %vm141, %v90, 0
    %v161 = vsel %vm141, %v91, 0
    %v164 = vsel %vm141, %v92, 0
    %v167 = vsel %vm141, %v93, 0
    %v170 = vsel %vm141, %v94, 0
    %v173 = vsel %vm141, %v95, 0
    %v176 = vsel %vm141, %v96, 0
    %v179 = vsel %vm141, %v97, 0
    %v182 = vsel %vm141, %v98, 0
    %v185 = vsel %vm141, %v99, 0
    %v188 = vsel %vm141, %v100, 0
    %v191 = vsel %vm141, %v101, 0
    %v194 = vsel %vm141, %v102, 0
    %v197 = vsel %vm141, %v103, 0
    %v200 = vsel %vm141, %v104, 0
    %v203 = vsel %vm141, %v105, 0
    %v206 = vsel %vm141, %v106, 0
    %v209 = vsel %vm141, %v107, 0
    %v212 = vsel %vm141, %v108, 0
    %v215 = vsel %vm141, %v109, 0
    %v218 = vsel %vm141, %v110, 0
    %v221 = vsel %vm141, %v111, 0
    %v224 = vsel %vm141, %v112, 0
    %v227 = vsel %vm141, %v113, 0
    %v230 = vsel %vm141, %v114, 0
    %v233 = vsel %vm141, %v115, 0
    %v236 = vsel %vm141, %v116, 0
    %238 = vmatprep.subr.bf16.mxu0 0
    %239 = vmatpush1.bf16.msra.mxu0 0
    %240 = vmatprep.subr.bf16.mxu0 0
    %241 = vmatpush1.bf16.msra.mxu0 0
    %242 = vmatprep.subr.bf16.mxu0 0
    %243 = vmatpush1.bf16.msra.mxu0 0
    %244 = vmatprep.subr.bf16.mxu0 0
    %245 = vmatpush1.bf16.msra.mxu0 0
    %246 = vmatprep.subr.bf16.mxu0 0
    %247 = vmatpush1.bf16.msra.mxu0 0
    %248 = vmatprep.subr.bf16.mxu0 0
    %249 = vmatpush1.bf16.msra.mxu0 0
    %250 = vmatprep.subr.bf16.mxu0 %v136
    %251 = vmatpush1.bf16.msra.mxu0 %v135
    %252 = vmatprep.subr.bf16.mxu0 %v134
    %253 = vmatpush1.bf16.msra.mxu0 %v133
    %254 = vmatprep.subr.bf16.mxu0 0
    %255 = vmatpush2.bf16.msra.mxu0 0
    %256 = vmatprep.subr.bf16.mxu0 0
    %257 = vmatpush2.bf16.msra.mxu0 0
    %258 = vmatprep.subr.bf16.mxu0 0
    %259 = vmatpush2.bf16.msra.mxu0 0
    %260 = vmatprep.subr.bf16.mxu0 0
    %261 = vmatpush2.bf16.msra.mxu0 0
    %262 = vmatprep.subr.bf16.mxu0 0
    %263 = vmatpush2.bf16.msra.mxu0 0
    %264 = vmatprep.subr.bf16.mxu0 0
    %265 = vmatpush2.bf16.msra.mxu0 0
    %266 = vmatprep.subr.bf16.mxu0 0
    %267 = vmatpush2.bf16.msra.mxu0 0
    %268 = vmatprep.subr.bf16.mxu0 0
    %269 = vmatpush2.bf16.msra.mxu0 0
    %270 = vmatprep.mubr.bf16.mxu0 0
    %271 = vmatmul.mubr.bf16.gmra.mxu0 %v143
    %v272 = vpop.f32.mrf.mxu0
    %v273 = vadd.f32 0.0, %v272
    %v274 = vpop.f32.mrf.mxu0
    %v275 = vadd.f32 0.0, %v274
    %v276 = vpop.f32.mrf.mxu0
    %v277 = vadd.f32 0.0, %v276
    %v278 = vpop.f32.mrf.mxu0
    %v279 = vadd.f32 0.0, %v278
    %280 = vmatprep.mubr.bf16.mxu0 0
    %281 = vmatmul.mubr.bf16.gmra.mxu0 %v146
    %v282 = vpop.f32.mrf.mxu0
    %v283 = vadd.f32 0.0, %v282
    %v284 = vpop.f32.mrf.mxu0
    %v285 = vadd.f32 0.0, %v284
    %v286 = vpop.f32.mrf.mxu0
    %v287 = vadd.f32 0.0, %v286
    %v288 = vpop.f32.mrf.mxu0
    %v289 = vadd.f32 0.0, %v288
    %290 = vmatprep.mubr.bf16.mxu0 0
    %291 = vmatmul.mubr.bf16.gmra.mxu0 %v149
    %v292 = vpop.f32.mrf.mxu0
    %v293 = vadd.f32 0.0, %v292
    %v294 = vpop.f32.mrf.mxu0
    %v295 = vadd.f32 0.0, %v294
    %v296 = vpop.f32.mrf.mxu0
    %v297 = vadd.f32 0.0, %v296
    %v298 = vpop.f32.mrf.mxu0
    %v299 = vadd.f32 0.0, %v298
    %300 = vmatprep.mubr.bf16.mxu0 0
    %301 = vmatmul.mubr.bf16.gmra.mxu0 %v152
    %v302 = vpop.f32.mrf.mxu0
    %v303 = vadd.f32 0.0, %v302
    %v304 = vpop.f32.mrf.mxu0
    %v305 = vadd.f32 0.0, %v304
    %v306 = vpop.f32.mrf.mxu0
    %v307 = vadd.f32 0.0, %v306
    %v308 = vpop.f32.mrf.mxu0
    %v309 = vadd.f32 0.0, %v308
    %310 = vmatprep.mubr.bf16.mxu0 0
    %311 = vmatmul.mubr.bf16.gmra.mxu0 %v155
    %v312 = vpop.f32.mrf.mxu0
    %v313 = vadd.f32 0.0, %v312
    %v314 = vpop.f32.mrf.mxu0
    %v315 = vadd.f32 0.0, %v314
    %v316 = vpop.f32.mrf.mxu0
    %v317 = vadd.f32 0.0, %v316
    %v318 = vpop.f32.mrf.mxu0
    %v319 = vadd.f32 0.0, %v318
    %320 = vmatprep.mubr.bf16.mxu0 0
    %321 = vmatmul.mubr.bf16.gmra.mxu0 %v158
    %v322 = vpop.f32.mrf.mxu0
    %v323 = vadd.f32 0.0, %v322
    %v324 = vpop.f32.mrf.mxu0
    %v325 = vadd.f32 0.0, %v324
    %v326 = vpop.f32.mrf.mxu0
    %v327 = vadd.f32 0.0, %v326
    %v328 = vpop.f32.mrf.mxu0
    %v329 = vadd.f32 0.0, %v328
    %330 = vmatprep.mubr.bf16.mxu0 0
    %331 = vmatmul.mubr.bf16.gmra.mxu0 %v161
    %v332 = vpop.f32.mrf.mxu0
    %v333 = vadd.f32 0.0, %v332
    %v334 = vpop.f32.mrf.mxu0
    %v335 = vadd.f32 0.0, %v334
    %v336 = vpop.f32.mrf.mxu0
    %v337 = vadd.f32 0.0, %v336
    %v338 = vpop.f32.mrf.mxu0
    %v339 = vadd.f32 0.0, %v338
    %340 = vmatprep.mubr.bf16.mxu0 0
    %341 = vmatmul.mubr.bf16.gmra.mxu0 %v164
    %v342 = vpop.f32.mrf.mxu0
    %v343 = vadd.f32 0.0, %v342
    %v344 = vpop.f32.mrf.mxu0
    %v345 = vadd.f32 0.0, %v344
    %v346 = vpop.f32.mrf.mxu0
    %v347 = vadd.f32 0.0, %v346
    %v348 = vpop.f32.mrf.mxu0
    %v349 = vadd.f32 0.0, %v348
    %350 = vmatprep.mubr.bf16.mxu0 0
    %351 = vmatmul.mubr.bf16.gmra.mxu0 %v167
    %v352 = vpop.f32.mrf.mxu0
    %v353 = vadd.f32 0.0, %v352
    %v354 = vpop.f32.mrf.mxu0
    %v355 = vadd.f32 0.0, %v354
    %v356 = vpop.f32.mrf.mxu0
    %v357 = vadd.f32 0.0, %v356
    %v358 = vpop.f32.mrf.mxu0
    %v359 = vadd.f32 0.0, %v358
    %360 = vmatprep.mubr.bf16.mxu0 0
    %361 = vmatmul.mubr.bf16.gmra.mxu0 %v170
    %v362 = vpop.f32.mrf.mxu0
    %v363 = vadd.f32 0.0, %v362
    %v364 = vpop.f32.mrf.mxu0
    %v365 = vadd.f32 0.0, %v364
    %v366 = vpop.f32.mrf.mxu0
    %v367 = vadd.f32 0.0, %v366
    %v368 = vpop.f32.mrf.mxu0
    %v369 = vadd.f32 0.0, %v368
    %370 = vmatprep.mubr.bf16.mxu0 0
    %371 = vmatmul.mubr.bf16.gmra.mxu0 %v173
    %v372 = vpop.f32.mrf.mxu0
    %v373 = vadd.f32 0.0, %v372
    %v374 = vpop.f32.mrf.mxu0
    %v375 = vadd.f32 0.0, %v374
    %v376 = vpop.f32.mrf.mxu0
    %v377 = vadd.f32 0.0, %v376
    %v378 = vpop.f32.mrf.mxu0
    %v379 = vadd.f32 0.0, %v378
    %380 = vmatprep.mubr.bf16.mxu0 0
    %381 = vmatmul.mubr.bf16.gmra.mxu0 %v176
    %v382 = vpop.f32.mrf.mxu0
    %v383 = vadd.f32 0.0, %v382
    %v384 = vpop.f32.mrf.mxu0
    %v385 = vadd.f32 0.0, %v384
    %v386 = vpop.f32.mrf.mxu0
    %v387 = vadd.f32 0.0, %v386
    %v388 = vpop.f32.mrf.mxu0
    %v389 = vadd.f32 0.0, %v388
    %390 = vmatprep.mubr.bf16.mxu0 0
    %391 = vmatmul.mubr.bf16.gmra.mxu0 %v179
    %v392 = vpop.f32.mrf.mxu0
    %v393 = vadd.f32 0.0, %v392
    %v394 = vpop.f32.mrf.mxu0
    %v395 = vadd.f32 0.0, %v394
    %v396 = vpop.f32.mrf.mxu0
    %v397 = vadd.f32 0.0, %v396
    %v398 = vpop.f32.mrf.mxu0
    %v399 = vadd.f32 0.0, %v398
    %400 = vmatprep.mubr.bf16.mxu0 0
    %401 = vmatmul.mubr.bf16.gmra.mxu0 %v182
    %v402 = vpop.f32.mrf.mxu0
    %v403 = vadd.f32 0.0, %v402
    %v404 = vpop.f32.mrf.mxu0
    %v405 = vadd.f32 0.0, %v404
    %v406 = vpop.f32.mrf.mxu0
    %v407 = vadd.f32 0.0, %v406
    %v408 = vpop.f32.mrf.mxu0
    %v409 = vadd.f32 0.0, %v408
    %410 = vmatprep.mubr.bf16.mxu0 0
    %411 = vmatmul.mubr.bf16.gmra.mxu0 %v185
    %v412 = vpop.f32.mrf.mxu0
    %v413 = vadd.f32 0.0, %v412
    %v414 = vpop.f32.mrf.mxu0
    %v415 = vadd.f32 0.0, %v414
    %v416 = vpop.f32.mrf.mxu0
    %v417 = vadd.f32 0.0, %v416
    %v418 = vpop.f32.mrf.mxu0
    %v419 = vadd.f32 0.0, %v418
    %420 = vmatprep.mubr.bf16.mxu0 0
    %421 = vmatmul.mubr.bf16.gmra.mxu0 %v188
    %v422 = vpop.f32.mrf.mxu0
    %v423 = vadd.f32 0.0, %v422
    %v424 = vpop.f32.mrf.mxu0
    %v425 = vadd.f32 0.0, %v424
    %v426 = vpop.f32.mrf.mxu0
    %v427 = vadd.f32 0.0, %v426
    %v428 = vpop.f32.mrf.mxu0
    %v429 = vadd.f32 0.0, %v428
    %430 = vmatprep.mubr.bf16.mxu0 0
    %431 = vmatmul.mubr.bf16.gmra.mxu0 %v191
    %v432 = vpop.f32.mrf.mxu0
    %v433 = vadd.f32 0.0, %v432
    %v434 = vpop.f32.mrf.mxu0
    %v435 = vadd.f32 0.0, %v434
    %v436 = vpop.f32.mrf.mxu0
    %v437 = vadd.f32 0.0, %v436
    %v438 = vpop.f32.mrf.mxu0
    %v439 = vadd.f32 0.0, %v438
    %440 = vmatprep.mubr.bf16.mxu0 0
    %441 = vmatmul.mubr.bf16.gmra.mxu0 %v194
    %v442 = vpop.f32.mrf.mxu0
    %v443 = vadd.f32 0.0, %v442
    %v444 = vpop.f32.mrf.mxu0
    %v445 = vadd.f32 0.0, %v444
    %v446 = vpop.f32.mrf.mxu0
    %v447 = vadd.f32 0.0, %v446
    %v448 = vpop.f32.mrf.mxu0
    %v449 = vadd.f32 0.0, %v448
    %450 = vmatprep.mubr.bf16.mxu0 0
    %451 = vmatmul.mubr.bf16.gmra.mxu0 %v197
    %v452 = vpop.f32.mrf.mxu0
    %v453 = vadd.f32 0.0, %v452
    %v454 = vpop.f32.mrf.mxu0
    %v455 = vadd.f32 0.0, %v454
    %v456 = vpop.f32.mrf.mxu0
    %v457 = vadd.f32 0.0, %v456
    %v458 = vpop.f32.mrf.mxu0
    %v459 = vadd.f32 0.0, %v458
    %460 = vmatprep.mubr.bf16.mxu0 0
    %461 = vmatmul.mubr.bf16.gmra.mxu0 %v200
    %v462 = vpop.f32.mrf.mxu0
    %v463 = vadd.f32 0.0, %v462
    %v464 = vpop.f32.mrf.mxu0
    %v465 = vadd.f32 0.0, %v464
    %v466 = vpop.f32.mrf.mxu0
    %v467 = vadd.f32 0.0, %v466
    %v468 = vpop.f32.mrf.mxu0
    %v469 = vadd.f32 0.0, %v468
    %470 = vmatprep.mubr.bf16.mxu0 0
    %471 = vmatmul.mubr.bf16.gmra.mxu0 %v203
    %v472 = vpop.f32.mrf.mxu0
    %v473 = vadd.f32 0.0, %v472
    %v474 = vpop.f32.mrf.mxu0
    %v475 = vadd.f32 0.0, %v474
    %v476 = vpop.f32.mrf.mxu0
    %v477 = vadd.f32 0.0, %v476
    %v478 = vpop.f32.mrf.mxu0
    %v479 = vadd.f32 0.0, %v478
    %480 = vmatprep.mubr.bf16.mxu0 0
    %481 = vmatmul.mubr.bf16.gmra.mxu0 %v206
    %v482 = vpop.f32.mrf.mxu0
    %v483 = vadd.f32 0.0, %v482
    %v484 = vpop.f32.mrf.mxu0
    %v485 = vadd.f32 0.0, %v484
    %v486 = vpop.f32.mrf.mxu0
    %v487 = vadd.f32 0.0, %v486
    %v488 = vpop.f32.mrf.mxu0
    %v489 = vadd.f32 0.0, %v488
    %490 = vmatprep.mubr.bf16.mxu0 0
    %491 = vmatmul.mubr.bf16.gmra.mxu0 %v209
    %v492 = vpop.f32.mrf.mxu0
    %v493 = vadd.f32 0.0, %v492
    %v494 = vpop.f32.mrf.mxu0
    %v495 = vadd.f32 0.0, %v494
    %v496 = vpop.f32.mrf.mxu0
    %v497 = vadd.f32 0.0, %v496
    %v498 = vpop.f32.mrf.mxu0
    %v499 = vadd.f32 0.0, %v498
    %500 = vmatprep.mubr.bf16.mxu0 0
    %501 = vmatmul.mubr.bf16.gmra.mxu0 %v212
    %v502 = vpop.f32.mrf.mxu0
    %v503 = vadd.f32 0.0, %v502
    %v504 = vpop.f32.mrf.mxu0
    %v505 = vadd.f32 0.0, %v504
    %v506 = vpop.f32.mrf.mxu0
    %v507 = vadd.f32 0.0, %v506
    %v508 = vpop.f32.mrf.mxu0
    %v509 = vadd.f32 0.0, %v508
    %510 = vmatprep.mubr.bf16.mxu0 0
    %511 = vmatmul.mubr.bf16.gmra.mxu0 %v215
    %v512 = vpop.f32.mrf.mxu0
    %v513 = vadd.f32 0.0, %v512
    %v514 = vpop.f32.mrf.mxu0
    %v515 = vadd.f32 0.0, %v514
    %v516 = vpop.f32.mrf.mxu0
    %v517 = vadd.f32 0.0, %v516
    %v518 = vpop.f32.mrf.mxu0
    %v519 = vadd.f32 0.0, %v518
    %520 = vmatprep.mubr.bf16.mxu0 0
    %521 = vmatmul.mubr.bf16.gmra.mxu0 %v218
    %v522 = vpop.f32.mrf.mxu0
    %v523 = vadd.f32 0.0, %v522
    %v524 = vpop.f32.mrf.mxu0
    %v525 = vadd.f32 0.0, %v524
    %v526 = vpop.f32.mrf.mxu0
    %v527 = vadd.f32 0.0, %v526
    %v528 = vpop.f32.mrf.mxu0
    %v529 = vadd.f32 0.0, %v528
    %530 = vmatprep.mubr.bf16.mxu0 0
    %531 = vmatmul.mubr.bf16.gmra.mxu0 %v221
    %v532 = vpop.f32.mrf.mxu0
    %v533 = vadd.f32 0.0, %v532
    %v534 = vpop.f32.mrf.mxu0
    %v535 = vadd.f32 0.0, %v534
    %v536 = vpop.f32.mrf.mxu0
    %v537 = vadd.f32 0.0, %v536
    %v538 = vpop.f32.mrf.mxu0
    %v539 = vadd.f32 0.0, %v538
    %540 = vmatprep.mubr.bf16.mxu0 0
    %541 = vmatmul.mubr.bf16.gmra.mxu0 %v224
    %v542 = vpop.f32.mrf.mxu0
    %v543 = vadd.f32 0.0, %v542
    %v544 = vpop.f32.mrf.mxu0
    %v545 = vadd.f32 0.0, %v544
    %v546 = vpop.f32.mrf.mxu0
    %v547 = vadd.f32 0.0, %v546
    %v548 = vpop.f32.mrf.mxu0
    %v549 = vadd.f32 0.0, %v548
    %550 = vmatprep.mubr.bf16.mxu0 0
    %551 = vmatmul.mubr.bf16.gmra.mxu0 %v227
    %v552 = vpop.f32.mrf.mxu0
    %v553 = vadd.f32 0.0, %v552
    %v554 = vpop.f32.mrf.mxu0
    %v555 = vadd.f32 0.0, %v554
    %v556 = vpop.f32.mrf.mxu0
    %v557 = vadd.f32 0.0, %v556
    %v558 = vpop.f32.mrf.mxu0
    %v559 = vadd.f32 0.0, %v558
    %560 = vmatprep.mubr.bf16.mxu0 0
    %561 = vmatmul.mubr.bf16.gmra.mxu0 %v230
    %v562 = vpop.f32.mrf.mxu0
    %v563 = vadd.f32 0.0, %v562
    %v564 = vpop.f32.mrf.mxu0
    %v565 = vadd.f32 0.0, %v564
    %v566 = vpop.f32.mrf.mxu0
    %v567 = vadd.f32 0.0, %v566
    %v568 = vpop.f32.mrf.mxu0
    %v569 = vadd.f32 0.0, %v568
    %570 = vmatprep.mubr.bf16.mxu0 0
    %571 = vmatmul.mubr.bf16.gmra.mxu0 %v233
    %v572 = vpop.f32.mrf.mxu0
    %v573 = vadd.f32 0.0, %v572
    %v574 = vpop.f32.mrf.mxu0
    %v575 = vadd.f32 0.0, %v574
    %v576 = vpop.f32.mrf.mxu0
    %v577 = vadd.f32 0.0, %v576
    %v578 = vpop.f32.mrf.mxu0
    %v579 = vadd.f32 0.0, %v578
    %580 = vmatprep.mubr.bf16.mxu0 0
    %581 = vmatmul.mubr.bf16.gmra.mxu0 %v236
    %v582 = vpop.f32.mrf.mxu0
    %v583 = vadd.f32 0.0, %v582
    %v584 = vpop.f32.mrf.mxu0
    %v585 = vadd.f32 0.0, %v584
    %v586 = vpop.f32.mrf.mxu0
    %v587 = vadd.f32 0.0, %v586
    %v588 = vpop.f32.mrf.mxu0
    %v589 = vadd.f32 0.0, %v588
    %590 = vdwg.mxu0
    %v591 = vld [vmem:[%s3] sm:$0x3]
    %v593 = vlaneseq
    %v594 = vshrl.u32 %v593, 7
    %v595 = vsub.s32 0, %v594
    %v596 = vrot.slane %v591, %v595
    %v597 = vlaneseq
    %v598 = vshrl.u32 %v597, 7
    %v599 = vsub.s32 1, %v598
    %v600 = vrot.slane %v591, %v599
    %v603 = vsub.f32 %v273, %v596
    %v604 = vsub.f32 %v275, %v600
    %v605 = vsub.f32 %v277, %v596
    %v606 = vsub.f32 %v279, %v600
    %v607 = vsub.f32 %v283, %v596
    %v608 = vsub.f32 %v285, %v600
    %v609 = vsub.f32 %v287, %v596
    %v610 = vsub.f32 %v289, %v600
    %v611 = vsub.f32 %v293, %v596
    %v612 = vsub.f32 %v295, %v600
    %v613 = vsub.f32 %v297, %v596
    %v614 = vsub.f32 %v299, %v600
    %v615 = vsub.f32 %v303, %v596
    %v616 = vsub.f32 %v305, %v600
    %v617 = vsub.f32 %v307, %v596
    %v618 = vsub.f32 %v309, %v600
    %v619 = vsub.f32 %v313, %v596
    %v620 = vsub.f32 %v315, %v600
    %v621 = vsub.f32 %v317, %v596
    %v622 = vsub.f32 %v319, %v600
    %v623 = vsub.f32 %v323, %v596
    %v624 = vsub.f32 %v325, %v600
    %v625 = vsub.f32 %v327, %v596
    %v626 = vsub.f32 %v329, %v600
    %v627 = vsub.f32 %v333, %v596
    %v628 = vsub.f32 %v335, %v600
    %v629 = vsub.f32 %v337, %v596
    %v630 = vsub.f32 %v339, %v600
    %v631 = vsub.f32 %v343, %v596
    %v632 = vsub.f32 %v345, %v600
    %v633 = vsub.f32 %v347, %v596
    %v634 = vsub.f32 %v349, %v600
    %v635 = vsub.f32 %v353, %v596
    %v636 = vsub.f32 %v355, %v600
    %v637 = vsub.f32 %v357, %v596
    %v638 = vsub.f32 %v359, %v600
    %v639 = vsub.f32 %v363, %v596
    %v640 = vsub.f32 %v365, %v600
    %v641 = vsub.f32 %v367, %v596
    %v642 = vsub.f32 %v369, %v600
    %v643 = vsub.f32 %v373, %v596
    %v644 = vsub.f32 %v375, %v600
    %v645 = vsub.f32 %v377, %v596
    %v646 = vsub.f32 %v379, %v600
    %v647 = vsub.f32 %v383, %v596
    %v648 = vsub.f32 %v385, %v600
    %v649 = vsub.f32 %v387, %v596
    %v650 = vsub.f32 %v389, %v600
    %v651 = vsub.f32 %v393, %v596
    %v652 = vsub.f32 %v395, %v600
    %v653 = vsub.f32 %v397, %v596
    %v654 = vsub.f32 %v399, %v600
    %v655 = vsub.f32 %v403, %v596
    %v656 = vsub.f32 %v405, %v600
    %v657 = vsub.f32 %v407, %v596
    %v658 = vsub.f32 %v409, %v600
    %v659 = vsub.f32 %v413, %v596
    %v660 = vsub.f32 %v415, %v600
    %v661 = vsub.f32 %v417, %v596
    %v662 = vsub.f32 %v419, %v600
    %v663 = vsub.f32 %v423, %v596
    %v664 = vsub.f32 %v425, %v600
    %v665 = vsub.f32 %v427, %v596
    %v666 = vsub.f32 %v429, %v600
    %v667 = vsub.f32 %v433, %v596
    %v668 = vsub.f32 %v435, %v600
    %v669 = vsub.f32 %v437, %v596
    %v670 = vsub.f32 %v439, %v600
    %v671 = vsub.f32 %v443, %v596
    %v672 = vsub.f32 %v445, %v600
    %v673 = vsub.f32 %v447, %v596
    %v674 = vsub.f32 %v449, %v600
    %v675 = vsub.f32 %v453, %v596
    %v676 = vsub.f32 %v455, %v600
    %v677 = vsub.f32 %v457, %v596
    %v678 = vsub.f32 %v459, %v600
    %v679 = vsub.f32 %v463, %v596
    %v680 = vsub.f32 %v465, %v600
    %v681 = vsub.f32 %v467, %v596
    %v682 = vsub.f32 %v469, %v600
    %v683 = vsub.f32 %v473, %v596
    %v684 = vsub.f32 %v475, %v600
    %v685 = vsub.f32 %v477, %v596
    %v686 = vsub.f32 %v479, %v600
    %v687 = vsub.f32 %v483, %v596
    %v688 = vsub.f32 %v485, %v600
    %v689 = vsub.f32 %v487, %v596
    %v690 = vsub.f32 %v489, %v600
    %v691 = vsub.f32 %v493, %v596
    %v692 = vsub.f32 %v495, %v600
    %v693 = vsub.f32 %v497, %v596
    %v694 = vsub.f32 %v499, %v600
    %v695 = vsub.f32 %v503, %v596
    %v696 = vsub.f32 %v505, %v600
    %v697 = vsub.f32 %v507, %v596
    %v698 = vsub.f32 %v509, %v600
    %v699 = vsub.f32 %v513, %v596
    %v700 = vsub.f32 %v515, %v600
    %v701 = vsub.f32 %v517, %v596
    %v702 = vsub.f32 %v519, %v600
    %v703 = vsub.f32 %v523, %v596
    %v704 = vsub.f32 %v525, %v600
    %v705 = vsub.f32 %v527, %v596
    %v706 = vsub.f32 %v529, %v600
    %v707 = vsub.f32 %v533, %v596
    %v708 = vsub.f32 %v535, %v600
    %v709 = vsub.f32 %v537, %v596
    %v710 = vsub.f32 %v539, %v600
    %v711 = vsub.f32 %v543, %v596
    %v712 = vsub.f32 %v545, %v600
    %v713 = vsub.f32 %v547, %v596
    %v714 = vsub.f32 %v549, %v600
    %v715 = vsub.f32 %v553, %v596
    %v716 = vsub.f32 %v555, %v600
    %v717 = vsub.f32 %v557, %v596
    %v718 = vsub.f32 %v559, %v600
    %v719 = vsub.f32 %v563, %v596
    %v720 = vsub.f32 %v565, %v600
    %v721 = vsub.f32 %v567, %v596
    %v722 = vsub.f32 %v569, %v600
    %v723 = vsub.f32 %v573, %v596
    %v724 = vsub.f32 %v575, %v600
    %v725 = vsub.f32 %v577, %v596
    %v726 = vsub.f32 %v579, %v600
    %v727 = vsub.f32 %v583, %v596
    %v728 = vsub.f32 %v585, %v600
    %v729 = vsub.f32 %v587, %v596
    %v730 = vsub.f32 %v589, %v600
    %v731 = vlaneseq
    %v732 = vand.u32 %v731, 127
    %v733 = vadd.s32 %v732, 128
    %vm734 = vcmp.ge.f32.partialorder %v603, %v604
    %v735 = vsel %vm734, %v603, %v604
    %v736 = vsel %vm734, %v732, %v733
    %737 = vmax.index.xlane.f32.xlu0 %v735
    %v738 = vpop.xlane.xlu0 %737
    %739 = vset.pattern.permute.xlu0 %v738
    %740 = vperm.xlu0 %739, %v736
    %v741 = vpop.permute.xlu0 %740
    %vm742 = vcmp.ge.f32.partialorder %v605, %v606
    %v743 = vsel %vm742, %v605, %v606
    %v744 = vsel %vm742, %v732, %v733
    %745 = vmax.index.xlane.f32.xlu0 %v743
    %v746 = vpop.xlane.xlu0 %745
    %747 = vset.pattern.permute.xlu0 %v746
    %748 = vperm.xlu0 %747, %v744
    %v749 = vpop.permute.xlu0 %748
    %vm750 = vcmp.ge.f32.partialorder %v607, %v608
    %v751 = vsel %vm750, %v607, %v608
    %v752 = vsel %vm750, %v732, %v733
    %753 = vmax.index.xlane.f32.xlu0 %v751
    %v754 = vpop.xlane.xlu0 %753
    %755 = vset.pattern.permute.xlu0 %v754
    %756 = vperm.xlu0 %755, %v752
    %v757 = vpop.permute.xlu0 %756
    %vm758 = vcmp.ge.f32.partialorder %v609, %v610
    %v759 = vsel %vm758, %v609, %v610
    %v760 = vsel %vm758, %v732, %v733
    %761 = vmax.index.xlane.f32.xlu0 %v759
    %v762 = vpop.xlane.xlu0 %761
    %763 = vset.pattern.permute.xlu0 %v762
    %764 = vperm.xlu0 %763, %v760
    %v765 = vpop.permute.xlu0 %764
    %vm766 = vcmp.ge.f32.partialorder %v611, %v612
    %v767 = vsel %vm766, %v611, %v612
    %v768 = vsel %vm766, %v732, %v733
    %769 = vmax.index.xlane.f32.xlu0 %v767
    %v770 = vpop.xlane.xlu0 %769
    %771 = vset.pattern.permute.xlu0 %v770
    %772 = vperm.xlu0 %771, %v768
    %v773 = vpop.permute.xlu0 %772
    %vm774 = vcmp.ge.f32.partialorder %v613, %v614
    %v775 = vsel %vm774, %v613, %v614
    %v776 = vsel %vm774, %v732, %v733
    %777 = vmax.index.xlane.f32.xlu0 %v775
    %v778 = vpop.xlane.xlu0 %777
    %779 = vset.pattern.permute.xlu0 %v778
    %780 = vperm.xlu0 %779, %v776
    %v781 = vpop.permute.xlu0 %780
    %vm782 = vcmp.ge.f32.partialorder %v615, %v616
    %v783 = vsel %vm782, %v615, %v616
    %v784 = vsel %vm782, %v732, %v733
    %785 = vmax.index.xlane.f32.xlu0 %v783
    %v786 = vpop.xlane.xlu0 %785
    %787 = vset.pattern.permute.xlu0 %v786
    %788 = vperm.xlu0 %787, %v784
    %v789 = vpop.permute.xlu0 %788
    %vm790 = vcmp.ge.f32.partialorder %v617, %v618
    %v791 = vsel %vm790, %v617, %v618
    %v792 = vsel %vm790, %v732, %v733
    %793 = vmax.index.xlane.f32.xlu0 %v791
    %v794 = vpop.xlane.xlu0 %793
    %795 = vset.pattern.permute.xlu0 %v794
    %796 = vperm.xlu0 %795, %v792
    %v797 = vpop.permute.xlu0 %796
    %vm798 = vcmp.ge.f32.partialorder %v619, %v620
    %v799 = vsel %vm798, %v619, %v620
    %v800 = vsel %vm798, %v732, %v733
    %801 = vmax.index.xlane.f32.xlu0 %v799
    %v802 = vpop.xlane.xlu0 %801
    %803 = vset.pattern.permute.xlu0 %v802
    %804 = vperm.xlu0 %803, %v800
    %v805 = vpop.permute.xlu0 %804
    %vm806 = vcmp.ge.f32.partialorder %v621, %v622
    %v807 = vsel %vm806, %v621, %v622
    %v808 = vsel %vm806, %v732, %v733
    %809 = vmax.index.xlane.f32.xlu0 %v807
    %v810 = vpop.xlane.xlu0 %809
    %811 = vset.pattern.permute.xlu0 %v810
    %812 = vperm.xlu0 %811, %v808
    %v813 = vpop.permute.xlu0 %812
    %vm814 = vcmp.ge.f32.partialorder %v623, %v624
    %v815 = vsel %vm814, %v623, %v624
    %v816 = vsel %vm814, %v732, %v733
    %817 = vmax.index.xlane.f32.xlu0 %v815
    %v818 = vpop.xlane.xlu0 %817
    %819 = vset.pattern.permute.xlu0 %v818
    %820 = vperm.xlu0 %819, %v816
    %v821 = vpop.permute.xlu0 %820
    %vm822 = vcmp.ge.f32.partialorder %v625, %v626
    %v823 = vsel %vm822, %v625, %v626
    %v824 = vsel %vm822, %v732, %v733
    %825 = vmax.index.xlane.f32.xlu0 %v823
    %v826 = vpop.xlane.xlu0 %825
    %827 = vset.pattern.permute.xlu0 %v826
    %828 = vperm.xlu0 %827, %v824
    %v829 = vpop.permute.xlu0 %828
    %vm830 = vcmp.ge.f32.partialorder %v627, %v628
    %v831 = vsel %vm830, %v627, %v628
    %v832 = vsel %vm830, %v732, %v733
    %833 = vmax.index.xlane.f32.xlu0 %v831
    %v834 = vpop.xlane.xlu0 %833
    %835 = vset.pattern.permute.xlu0 %v834
    %836 = vperm.xlu0 %835, %v832
    %v837 = vpop.permute.xlu0 %836
    %vm838 = vcmp.ge.f32.partialorder %v629, %v630
    %v839 = vsel %vm838, %v629, %v630
    %v840 = vsel %vm838, %v732, %v733
    %841 = vmax.index.xlane.f32.xlu0 %v839
    %v842 = vpop.xlane.xlu0 %841
    %843 = vset.pattern.permute.xlu0 %v842
    %844 = vperm.xlu0 %843, %v840
    %v845 = vpop.permute.xlu0 %844
    %vm846 = vcmp.ge.f32.partialorder %v631, %v632
    %v847 = vsel %vm846, %v631, %v632
    %v848 = vsel %vm846, %v732, %v733
    %849 = vmax.index.xlane.f32.xlu0 %v847
    %v850 = vpop.xlane.xlu0 %849
    %851 = vset.pattern.permute.xlu0 %v850
    %852 = vperm.xlu0 %851, %v848
    %v853 = vpop.permute.xlu0 %852
    %vm854 = vcmp.ge.f32.partialorder %v633, %v634
    %v855 = vsel %vm854, %v633, %v634
    %v856 = vsel %vm854, %v732, %v733
    %857 = vmax.index.xlane.f32.xlu0 %v855
    %v858 = vpop.xlane.xlu0 %857
    %859 = vset.pattern.permute.xlu0 %v858
    %860 = vperm.xlu0 %859, %v856
    %v861 = vpop.permute.xlu0 %860
    %vm862 = vcmp.ge.f32.partialorder %v635, %v636
    %v863 = vsel %vm862, %v635, %v636
    %v864 = vsel %vm862, %v732, %v733
    %865 = vmax.index.xlane.f32.xlu0 %v863
    %v866 = vpop.xlane.xlu0 %865
    %867 = vset.pattern.permute.xlu0 %v866
    %868 = vperm.xlu0 %867, %v864
    %v869 = vpop.permute.xlu0 %868
    %vm870 = vcmp.ge.f32.partialorder %v637, %v638
    %v871 = vsel %vm870, %v637, %v638
    %v872 = vsel %vm870, %v732, %v733
    %873 = vmax.index.xlane.f32.xlu0 %v871
    %v874 = vpop.xlane.xlu0 %873
    %875 = vset.pattern.permute.xlu0 %v874
    %876 = vperm.xlu0 %875, %v872
    %v877 = vpop.permute.xlu0 %876
    %vm878 = vcmp.ge.f32.partialorder %v639, %v640
    %v879 = vsel %vm878, %v639, %v640
    %v880 = vsel %vm878, %v732, %v733
    %881 = vmax.index.xlane.f32.xlu0 %v879
    %v882 = vpop.xlane.xlu0 %881
    %883 = vset.pattern.permute.xlu0 %v882
    %884 = vperm.xlu0 %883, %v880
    %v885 = vpop.permute.xlu0 %884
    %vm886 = vcmp.ge.f32.partialorder %v641, %v642
    %v887 = vsel %vm886, %v641, %v642
    %v888 = vsel %vm886, %v732, %v733
    %889 = vmax.index.xlane.f32.xlu0 %v887
    %v890 = vpop.xlane.xlu0 %889
    %891 = vset.pattern.permute.xlu0 %v890
    %892 = vperm.xlu0 %891, %v888
    %v893 = vpop.permute.xlu0 %892
    %vm894 = vcmp.ge.f32.partialorder %v643, %v644
    %v895 = vsel %vm894, %v643, %v644
    %v896 = vsel %vm894, %v732, %v733
    %897 = vmax.index.xlane.f32.xlu0 %v895
    %v898 = vpop.xlane.xlu0 %897
    %899 = vset.pattern.permute.xlu0 %v898
    %900 = vperm.xlu0 %899, %v896
    %v901 = vpop.permute.xlu0 %900
    %vm902 = vcmp.ge.f32.partialorder %v645, %v646
    %v903 = vsel %vm902, %v645, %v646
    %v904 = vsel %vm902, %v732, %v733
    %905 = vmax.index.xlane.f32.xlu0 %v903
    %v906 = vpop.xlane.xlu0 %905
    %907 = vset.pattern.permute.xlu0 %v906
    %908 = vperm.xlu0 %907, %v904
    %v909 = vpop.permute.xlu0 %908
    %vm910 = vcmp.ge.f32.partialorder %v647, %v648
    %v911 = vsel %vm910, %v647, %v648
    %v912 = vsel %vm910, %v732, %v733
    %913 = vmax.index.xlane.f32.xlu0 %v911
    %v914 = vpop.xlane.xlu0 %913
    %915 = vset.pattern.permute.xlu0 %v914
    %916 = vperm.xlu0 %915, %v912
    %v917 = vpop.permute.xlu0 %916
    %vm918 = vcmp.ge.f32.partialorder %v649, %v650
    %v919 = vsel %vm918, %v649, %v650
    %v920 = vsel %vm918, %v732, %v733
    %921 = vmax.index.xlane.f32.xlu0 %v919
    %v922 = vpop.xlane.xlu0 %921
    %923 = vset.pattern.permute.xlu0 %v922
    %924 = vperm.xlu0 %923, %v920
    %v925 = vpop.permute.xlu0 %924
    %vm926 = vcmp.ge.f32.partialorder %v651, %v652
    %v927 = vsel %vm926, %v651, %v652
    %v928 = vsel %vm926, %v732, %v733
    %929 = vmax.index.xlane.f32.xlu0 %v927
    %v930 = vpop.xlane.xlu0 %929
    %931 = vset.pattern.permute.xlu0 %v930
    %932 = vperm.xlu0 %931, %v928
    %v933 = vpop.permute.xlu0 %932
    %vm934 = vcmp.ge.f32.partialorder %v653, %v654
    %v935 = vsel %vm934, %v653, %v654
    %v936 = vsel %vm934, %v732, %v733
    %937 = vmax.index.xlane.f32.xlu0 %v935
    %v938 = vpop.xlane.xlu0 %937
    %939 = vset.pattern.permute.xlu0 %v938
    %940 = vperm.xlu0 %939, %v936
    %v941 = vpop.permute.xlu0 %940
    %vm942 = vcmp.ge.f32.partialorder %v655, %v656
    %v943 = vsel %vm942, %v655, %v656
    %v944 = vsel %vm942, %v732, %v733
    %945 = vmax.index.xlane.f32.xlu0 %v943
    %v946 = vpop.xlane.xlu0 %945
    %947 = vset.pattern.permute.xlu0 %v946
    %948 = vperm.xlu0 %947, %v944
    %v949 = vpop.permute.xlu0 %948
    %vm950 = vcmp.ge.f32.partialorder %v657, %v658
    %v951 = vsel %vm950, %v657, %v658
    %v952 = vsel %vm950, %v732, %v733
    %953 = vmax.index.xlane.f32.xlu0 %v951
    %v954 = vpop.xlane.xlu0 %953
    %955 = vset.pattern.permute.xlu0 %v954
    %956 = vperm.xlu0 %955, %v952
    %v957 = vpop.permute.xlu0 %956
    %vm958 = vcmp.ge.f32.partialorder %v659, %v660
    %v959 = vsel %vm958, %v659, %v660
    %v960 = vsel %vm958, %v732, %v733
    %961 = vmax.index.xlane.f32.xlu0 %v959
    %v962 = vpop.xlane.xlu0 %961
    %963 = vset.pattern.permute.xlu0 %v962
    %964 = vperm.xlu0 %963, %v960
    %v965 = vpop.permute.xlu0 %964
    %vm966 = vcmp.ge.f32.partialorder %v661, %v662
    %v967 = vsel %vm966, %v661, %v662
    %v968 = vsel %vm966, %v732, %v733
    %969 = vmax.index.xlane.f32.xlu0 %v967
    %v970 = vpop.xlane.xlu0 %969
    %971 = vset.pattern.permute.xlu0 %v970
    %972 = vperm.xlu0 %971, %v968
    %v973 = vpop.permute.xlu0 %972
    %vm974 = vcmp.ge.f32.partialorder %v663, %v664
    %v975 = vsel %vm974, %v663, %v664
    %v976 = vsel %vm974, %v732, %v733
    %977 = vmax.index.xlane.f32.xlu0 %v975
    %v978 = vpop.xlane.xlu0 %977
    %979 = vset.pattern.permute.xlu0 %v978
    %980 = vperm.xlu0 %979, %v976
    %v981 = vpop.permute.xlu0 %980
    %vm982 = vcmp.ge.f32.partialorder %v665, %v666
    %v983 = vsel %vm982, %v665, %v666
    %v984 = vsel %vm982, %v732, %v733
    %985 = vmax.index.xlane.f32.xlu0 %v983
    %v986 = vpop.xlane.xlu0 %985
    %987 = vset.pattern.permute.xlu0 %v986
    %988 = vperm.xlu0 %987, %v984
    %v989 = vpop.permute.xlu0 %988
    %vm990 = vcmp.ge.f32.partialorder %v667, %v668
    %v991 = vsel %vm990, %v667, %v668
    %v992 = vsel %vm990, %v732, %v733
    %993 = vmax.index.xlane.f32.xlu0 %v991
    %v994 = vpop.xlane.xlu0 %993
    %995 = vset.pattern.permute.xlu0 %v994
    %996 = vperm.xlu0 %995, %v992
    %v997 = vpop.permute.xlu0 %996
    %vm998 = vcmp.ge.f32.partialorder %v669, %v670
    %v999 = vsel %vm998, %v669, %v670
    %v1000 = vsel %vm998, %v732, %v733
    %1001 = vmax.index.xlane.f32.xlu0 %v999
    %v1002 = vpop.xlane.xlu0 %1001
    %1003 = vset.pattern.permute.xlu0 %v1002
    %1004 = vperm.xlu0 %1003, %v1000
    %v1005 = vpop.permute.xlu0 %1004
    %vm1006 = vcmp.ge.f32.partialorder %v671, %v672
    %v1007 = vsel %vm1006, %v671, %v672
    %v1008 = vsel %vm1006, %v732, %v733
    %1009 = vmax.index.xlane.f32.xlu0 %v1007
    %v1010 = vpop.xlane.xlu0 %1009
    %1011 = vset.pattern.permute.xlu0 %v1010
    %1012 = vperm.xlu0 %1011, %v1008
    %v1013 = vpop.permute.xlu0 %1012
    %vm1014 = vcmp.ge.f32.partialorder %v673, %v674
    %v1015 = vsel %vm1014, %v673, %v674
    %v1016 = vsel %vm1014, %v732, %v733
    %1017 = vmax.index.xlane.f32.xlu0 %v1015
    %v1018 = vpop.xlane.xlu0 %1017
    %1019 = vset.pattern.permute.xlu0 %v1018
    %1020 = vperm.xlu0 %1019, %v1016
    %v1021 = vpop.permute.xlu0 %1020
    %vm1022 = vcmp.ge.f32.partialorder %v675, %v676
    %v1023 = vsel %vm1022, %v675, %v676
    %v1024 = vsel %vm1022, %v732, %v733
    %1025 = vmax.index.xlane.f32.xlu0 %v1023
    %v1026 = vpop.xlane.xlu0 %1025
    %1027 = vset.pattern.permute.xlu0 %v1026
    %1028 = vperm.xlu0 %1027, %v1024
    %v1029 = vpop.permute.xlu0 %1028
    %vm1030 = vcmp.ge.f32.partialorder %v677, %v678
    %v1031 = vsel %vm1030, %v677, %v678
    %v1032 = vsel %vm1030, %v732, %v733
    %1033 = vmax.index.xlane.f32.xlu0 %v1031
    %v1034 = vpop.xlane.xlu0 %1033
    %1035 = vset.pattern.permute.xlu0 %v1034
    %1036 = vperm.xlu0 %1035, %v1032
    %v1037 = vpop.permute.xlu0 %1036
    %vm1038 = vcmp.ge.f32.partialorder %v679, %v680
    %v1039 = vsel %vm1038, %v679, %v680
    %v1040 = vsel %vm1038, %v732, %v733
    %1041 = vmax.index.xlane.f32.xlu0 %v1039
    %v1042 = vpop.xlane.xlu0 %1041
    %1043 = vset.pattern.permute.xlu0 %v1042
    %1044 = vperm.xlu0 %1043, %v1040
    %v1045 = vpop.permute.xlu0 %1044
    %vm1046 = vcmp.ge.f32.partialorder %v681, %v682
    %v1047 = vsel %vm1046, %v681, %v682
    %v1048 = vsel %vm1046, %v732, %v733
    %1049 = vmax.index.xlane.f32.xlu0 %v1047
    %v1050 = vpop.xlane.xlu0 %1049
    %1051 = vset.pattern.permute.xlu0 %v1050
    %1052 = vperm.xlu0 %1051, %v1048
    %v1053 = vpop.permute.xlu0 %1052
    %vm1054 = vcmp.ge.f32.partialorder %v683, %v684
    %v1055 = vsel %vm1054, %v683, %v684
    %v1056 = vsel %vm1054, %v732, %v733
    %1057 = vmax.index.xlane.f32.xlu0 %v1055
    %v1058 = vpop.xlane.xlu0 %1057
    %1059 = vset.pattern.permute.xlu0 %v1058
    %1060 = vperm.xlu0 %1059, %v1056
    %v1061 = vpop.permute.xlu0 %1060
    %vm1062 = vcmp.ge.f32.partialorder %v685, %v686
    %v1063 = vsel %vm1062, %v685, %v686
    %v1064 = vsel %vm1062, %v732, %v733
    %1065 = vmax.index.xlane.f32.xlu0 %v1063
    %v1066 = vpop.xlane.xlu0 %1065
    %1067 = vset.pattern.permute.xlu0 %v1066
    %1068 = vperm.xlu0 %1067, %v1064
    %v1069 = vpop.permute.xlu0 %1068
    %vm1070 = vcmp.ge.f32.partialorder %v687, %v688
    %v1071 = vsel %vm1070, %v687, %v688
    %v1072 = vsel %vm1070, %v732, %v733
    %1073 = vmax.index.xlane.f32.xlu0 %v1071
    %v1074 = vpop.xlane.xlu0 %1073
    %1075 = vset.pattern.permute.xlu0 %v1074
    %1076 = vperm.xlu0 %1075, %v1072
    %v1077 = vpop.permute.xlu0 %1076
    %vm1078 = vcmp.ge.f32.partialorder %v689, %v690
    %v1079 = vsel %vm1078, %v689, %v690
    %v1080 = vsel %vm1078, %v732, %v733
    %1081 = vmax.index.xlane.f32.xlu0 %v1079
    %v1082 = vpop.xlane.xlu0 %1081
    %1083 = vset.pattern.permute.xlu0 %v1082
    %1084 = vperm.xlu0 %1083, %v1080
    %v1085 = vpop.permute.xlu0 %1084
    %vm1086 = vcmp.ge.f32.partialorder %v691, %v692
    %v1087 = vsel %vm1086, %v691, %v692
    %v1088 = vsel %vm1086, %v732, %v733
    %1089 = vmax.index.xlane.f32.xlu0 %v1087
    %v1090 = vpop.xlane.xlu0 %1089
    %1091 = vset.pattern.permute.xlu0 %v1090
    %1092 = vperm.xlu0 %1091, %v1088
    %v1093 = vpop.permute.xlu0 %1092
    %vm1094 = vcmp.ge.f32.partialorder %v693, %v694
    %v1095 = vsel %vm1094, %v693, %v694
    %v1096 = vsel %vm1094, %v732, %v733
    %1097 = vmax.index.xlane.f32.xlu0 %v1095
    %v1098 = vpop.xlane.xlu0 %1097
    %1099 = vset.pattern.permute.xlu0 %v1098
    %1100 = vperm.xlu0 %1099, %v1096
    %v1101 = vpop.permute.xlu0 %1100
    %vm1102 = vcmp.ge.f32.partialorder %v695, %v696
    %v1103 = vsel %vm1102, %v695, %v696
    %v1104 = vsel %vm1102, %v732, %v733
    %1105 = vmax.index.xlane.f32.xlu0 %v1103
    %v1106 = vpop.xlane.xlu0 %1105
    %1107 = vset.pattern.permute.xlu0 %v1106
    %1108 = vperm.xlu0 %1107, %v1104
    %v1109 = vpop.permute.xlu0 %1108
    %vm1110 = vcmp.ge.f32.partialorder %v697, %v698
    %v1111 = vsel %vm1110, %v697, %v698
    %v1112 = vsel %vm1110, %v732, %v733
    %1113 = vmax.index.xlane.f32.xlu0 %v1111
    %v1114 = vpop.xlane.xlu0 %1113
    %1115 = vset.pattern.permute.xlu0 %v1114
    %1116 = vperm.xlu0 %1115, %v1112
    %v1117 = vpop.permute.xlu0 %1116
    %vm1118 = vcmp.ge.f32.partialorder %v699, %v700
    %v1119 = vsel %vm1118, %v699, %v700
    %v1120 = vsel %vm1118, %v732, %v733
    %1121 = vmax.index.xlane.f32.xlu0 %v1119
    %v1122 = vpop.xlane.xlu0 %1121
    %1123 = vset.pattern.permute.xlu0 %v1122
    %1124 = vperm.xlu0 %1123, %v1120
    %v1125 = vpop.permute.xlu0 %1124
    %vm1126 = vcmp.ge.f32.partialorder %v701, %v702
    %v1127 = vsel %vm1126, %v701, %v702
    %v1128 = vsel %vm1126, %v732, %v733
    %1129 = vmax.index.xlane.f32.xlu0 %v1127
    %v1130 = vpop.xlane.xlu0 %1129
    %1131 = vset.pattern.permute.xlu0 %v1130
    %1132 = vperm.xlu0 %1131, %v1128
    %v1133 = vpop.permute.xlu0 %1132
    %vm1134 = vcmp.ge.f32.partialorder %v703, %v704
    %v1135 = vsel %vm1134, %v703, %v704
    %v1136 = vsel %vm1134, %v732, %v733
    %1137 = vmax.index.xlane.f32.xlu0 %v1135
    %v1138 = vpop.xlane.xlu0 %1137
    %1139 = vset.pattern.permute.xlu0 %v1138
    %1140 = vperm.xlu0 %1139, %v1136
    %v1141 = vpop.permute.xlu0 %1140
    %vm1142 = vcmp.ge.f32.partialorder %v705, %v706
    %v1143 = vsel %vm1142, %v705, %v706
    %v1144 = vsel %vm1142, %v732, %v733
    %1145 = vmax.index.xlane.f32.xlu0 %v1143
    %v1146 = vpop.xlane.xlu0 %1145
    %1147 = vset.pattern.permute.xlu0 %v1146
    %1148 = vperm.xlu0 %1147, %v1144
    %v1149 = vpop.permute.xlu0 %1148
    %vm1150 = vcmp.ge.f32.partialorder %v707, %v708
    %v1151 = vsel %vm1150, %v707, %v708
    %v1152 = vsel %vm1150, %v732, %v733
    %1153 = vmax.index.xlane.f32.xlu0 %v1151
    %v1154 = vpop.xlane.xlu0 %1153
    %1155 = vset.pattern.permute.xlu0 %v1154
    %1156 = vperm.xlu0 %1155, %v1152
    %v1157 = vpop.permute.xlu0 %1156
    %vm1158 = vcmp.ge.f32.partialorder %v709, %v710
    %v1159 = vsel %vm1158, %v709, %v710
    %v1160 = vsel %vm1158, %v732, %v733
    %1161 = vmax.index.xlane.f32.xlu0 %v1159
    %v1162 = vpop.xlane.xlu0 %1161
    %1163 = vset.pattern.permute.xlu0 %v1162
    %1164 = vperm.xlu0 %1163, %v1160
    %v1165 = vpop.permute.xlu0 %1164
    %vm1166 = vcmp.ge.f32.partialorder %v711, %v712
    %v1167 = vsel %vm1166, %v711, %v712
    %v1168 = vsel %vm1166, %v732, %v733
    %1169 = vmax.index.xlane.f32.xlu0 %v1167
    %v1170 = vpop.xlane.xlu0 %1169
    %1171 = vset.pattern.permute.xlu0 %v1170
    %1172 = vperm.xlu0 %1171, %v1168
    %v1173 = vpop.permute.xlu0 %1172
    %vm1174 = vcmp.ge.f32.partialorder %v713, %v714
    %v1175 = vsel %vm1174, %v713, %v714
    %v1176 = vsel %vm1174, %v732, %v733
    %1177 = vmax.index.xlane.f32.xlu0 %v1175
    %v1178 = vpop.xlane.xlu0 %1177
    %1179 = vset.pattern.permute.xlu0 %v1178
    %1180 = vperm.xlu0 %1179, %v1176
    %v1181 = vpop.permute.xlu0 %1180
    %vm1182 = vcmp.ge.f32.partialorder %v715, %v716
    %v1183 = vsel %vm1182, %v715, %v716
    %v1184 = vsel %vm1182, %v732, %v733
    %1185 = vmax.index.xlane.f32.xlu0 %v1183
    %v1186 = vpop.xlane.xlu0 %1185
    %1187 = vset.pattern.permute.xlu0 %v1186
    %1188 = vperm.xlu0 %1187, %v1184
    %v1189 = vpop.permute.xlu0 %1188
    %vm1190 = vcmp.ge.f32.partialorder %v717, %v718
    %v1191 = vsel %vm1190, %v717, %v718
    %v1192 = vsel %vm1190, %v732, %v733
    %1193 = vmax.index.xlane.f32.xlu0 %v1191
    %v1194 = vpop.xlane.xlu0 %1193
    %1195 = vset.pattern.permute.xlu0 %v1194
    %1196 = vperm.xlu0 %1195, %v1192
    %v1197 = vpop.permute.xlu0 %1196
    %vm1198 = vcmp.ge.f32.partialorder %v719, %v720
    %v1199 = vsel %vm1198, %v719, %v720
    %v1200 = vsel %vm1198, %v732, %v733
    %1201 = vmax.index.xlane.f32.xlu0 %v1199
    %v1202 = vpop.xlane.xlu0 %1201
    %1203 = vset.pattern.permute.xlu0 %v1202
    %1204 = vperm.xlu0 %1203, %v1200
    %v1205 = vpop.permute.xlu0 %1204
    %vm1206 = vcmp.ge.f32.partialorder %v721, %v722
    %v1207 = vsel %vm1206, %v721, %v722
    %v1208 = vsel %vm1206, %v732, %v733
    %1209 = vmax.index.xlane.f32.xlu0 %v1207
    %v1210 = vpop.xlane.xlu0 %1209
    %1211 = vset.pattern.permute.xlu0 %v1210
    %1212 = vperm.xlu0 %1211, %v1208
    %v1213 = vpop.permute.xlu0 %1212
    %vm1214 = vcmp.ge.f32.partialorder %v723, %v724
    %v1215 = vsel %vm1214, %v723, %v724
    %v1216 = vsel %vm1214, %v732, %v733
    %1217 = vmax.index.xlane.f32.xlu0 %v1215
    %v1218 = vpop.xlane.xlu0 %1217
    %1219 = vset.pattern.permute.xlu0 %v1218
    %1220 = vperm.xlu0 %1219, %v1216
    %v1221 = vpop.permute.xlu0 %1220
    %vm1222 = vcmp.ge.f32.partialorder %v725, %v726
    %v1223 = vsel %vm1222, %v725, %v726
    %v1224 = vsel %vm1222, %v732, %v733
    %1225 = vmax.index.xlane.f32.xlu0 %v1223
    %v1226 = vpop.xlane.xlu0 %1225
    %1227 = vset.pattern.permute.xlu0 %v1226
    %1228 = vperm.xlu0 %1227, %v1224
    %v1229 = vpop.permute.xlu0 %1228
    %vm1230 = vcmp.ge.f32.partialorder %v727, %v728
    %v1231 = vsel %vm1230, %v727, %v728
    %v1232 = vsel %vm1230, %v732, %v733
    %1233 = vmax.index.xlane.f32.xlu0 %v1231
    %v1234 = vpop.xlane.xlu0 %1233
    %1235 = vset.pattern.permute.xlu0 %v1234
    %1236 = vperm.xlu0 %1235, %v1232
    %v1237 = vpop.permute.xlu0 %1236
    %vm1238 = vcmp.ge.f32.partialorder %v729, %v730
    %v1239 = vsel %vm1238, %v729, %v730
    %v1240 = vsel %vm1238, %v732, %v733
    %1241 = vmax.index.xlane.f32.xlu0 %v1239
    %v1242 = vpop.xlane.xlu0 %1241
    %1243 = vset.pattern.permute.xlu0 %v1242
    %1244 = vperm.xlu0 %1243, %v1240
    %v1245 = vpop.permute.xlu0 %1244
    %v1246 = vlaneseq
    %v1247 = vshrl.u32 %v1246, 7
    %v1248 = vsub.s32 0, %v1247
    %v1249 = vrot.slane %v741, %v1248
    %v1250 = vlaneseq
    %v1251 = vshrl.u32 %v1250, 7
    %v1252 = vsub.s32 1, %v1251
    %v1253 = vrot.slane %v741, %v1252
    %v1254 = vlaneseq
    %v1255 = vshrl.u32 %v1254, 7
    %v1256 = vsub.s32 2, %v1255
    %v1257 = vrot.slane %v741, %v1256
    %v1258 = vlaneseq
    %v1259 = vshrl.u32 %v1258, 7
    %v1260 = vsub.s32 3, %v1259
    %v1261 = vrot.slane %v741, %v1260
    %v1262 = vlaneseq
    %v1263 = vshrl.u32 %v1262, 7
    %v1264 = vsub.s32 4, %v1263
    %v1265 = vrot.slane %v741, %v1264
    %v1266 = vlaneseq
    %v1267 = vshrl.u32 %v1266, 7
    %v1268 = vsub.s32 5, %v1267
    %v1269 = vrot.slane %v741, %v1268
    %v1270 = vlaneseq
    %v1271 = vshrl.u32 %v1270, 7
    %v1272 = vsub.s32 6, %v1271
    %v1273 = vrot.slane %v741, %v1272
    %v1274 = vlaneseq
    %v1275 = vshrl.u32 %v1274, 7
    %v1276 = vsub.s32 7, %v1275
    %v1277 = vrot.slane %v741, %v1276
    %v1278 = vlaneseq
    %v1279 = vshrl.u32 %v1278, 7
    %v1280 = vsub.s32 0, %v1279
    %v1281 = vrot.slane %v749, %v1280
    %v1282 = vlaneseq
    %v1283 = vshrl.u32 %v1282, 7
    %v1284 = vsub.s32 1, %v1283
    %v1285 = vrot.slane %v749, %v1284
    %v1286 = vlaneseq
    %v1287 = vshrl.u32 %v1286, 7
    %v1288 = vsub.s32 2, %v1287
    %v1289 = vrot.slane %v749, %v1288
    %v1290 = vlaneseq
    %v1291 = vshrl.u32 %v1290, 7
    %v1292 = vsub.s32 3, %v1291
    %v1293 = vrot.slane %v749, %v1292
    %v1294 = vlaneseq
    %v1295 = vshrl.u32 %v1294, 7
    %v1296 = vsub.s32 4, %v1295
    %v1297 = vrot.slane %v749, %v1296
    %v1298 = vlaneseq
    %v1299 = vshrl.u32 %v1298, 7
    %v1300 = vsub.s32 5, %v1299
    %v1301 = vrot.slane %v749, %v1300
    %v1302 = vlaneseq
    %v1303 = vshrl.u32 %v1302, 7
    %v1304 = vsub.s32 6, %v1303
    %v1305 = vrot.slane %v749, %v1304
    %v1306 = vlaneseq
    %v1307 = vshrl.u32 %v1306, 7
    %v1308 = vsub.s32 7, %v1307
    %v1309 = vrot.slane %v749, %v1308
    %v1310 = vlaneseq
    %v1311 = vshrl.u32 %v1310, 7
    %v1312 = vsub.s32 0, %v1311
    %v1313 = vrot.slane %v757, %v1312
    %v1314 = vlaneseq
    %v1315 = vshrl.u32 %v1314, 7
    %v1316 = vsub.s32 1, %v1315
    %v1317 = vrot.slane %v757, %v1316
    %v1318 = vlaneseq
    %v1319 = vshrl.u32 %v1318, 7
    %v1320 = vsub.s32 2, %v1319
    %v1321 = vrot.slane %v757, %v1320
    %v1322 = vlaneseq
    %v1323 = vshrl.u32 %v1322, 7
    %v1324 = vsub.s32 3, %v1323
    %v1325 = vrot.slane %v757, %v1324
    %v1326 = vlaneseq
    %v1327 = vshrl.u32 %v1326, 7
    %v1328 = vsub.s32 4, %v1327
    %v1329 = vrot.slane %v757, %v1328
    %v1330 = vlaneseq
    %v1331 = vshrl.u32 %v1330, 7
    %v1332 = vsub.s32 5, %v1331
    %v1333 = vrot.slane %v757, %v1332
    %v1334 = vlaneseq
    %v1335 = vshrl.u32 %v1334, 7
    %v1336 = vsub.s32 6, %v1335
    %v1337 = vrot.slane %v757, %v1336
    %v1338 = vlaneseq
    %v1339 = vshrl.u32 %v1338, 7
    %v1340 = vsub.s32 7, %v1339
    %v1341 = vrot.slane %v757, %v1340
    %v1342 = vlaneseq
    %v1343 = vshrl.u32 %v1342, 7
    %v1344 = vsub.s32 0, %v1343
    %v1345 = vrot.slane %v765, %v1344
    %v1346 = vlaneseq
    %v1347 = vshrl.u32 %v1346, 7
    %v1348 = vsub.s32 1, %v1347
    %v1349 = vrot.slane %v765, %v1348
    %v1350 = vlaneseq
    %v1351 = vshrl.u32 %v1350, 7
    %v1352 = vsub.s32 2, %v1351
    %v1353 = vrot.slane %v765, %v1352
    %v1354 = vlaneseq
    %v1355 = vshrl.u32 %v1354, 7
    %v1356 = vsub.s32 3, %v1355
    %v1357 = vrot.slane %v765, %v1356
    %v1358 = vlaneseq
    %v1359 = vshrl.u32 %v1358, 7
    %v1360 = vsub.s32 4, %v1359
    %v1361 = vrot.slane %v765, %v1360
    %v1362 = vlaneseq
    %v1363 = vshrl.u32 %v1362, 7
    %v1364 = vsub.s32 5, %v1363
    %v1365 = vrot.slane %v765, %v1364
    %v1366 = vlaneseq
    %v1367 = vshrl.u32 %v1366, 7
    %v1368 = vsub.s32 6, %v1367
    %v1369 = vrot.slane %v765, %v1368
    %v1370 = vlaneseq
    %v1371 = vshrl.u32 %v1370, 7
    %v1372 = vsub.s32 7, %v1371
    %v1373 = vrot.slane %v765, %v1372
    %v1374 = vlaneseq
    %v1375 = vshrl.u32 %v1374, 7
    %v1376 = vsub.s32 0, %v1375
    %v1377 = vrot.slane %v773, %v1376
    %v1378 = vlaneseq
    %v1379 = vshrl.u32 %v1378, 7
    %v1380 = vsub.s32 1, %v1379
    %v1381 = vrot.slane %v773, %v1380
    %v1382 = vlaneseq
    %v1383 = vshrl.u32 %v1382, 7
    %v1384 = vsub.s32 2, %v1383
    %v1385 = vrot.slane %v773, %v1384
    %v1386 = vlaneseq
    %v1387 = vshrl.u32 %v1386, 7
    %v1388 = vsub.s32 3, %v1387
    %v1389 = vrot.slane %v773, %v1388
    %v1390 = vlaneseq
    %v1391 = vshrl.u32 %v1390, 7
    %v1392 = vsub.s32 4, %v1391
    %v1393 = vrot.slane %v773, %v1392
    %v1394 = vlaneseq
    %v1395 = vshrl.u32 %v1394, 7
    %v1396 = vsub.s32 5, %v1395
    %v1397 = vrot.slane %v773, %v1396
    %v1398 = vlaneseq
    %v1399 = vshrl.u32 %v1398, 7
    %v1400 = vsub.s32 6, %v1399
    %v1401 = vrot.slane %v773, %v1400
    %v1402 = vlaneseq
    %v1403 = vshrl.u32 %v1402, 7
    %v1404 = vsub.s32 7, %v1403
    %v1405 = vrot.slane %v773, %v1404
    %v1406 = vlaneseq
    %v1407 = vshrl.u32 %v1406, 7
    %v1408 = vsub.s32 0, %v1407
    %v1409 = vrot.slane %v781, %v1408
    %v1410 = vlaneseq
    %v1411 = vshrl.u32 %v1410, 7
    %v1412 = vsub.s32 1, %v1411
    %v1413 = vrot.slane %v781, %v1412
    %v1414 = vlaneseq
    %v1415 = vshrl.u32 %v1414, 7
    %v1416 = vsub.s32 2, %v1415
    %v1417 = vrot.slane %v781, %v1416
    %v1418 = vlaneseq
    %v1419 = vshrl.u32 %v1418, 7
    %v1420 = vsub.s32 3, %v1419
    %v1421 = vrot.slane %v781, %v1420
    %v1422 = vlaneseq
    %v1423 = vshrl.u32 %v1422, 7
    %v1424 = vsub.s32 4, %v1423
    %v1425 = vrot.slane %v781, %v1424
    %v1426 = vlaneseq
    %v1427 = vshrl.u32 %v1426, 7
    %v1428 = vsub.s32 5, %v1427
    %v1429 = vrot.slane %v781, %v1428
    %v1430 = vlaneseq
    %v1431 = vshrl.u32 %v1430, 7
    %v1432 = vsub.s32 6, %v1431
    %v1433 = vrot.slane %v781, %v1432
    %v1434 = vlaneseq
    %v1435 = vshrl.u32 %v1434, 7
    %v1436 = vsub.s32 7, %v1435
    %v1437 = vrot.slane %v781, %v1436
    %v1438 = vlaneseq
    %v1439 = vshrl.u32 %v1438, 7
    %v1440 = vsub.s32 0, %v1439
    %v1441 = vrot.slane %v789, %v1440
    %v1442 = vlaneseq
    %v1443 = vshrl.u32 %v1442, 7
    %v1444 = vsub.s32 1, %v1443
    %v1445 = vrot.slane %v789, %v1444
    %v1446 = vlaneseq
    %v1447 = vshrl.u32 %v1446, 7
    %v1448 = vsub.s32 2, %v1447
    %v1449 = vrot.slane %v789, %v1448
    %v1450 = vlaneseq
    %v1451 = vshrl.u32 %v1450, 7
    %v1452 = vsub.s32 3, %v1451
    %v1453 = vrot.slane %v789, %v1452
    %v1454 = vlaneseq
    %v1455 = vshrl.u32 %v1454, 7
    %v1456 = vsub.s32 4, %v1455
    %v1457 = vrot.slane %v789, %v1456
    %v1458 = vlaneseq
    %v1459 = vshrl.u32 %v1458, 7
    %v1460 = vsub.s32 5, %v1459
    %v1461 = vrot.slane %v789, %v1460
    %v1462 = vlaneseq
    %v1463 = vshrl.u32 %v1462, 7
    %v1464 = vsub.s32 6, %v1463
    %v1465 = vrot.slane %v789, %v1464
    %v1466 = vlaneseq
    %v1467 = vshrl.u32 %v1466, 7
    %v1468 = vsub.s32 7, %v1467
    %v1469 = vrot.slane %v789, %v1468
    %v1470 = vlaneseq
    %v1471 = vshrl.u32 %v1470, 7
    %v1472 = vsub.s32 0, %v1471
    %v1473 = vrot.slane %v797, %v1472
    %v1474 = vlaneseq
    %v1475 = vshrl.u32 %v1474, 7
    %v1476 = vsub.s32 1, %v1475
    %v1477 = vrot.slane %v797, %v1476
    %v1478 = vlaneseq
    %v1479 = vshrl.u32 %v1478, 7
    %v1480 = vsub.s32 2, %v1479
    %v1481 = vrot.slane %v797, %v1480
    %v1482 = vlaneseq
    %v1483 = vshrl.u32 %v1482, 7
    %v1484 = vsub.s32 3, %v1483
    %v1485 = vrot.slane %v797, %v1484
    %v1486 = vlaneseq
    %v1487 = vshrl.u32 %v1486, 7
    %v1488 = vsub.s32 4, %v1487
    %v1489 = vrot.slane %v797, %v1488
    %v1490 = vlaneseq
    %v1491 = vshrl.u32 %v1490, 7
    %v1492 = vsub.s32 5, %v1491
    %v1493 = vrot.slane %v797, %v1492
    %v1494 = vlaneseq
    %v1495 = vshrl.u32 %v1494, 7
    %v1496 = vsub.s32 6, %v1495
    %v1497 = vrot.slane %v797, %v1496
    %v1498 = vlaneseq
    %v1499 = vshrl.u32 %v1498, 7
    %v1500 = vsub.s32 7, %v1499
    %v1501 = vrot.slane %v797, %v1500
    %v1502 = vlaneseq
    %v1503 = vshrl.u32 %v1502, 7
    %v1504 = vsub.s32 0, %v1503
    %v1505 = vrot.slane %v805, %v1504
    %v1506 = vlaneseq
    %v1507 = vshrl.u32 %v1506, 7
    %v1508 = vsub.s32 1, %v1507
    %v1509 = vrot.slane %v805, %v1508
    %v1510 = vlaneseq
    %v1511 = vshrl.u32 %v1510, 7
    %v1512 = vsub.s32 2, %v1511
    %v1513 = vrot.slane %v805, %v1512
    %v1514 = vlaneseq
    %v1515 = vshrl.u32 %v1514, 7
    %v1516 = vsub.s32 3, %v1515
    %v1517 = vrot.slane %v805, %v1516
    %v1518 = vlaneseq
    %v1519 = vshrl.u32 %v1518, 7
    %v1520 = vsub.s32 4, %v1519
    %v1521 = vrot.slane %v805, %v1520
    %v1522 = vlaneseq
    %v1523 = vshrl.u32 %v1522, 7
    %v1524 = vsub.s32 5, %v1523
    %v1525 = vrot.slane %v805, %v1524
    %v1526 = vlaneseq
    %v1527 = vshrl.u32 %v1526, 7
    %v1528 = vsub.s32 6, %v1527
    %v1529 = vrot.slane %v805, %v1528
    %v1530 = vlaneseq
    %v1531 = vshrl.u32 %v1530, 7
    %v1532 = vsub.s32 7, %v1531
    %v1533 = vrot.slane %v805, %v1532
    %v1534 = vlaneseq
    %v1535 = vshrl.u32 %v1534, 7
    %v1536 = vsub.s32 0, %v1535
    %v1537 = vrot.slane %v813, %v1536
    %v1538 = vlaneseq
    %v1539 = vshrl.u32 %v1538, 7
    %v1540 = vsub.s32 1, %v1539
    %v1541 = vrot.slane %v813, %v1540
    %v1542 = vlaneseq
    %v1543 = vshrl.u32 %v1542, 7
    %v1544 = vsub.s32 2, %v1543
    %v1545 = vrot.slane %v813, %v1544
    %v1546 = vlaneseq
    %v1547 = vshrl.u32 %v1546, 7
    %v1548 = vsub.s32 3, %v1547
    %v1549 = vrot.slane %v813, %v1548
    %v1550 = vlaneseq
    %v1551 = vshrl.u32 %v1550, 7
    %v1552 = vsub.s32 4, %v1551
    %v1553 = vrot.slane %v813, %v1552
    %v1554 = vlaneseq
    %v1555 = vshrl.u32 %v1554, 7
    %v1556 = vsub.s32 5, %v1555
    %v1557 = vrot.slane %v813, %v1556
    %v1558 = vlaneseq
    %v1559 = vshrl.u32 %v1558, 7
    %v1560 = vsub.s32 6, %v1559
    %v1561 = vrot.slane %v813, %v1560
    %v1562 = vlaneseq
    %v1563 = vshrl.u32 %v1562, 7
    %v1564 = vsub.s32 7, %v1563
    %v1565 = vrot.slane %v813, %v1564
    %v1566 = vlaneseq
    %v1567 = vshrl.u32 %v1566, 7
    %v1568 = vsub.s32 0, %v1567
    %v1569 = vrot.slane %v821, %v1568
    %v1570 = vlaneseq
    %v1571 = vshrl.u32 %v1570, 7
    %v1572 = vsub.s32 1, %v1571
    %v1573 = vrot.slane %v821, %v1572
    %v1574 = vlaneseq
    %v1575 = vshrl.u32 %v1574, 7
    %v1576 = vsub.s32 2, %v1575
    %v1577 = vrot.slane %v821, %v1576
    %v1578 = vlaneseq
    %v1579 = vshrl.u32 %v1578, 7
    %v1580 = vsub.s32 3, %v1579
    %v1581 = vrot.slane %v821, %v1580
    %v1582 = vlaneseq
    %v1583 = vshrl.u32 %v1582, 7
    %v1584 = vsub.s32 4, %v1583
    %v1585 = vrot.slane %v821, %v1584
    %v1586 = vlaneseq
    %v1587 = vshrl.u32 %v1586, 7
    %v1588 = vsub.s32 5, %v1587
    %v1589 = vrot.slane %v821, %v1588
    %v1590 = vlaneseq
    %v1591 = vshrl.u32 %v1590, 7
    %v1592 = vsub.s32 6, %v1591
    %v1593 = vrot.slane %v821, %v1592
    %v1594 = vlaneseq
    %v1595 = vshrl.u32 %v1594, 7
    %v1596 = vsub.s32 7, %v1595
    %v1597 = vrot.slane %v821, %v1596
    %v1598 = vlaneseq
    %v1599 = vshrl.u32 %v1598, 7
    %v1600 = vsub.s32 0, %v1599
    %v1601 = vrot.slane %v829, %v1600
    %v1602 = vlaneseq
    %v1603 = vshrl.u32 %v1602, 7
    %v1604 = vsub.s32 1, %v1603
    %v1605 = vrot.slane %v829, %v1604
    %v1606 = vlaneseq
    %v1607 = vshrl.u32 %v1606, 7
    %v1608 = vsub.s32 2, %v1607
    %v1609 = vrot.slane %v829, %v1608
    %v1610 = vlaneseq
    %v1611 = vshrl.u32 %v1610, 7
    %v1612 = vsub.s32 3, %v1611
    %v1613 = vrot.slane %v829, %v1612
    %v1614 = vlaneseq
    %v1615 = vshrl.u32 %v1614, 7
    %v1616 = vsub.s32 4, %v1615
    %v1617 = vrot.slane %v829, %v1616
    %v1618 = vlaneseq
    %v1619 = vshrl.u32 %v1618, 7
    %v1620 = vsub.s32 5, %v1619
    %v1621 = vrot.slane %v829, %v1620
    %v1622 = vlaneseq
    %v1623 = vshrl.u32 %v1622, 7
    %v1624 = vsub.s32 6, %v1623
    %v1625 = vrot.slane %v829, %v1624
    %v1626 = vlaneseq
    %v1627 = vshrl.u32 %v1626, 7
    %v1628 = vsub.s32 7, %v1627
    %v1629 = vrot.slane %v829, %v1628
    %v1630 = vlaneseq
    %v1631 = vshrl.u32 %v1630, 7
    %v1632 = vsub.s32 0, %v1631
    %v1633 = vrot.slane %v837, %v1632
    %v1634 = vlaneseq
    %v1635 = vshrl.u32 %v1634, 7
    %v1636 = vsub.s32 1, %v1635
    %v1637 = vrot.slane %v837, %v1636
    %v1638 = vlaneseq
    %v1639 = vshrl.u32 %v1638, 7
    %v1640 = vsub.s32 2, %v1639
    %v1641 = vrot.slane %v837, %v1640
    %v1642 = vlaneseq
    %v1643 = vshrl.u32 %v1642, 7
    %v1644 = vsub.s32 3, %v1643
    %v1645 = vrot.slane %v837, %v1644
    %v1646 = vlaneseq
    %v1647 = vshrl.u32 %v1646, 7
    %v1648 = vsub.s32 4, %v1647
    %v1649 = vrot.slane %v837, %v1648
    %v1650 = vlaneseq
    %v1651 = vshrl.u32 %v1650, 7
    %v1652 = vsub.s32 5, %v1651
    %v1653 = vrot.slane %v837, %v1652
    %v1654 = vlaneseq
    %v1655 = vshrl.u32 %v1654, 7
    %v1656 = vsub.s32 6, %v1655
    %v1657 = vrot.slane %v837, %v1656
    %v1658 = vlaneseq
    %v1659 = vshrl.u32 %v1658, 7
    %v1660 = vsub.s32 7, %v1659
    %v1661 = vrot.slane %v837, %v1660
    %v1662 = vlaneseq
    %v1663 = vshrl.u32 %v1662, 7
    %v1664 = vsub.s32 0, %v1663
    %v1665 = vrot.slane %v845, %v1664
    %v1666 = vlaneseq
    %v1667 = vshrl.u32 %v1666, 7
    %v1668 = vsub.s32 1, %v1667
    %v1669 = vrot.slane %v845, %v1668
    %v1670 = vlaneseq
    %v1671 = vshrl.u32 %v1670, 7
    %v1672 = vsub.s32 2, %v1671
    %v1673 = vrot.slane %v845, %v1672
    %v1674 = vlaneseq
    %v1675 = vshrl.u32 %v1674, 7
    %v1676 = vsub.s32 3, %v1675
    %v1677 = vrot.slane %v845, %v1676
    %v1678 = vlaneseq
    %v1679 = vshrl.u32 %v1678, 7
    %v1680 = vsub.s32 4, %v1679
    %v1681 = vrot.slane %v845, %v1680
    %v1682 = vlaneseq
    %v1683 = vshrl.u32 %v1682, 7
    %v1684 = vsub.s32 5, %v1683
    %v1685 = vrot.slane %v845, %v1684
    %v1686 = vlaneseq
    %v1687 = vshrl.u32 %v1686, 7
    %v1688 = vsub.s32 6, %v1687
    %v1689 = vrot.slane %v845, %v1688
    %v1690 = vlaneseq
    %v1691 = vshrl.u32 %v1690, 7
    %v1692 = vsub.s32 7, %v1691
    %v1693 = vrot.slane %v845, %v1692
    %v1694 = vlaneseq
    %v1695 = vshrl.u32 %v1694, 7
    %v1696 = vsub.s32 0, %v1695
    %v1697 = vrot.slane %v853, %v1696
    %v1698 = vlaneseq
    %v1699 = vshrl.u32 %v1698, 7
    %v1700 = vsub.s32 1, %v1699
    %v1701 = vrot.slane %v853, %v1700
    %v1702 = vlaneseq
    %v1703 = vshrl.u32 %v1702, 7
    %v1704 = vsub.s32 2, %v1703
    %v1705 = vrot.slane %v853, %v1704
    %v1706 = vlaneseq
    %v1707 = vshrl.u32 %v1706, 7
    %v1708 = vsub.s32 3, %v1707
    %v1709 = vrot.slane %v853, %v1708
    %v1710 = vlaneseq
    %v1711 = vshrl.u32 %v1710, 7
    %v1712 = vsub.s32 4, %v1711
    %v1713 = vrot.slane %v853, %v1712
    %v1714 = vlaneseq
    %v1715 = vshrl.u32 %v1714, 7
    %v1716 = vsub.s32 5, %v1715
    %v1717 = vrot.slane %v853, %v1716
    %v1718 = vlaneseq
    %v1719 = vshrl.u32 %v1718, 7
    %v1720 = vsub.s32 6, %v1719
    %v1721 = vrot.slane %v853, %v1720
    %v1722 = vlaneseq
    %v1723 = vshrl.u32 %v1722, 7
    %v1724 = vsub.s32 7, %v1723
    %v1725 = vrot.slane %v853, %v1724
    %v1726 = vlaneseq
    %v1727 = vshrl.u32 %v1726, 7
    %v1728 = vsub.s32 0, %v1727
    %v1729 = vrot.slane %v861, %v1728
    %v1730 = vlaneseq
    %v1731 = vshrl.u32 %v1730, 7
    %v1732 = vsub.s32 1, %v1731
    %v1733 = vrot.slane %v861, %v1732
    %v1734 = vlaneseq
    %v1735 = vshrl.u32 %v1734, 7
    %v1736 = vsub.s32 2, %v1735
    %v1737 = vrot.slane %v861, %v1736
    %v1738 = vlaneseq
    %v1739 = vshrl.u32 %v1738, 7
    %v1740 = vsub.s32 3, %v1739
    %v1741 = vrot.slane %v861, %v1740
    %v1742 = vlaneseq
    %v1743 = vshrl.u32 %v1742, 7
    %v1744 = vsub.s32 4, %v1743
    %v1745 = vrot.slane %v861, %v1744
    %v1746 = vlaneseq
    %v1747 = vshrl.u32 %v1746, 7
    %v1748 = vsub.s32 5, %v1747
    %v1749 = vrot.slane %v861, %v1748
    %v1750 = vlaneseq
    %v1751 = vshrl.u32 %v1750, 7
    %v1752 = vsub.s32 6, %v1751
    %v1753 = vrot.slane %v861, %v1752
    %v1754 = vlaneseq
    %v1755 = vshrl.u32 %v1754, 7
    %v1756 = vsub.s32 7, %v1755
    %v1757 = vrot.slane %v861, %v1756
    %v1758 = vlaneseq
    %v1759 = vshrl.u32 %v1758, 7
    %v1760 = vsub.s32 0, %v1759
    %v1761 = vrot.slane %v869, %v1760
    %v1762 = vlaneseq
    %v1763 = vshrl.u32 %v1762, 7
    %v1764 = vsub.s32 1, %v1763
    %v1765 = vrot.slane %v869, %v1764
    %v1766 = vlaneseq
    %v1767 = vshrl.u32 %v1766, 7
    %v1768 = vsub.s32 2, %v1767
    %v1769 = vrot.slane %v869, %v1768
    %v1770 = vlaneseq
    %v1771 = vshrl.u32 %v1770, 7
    %v1772 = vsub.s32 3, %v1771
    %v1773 = vrot.slane %v869, %v1772
    %v1774 = vlaneseq
    %v1775 = vshrl.u32 %v1774, 7
    %v1776 = vsub.s32 4, %v1775
    %v1777 = vrot.slane %v869, %v1776
    %v1778 = vlaneseq
    %v1779 = vshrl.u32 %v1778, 7
    %v1780 = vsub.s32 5, %v1779
    %v1781 = vrot.slane %v869, %v1780
    %v1782 = vlaneseq
    %v1783 = vshrl.u32 %v1782, 7
    %v1784 = vsub.s32 6, %v1783
    %v1785 = vrot.slane %v869, %v1784
    %v1786 = vlaneseq
    %v1787 = vshrl.u32 %v1786, 7
    %v1788 = vsub.s32 7, %v1787
    %v1789 = vrot.slane %v869, %v1788
    %v1790 = vlaneseq
    %v1791 = vshrl.u32 %v1790, 7
    %v1792 = vsub.s32 0, %v1791
    %v1793 = vrot.slane %v877, %v1792
    %v1794 = vlaneseq
    %v1795 = vshrl.u32 %v1794, 7
    %v1796 = vsub.s32 1, %v1795
    %v1797 = vrot.slane %v877, %v1796
    %v1798 = vlaneseq
    %v1799 = vshrl.u32 %v1798, 7
    %v1800 = vsub.s32 2, %v1799
    %v1801 = vrot.slane %v877, %v1800
    %v1802 = vlaneseq
    %v1803 = vshrl.u32 %v1802, 7
    %v1804 = vsub.s32 3, %v1803
    %v1805 = vrot.slane %v877, %v1804
    %v1806 = vlaneseq
    %v1807 = vshrl.u32 %v1806, 7
    %v1808 = vsub.s32 4, %v1807
    %v1809 = vrot.slane %v877, %v1808
    %v1810 = vlaneseq
    %v1811 = vshrl.u32 %v1810, 7
    %v1812 = vsub.s32 5, %v1811
    %v1813 = vrot.slane %v877, %v1812
    %v1814 = vlaneseq
    %v1815 = vshrl.u32 %v1814, 7
    %v1816 = vsub.s32 6, %v1815
    %v1817 = vrot.slane %v877, %v1816
    %v1818 = vlaneseq
    %v1819 = vshrl.u32 %v1818, 7
    %v1820 = vsub.s32 7, %v1819
    %v1821 = vrot.slane %v877, %v1820
    %v1822 = vlaneseq
    %v1823 = vshrl.u32 %v1822, 7
    %v1824 = vsub.s32 0, %v1823
    %v1825 = vrot.slane %v885, %v1824
    %v1826 = vlaneseq
    %v1827 = vshrl.u32 %v1826, 7
    %v1828 = vsub.s32 1, %v1827
    %v1829 = vrot.slane %v885, %v1828
    %v1830 = vlaneseq
    %v1831 = vshrl.u32 %v1830, 7
    %v1832 = vsub.s32 2, %v1831
    %v1833 = vrot.slane %v885, %v1832
    %v1834 = vlaneseq
    %v1835 = vshrl.u32 %v1834, 7
    %v1836 = vsub.s32 3, %v1835
    %v1837 = vrot.slane %v885, %v1836
    %v1838 = vlaneseq
    %v1839 = vshrl.u32 %v1838, 7
    %v1840 = vsub.s32 4, %v1839
    %v1841 = vrot.slane %v885, %v1840
    %v1842 = vlaneseq
    %v1843 = vshrl.u32 %v1842, 7
    %v1844 = vsub.s32 5, %v1843
    %v1845 = vrot.slane %v885, %v1844
    %v1846 = vlaneseq
    %v1847 = vshrl.u32 %v1846, 7
    %v1848 = vsub.s32 6, %v1847
    %v1849 = vrot.slane %v885, %v1848
    %v1850 = vlaneseq
    %v1851 = vshrl.u32 %v1850, 7
    %v1852 = vsub.s32 7, %v1851
    %v1853 = vrot.slane %v885, %v1852
    %v1854 = vlaneseq
    %v1855 = vshrl.u32 %v1854, 7
    %v1856 = vsub.s32 0, %v1855
    %v1857 = vrot.slane %v893, %v1856
    %v1858 = vlaneseq
    %v1859 = vshrl.u32 %v1858, 7
    %v1860 = vsub.s32 1, %v1859
    %v1861 = vrot.slane %v893, %v1860
    %v1862 = vlaneseq
    %v1863 = vshrl.u32 %v1862, 7
    %v1864 = vsub.s32 2, %v1863
    %v1865 = vrot.slane %v893, %v1864
    %v1866 = vlaneseq
    %v1867 = vshrl.u32 %v1866, 7
    %v1868 = vsub.s32 3, %v1867
    %v1869 = vrot.slane %v893, %v1868
    %v1870 = vlaneseq
    %v1871 = vshrl.u32 %v1870, 7
    %v1872 = vsub.s32 4, %v1871
    %v1873 = vrot.slane %v893, %v1872
    %v1874 = vlaneseq
    %v1875 = vshrl.u32 %v1874, 7
    %v1876 = vsub.s32 5, %v1875
    %v1877 = vrot.slane %v893, %v1876
    %v1878 = vlaneseq
    %v1879 = vshrl.u32 %v1878, 7
    %v1880 = vsub.s32 6, %v1879
    %v1881 = vrot.slane %v893, %v1880
    %v1882 = vlaneseq
    %v1883 = vshrl.u32 %v1882, 7
    %v1884 = vsub.s32 7, %v1883
    %v1885 = vrot.slane %v893, %v1884
    %v1886 = vlaneseq
    %v1887 = vshrl.u32 %v1886, 7
    %v1888 = vsub.s32 0, %v1887
    %v1889 = vrot.slane %v901, %v1888
    %v1890 = vlaneseq
    %v1891 = vshrl.u32 %v1890, 7
    %v1892 = vsub.s32 1, %v1891
    %v1893 = vrot.slane %v901, %v1892
    %v1894 = vlaneseq
    %v1895 = vshrl.u32 %v1894, 7
    %v1896 = vsub.s32 2, %v1895
    %v1897 = vrot.slane %v901, %v1896
    %v1898 = vlaneseq
    %v1899 = vshrl.u32 %v1898, 7
    %v1900 = vsub.s32 3, %v1899
    %v1901 = vrot.slane %v901, %v1900
    %v1902 = vlaneseq
    %v1903 = vshrl.u32 %v1902, 7
    %v1904 = vsub.s32 4, %v1903
    %v1905 = vrot.slane %v901, %v1904
    %v1906 = vlaneseq
    %v1907 = vshrl.u32 %v1906, 7
    %v1908 = vsub.s32 5, %v1907
    %v1909 = vrot.slane %v901, %v1908
    %v1910 = vlaneseq
    %v1911 = vshrl.u32 %v1910, 7
    %v1912 = vsub.s32 6, %v1911
    %v1913 = vrot.slane %v901, %v1912
    %v1914 = vlaneseq
    %v1915 = vshrl.u32 %v1914, 7
    %v1916 = vsub.s32 7, %v1915
    %v1917 = vrot.slane %v901, %v1916
    %v1918 = vlaneseq
    %v1919 = vshrl.u32 %v1918, 7
    %v1920 = vsub.s32 0, %v1919
    %v1921 = vrot.slane %v909, %v1920
    %v1922 = vlaneseq
    %v1923 = vshrl.u32 %v1922, 7
    %v1924 = vsub.s32 1, %v1923
    %v1925 = vrot.slane %v909, %v1924
    %v1926 = vlaneseq
    %v1927 = vshrl.u32 %v1926, 7
    %v1928 = vsub.s32 2, %v1927
    %v1929 = vrot.slane %v909, %v1928
    %v1930 = vlaneseq
    %v1931 = vshrl.u32 %v1930, 7
    %v1932 = vsub.s32 3, %v1931
    %v1933 = vrot.slane %v909, %v1932
    %v1934 = vlaneseq
    %v1935 = vshrl.u32 %v1934, 7
    %v1936 = vsub.s32 4, %v1935
    %v1937 = vrot.slane %v909, %v1936
    %v1938 = vlaneseq
    %v1939 = vshrl.u32 %v1938, 7
    %v1940 = vsub.s32 5, %v1939
    %v1941 = vrot.slane %v909, %v1940
    %v1942 = vlaneseq
    %v1943 = vshrl.u32 %v1942, 7
    %v1944 = vsub.s32 6, %v1943
    %v1945 = vrot.slane %v909, %v1944
    %v1946 = vlaneseq
    %v1947 = vshrl.u32 %v1946, 7
    %v1948 = vsub.s32 7, %v1947
    %v1949 = vrot.slane %v909, %v1948
    %v1950 = vlaneseq
    %v1951 = vshrl.u32 %v1950, 7
    %v1952 = vsub.s32 0, %v1951
    %v1953 = vrot.slane %v917, %v1952
    %v1954 = vlaneseq
    %v1955 = vshrl.u32 %v1954, 7
    %v1956 = vsub.s32 1, %v1955
    %v1957 = vrot.slane %v917, %v1956
    %v1958 = vlaneseq
    %v1959 = vshrl.u32 %v1958, 7
    %v1960 = vsub.s32 2, %v1959
    %v1961 = vrot.slane %v917, %v1960
    %v1962 = vlaneseq
    %v1963 = vshrl.u32 %v1962, 7
    %v1964 = vsub.s32 3, %v1963
    %v1965 = vrot.slane %v917, %v1964
    %v1966 = vlaneseq
    %v1967 = vshrl.u32 %v1966, 7
    %v1968 = vsub.s32 4, %v1967
    %v1969 = vrot.slane %v917, %v1968
    %v1970 = vlaneseq
    %v1971 = vshrl.u32 %v1970, 7
    %v1972 = vsub.s32 5, %v1971
    %v1973 = vrot.slane %v917, %v1972
    %v1974 = vlaneseq
    %v1975 = vshrl.u32 %v1974, 7
    %v1976 = vsub.s32 6, %v1975
    %v1977 = vrot.slane %v917, %v1976
    %v1978 = vlaneseq
    %v1979 = vshrl.u32 %v1978, 7
    %v1980 = vsub.s32 7, %v1979
    %v1981 = vrot.slane %v917, %v1980
    %v1982 = vlaneseq
    %v1983 = vshrl.u32 %v1982, 7
    %v1984 = vsub.s32 0, %v1983
    %v1985 = vrot.slane %v925, %v1984
    %v1986 = vlaneseq
    %v1987 = vshrl.u32 %v1986, 7
    %v1988 = vsub.s32 1, %v1987
    %v1989 = vrot.slane %v925, %v1988
    %v1990 = vlaneseq
    %v1991 = vshrl.u32 %v1990, 7
    %v1992 = vsub.s32 2, %v1991
    %v1993 = vrot.slane %v925, %v1992
    %v1994 = vlaneseq
    %v1995 = vshrl.u32 %v1994, 7
    %v1996 = vsub.s32 3, %v1995
    %v1997 = vrot.slane %v925, %v1996
    %v1998 = vlaneseq
    %v1999 = vshrl.u32 %v1998, 7
    %v2000 = vsub.s32 4, %v1999
    %v2001 = vrot.slane %v925, %v2000
    %v2002 = vlaneseq
    %v2003 = vshrl.u32 %v2002, 7
    %v2004 = vsub.s32 5, %v2003
    %v2005 = vrot.slane %v925, %v2004
    %v2006 = vlaneseq
    %v2007 = vshrl.u32 %v2006, 7
    %v2008 = vsub.s32 6, %v2007
    %v2009 = vrot.slane %v925, %v2008
    %v2010 = vlaneseq
    %v2011 = vshrl.u32 %v2010, 7
    %v2012 = vsub.s32 7, %v2011
    %v2013 = vrot.slane %v925, %v2012
    %v2014 = vlaneseq
    %v2015 = vshrl.u32 %v2014, 7
    %v2016 = vsub.s32 0, %v2015
    %v2017 = vrot.slane %v933, %v2016
    %v2018 = vlaneseq
    %v2019 = vshrl.u32 %v2018, 7
    %v2020 = vsub.s32 1, %v2019
    %v2021 = vrot.slane %v933, %v2020
    %v2022 = vlaneseq
    %v2023 = vshrl.u32 %v2022, 7
    %v2024 = vsub.s32 2, %v2023
    %v2025 = vrot.slane %v933, %v2024
    %v2026 = vlaneseq
    %v2027 = vshrl.u32 %v2026, 7
    %v2028 = vsub.s32 3, %v2027
    %v2029 = vrot.slane %v933, %v2028
    %v2030 = vlaneseq
    %v2031 = vshrl.u32 %v2030, 7
    %v2032 = vsub.s32 4, %v2031
    %v2033 = vrot.slane %v933, %v2032
    %v2034 = vlaneseq
    %v2035 = vshrl.u32 %v2034, 7
    %v2036 = vsub.s32 5, %v2035
    %v2037 = vrot.slane %v933, %v2036
    %v2038 = vlaneseq
    %v2039 = vshrl.u32 %v2038, 7
    %v2040 = vsub.s32 6, %v2039
    %v2041 = vrot.slane %v933, %v2040
    %v2042 = vlaneseq
    %v2043 = vshrl.u32 %v2042, 7
    %v2044 = vsub.s32 7, %v2043
    %v2045 = vrot.slane %v933, %v2044
    %v2046 = vlaneseq
    %v2047 = vshrl.u32 %v2046, 7
    %v2048 = vsub.s32 0, %v2047
    %v2049 = vrot.slane %v941, %v2048
    %v2050 = vlaneseq
    %v2051 = vshrl.u32 %v2050, 7
    %v2052 = vsub.s32 1, %v2051
    %v2053 = vrot.slane %v941, %v2052
    %v2054 = vlaneseq
    %v2055 = vshrl.u32 %v2054, 7
    %v2056 = vsub.s32 2, %v2055
    %v2057 = vrot.slane %v941, %v2056
    %v2058 = vlaneseq
    %v2059 = vshrl.u32 %v2058, 7
    %v2060 = vsub.s32 3, %v2059
    %v2061 = vrot.slane %v941, %v2060
    %v2062 = vlaneseq
    %v2063 = vshrl.u32 %v2062, 7
    %v2064 = vsub.s32 4, %v2063
    %v2065 = vrot.slane %v941, %v2064
    %v2066 = vlaneseq
    %v2067 = vshrl.u32 %v2066, 7
    %v2068 = vsub.s32 5, %v2067
    %v2069 = vrot.slane %v941, %v2068
    %v2070 = vlaneseq
    %v2071 = vshrl.u32 %v2070, 7
    %v2072 = vsub.s32 6, %v2071
    %v2073 = vrot.slane %v941, %v2072
    %v2074 = vlaneseq
    %v2075 = vshrl.u32 %v2074, 7
    %v2076 = vsub.s32 7, %v2075
    %v2077 = vrot.slane %v941, %v2076
    %v2078 = vlaneseq
    %v2079 = vshrl.u32 %v2078, 7
    %v2080 = vsub.s32 0, %v2079
    %v2081 = vrot.slane %v949, %v2080
    %v2082 = vlaneseq
    %v2083 = vshrl.u32 %v2082, 7
    %v2084 = vsub.s32 1, %v2083
    %v2085 = vrot.slane %v949, %v2084
    %v2086 = vlaneseq
    %v2087 = vshrl.u32 %v2086, 7
    %v2088 = vsub.s32 2, %v2087
    %v2089 = vrot.slane %v949, %v2088
    %v2090 = vlaneseq
    %v2091 = vshrl.u32 %v2090, 7
    %v2092 = vsub.s32 3, %v2091
    %v2093 = vrot.slane %v949, %v2092
    %v2094 = vlaneseq
    %v2095 = vshrl.u32 %v2094, 7
    %v2096 = vsub.s32 4, %v2095
    %v2097 = vrot.slane %v949, %v2096
    %v2098 = vlaneseq
    %v2099 = vshrl.u32 %v2098, 7
    %v2100 = vsub.s32 5, %v2099
    %v2101 = vrot.slane %v949, %v2100
    %v2102 = vlaneseq
    %v2103 = vshrl.u32 %v2102, 7
    %v2104 = vsub.s32 6, %v2103
    %v2105 = vrot.slane %v949, %v2104
    %v2106 = vlaneseq
    %v2107 = vshrl.u32 %v2106, 7
    %v2108 = vsub.s32 7, %v2107
    %v2109 = vrot.slane %v949, %v2108
    %v2110 = vlaneseq
    %v2111 = vshrl.u32 %v2110, 7
    %v2112 = vsub.s32 0, %v2111
    %v2113 = vrot.slane %v957, %v2112
    %v2114 = vlaneseq
    %v2115 = vshrl.u32 %v2114, 7
    %v2116 = vsub.s32 1, %v2115
    %v2117 = vrot.slane %v957, %v2116
    %v2118 = vlaneseq
    %v2119 = vshrl.u32 %v2118, 7
    %v2120 = vsub.s32 2, %v2119
    %v2121 = vrot.slane %v957, %v2120
    %v2122 = vlaneseq
    %v2123 = vshrl.u32 %v2122, 7
    %v2124 = vsub.s32 3, %v2123
    %v2125 = vrot.slane %v957, %v2124
    %v2126 = vlaneseq
    %v2127 = vshrl.u32 %v2126, 7
    %v2128 = vsub.s32 4, %v2127
    %v2129 = vrot.slane %v957, %v2128
    %v2130 = vlaneseq
    %v2131 = vshrl.u32 %v2130, 7
    %v2132 = vsub.s32 5, %v2131
    %v2133 = vrot.slane %v957, %v2132
    %v2134 = vlaneseq
    %v2135 = vshrl.u32 %v2134, 7
    %v2136 = vsub.s32 6, %v2135
    %v2137 = vrot.slane %v957, %v2136
    %v2138 = vlaneseq
    %v2139 = vshrl.u32 %v2138, 7
    %v2140 = vsub.s32 7, %v2139
    %v2141 = vrot.slane %v957, %v2140
    %v2142 = vlaneseq
    %v2143 = vshrl.u32 %v2142, 7
    %v2144 = vsub.s32 0, %v2143
    %v2145 = vrot.slane %v965, %v2144
    %v2146 = vlaneseq
    %v2147 = vshrl.u32 %v2146, 7
    %v2148 = vsub.s32 1, %v2147
    %v2149 = vrot.slane %v965, %v2148
    %v2150 = vlaneseq
    %v2151 = vshrl.u32 %v2150, 7
    %v2152 = vsub.s32 2, %v2151
    %v2153 = vrot.slane %v965, %v2152
    %v2154 = vlaneseq
    %v2155 = vshrl.u32 %v2154, 7
    %v2156 = vsub.s32 3, %v2155
    %v2157 = vrot.slane %v965, %v2156
    %v2158 = vlaneseq
    %v2159 = vshrl.u32 %v2158, 7
    %v2160 = vsub.s32 4, %v2159
    %v2161 = vrot.slane %v965, %v2160
    %v2162 = vlaneseq
    %v2163 = vshrl.u32 %v2162, 7
    %v2164 = vsub.s32 5, %v2163
    %v2165 = vrot.slane %v965, %v2164
    %v2166 = vlaneseq
    %v2167 = vshrl.u32 %v2166, 7
    %v2168 = vsub.s32 6, %v2167
    %v2169 = vrot.slane %v965, %v2168
    %v2170 = vlaneseq
    %v2171 = vshrl.u32 %v2170, 7
    %v2172 = vsub.s32 7, %v2171
    %v2173 = vrot.slane %v965, %v2172
    %v2174 = vlaneseq
    %v2175 = vshrl.u32 %v2174, 7
    %v2176 = vsub.s32 0, %v2175
    %v2177 = vrot.slane %v973, %v2176
    %v2178 = vlaneseq
    %v2179 = vshrl.u32 %v2178, 7
    %v2180 = vsub.s32 1, %v2179
    %v2181 = vrot.slane %v973, %v2180
    %v2182 = vlaneseq
    %v2183 = vshrl.u32 %v2182, 7
    %v2184 = vsub.s32 2, %v2183
    %v2185 = vrot.slane %v973, %v2184
    %v2186 = vlaneseq
    %v2187 = vshrl.u32 %v2186, 7
    %v2188 = vsub.s32 3, %v2187
    %v2189 = vrot.slane %v973, %v2188
    %v2190 = vlaneseq
    %v2191 = vshrl.u32 %v2190, 7
    %v2192 = vsub.s32 4, %v2191
    %v2193 = vrot.slane %v973, %v2192
    %v2194 = vlaneseq
    %v2195 = vshrl.u32 %v2194, 7
    %v2196 = vsub.s32 5, %v2195
    %v2197 = vrot.slane %v973, %v2196
    %v2198 = vlaneseq
    %v2199 = vshrl.u32 %v2198, 7
    %v2200 = vsub.s32 6, %v2199
    %v2201 = vrot.slane %v973, %v2200
    %v2202 = vlaneseq
    %v2203 = vshrl.u32 %v2202, 7
    %v2204 = vsub.s32 7, %v2203
    %v2205 = vrot.slane %v973, %v2204
    %v2206 = vlaneseq
    %v2207 = vshrl.u32 %v2206, 7
    %v2208 = vsub.s32 0, %v2207
    %v2209 = vrot.slane %v981, %v2208
    %v2210 = vlaneseq
    %v2211 = vshrl.u32 %v2210, 7
    %v2212 = vsub.s32 1, %v2211
    %v2213 = vrot.slane %v981, %v2212
    %v2214 = vlaneseq
    %v2215 = vshrl.u32 %v2214, 7
    %v2216 = vsub.s32 2, %v2215
    %v2217 = vrot.slane %v981, %v2216
    %v2218 = vlaneseq
    %v2219 = vshrl.u32 %v2218, 7
    %v2220 = vsub.s32 3, %v2219
    %v2221 = vrot.slane %v981, %v2220
    %v2222 = vlaneseq
    %v2223 = vshrl.u32 %v2222, 7
    %v2224 = vsub.s32 4, %v2223
    %v2225 = vrot.slane %v981, %v2224
    %v2226 = vlaneseq
    %v2227 = vshrl.u32 %v2226, 7
    %v2228 = vsub.s32 5, %v2227
    %v2229 = vrot.slane %v981, %v2228
    %v2230 = vlaneseq
    %v2231 = vshrl.u32 %v2230, 7
    %v2232 = vsub.s32 6, %v2231
    %v2233 = vrot.slane %v981, %v2232
    %v2234 = vlaneseq
    %v2235 = vshrl.u32 %v2234, 7
    %v2236 = vsub.s32 7, %v2235
    %v2237 = vrot.slane %v981, %v2236
    %v2238 = vlaneseq
    %v2239 = vshrl.u32 %v2238, 7
    %v2240 = vsub.s32 0, %v2239
    %v2241 = vrot.slane %v989, %v2240
    %v2242 = vlaneseq
    %v2243 = vshrl.u32 %v2242, 7
    %v2244 = vsub.s32 1, %v2243
    %v2245 = vrot.slane %v989, %v2244
    %v2246 = vlaneseq
    %v2247 = vshrl.u32 %v2246, 7
    %v2248 = vsub.s32 2, %v2247
    %v2249 = vrot.slane %v989, %v2248
    %v2250 = vlaneseq
    %v2251 = vshrl.u32 %v2250, 7
    %v2252 = vsub.s32 3, %v2251
    %v2253 = vrot.slane %v989, %v2252
    %v2254 = vlaneseq
    %v2255 = vshrl.u32 %v2254, 7
    %v2256 = vsub.s32 4, %v2255
    %v2257 = vrot.slane %v989, %v2256
    %v2258 = vlaneseq
    %v2259 = vshrl.u32 %v2258, 7
    %v2260 = vsub.s32 5, %v2259
    %v2261 = vrot.slane %v989, %v2260
    %v2262 = vlaneseq
    %v2263 = vshrl.u32 %v2262, 7
    %v2264 = vsub.s32 6, %v2263
    %v2265 = vrot.slane %v989, %v2264
    %v2266 = vlaneseq
    %v2267 = vshrl.u32 %v2266, 7
    %v2268 = vsub.s32 7, %v2267
    %v2269 = vrot.slane %v989, %v2268
    %v2270 = vlaneseq
    %v2271 = vshrl.u32 %v2270, 7
    %v2272 = vsub.s32 0, %v2271
    %v2273 = vrot.slane %v997, %v2272
    %v2274 = vlaneseq
    %v2275 = vshrl.u32 %v2274, 7
    %v2276 = vsub.s32 1, %v2275
    %v2277 = vrot.slane %v997, %v2276
    %v2278 = vlaneseq
    %v2279 = vshrl.u32 %v2278, 7
    %v2280 = vsub.s32 2, %v2279
    %v2281 = vrot.slane %v997, %v2280
    %v2282 = vlaneseq
    %v2283 = vshrl.u32 %v2282, 7
    %v2284 = vsub.s32 3, %v2283
    %v2285 = vrot.slane %v997, %v2284
    %v2286 = vlaneseq
    %v2287 = vshrl.u32 %v2286, 7
    %v2288 = vsub.s32 4, %v2287
    %v2289 = vrot.slane %v997, %v2288
    %v2290 = vlaneseq
    %v2291 = vshrl.u32 %v2290, 7
    %v2292 = vsub.s32 5, %v2291
    %v2293 = vrot.slane %v997, %v2292
    %v2294 = vlaneseq
    %v2295 = vshrl.u32 %v2294, 7
    %v2296 = vsub.s32 6, %v2295
    %v2297 = vrot.slane %v997, %v2296
    %v2298 = vlaneseq
    %v2299 = vshrl.u32 %v2298, 7
    %v2300 = vsub.s32 7, %v2299
    %v2301 = vrot.slane %v997, %v2300
    %v2302 = vlaneseq
    %v2303 = vshrl.u32 %v2302, 7
    %v2304 = vsub.s32 0, %v2303
    %v2305 = vrot.slane %v1005, %v2304
    %v2306 = vlaneseq
    %v2307 = vshrl.u32 %v2306, 7
    %v2308 = vsub.s32 1, %v2307
    %v2309 = vrot.slane %v1005, %v2308
    %v2310 = vlaneseq
    %v2311 = vshrl.u32 %v2310, 7
    %v2312 = vsub.s32 2, %v2311
    %v2313 = vrot.slane %v1005, %v2312
    %v2314 = vlaneseq
    %v2315 = vshrl.u32 %v2314, 7
    %v2316 = vsub.s32 3, %v2315
    %v2317 = vrot.slane %v1005, %v2316
    %v2318 = vlaneseq
    %v2319 = vshrl.u32 %v2318, 7
    %v2320 = vsub.s32 4, %v2319
    %v2321 = vrot.slane %v1005, %v2320
    %v2322 = vlaneseq
    %v2323 = vshrl.u32 %v2322, 7
    %v2324 = vsub.s32 5, %v2323
    %v2325 = vrot.slane %v1005, %v2324
    %v2326 = vlaneseq
    %v2327 = vshrl.u32 %v2326, 7
    %v2328 = vsub.s32 6, %v2327
    %v2329 = vrot.slane %v1005, %v2328
    %v2330 = vlaneseq
    %v2331 = vshrl.u32 %v2330, 7
    %v2332 = vsub.s32 7, %v2331
    %v2333 = vrot.slane %v1005, %v2332
    %v2334 = vlaneseq
    %v2335 = vshrl.u32 %v2334, 7
    %v2336 = vsub.s32 0, %v2335
    %v2337 = vrot.slane %v1013, %v2336
    %v2338 = vlaneseq
    %v2339 = vshrl.u32 %v2338, 7
    %v2340 = vsub.s32 1, %v2339
    %v2341 = vrot.slane %v1013, %v2340
    %v2342 = vlaneseq
    %v2343 = vshrl.u32 %v2342, 7
    %v2344 = vsub.s32 2, %v2343
    %v2345 = vrot.slane %v1013, %v2344
    %v2346 = vlaneseq
    %v2347 = vshrl.u32 %v2346, 7
    %v2348 = vsub.s32 3, %v2347
    %v2349 = vrot.slane %v1013, %v2348
    %v2350 = vlaneseq
    %v2351 = vshrl.u32 %v2350, 7
    %v2352 = vsub.s32 4, %v2351
    %v2353 = vrot.slane %v1013, %v2352
    %v2354 = vlaneseq
    %v2355 = vshrl.u32 %v2354, 7
    %v2356 = vsub.s32 5, %v2355
    %v2357 = vrot.slane %v1013, %v2356
    %v2358 = vlaneseq
    %v2359 = vshrl.u32 %v2358, 7
    %v2360 = vsub.s32 6, %v2359
    %v2361 = vrot.slane %v1013, %v2360
    %v2362 = vlaneseq
    %v2363 = vshrl.u32 %v2362, 7
    %v2364 = vsub.s32 7, %v2363
    %v2365 = vrot.slane %v1013, %v2364
    %v2366 = vlaneseq
    %v2367 = vshrl.u32 %v2366, 7
    %v2368 = vsub.s32 0, %v2367
    %v2369 = vrot.slane %v1021, %v2368
    %v2370 = vlaneseq
    %v2371 = vshrl.u32 %v2370, 7
    %v2372 = vsub.s32 1, %v2371
    %v2373 = vrot.slane %v1021, %v2372
    %v2374 = vlaneseq
    %v2375 = vshrl.u32 %v2374, 7
    %v2376 = vsub.s32 2, %v2375
    %v2377 = vrot.slane %v1021, %v2376
    %v2378 = vlaneseq
    %v2379 = vshrl.u32 %v2378, 7
    %v2380 = vsub.s32 3, %v2379
    %v2381 = vrot.slane %v1021, %v2380
    %v2382 = vlaneseq
    %v2383 = vshrl.u32 %v2382, 7
    %v2384 = vsub.s32 4, %v2383
    %v2385 = vrot.slane %v1021, %v2384
    %v2386 = vlaneseq
    %v2387 = vshrl.u32 %v2386, 7
    %v2388 = vsub.s32 5, %v2387
    %v2389 = vrot.slane %v1021, %v2388
    %v2390 = vlaneseq
    %v2391 = vshrl.u32 %v2390, 7
    %v2392 = vsub.s32 6, %v2391
    %v2393 = vrot.slane %v1021, %v2392
    %v2394 = vlaneseq
    %v2395 = vshrl.u32 %v2394, 7
    %v2396 = vsub.s32 7, %v2395
    %v2397 = vrot.slane %v1021, %v2396
    %v2398 = vlaneseq
    %v2399 = vshrl.u32 %v2398, 7
    %v2400 = vsub.s32 0, %v2399
    %v2401 = vrot.slane %v1029, %v2400
    %v2402 = vlaneseq
    %v2403 = vshrl.u32 %v2402, 7
    %v2404 = vsub.s32 1, %v2403
    %v2405 = vrot.slane %v1029, %v2404
    %v2406 = vlaneseq
    %v2407 = vshrl.u32 %v2406, 7
    %v2408 = vsub.s32 2, %v2407
    %v2409 = vrot.slane %v1029, %v2408
    %v2410 = vlaneseq
    %v2411 = vshrl.u32 %v2410, 7
    %v2412 = vsub.s32 3, %v2411
    %v2413 = vrot.slane %v1029, %v2412
    %v2414 = vlaneseq
    %v2415 = vshrl.u32 %v2414, 7
    %v2416 = vsub.s32 4, %v2415
    %v2417 = vrot.slane %v1029, %v2416
    %v2418 = vlaneseq
    %v2419 = vshrl.u32 %v2418, 7
    %v2420 = vsub.s32 5, %v2419
    %v2421 = vrot.slane %v1029, %v2420
    %v2422 = vlaneseq
    %v2423 = vshrl.u32 %v2422, 7
    %v2424 = vsub.s32 6, %v2423
    %v2425 = vrot.slane %v1029, %v2424
    %v2426 = vlaneseq
    %v2427 = vshrl.u32 %v2426, 7
    %v2428 = vsub.s32 7, %v2427
    %v2429 = vrot.slane %v1029, %v2428
    %v2430 = vlaneseq
    %v2431 = vshrl.u32 %v2430, 7
    %v2432 = vsub.s32 0, %v2431
    %v2433 = vrot.slane %v1037, %v2432
    %v2434 = vlaneseq
    %v2435 = vshrl.u32 %v2434, 7
    %v2436 = vsub.s32 1, %v2435
    %v2437 = vrot.slane %v1037, %v2436
    %v2438 = vlaneseq
    %v2439 = vshrl.u32 %v2438, 7
    %v2440 = vsub.s32 2, %v2439
    %v2441 = vrot.slane %v1037, %v2440
    %v2442 = vlaneseq
    %v2443 = vshrl.u32 %v2442, 7
    %v2444 = vsub.s32 3, %v2443
    %v2445 = vrot.slane %v1037, %v2444
    %v2446 = vlaneseq
    %v2447 = vshrl.u32 %v2446, 7
    %v2448 = vsub.s32 4, %v2447
    %v2449 = vrot.slane %v1037, %v2448
    %v2450 = vlaneseq
    %v2451 = vshrl.u32 %v2450, 7
    %v2452 = vsub.s32 5, %v2451
    %v2453 = vrot.slane %v1037, %v2452
    %v2454 = vlaneseq
    %v2455 = vshrl.u32 %v2454, 7
    %v2456 = vsub.s32 6, %v2455
    %v2457 = vrot.slane %v1037, %v2456
    %v2458 = vlaneseq
    %v2459 = vshrl.u32 %v2458, 7
    %v2460 = vsub.s32 7, %v2459
    %v2461 = vrot.slane %v1037, %v2460
    %v2462 = vlaneseq
    %v2463 = vshrl.u32 %v2462, 7
    %v2464 = vsub.s32 0, %v2463
    %v2465 = vrot.slane %v1045, %v2464
    %v2466 = vlaneseq
    %v2467 = vshrl.u32 %v2466, 7
    %v2468 = vsub.s32 1, %v2467
    %v2469 = vrot.slane %v1045, %v2468
    %v2470 = vlaneseq
    %v2471 = vshrl.u32 %v2470, 7
    %v2472 = vsub.s32 2, %v2471
    %v2473 = vrot.slane %v1045, %v2472
    %v2474 = vlaneseq
    %v2475 = vshrl.u32 %v2474, 7
    %v2476 = vsub.s32 3, %v2475
    %v2477 = vrot.slane %v1045, %v2476
    %v2478 = vlaneseq
    %v2479 = vshrl.u32 %v2478, 7
    %v2480 = vsub.s32 4, %v2479
    %v2481 = vrot.slane %v1045, %v2480
    %v2482 = vlaneseq
    %v2483 = vshrl.u32 %v2482, 7
    %v2484 = vsub.s32 5, %v2483
    %v2485 = vrot.slane %v1045, %v2484
    %v2486 = vlaneseq
    %v2487 = vshrl.u32 %v2486, 7
    %v2488 = vsub.s32 6, %v2487
    %v2489 = vrot.slane %v1045, %v2488
    %v2490 = vlaneseq
    %v2491 = vshrl.u32 %v2490, 7
    %v2492 = vsub.s32 7, %v2491
    %v2493 = vrot.slane %v1045, %v2492
    %v2494 = vlaneseq
    %v2495 = vshrl.u32 %v2494, 7
    %v2496 = vsub.s32 0, %v2495
    %v2497 = vrot.slane %v1053, %v2496
    %v2498 = vlaneseq
    %v2499 = vshrl.u32 %v2498, 7
    %v2500 = vsub.s32 1, %v2499
    %v2501 = vrot.slane %v1053, %v2500
    %v2502 = vlaneseq
    %v2503 = vshrl.u32 %v2502, 7
    %v2504 = vsub.s32 2, %v2503
    %v2505 = vrot.slane %v1053, %v2504
    %v2506 = vlaneseq
    %v2507 = vshrl.u32 %v2506, 7
    %v2508 = vsub.s32 3, %v2507
    %v2509 = vrot.slane %v1053, %v2508
    %v2510 = vlaneseq
    %v2511 = vshrl.u32 %v2510, 7
    %v2512 = vsub.s32 4, %v2511
    %v2513 = vrot.slane %v1053, %v2512
    %v2514 = vlaneseq
    %v2515 = vshrl.u32 %v2514, 7
    %v2516 = vsub.s32 5, %v2515
    %v2517 = vrot.slane %v1053, %v2516
    %v2518 = vlaneseq
    %v2519 = vshrl.u32 %v2518, 7
    %v2520 = vsub.s32 6, %v2519
    %v2521 = vrot.slane %v1053, %v2520
    %v2522 = vlaneseq
    %v2523 = vshrl.u32 %v2522, 7
    %v2524 = vsub.s32 7, %v2523
    %v2525 = vrot.slane %v1053, %v2524
    %v2526 = vlaneseq
    %v2527 = vshrl.u32 %v2526, 7
    %v2528 = vsub.s32 0, %v2527
    %v2529 = vrot.slane %v1061, %v2528
    %v2530 = vlaneseq
    %v2531 = vshrl.u32 %v2530, 7
    %v2532 = vsub.s32 1, %v2531
    %v2533 = vrot.slane %v1061, %v2532
    %v2534 = vlaneseq
    %v2535 = vshrl.u32 %v2534, 7
    %v2536 = vsub.s32 2, %v2535
    %v2537 = vrot.slane %v1061, %v2536
    %v2538 = vlaneseq
    %v2539 = vshrl.u32 %v2538, 7
    %v2540 = vsub.s32 3, %v2539
    %v2541 = vrot.slane %v1061, %v2540
    %v2542 = vlaneseq
    %v2543 = vshrl.u32 %v2542, 7
    %v2544 = vsub.s32 4, %v2543
    %v2545 = vrot.slane %v1061, %v2544
    %v2546 = vlaneseq
    %v2547 = vshrl.u32 %v2546, 7
    %v2548 = vsub.s32 5, %v2547
    %v2549 = vrot.slane %v1061, %v2548
    %v2550 = vlaneseq
    %v2551 = vshrl.u32 %v2550, 7
    %v2552 = vsub.s32 6, %v2551
    %v2553 = vrot.slane %v1061, %v2552
    %v2554 = vlaneseq
    %v2555 = vshrl.u32 %v2554, 7
    %v2556 = vsub.s32 7, %v2555
    %v2557 = vrot.slane %v1061, %v2556
    %v2558 = vlaneseq
    %v2559 = vshrl.u32 %v2558, 7
    %v2560 = vsub.s32 0, %v2559
    %v2561 = vrot.slane %v1069, %v2560
    %v2562 = vlaneseq
    %v2563 = vshrl.u32 %v2562, 7
    %v2564 = vsub.s32 1, %v2563
    %v2565 = vrot.slane %v1069, %v2564
    %v2566 = vlaneseq
    %v2567 = vshrl.u32 %v2566, 7
    %v2568 = vsub.s32 2, %v2567
    %v2569 = vrot.slane %v1069, %v2568
    %v2570 = vlaneseq
    %v2571 = vshrl.u32 %v2570, 7
    %v2572 = vsub.s32 3, %v2571
    %v2573 = vrot.slane %v1069, %v2572
    %v2574 = vlaneseq
    %v2575 = vshrl.u32 %v2574, 7
    %v2576 = vsub.s32 4, %v2575
    %v2577 = vrot.slane %v1069, %v2576
    %v2578 = vlaneseq
    %v2579 = vshrl.u32 %v2578, 7
    %v2580 = vsub.s32 5, %v2579
    %v2581 = vrot.slane %v1069, %v2580
    %v2582 = vlaneseq
    %v2583 = vshrl.u32 %v2582, 7
    %v2584 = vsub.s32 6, %v2583
    %v2585 = vrot.slane %v1069, %v2584
    %v2586 = vlaneseq
    %v2587 = vshrl.u32 %v2586, 7
    %v2588 = vsub.s32 7, %v2587
    %v2589 = vrot.slane %v1069, %v2588
    %v2590 = vlaneseq
    %v2591 = vshrl.u32 %v2590, 7
    %v2592 = vsub.s32 0, %v2591
    %v2593 = vrot.slane %v1077, %v2592
    %v2594 = vlaneseq
    %v2595 = vshrl.u32 %v2594, 7
    %v2596 = vsub.s32 1, %v2595
    %v2597 = vrot.slane %v1077, %v2596
    %v2598 = vlaneseq
    %v2599 = vshrl.u32 %v2598, 7
    %v2600 = vsub.s32 2, %v2599
    %v2601 = vrot.slane %v1077, %v2600
    %v2602 = vlaneseq
    %v2603 = vshrl.u32 %v2602, 7
    %v2604 = vsub.s32 3, %v2603
    %v2605 = vrot.slane %v1077, %v2604
    %v2606 = vlaneseq
    %v2607 = vshrl.u32 %v2606, 7
    %v2608 = vsub.s32 4, %v2607
    %v2609 = vrot.slane %v1077, %v2608
    %v2610 = vlaneseq
    %v2611 = vshrl.u32 %v2610, 7
    %v2612 = vsub.s32 5, %v2611
    %v2613 = vrot.slane %v1077, %v2612
    %v2614 = vlaneseq
    %v2615 = vshrl.u32 %v2614, 7
    %v2616 = vsub.s32 6, %v2615
    %v2617 = vrot.slane %v1077, %v2616
    %v2618 = vlaneseq
    %v2619 = vshrl.u32 %v2618, 7
    %v2620 = vsub.s32 7, %v2619
    %v2621 = vrot.slane %v1077, %v2620
    %v2622 = vlaneseq
    %v2623 = vshrl.u32 %v2622, 7
    %v2624 = vsub.s32 0, %v2623
    %v2625 = vrot.slane %v1085, %v2624
    %v2626 = vlaneseq
    %v2627 = vshrl.u32 %v2626, 7
    %v2628 = vsub.s32 1, %v2627
    %v2629 = vrot.slane %v1085, %v2628
    %v2630 = vlaneseq
    %v2631 = vshrl.u32 %v2630, 7
    %v2632 = vsub.s32 2, %v2631
    %v2633 = vrot.slane %v1085, %v2632
    %v2634 = vlaneseq
    %v2635 = vshrl.u32 %v2634, 7
    %v2636 = vsub.s32 3, %v2635
    %v2637 = vrot.slane %v1085, %v2636
    %v2638 = vlaneseq
    %v2639 = vshrl.u32 %v2638, 7
    %v2640 = vsub.s32 4, %v2639
    %v2641 = vrot.slane %v1085, %v2640
    %v2642 = vlaneseq
    %v2643 = vshrl.u32 %v2642, 7
    %v2644 = vsub.s32 5, %v2643
    %v2645 = vrot.slane %v1085, %v2644
    %v2646 = vlaneseq
    %v2647 = vshrl.u32 %v2646, 7
    %v2648 = vsub.s32 6, %v2647
    %v2649 = vrot.slane %v1085, %v2648
    %v2650 = vlaneseq
    %v2651 = vshrl.u32 %v2650, 7
    %v2652 = vsub.s32 7, %v2651
    %v2653 = vrot.slane %v1085, %v2652
    %v2654 = vlaneseq
    %v2655 = vshrl.u32 %v2654, 7
    %v2656 = vsub.s32 0, %v2655
    %v2657 = vrot.slane %v1093, %v2656
    %v2658 = vlaneseq
    %v2659 = vshrl.u32 %v2658, 7
    %v2660 = vsub.s32 1, %v2659
    %v2661 = vrot.slane %v1093, %v2660
    %v2662 = vlaneseq
    %v2663 = vshrl.u32 %v2662, 7
    %v2664 = vsub.s32 2, %v2663
    %v2665 = vrot.slane %v1093, %v2664
    %v2666 = vlaneseq
    %v2667 = vshrl.u32 %v2666, 7
    %v2668 = vsub.s32 3, %v2667
    %v2669 = vrot.slane %v1093, %v2668
    %v2670 = vlaneseq
    %v2671 = vshrl.u32 %v2670, 7
    %v2672 = vsub.s32 4, %v2671
    %v2673 = vrot.slane %v1093, %v2672
    %v2674 = vlaneseq
    %v2675 = vshrl.u32 %v2674, 7
    %v2676 = vsub.s32 5, %v2675
    %v2677 = vrot.slane %v1093, %v2676
    %v2678 = vlaneseq
    %v2679 = vshrl.u32 %v2678, 7
    %v2680 = vsub.s32 6, %v2679
    %v2681 = vrot.slane %v1093, %v2680
    %v2682 = vlaneseq
    %v2683 = vshrl.u32 %v2682, 7
    %v2684 = vsub.s32 7, %v2683
    %v2685 = vrot.slane %v1093, %v2684
    %v2686 = vlaneseq
    %v2687 = vshrl.u32 %v2686, 7
    %v2688 = vsub.s32 0, %v2687
    %v2689 = vrot.slane %v1101, %v2688
    %v2690 = vlaneseq
    %v2691 = vshrl.u32 %v2690, 7
    %v2692 = vsub.s32 1, %v2691
    %v2693 = vrot.slane %v1101, %v2692
    %v2694 = vlaneseq
    %v2695 = vshrl.u32 %v2694, 7
    %v2696 = vsub.s32 2, %v2695
    %v2697 = vrot.slane %v1101, %v2696
    %v2698 = vlaneseq
    %v2699 = vshrl.u32 %v2698, 7
    %v2700 = vsub.s32 3, %v2699
    %v2701 = vrot.slane %v1101, %v2700
    %v2702 = vlaneseq
    %v2703 = vshrl.u32 %v2702, 7
    %v2704 = vsub.s32 4, %v2703
    %v2705 = vrot.slane %v1101, %v2704
    %v2706 = vlaneseq
    %v2707 = vshrl.u32 %v2706, 7
    %v2708 = vsub.s32 5, %v2707
    %v2709 = vrot.slane %v1101, %v2708
    %v2710 = vlaneseq
    %v2711 = vshrl.u32 %v2710, 7
    %v2712 = vsub.s32 6, %v2711
    %v2713 = vrot.slane %v1101, %v2712
    %v2714 = vlaneseq
    %v2715 = vshrl.u32 %v2714, 7
    %v2716 = vsub.s32 7, %v2715
    %v2717 = vrot.slane %v1101, %v2716
    %v2718 = vlaneseq
    %v2719 = vshrl.u32 %v2718, 7
    %v2720 = vsub.s32 0, %v2719
    %v2721 = vrot.slane %v1109, %v2720
    %v2722 = vlaneseq
    %v2723 = vshrl.u32 %v2722, 7
    %v2724 = vsub.s32 1, %v2723
    %v2725 = vrot.slane %v1109, %v2724
    %v2726 = vlaneseq
    %v2727 = vshrl.u32 %v2726, 7
    %v2728 = vsub.s32 2, %v2727
    %v2729 = vrot.slane %v1109, %v2728
    %v2730 = vlaneseq
    %v2731 = vshrl.u32 %v2730, 7
    %v2732 = vsub.s32 3, %v2731
    %v2733 = vrot.slane %v1109, %v2732
    %v2734 = vlaneseq
    %v2735 = vshrl.u32 %v2734, 7
    %v2736 = vsub.s32 4, %v2735
    %v2737 = vrot.slane %v1109, %v2736
    %v2738 = vlaneseq
    %v2739 = vshrl.u32 %v2738, 7
    %v2740 = vsub.s32 5, %v2739
    %v2741 = vrot.slane %v1109, %v2740
    %v2742 = vlaneseq
    %v2743 = vshrl.u32 %v2742, 7
    %v2744 = vsub.s32 6, %v2743
    %v2745 = vrot.slane %v1109, %v2744
    %v2746 = vlaneseq
    %v2747 = vshrl.u32 %v2746, 7
    %v2748 = vsub.s32 7, %v2747
    %v2749 = vrot.slane %v1109, %v2748
    %v2750 = vlaneseq
    %v2751 = vshrl.u32 %v2750, 7
    %v2752 = vsub.s32 0, %v2751
    %v2753 = vrot.slane %v1117, %v2752
    %v2754 = vlaneseq
    %v2755 = vshrl.u32 %v2754, 7
    %v2756 = vsub.s32 1, %v2755
    %v2757 = vrot.slane %v1117, %v2756
    %v2758 = vlaneseq
    %v2759 = vshrl.u32 %v2758, 7
    %v2760 = vsub.s32 2, %v2759
    %v2761 = vrot.slane %v1117, %v2760
    %v2762 = vlaneseq
    %v2763 = vshrl.u32 %v2762, 7
    %v2764 = vsub.s32 3, %v2763
    %v2765 = vrot.slane %v1117, %v2764
    %v2766 = vlaneseq
    %v2767 = vshrl.u32 %v2766, 7
    %v2768 = vsub.s32 4, %v2767
    %v2769 = vrot.slane %v1117, %v2768
    %v2770 = vlaneseq
    %v2771 = vshrl.u32 %v2770, 7
    %v2772 = vsub.s32 5, %v2771
    %v2773 = vrot.slane %v1117, %v2772
    %v2774 = vlaneseq
    %v2775 = vshrl.u32 %v2774, 7
    %v2776 = vsub.s32 6, %v2775
    %v2777 = vrot.slane %v1117, %v2776
    %v2778 = vlaneseq
    %v2779 = vshrl.u32 %v2778, 7
    %v2780 = vsub.s32 7, %v2779
    %v2781 = vrot.slane %v1117, %v2780
    %v2782 = vlaneseq
    %v2783 = vshrl.u32 %v2782, 7
    %v2784 = vsub.s32 0, %v2783
    %v2785 = vrot.slane %v1125, %v2784
    %v2786 = vlaneseq
    %v2787 = vshrl.u32 %v2786, 7
    %v2788 = vsub.s32 1, %v2787
    %v2789 = vrot.slane %v1125, %v2788
    %v2790 = vlaneseq
    %v2791 = vshrl.u32 %v2790, 7
    %v2792 = vsub.s32 2, %v2791
    %v2793 = vrot.slane %v1125, %v2792
    %v2794 = vlaneseq
    %v2795 = vshrl.u32 %v2794, 7
    %v2796 = vsub.s32 3, %v2795
    %v2797 = vrot.slane %v1125, %v2796
    %v2798 = vlaneseq
    %v2799 = vshrl.u32 %v2798, 7
    %v2800 = vsub.s32 4, %v2799
    %v2801 = vrot.slane %v1125, %v2800
    %v2802 = vlaneseq
    %v2803 = vshrl.u32 %v2802, 7
    %v2804 = vsub.s32 5, %v2803
    %v2805 = vrot.slane %v1125, %v2804
    %v2806 = vlaneseq
    %v2807 = vshrl.u32 %v2806, 7
    %v2808 = vsub.s32 6, %v2807
    %v2809 = vrot.slane %v1125, %v2808
    %v2810 = vlaneseq
    %v2811 = vshrl.u32 %v2810, 7
    %v2812 = vsub.s32 7, %v2811
    %v2813 = vrot.slane %v1125, %v2812
    %v2814 = vlaneseq
    %v2815 = vshrl.u32 %v2814, 7
    %v2816 = vsub.s32 0, %v2815
    %v2817 = vrot.slane %v1133, %v2816
    %v2818 = vlaneseq
    %v2819 = vshrl.u32 %v2818, 7
    %v2820 = vsub.s32 1, %v2819
    %v2821 = vrot.slane %v1133, %v2820
    %v2822 = vlaneseq
    %v2823 = vshrl.u32 %v2822, 7
    %v2824 = vsub.s32 2, %v2823
    %v2825 = vrot.slane %v1133, %v2824
    %v2826 = vlaneseq
    %v2827 = vshrl.u32 %v2826, 7
    %v2828 = vsub.s32 3, %v2827
    %v2829 = vrot.slane %v1133, %v2828
    %v2830 = vlaneseq
    %v2831 = vshrl.u32 %v2830, 7
    %v2832 = vsub.s32 4, %v2831
    %v2833 = vrot.slane %v1133, %v2832
    %v2834 = vlaneseq
    %v2835 = vshrl.u32 %v2834, 7
    %v2836 = vsub.s32 5, %v2835
    %v2837 = vrot.slane %v1133, %v2836
    %v2838 = vlaneseq
    %v2839 = vshrl.u32 %v2838, 7
    %v2840 = vsub.s32 6, %v2839
    %v2841 = vrot.slane %v1133, %v2840
    %v2842 = vlaneseq
    %v2843 = vshrl.u32 %v2842, 7
    %v2844 = vsub.s32 7, %v2843
    %v2845 = vrot.slane %v1133, %v2844
    %v2846 = vlaneseq
    %v2847 = vshrl.u32 %v2846, 7
    %v2848 = vsub.s32 0, %v2847
    %v2849 = vrot.slane %v1141, %v2848
    %v2850 = vlaneseq
    %v2851 = vshrl.u32 %v2850, 7
    %v2852 = vsub.s32 1, %v2851
    %v2853 = vrot.slane %v1141, %v2852
    %v2854 = vlaneseq
    %v2855 = vshrl.u32 %v2854, 7
    %v2856 = vsub.s32 2, %v2855
    %v2857 = vrot.slane %v1141, %v2856
    %v2858 = vlaneseq
    %v2859 = vshrl.u32 %v2858, 7
    %v2860 = vsub.s32 3, %v2859
    %v2861 = vrot.slane %v1141, %v2860
    %v2862 = vlaneseq
    %v2863 = vshrl.u32 %v2862, 7
    %v2864 = vsub.s32 4, %v2863
    %v2865 = vrot.slane %v1141, %v2864
    %v2866 = vlaneseq
    %v2867 = vshrl.u32 %v2866, 7
    %v2868 = vsub.s32 5, %v2867
    %v2869 = vrot.slane %v1141, %v2868
    %v2870 = vlaneseq
    %v2871 = vshrl.u32 %v2870, 7
    %v2872 = vsub.s32 6, %v2871
    %v2873 = vrot.slane %v1141, %v2872
    %v2874 = vlaneseq
    %v2875 = vshrl.u32 %v2874, 7
    %v2876 = vsub.s32 7, %v2875
    %v2877 = vrot.slane %v1141, %v2876
    %v2878 = vlaneseq
    %v2879 = vshrl.u32 %v2878, 7
    %v2880 = vsub.s32 0, %v2879
    %v2881 = vrot.slane %v1149, %v2880
    %v2882 = vlaneseq
    %v2883 = vshrl.u32 %v2882, 7
    %v2884 = vsub.s32 1, %v2883
    %v2885 = vrot.slane %v1149, %v2884
    %v2886 = vlaneseq
    %v2887 = vshrl.u32 %v2886, 7
    %v2888 = vsub.s32 2, %v2887
    %v2889 = vrot.slane %v1149, %v2888
    %v2890 = vlaneseq
    %v2891 = vshrl.u32 %v2890, 7
    %v2892 = vsub.s32 3, %v2891
    %v2893 = vrot.slane %v1149, %v2892
    %v2894 = vlaneseq
    %v2895 = vshrl.u32 %v2894, 7
    %v2896 = vsub.s32 4, %v2895
    %v2897 = vrot.slane %v1149, %v2896
    %v2898 = vlaneseq
    %v2899 = vshrl.u32 %v2898, 7
    %v2900 = vsub.s32 5, %v2899
    %v2901 = vrot.slane %v1149, %v2900
    %v2902 = vlaneseq
    %v2903 = vshrl.u32 %v2902, 7
    %v2904 = vsub.s32 6, %v2903
    %v2905 = vrot.slane %v1149, %v2904
    %v2906 = vlaneseq
    %v2907 = vshrl.u32 %v2906, 7
    %v2908 = vsub.s32 7, %v2907
    %v2909 = vrot.slane %v1149, %v2908
    %v2910 = vlaneseq
    %v2911 = vshrl.u32 %v2910, 7
    %v2912 = vsub.s32 0, %v2911
    %v2913 = vrot.slane %v1157, %v2912
    %v2914 = vlaneseq
    %v2915 = vshrl.u32 %v2914, 7
    %v2916 = vsub.s32 1, %v2915
    %v2917 = vrot.slane %v1157, %v2916
    %v2918 = vlaneseq
    %v2919 = vshrl.u32 %v2918, 7
    %v2920 = vsub.s32 2, %v2919
    %v2921 = vrot.slane %v1157, %v2920
    %v2922 = vlaneseq
    %v2923 = vshrl.u32 %v2922, 7
    %v2924 = vsub.s32 3, %v2923
    %v2925 = vrot.slane %v1157, %v2924
    %v2926 = vlaneseq
    %v2927 = vshrl.u32 %v2926, 7
    %v2928 = vsub.s32 4, %v2927
    %v2929 = vrot.slane %v1157, %v2928
    %v2930 = vlaneseq
    %v2931 = vshrl.u32 %v2930, 7
    %v2932 = vsub.s32 5, %v2931
    %v2933 = vrot.slane %v1157, %v2932
    %v2934 = vlaneseq
    %v2935 = vshrl.u32 %v2934, 7
    %v2936 = vsub.s32 6, %v2935
    %v2937 = vrot.slane %v1157, %v2936
    %v2938 = vlaneseq
    %v2939 = vshrl.u32 %v2938, 7
    %v2940 = vsub.s32 7, %v2939
    %v2941 = vrot.slane %v1157, %v2940
    %v2942 = vlaneseq
    %v2943 = vshrl.u32 %v2942, 7
    %v2944 = vsub.s32 0, %v2943
    %v2945 = vrot.slane %v1165, %v2944
    %v2946 = vlaneseq
    %v2947 = vshrl.u32 %v2946, 7
    %v2948 = vsub.s32 1, %v2947
    %v2949 = vrot.slane %v1165, %v2948
    %v2950 = vlaneseq
    %v2951 = vshrl.u32 %v2950, 7
    %v2952 = vsub.s32 2, %v2951
    %v2953 = vrot.slane %v1165, %v2952
    %v2954 = vlaneseq
    %v2955 = vshrl.u32 %v2954, 7
    %v2956 = vsub.s32 3, %v2955
    %v2957 = vrot.slane %v1165, %v2956
    %v2958 = vlaneseq
    %v2959 = vshrl.u32 %v2958, 7
    %v2960 = vsub.s32 4, %v2959
    %v2961 = vrot.slane %v1165, %v2960
    %v2962 = vlaneseq
    %v2963 = vshrl.u32 %v2962, 7
    %v2964 = vsub.s32 5, %v2963
    %v2965 = vrot.slane %v1165, %v2964
    %v2966 = vlaneseq
    %v2967 = vshrl.u32 %v2966, 7
    %v2968 = vsub.s32 6, %v2967
    %v2969 = vrot.slane %v1165, %v2968
    %v2970 = vlaneseq
    %v2971 = vshrl.u32 %v2970, 7
    %v2972 = vsub.s32 7, %v2971
    %v2973 = vrot.slane %v1165, %v2972
    %v2974 = vlaneseq
    %v2975 = vshrl.u32 %v2974, 7
    %v2976 = vsub.s32 0, %v2975
    %v2977 = vrot.slane %v1173, %v2976
    %v2978 = vlaneseq
    %v2979 = vshrl.u32 %v2978, 7
    %v2980 = vsub.s32 1, %v2979
    %v2981 = vrot.slane %v1173, %v2980
    %v2982 = vlaneseq
    %v2983 = vshrl.u32 %v2982, 7
    %v2984 = vsub.s32 2, %v2983
    %v2985 = vrot.slane %v1173, %v2984
    %v2986 = vlaneseq
    %v2987 = vshrl.u32 %v2986, 7
    %v2988 = vsub.s32 3, %v2987
    %v2989 = vrot.slane %v1173, %v2988
    %v2990 = vlaneseq
    %v2991 = vshrl.u32 %v2990, 7
    %v2992 = vsub.s32 4, %v2991
    %v2993 = vrot.slane %v1173, %v2992
    %v2994 = vlaneseq
    %v2995 = vshrl.u32 %v2994, 7
    %v2996 = vsub.s32 5, %v2995
    %v2997 = vrot.slane %v1173, %v2996
    %v2998 = vlaneseq
    %v2999 = vshrl.u32 %v2998, 7
    %v3000 = vsub.s32 6, %v2999
    %v3001 = vrot.slane %v1173, %v3000
    %v3002 = vlaneseq
    %v3003 = vshrl.u32 %v3002, 7
    %v3004 = vsub.s32 7, %v3003
    %v3005 = vrot.slane %v1173, %v3004
    %v3006 = vlaneseq
    %v3007 = vshrl.u32 %v3006, 7
    %v3008 = vsub.s32 0, %v3007
    %v3009 = vrot.slane %v1181, %v3008
    %v3010 = vlaneseq
    %v3011 = vshrl.u32 %v3010, 7
    %v3012 = vsub.s32 1, %v3011
    %v3013 = vrot.slane %v1181, %v3012
    %v3014 = vlaneseq
    %v3015 = vshrl.u32 %v3014, 7
    %v3016 = vsub.s32 2, %v3015
    %v3017 = vrot.slane %v1181, %v3016
    %v3018 = vlaneseq
    %v3019 = vshrl.u32 %v3018, 7
    %v3020 = vsub.s32 3, %v3019
    %v3021 = vrot.slane %v1181, %v3020
    %v3022 = vlaneseq
    %v3023 = vshrl.u32 %v3022, 7
    %v3024 = vsub.s32 4, %v3023
    %v3025 = vrot.slane %v1181, %v3024
    %v3026 = vlaneseq
    %v3027 = vshrl.u32 %v3026, 7
    %v3028 = vsub.s32 5, %v3027
    %v3029 = vrot.slane %v1181, %v3028
    %v3030 = vlaneseq
    %v3031 = vshrl.u32 %v3030, 7
    %v3032 = vsub.s32 6, %v3031
    %v3033 = vrot.slane %v1181, %v3032
    %v3034 = vlaneseq
    %v3035 = vshrl.u32 %v3034, 7
    %v3036 = vsub.s32 7, %v3035
    %v3037 = vrot.slane %v1181, %v3036
    %v3038 = vlaneseq
    %v3039 = vshrl.u32 %v3038, 7
    %v3040 = vsub.s32 0, %v3039
    %v3041 = vrot.slane %v1189, %v3040
    %v3042 = vlaneseq
    %v3043 = vshrl.u32 %v3042, 7
    %v3044 = vsub.s32 1, %v3043
    %v3045 = vrot.slane %v1189, %v3044
    %v3046 = vlaneseq
    %v3047 = vshrl.u32 %v3046, 7
    %v3048 = vsub.s32 2, %v3047
    %v3049 = vrot.slane %v1189, %v3048
    %v3050 = vlaneseq
    %v3051 = vshrl.u32 %v3050, 7
    %v3052 = vsub.s32 3, %v3051
    %v3053 = vrot.slane %v1189, %v3052
    %v3054 = vlaneseq
    %v3055 = vshrl.u32 %v3054, 7
    %v3056 = vsub.s32 4, %v3055
    %v3057 = vrot.slane %v1189, %v3056
    %v3058 = vlaneseq
    %v3059 = vshrl.u32 %v3058, 7
    %v3060 = vsub.s32 5, %v3059
    %v3061 = vrot.slane %v1189, %v3060
    %v3062 = vlaneseq
    %v3063 = vshrl.u32 %v3062, 7
    %v3064 = vsub.s32 6, %v3063
    %v3065 = vrot.slane %v1189, %v3064
    %v3066 = vlaneseq
    %v3067 = vshrl.u32 %v3066, 7
    %v3068 = vsub.s32 7, %v3067
    %v3069 = vrot.slane %v1189, %v3068
    %v3070 = vlaneseq
    %v3071 = vshrl.u32 %v3070, 7
    %v3072 = vsub.s32 0, %v3071
    %v3073 = vrot.slane %v1197, %v3072
    %v3074 = vlaneseq
    %v3075 = vshrl.u32 %v3074, 7
    %v3076 = vsub.s32 1, %v3075
    %v3077 = vrot.slane %v1197, %v3076
    %v3078 = vlaneseq
    %v3079 = vshrl.u32 %v3078, 7
    %v3080 = vsub.s32 2, %v3079
    %v3081 = vrot.slane %v1197, %v3080
    %v3082 = vlaneseq
    %v3083 = vshrl.u32 %v3082, 7
    %v3084 = vsub.s32 3, %v3083
    %v3085 = vrot.slane %v1197, %v3084
    %v3086 = vlaneseq
    %v3087 = vshrl.u32 %v3086, 7
    %v3088 = vsub.s32 4, %v3087
    %v3089 = vrot.slane %v1197, %v3088
    %v3090 = vlaneseq
    %v3091 = vshrl.u32 %v3090, 7
    %v3092 = vsub.s32 5, %v3091
    %v3093 = vrot.slane %v1197, %v3092
    %v3094 = vlaneseq
    %v3095 = vshrl.u32 %v3094, 7
    %v3096 = vsub.s32 6, %v3095
    %v3097 = vrot.slane %v1197, %v3096
    %v3098 = vlaneseq
    %v3099 = vshrl.u32 %v3098, 7
    %v3100 = vsub.s32 7, %v3099
    %v3101 = vrot.slane %v1197, %v3100
    %v3102 = vlaneseq
    %v3103 = vshrl.u32 %v3102, 7
    %v3104 = vsub.s32 0, %v3103
    %v3105 = vrot.slane %v1205, %v3104
    %v3106 = vlaneseq
    %v3107 = vshrl.u32 %v3106, 7
    %v3108 = vsub.s32 1, %v3107
    %v3109 = vrot.slane %v1205, %v3108
    %v3110 = vlaneseq
    %v3111 = vshrl.u32 %v3110, 7
    %v3112 = vsub.s32 2, %v3111
    %v3113 = vrot.slane %v1205, %v3112
    %v3114 = vlaneseq
    %v3115 = vshrl.u32 %v3114, 7
    %v3116 = vsub.s32 3, %v3115
    %v3117 = vrot.slane %v1205, %v3116
    %v3118 = vlaneseq
    %v3119 = vshrl.u32 %v3118, 7
    %v3120 = vsub.s32 4, %v3119
    %v3121 = vrot.slane %v1205, %v3120
    %v3122 = vlaneseq
    %v3123 = vshrl.u32 %v3122, 7
    %v3124 = vsub.s32 5, %v3123
    %v3125 = vrot.slane %v1205, %v3124
    %v3126 = vlaneseq
    %v3127 = vshrl.u32 %v3126, 7
    %v3128 = vsub.s32 6, %v3127
    %v3129 = vrot.slane %v1205, %v3128
    %v3130 = vlaneseq
    %v3131 = vshrl.u32 %v3130, 7
    %v3132 = vsub.s32 7, %v3131
    %v3133 = vrot.slane %v1205, %v3132
    %v3134 = vlaneseq
    %v3135 = vshrl.u32 %v3134, 7
    %v3136 = vsub.s32 0, %v3135
    %v3137 = vrot.slane %v1213, %v3136
    %v3138 = vlaneseq
    %v3139 = vshrl.u32 %v3138, 7
    %v3140 = vsub.s32 1, %v3139
    %v3141 = vrot.slane %v1213, %v3140
    %v3142 = vlaneseq
    %v3143 = vshrl.u32 %v3142, 7
    %v3144 = vsub.s32 2, %v3143
    %v3145 = vrot.slane %v1213, %v3144
    %v3146 = vlaneseq
    %v3147 = vshrl.u32 %v3146, 7
    %v3148 = vsub.s32 3, %v3147
    %v3149 = vrot.slane %v1213, %v3148
    %v3150 = vlaneseq
    %v3151 = vshrl.u32 %v3150, 7
    %v3152 = vsub.s32 4, %v3151
    %v3153 = vrot.slane %v1213, %v3152
    %v3154 = vlaneseq
    %v3155 = vshrl.u32 %v3154, 7
    %v3156 = vsub.s32 5, %v3155
    %v3157 = vrot.slane %v1213, %v3156
    %v3158 = vlaneseq
    %v3159 = vshrl.u32 %v3158, 7
    %v3160 = vsub.s32 6, %v3159
    %v3161 = vrot.slane %v1213, %v3160
    %v3162 = vlaneseq
    %v3163 = vshrl.u32 %v3162, 7
    %v3164 = vsub.s32 7, %v3163
    %v3165 = vrot.slane %v1213, %v3164
    %v3166 = vlaneseq
    %v3167 = vshrl.u32 %v3166, 7
    %v3168 = vsub.s32 0, %v3167
    %v3169 = vrot.slane %v1221, %v3168
    %v3170 = vlaneseq
    %v3171 = vshrl.u32 %v3170, 7
    %v3172 = vsub.s32 1, %v3171
    %v3173 = vrot.slane %v1221, %v3172
    %v3174 = vlaneseq
    %v3175 = vshrl.u32 %v3174, 7
    %v3176 = vsub.s32 2, %v3175
    %v3177 = vrot.slane %v1221, %v3176
    %v3178 = vlaneseq
    %v3179 = vshrl.u32 %v3178, 7
    %v3180 = vsub.s32 3, %v3179
    %v3181 = vrot.slane %v1221, %v3180
    %v3182 = vlaneseq
    %v3183 = vshrl.u32 %v3182, 7
    %v3184 = vsub.s32 4, %v3183
    %v3185 = vrot.slane %v1221, %v3184
    %v3186 = vlaneseq
    %v3187 = vshrl.u32 %v3186, 7
    %v3188 = vsub.s32 5, %v3187
    %v3189 = vrot.slane %v1221, %v3188
    %v3190 = vlaneseq
    %v3191 = vshrl.u32 %v3190, 7
    %v3192 = vsub.s32 6, %v3191
    %v3193 = vrot.slane %v1221, %v3192
    %v3194 = vlaneseq
    %v3195 = vshrl.u32 %v3194, 7
    %v3196 = vsub.s32 7, %v3195
    %v3197 = vrot.slane %v1221, %v3196
    %v3198 = vlaneseq
    %v3199 = vshrl.u32 %v3198, 7
    %v3200 = vsub.s32 0, %v3199
    %v3201 = vrot.slane %v1229, %v3200
    %v3202 = vlaneseq
    %v3203 = vshrl.u32 %v3202, 7
    %v3204 = vsub.s32 1, %v3203
    %v3205 = vrot.slane %v1229, %v3204
    %v3206 = vlaneseq
    %v3207 = vshrl.u32 %v3206, 7
    %v3208 = vsub.s32 2, %v3207
    %v3209 = vrot.slane %v1229, %v3208
    %v3210 = vlaneseq
    %v3211 = vshrl.u32 %v3210, 7
    %v3212 = vsub.s32 3, %v3211
    %v3213 = vrot.slane %v1229, %v3212
    %v3214 = vlaneseq
    %v3215 = vshrl.u32 %v3214, 7
    %v3216 = vsub.s32 4, %v3215
    %v3217 = vrot.slane %v1229, %v3216
    %v3218 = vlaneseq
    %v3219 = vshrl.u32 %v3218, 7
    %v3220 = vsub.s32 5, %v3219
    %v3221 = vrot.slane %v1229, %v3220
    %v3222 = vlaneseq
    %v3223 = vshrl.u32 %v3222, 7
    %v3224 = vsub.s32 6, %v3223
    %v3225 = vrot.slane %v1229, %v3224
    %v3226 = vlaneseq
    %v3227 = vshrl.u32 %v3226, 7
    %v3228 = vsub.s32 7, %v3227
    %v3229 = vrot.slane %v1229, %v3228
    %v3230 = vlaneseq
    %v3231 = vshrl.u32 %v3230, 7
    %v3232 = vsub.s32 0, %v3231
    %v3233 = vrot.slane %v1237, %v3232
    %v3234 = vlaneseq
    %v3235 = vshrl.u32 %v3234, 7
    %v3236 = vsub.s32 1, %v3235
    %v3237 = vrot.slane %v1237, %v3236
    %v3238 = vlaneseq
    %v3239 = vshrl.u32 %v3238, 7
    %v3240 = vsub.s32 2, %v3239
    %v3241 = vrot.slane %v1237, %v3240
    %v3242 = vlaneseq
    %v3243 = vshrl.u32 %v3242, 7
    %v3244 = vsub.s32 3, %v3243
    %v3245 = vrot.slane %v1237, %v3244
    %v3246 = vlaneseq
    %v3247 = vshrl.u32 %v3246, 7
    %v3248 = vsub.s32 4, %v3247
    %v3249 = vrot.slane %v1237, %v3248
    %v3250 = vlaneseq
    %v3251 = vshrl.u32 %v3250, 7
    %v3252 = vsub.s32 5, %v3251
    %v3253 = vrot.slane %v1237, %v3252
    %v3254 = vlaneseq
    %v3255 = vshrl.u32 %v3254, 7
    %v3256 = vsub.s32 6, %v3255
    %v3257 = vrot.slane %v1237, %v3256
    %v3258 = vlaneseq
    %v3259 = vshrl.u32 %v3258, 7
    %v3260 = vsub.s32 7, %v3259
    %v3261 = vrot.slane %v1237, %v3260
    %v3262 = vlaneseq
    %v3263 = vshrl.u32 %v3262, 7
    %v3264 = vsub.s32 0, %v3263
    %v3265 = vrot.slane %v1245, %v3264
    %v3266 = vlaneseq
    %v3267 = vshrl.u32 %v3266, 7
    %v3268 = vsub.s32 1, %v3267
    %v3269 = vrot.slane %v1245, %v3268
    %v3270 = vlaneseq
    %v3271 = vshrl.u32 %v3270, 7
    %v3272 = vsub.s32 2, %v3271
    %v3273 = vrot.slane %v1245, %v3272
    %v3274 = vlaneseq
    %v3275 = vshrl.u32 %v3274, 7
    %v3276 = vsub.s32 3, %v3275
    %v3277 = vrot.slane %v1245, %v3276
    %v3278 = vlaneseq
    %v3279 = vshrl.u32 %v3278, 7
    %v3280 = vsub.s32 4, %v3279
    %v3281 = vrot.slane %v1245, %v3280
    %v3282 = vlaneseq
    %v3283 = vshrl.u32 %v3282, 7
    %v3284 = vsub.s32 5, %v3283
    %v3285 = vrot.slane %v1245, %v3284
    %v3286 = vlaneseq
    %v3287 = vshrl.u32 %v3286, 7
    %v3288 = vsub.s32 6, %v3287
    %v3289 = vrot.slane %v1245, %v3288
    %v3290 = vlaneseq
    %v3291 = vshrl.u32 %v3290, 7
    %v3292 = vsub.s32 7, %v3291
    %v3293 = vrot.slane %v1245, %v3292
    %v3294 = vcombine.low %v1249, %v1253
    %v3295 = vcombine.low %v1257, %v1261
    %v3296 = vcombine.low %v1265, %v1269
    %v3297 = vcombine.low %v1273, %v1277
    %v3299 = vunpack.c.l.s4 1966171168
    %v3300 = vunpack.c.0.s8 %v3299
    %v3301 = vlaneseq
    %v3302 = vshrl.u32 %v3301, 7
    %v3303 = vsub.s32 %v3300, %v3302
    %v3304 = vrot.slane %v3294, %v3303
    %v3306 = vunpack.c.l.s4 1966171168
    %v3307 = vunpack.c.0.s8 %v3306
    %v3308 = vlaneseq
    %v3309 = vshrl.u32 %v3308, 7
    %v3310 = vsub.s32 %v3307, %v3309
    %v3311 = vrot.slane %v3295, %v3310
    %v3313 = vunpack.c.l.s4 1966171168
    %v3314 = vunpack.c.0.s8 %v3313
    %v3315 = vlaneseq
    %v3316 = vshrl.u32 %v3315, 7
    %v3317 = vsub.s32 %v3314, %v3316
    %v3318 = vrot.slane %v3296, %v3317
    %v3320 = vunpack.c.l.s4 1966171168
    %v3321 = vunpack.c.0.s8 %v3320
    %v3322 = vlaneseq
    %v3323 = vshrl.u32 %v3322, 7
    %v3324 = vsub.s32 %v3321, %v3323
    %v3325 = vrot.slane %v3297, %v3324
    %v3326 = vcombine.low %v3304, %v3311
    %v3327 = vcombine.low %v3318, %v3325
    %v3329 = vunpack.c.l.s4 1966171168
    %v3330 = vunpack.c.0.s8 %v3329
    %v3331 = vlaneseq
    %v3332 = vshrl.u32 %v3331, 7
    %v3333 = vsub.s32 %v3330, %v3332
    %v3334 = vrot.slane %v3326, %v3333
    %v3336 = vunpack.c.l.s4 1966171168
    %v3337 = vunpack.c.0.s8 %v3336
    %v3338 = vlaneseq
    %v3339 = vshrl.u32 %v3338, 7
    %v3340 = vsub.s32 %v3337, %v3339
    %v3341 = vrot.slane %v3327, %v3340
    %v3342 = vcombine.low %v3334, %v3341
    %v3343 = vcombine.low %v1281, %v1285
    %v3344 = vcombine.low %v1289, %v1293
    %v3345 = vcombine.low %v1297, %v1301
    %v3346 = vcombine.low %v1305, %v1309
    %v3348 = vunpack.c.l.s4 1966171168
    %v3349 = vunpack.c.0.s8 %v3348
    %v3350 = vlaneseq
    %v3351 = vshrl.u32 %v3350, 7
    %v3352 = vsub.s32 %v3349, %v3351
    %v3353 = vrot.slane %v3343, %v3352
    %v3355 = vunpack.c.l.s4 1966171168
    %v3356 = vunpack.c.0.s8 %v3355
    %v3357 = vlaneseq
    %v3358 = vshrl.u32 %v3357, 7
    %v3359 = vsub.s32 %v3356, %v3358
    %v3360 = vrot.slane %v3344, %v3359
    %v3362 = vunpack.c.l.s4 1966171168
    %v3363 = vunpack.c.0.s8 %v3362
    %v3364 = vlaneseq
    %v3365 = vshrl.u32 %v3364, 7
    %v3366 = vsub.s32 %v3363, %v3365
    %v3367 = vrot.slane %v3345, %v3366
    %v3369 = vunpack.c.l.s4 1966171168
    %v3370 = vunpack.c.0.s8 %v3369
    %v3371 = vlaneseq
    %v3372 = vshrl.u32 %v3371, 7
    %v3373 = vsub.s32 %v3370, %v3372
    %v3374 = vrot.slane %v3346, %v3373
    %v3375 = vcombine.low %v3353, %v3360
    %v3376 = vcombine.low %v3367, %v3374
    %v3378 = vunpack.c.l.s4 1966171168
    %v3379 = vunpack.c.0.s8 %v3378
    %v3380 = vlaneseq
    %v3381 = vshrl.u32 %v3380, 7
    %v3382 = vsub.s32 %v3379, %v3381
    %v3383 = vrot.slane %v3375, %v3382
    %v3385 = vunpack.c.l.s4 1966171168
    %v3386 = vunpack.c.0.s8 %v3385
    %v3387 = vlaneseq
    %v3388 = vshrl.u32 %v3387, 7
    %v3389 = vsub.s32 %v3386, %v3388
    %v3390 = vrot.slane %v3376, %v3389
    %v3391 = vcombine.low %v3383, %v3390
    %v3392 = vcombine.low %v1313, %v1317
    %v3393 = vcombine.low %v1321, %v1325
    %v3394 = vcombine.low %v1329, %v1333
    %v3395 = vcombine.low %v1337, %v1341
    %v3397 = vunpack.c.l.s4 1966171168
    %v3398 = vunpack.c.0.s8 %v3397
    %v3399 = vlaneseq
    %v3400 = vshrl.u32 %v3399, 7
    %v3401 = vsub.s32 %v3398, %v3400
    %v3402 = vrot.slane %v3392, %v3401
    %v3404 = vunpack.c.l.s4 1966171168
    %v3405 = vunpack.c.0.s8 %v3404
    %v3406 = vlaneseq
    %v3407 = vshrl.u32 %v3406, 7
    %v3408 = vsub.s32 %v3405, %v3407
    %v3409 = vrot.slane %v3393, %v3408
    %v3411 = vunpack.c.l.s4 1966171168
    %v3412 = vunpack.c.0.s8 %v3411
    %v3413 = vlaneseq
    %v3414 = vshrl.u32 %v3413, 7
    %v3415 = vsub.s32 %v3412, %v3414
    %v3416 = vrot.slane %v3394, %v3415
    %v3418 = vunpack.c.l.s4 1966171168
    %v3419 = vunpack.c.0.s8 %v3418
    %v3420 = vlaneseq
    %v3421 = vshrl.u32 %v3420, 7
    %v3422 = vsub.s32 %v3419, %v3421
    %v3423 = vrot.slane %v3395, %v3422
    %v3424 = vcombine.low %v3402, %v3409
    %v3425 = vcombine.low %v3416, %v3423
    %v3427 = vunpack.c.l.s4 1966171168
    %v3428 = vunpack.c.0.s8 %v3427
    %v3429 = vlaneseq
    %v3430 = vshrl.u32 %v3429, 7
    %v3431 = vsub.s32 %v3428, %v3430
    %v3432 = vrot.slane %v3424, %v3431
    %v3434 = vunpack.c.l.s4 1966171168
    %v3435 = vunpack.c.0.s8 %v3434
    %v3436 = vlaneseq
    %v3437 = vshrl.u32 %v3436, 7
    %v3438 = vsub.s32 %v3435, %v3437
    %v3439 = vrot.slane %v3425, %v3438
    %v3440 = vcombine.low %v3432, %v3439
    %v3441 = vcombine.low %v1345, %v1349
    %v3442 = vcombine.low %v1353, %v1357
    %v3443 = vcombine.low %v1361, %v1365
    %v3444 = vcombine.low %v1369, %v1373
    %v3446 = vunpack.c.l.s4 1966171168
    %v3447 = vunpack.c.0.s8 %v3446
    %v3448 = vlaneseq
    %v3449 = vshrl.u32 %v3448, 7
    %v3450 = vsub.s32 %v3447, %v3449
    %v3451 = vrot.slane %v3441, %v3450
    %v3453 = vunpack.c.l.s4 1966171168
    %v3454 = vunpack.c.0.s8 %v3453
    %v3455 = vlaneseq
    %v3456 = vshrl.u32 %v3455, 7
    %v3457 = vsub.s32 %v3454, %v3456
    %v3458 = vrot.slane %v3442, %v3457
    %v3460 = vunpack.c.l.s4 1966171168
    %v3461 = vunpack.c.0.s8 %v3460
    %v3462 = vlaneseq
    %v3463 = vshrl.u32 %v3462, 7
    %v3464 = vsub.s32 %v3461, %v3463
    %v3465 = vrot.slane %v3443, %v3464
    %v3467 = vunpack.c.l.s4 1966171168
    %v3468 = vunpack.c.0.s8 %v3467
    %v3469 = vlaneseq
    %v3470 = vshrl.u32 %v3469, 7
    %v3471 = vsub.s32 %v3468, %v3470
    %v3472 = vrot.slane %v3444, %v3471
    %v3473 = vcombine.low %v3451, %v3458
    %v3474 = vcombine.low %v3465, %v3472
    %v3476 = vunpack.c.l.s4 1966171168
    %v3477 = vunpack.c.0.s8 %v3476
    %v3478 = vlaneseq
    %v3479 = vshrl.u32 %v3478, 7
    %v3480 = vsub.s32 %v3477, %v3479
    %v3481 = vrot.slane %v3473, %v3480
    %v3483 = vunpack.c.l.s4 1966171168
    %v3484 = vunpack.c.0.s8 %v3483
    %v3485 = vlaneseq
    %v3486 = vshrl.u32 %v3485, 7
    %v3487 = vsub.s32 %v3484, %v3486
    %v3488 = vrot.slane %v3474, %v3487
    %v3489 = vcombine.low %v3481, %v3488
    %v3490 = vcombine.low %v1377, %v1381
    %v3491 = vcombine.low %v1385, %v1389
    %v3492 = vcombine.low %v1393, %v1397
    %v3493 = vcombine.low %v1401, %v1405
    %v3495 = vunpack.c.l.s4 1966171168
    %v3496 = vunpack.c.0.s8 %v3495
    %v3497 = vlaneseq
    %v3498 = vshrl.u32 %v3497, 7
    %v3499 = vsub.s32 %v3496, %v3498
    %v3500 = vrot.slane %v3490, %v3499
    %v3502 = vunpack.c.l.s4 1966171168
    %v3503 = vunpack.c.0.s8 %v3502
    %v3504 = vlaneseq
    %v3505 = vshrl.u32 %v3504, 7
    %v3506 = vsub.s32 %v3503, %v3505
    %v3507 = vrot.slane %v3491, %v3506
    %v3509 = vunpack.c.l.s4 1966171168
    %v3510 = vunpack.c.0.s8 %v3509
    %v3511 = vlaneseq
    %v3512 = vshrl.u32 %v3511, 7
    %v3513 = vsub.s32 %v3510, %v3512
    %v3514 = vrot.slane %v3492, %v3513
    %v3516 = vunpack.c.l.s4 1966171168
    %v3517 = vunpack.c.0.s8 %v3516
    %v3518 = vlaneseq
    %v3519 = vshrl.u32 %v3518, 7
    %v3520 = vsub.s32 %v3517, %v3519
    %v3521 = vrot.slane %v3493, %v3520
    %v3522 = vcombine.low %v3500, %v3507
    %v3523 = vcombine.low %v3514, %v3521
    %v3525 = vunpack.c.l.s4 1966171168
    %v3526 = vunpack.c.0.s8 %v3525
    %v3527 = vlaneseq
    %v3528 = vshrl.u32 %v3527, 7
    %v3529 = vsub.s32 %v3526, %v3528
    %v3530 = vrot.slane %v3522, %v3529
    %v3532 = vunpack.c.l.s4 1966171168
    %v3533 = vunpack.c.0.s8 %v3532
    %v3534 = vlaneseq
    %v3535 = vshrl.u32 %v3534, 7
    %v3536 = vsub.s32 %v3533, %v3535
    %v3537 = vrot.slane %v3523, %v3536
    %v3538 = vcombine.low %v3530, %v3537
    %v3539 = vcombine.low %v1409, %v1413
    %v3540 = vcombine.low %v1417, %v1421
    %v3541 = vcombine.low %v1425, %v1429
    %v3542 = vcombine.low %v1433, %v1437
    %v3544 = vunpack.c.l.s4 1966171168
    %v3545 = vunpack.c.0.s8 %v3544
    %v3546 = vlaneseq
    %v3547 = vshrl.u32 %v3546, 7
    %v3548 = vsub.s32 %v3545, %v3547
    %v3549 = vrot.slane %v3539, %v3548
    %v3551 = vunpack.c.l.s4 1966171168
    %v3552 = vunpack.c.0.s8 %v3551
    %v3553 = vlaneseq
    %v3554 = vshrl.u32 %v3553, 7
    %v3555 = vsub.s32 %v3552, %v3554
    %v3556 = vrot.slane %v3540, %v3555
    %v3558 = vunpack.c.l.s4 1966171168
    %v3559 = vunpack.c.0.s8 %v3558
    %v3560 = vlaneseq
    %v3561 = vshrl.u32 %v3560, 7
    %v3562 = vsub.s32 %v3559, %v3561
    %v3563 = vrot.slane %v3541, %v3562
    %v3565 = vunpack.c.l.s4 1966171168
    %v3566 = vunpack.c.0.s8 %v3565
    %v3567 = vlaneseq
    %v3568 = vshrl.u32 %v3567, 7
    %v3569 = vsub.s32 %v3566, %v3568
    %v3570 = vrot.slane %v3542, %v3569
    %v3571 = vcombine.low %v3549, %v3556
    %v3572 = vcombine.low %v3563, %v3570
    %v3574 = vunpack.c.l.s4 1966171168
    %v3575 = vunpack.c.0.s8 %v3574
    %v3576 = vlaneseq
    %v3577 = vshrl.u32 %v3576, 7
    %v3578 = vsub.s32 %v3575, %v3577
    %v3579 = vrot.slane %v3571, %v3578
    %v3581 = vunpack.c.l.s4 1966171168
    %v3582 = vunpack.c.0.s8 %v3581
    %v3583 = vlaneseq
    %v3584 = vshrl.u32 %v3583, 7
    %v3585 = vsub.s32 %v3582, %v3584
    %v3586 = vrot.slane %v3572, %v3585
    %v3587 = vcombine.low %v3579, %v3586
    %v3588 = vcombine.low %v1441, %v1445
    %v3589 = vcombine.low %v1449, %v1453
    %v3590 = vcombine.low %v1457, %v1461
    %v3591 = vcombine.low %v1465, %v1469
    %v3593 = vunpack.c.l.s4 1966171168
    %v3594 = vunpack.c.0.s8 %v3593
    %v3595 = vlaneseq
    %v3596 = vshrl.u32 %v3595, 7
    %v3597 = vsub.s32 %v3594, %v3596
    %v3598 = vrot.slane %v3588, %v3597
    %v3600 = vunpack.c.l.s4 1966171168
    %v3601 = vunpack.c.0.s8 %v3600
    %v3602 = vlaneseq
    %v3603 = vshrl.u32 %v3602, 7
    %v3604 = vsub.s32 %v3601, %v3603
    %v3605 = vrot.slane %v3589, %v3604
    %v3607 = vunpack.c.l.s4 1966171168
    %v3608 = vunpack.c.0.s8 %v3607
    %v3609 = vlaneseq
    %v3610 = vshrl.u32 %v3609, 7
    %v3611 = vsub.s32 %v3608, %v3610
    %v3612 = vrot.slane %v3590, %v3611
    %v3614 = vunpack.c.l.s4 1966171168
    %v3615 = vunpack.c.0.s8 %v3614
    %v3616 = vlaneseq
    %v3617 = vshrl.u32 %v3616, 7
    %v3618 = vsub.s32 %v3615, %v3617
    %v3619 = vrot.slane %v3591, %v3618
    %v3620 = vcombine.low %v3598, %v3605
    %v3621 = vcombine.low %v3612, %v3619
    %v3623 = vunpack.c.l.s4 1966171168
    %v3624 = vunpack.c.0.s8 %v3623
    %v3625 = vlaneseq
    %v3626 = vshrl.u32 %v3625, 7
    %v3627 = vsub.s32 %v3624, %v3626
    %v3628 = vrot.slane %v3620, %v3627
    %v3630 = vunpack.c.l.s4 1966171168
    %v3631 = vunpack.c.0.s8 %v3630
    %v3632 = vlaneseq
    %v3633 = vshrl.u32 %v3632, 7
    %v3634 = vsub.s32 %v3631, %v3633
    %v3635 = vrot.slane %v3621, %v3634
    %v3636 = vcombine.low %v3628, %v3635
    %v3637 = vcombine.low %v1473, %v1477
    %v3638 = vcombine.low %v1481, %v1485
    %v3639 = vcombine.low %v1489, %v1493
    %v3640 = vcombine.low %v1497, %v1501
    %v3642 = vunpack.c.l.s4 1966171168
    %v3643 = vunpack.c.0.s8 %v3642
    %v3644 = vlaneseq
    %v3645 = vshrl.u32 %v3644, 7
    %v3646 = vsub.s32 %v3643, %v3645
    %v3647 = vrot.slane %v3637, %v3646
    %v3649 = vunpack.c.l.s4 1966171168
    %v3650 = vunpack.c.0.s8 %v3649
    %v3651 = vlaneseq
    %v3652 = vshrl.u32 %v3651, 7
    %v3653 = vsub.s32 %v3650, %v3652
    %v3654 = vrot.slane %v3638, %v3653
    %v3656 = vunpack.c.l.s4 1966171168
    %v3657 = vunpack.c.0.s8 %v3656
    %v3658 = vlaneseq
    %v3659 = vshrl.u32 %v3658, 7
    %v3660 = vsub.s32 %v3657, %v3659
    %v3661 = vrot.slane %v3639, %v3660
    %v3663 = vunpack.c.l.s4 1966171168
    %v3664 = vunpack.c.0.s8 %v3663
    %v3665 = vlaneseq
    %v3666 = vshrl.u32 %v3665, 7
    %v3667 = vsub.s32 %v3664, %v3666
    %v3668 = vrot.slane %v3640, %v3667
    %v3669 = vcombine.low %v3647, %v3654
    %v3670 = vcombine.low %v3661, %v3668
    %v3672 = vunpack.c.l.s4 1966171168
    %v3673 = vunpack.c.0.s8 %v3672
    %v3674 = vlaneseq
    %v3675 = vshrl.u32 %v3674, 7
    %v3676 = vsub.s32 %v3673, %v3675
    %v3677 = vrot.slane %v3669, %v3676
    %v3679 = vunpack.c.l.s4 1966171168
    %v3680 = vunpack.c.0.s8 %v3679
    %v3681 = vlaneseq
    %v3682 = vshrl.u32 %v3681, 7
    %v3683 = vsub.s32 %v3680, %v3682
    %v3684 = vrot.slane %v3670, %v3683
    %v3685 = vcombine.low %v3677, %v3684
    %v3686 = vcombine.low %v1505, %v1509
    %v3687 = vcombine.low %v1513, %v1517
    %v3688 = vcombine.low %v1521, %v1525
    %v3689 = vcombine.low %v1529, %v1533
    %v3691 = vunpack.c.l.s4 1966171168
    %v3692 = vunpack.c.0.s8 %v3691
    %v3693 = vlaneseq
    %v3694 = vshrl.u32 %v3693, 7
    %v3695 = vsub.s32 %v3692, %v3694
    %v3696 = vrot.slane %v3686, %v3695
    %v3698 = vunpack.c.l.s4 1966171168
    %v3699 = vunpack.c.0.s8 %v3698
    %v3700 = vlaneseq
    %v3701 = vshrl.u32 %v3700, 7
    %v3702 = vsub.s32 %v3699, %v3701
    %v3703 = vrot.slane %v3687, %v3702
    %v3705 = vunpack.c.l.s4 1966171168
    %v3706 = vunpack.c.0.s8 %v3705
    %v3707 = vlaneseq
    %v3708 = vshrl.u32 %v3707, 7
    %v3709 = vsub.s32 %v3706, %v3708
    %v3710 = vrot.slane %v3688, %v3709
    %v3712 = vunpack.c.l.s4 1966171168
    %v3713 = vunpack.c.0.s8 %v3712
    %v3714 = vlaneseq
    %v3715 = vshrl.u32 %v3714, 7
    %v3716 = vsub.s32 %v3713, %v3715
    %v3717 = vrot.slane %v3689, %v3716
    %v3718 = vcombine.low %v3696, %v3703
    %v3719 = vcombine.low %v3710, %v3717
    %v3721 = vunpack.c.l.s4 1966171168
    %v3722 = vunpack.c.0.s8 %v3721
    %v3723 = vlaneseq
    %v3724 = vshrl.u32 %v3723, 7
    %v3725 = vsub.s32 %v3722, %v3724
    %v3726 = vrot.slane %v3718, %v3725
    %v3728 = vunpack.c.l.s4 1966171168
    %v3729 = vunpack.c.0.s8 %v3728
    %v3730 = vlaneseq
    %v3731 = vshrl.u32 %v3730, 7
    %v3732 = vsub.s32 %v3729, %v3731
    %v3733 = vrot.slane %v3719, %v3732
    %v3734 = vcombine.low %v3726, %v3733
    %v3735 = vcombine.low %v1537, %v1541
    %v3736 = vcombine.low %v1545, %v1549
    %v3737 = vcombine.low %v1553, %v1557
    %v3738 = vcombine.low %v1561, %v1565
    %v3740 = vunpack.c.l.s4 1966171168
    %v3741 = vunpack.c.0.s8 %v3740
    %v3742 = vlaneseq
    %v3743 = vshrl.u32 %v3742, 7
    %v3744 = vsub.s32 %v3741, %v3743
    %v3745 = vrot.slane %v3735, %v3744
    %v3747 = vunpack.c.l.s4 1966171168
    %v3748 = vunpack.c.0.s8 %v3747
    %v3749 = vlaneseq
    %v3750 = vshrl.u32 %v3749, 7
    %v3751 = vsub.s32 %v3748, %v3750
    %v3752 = vrot.slane %v3736, %v3751
    %v3754 = vunpack.c.l.s4 1966171168
    %v3755 = vunpack.c.0.s8 %v3754
    %v3756 = vlaneseq
    %v3757 = vshrl.u32 %v3756, 7
    %v3758 = vsub.s32 %v3755, %v3757
    %v3759 = vrot.slane %v3737, %v3758
    %v3761 = vunpack.c.l.s4 1966171168
    %v3762 = vunpack.c.0.s8 %v3761
    %v3763 = vlaneseq
    %v3764 = vshrl.u32 %v3763, 7
    %v3765 = vsub.s32 %v3762, %v3764
    %v3766 = vrot.slane %v3738, %v3765
    %v3767 = vcombine.low %v3745, %v3752
    %v3768 = vcombine.low %v3759, %v3766
    %v3770 = vunpack.c.l.s4 1966171168
    %v3771 = vunpack.c.0.s8 %v3770
    %v3772 = vlaneseq
    %v3773 = vshrl.u32 %v3772, 7
    %v3774 = vsub.s32 %v3771, %v3773
    %v3775 = vrot.slane %v3767, %v3774
    %v3777 = vunpack.c.l.s4 1966171168
    %v3778 = vunpack.c.0.s8 %v3777
    %v3779 = vlaneseq
    %v3780 = vshrl.u32 %v3779, 7
    %v3781 = vsub.s32 %v3778, %v3780
    %v3782 = vrot.slane %v3768, %v3781
    %v3783 = vcombine.low %v3775, %v3782
    %v3784 = vcombine.low %v1569, %v1573
    %v3785 = vcombine.low %v1577, %v1581
    %v3786 = vcombine.low %v1585, %v1589
    %v3787 = vcombine.low %v1593, %v1597
    %v3789 = vunpack.c.l.s4 1966171168
    %v3790 = vunpack.c.0.s8 %v3789
    %v3791 = vlaneseq
    %v3792 = vshrl.u32 %v3791, 7
    %v3793 = vsub.s32 %v3790, %v3792
    %v3794 = vrot.slane %v3784, %v3793
    %v3796 = vunpack.c.l.s4 1966171168
    %v3797 = vunpack.c.0.s8 %v3796
    %v3798 = vlaneseq
    %v3799 = vshrl.u32 %v3798, 7
    %v3800 = vsub.s32 %v3797, %v3799
    %v3801 = vrot.slane %v3785, %v3800
    %v3803 = vunpack.c.l.s4 1966171168
    %v3804 = vunpack.c.0.s8 %v3803
    %v3805 = vlaneseq
    %v3806 = vshrl.u32 %v3805, 7
    %v3807 = vsub.s32 %v3804, %v3806
    %v3808 = vrot.slane %v3786, %v3807
    %v3810 = vunpack.c.l.s4 1966171168
    %v3811 = vunpack.c.0.s8 %v3810
    %v3812 = vlaneseq
    %v3813 = vshrl.u32 %v3812, 7
    %v3814 = vsub.s32 %v3811, %v3813
    %v3815 = vrot.slane %v3787, %v3814
    %v3816 = vcombine.low %v3794, %v3801
    %v3817 = vcombine.low %v3808, %v3815
    %v3819 = vunpack.c.l.s4 1966171168
    %v3820 = vunpack.c.0.s8 %v3819
    %v3821 = vlaneseq
    %v3822 = vshrl.u32 %v3821, 7
    %v3823 = vsub.s32 %v3820, %v3822
    %v3824 = vrot.slane %v3816, %v3823
    %v3826 = vunpack.c.l.s4 1966171168
    %v3827 = vunpack.c.0.s8 %v3826
    %v3828 = vlaneseq
    %v3829 = vshrl.u32 %v3828, 7
    %v3830 = vsub.s32 %v3827, %v3829
    %v3831 = vrot.slane %v3817, %v3830
    %v3832 = vcombine.low %v3824, %v3831
    %v3833 = vcombine.low %v1601, %v1605
    %v3834 = vcombine.low %v1609, %v1613
    %v3835 = vcombine.low %v1617, %v1621
    %v3836 = vcombine.low %v1625, %v1629
    %v3838 = vunpack.c.l.s4 1966171168
    %v3839 = vunpack.c.0.s8 %v3838
    %v3840 = vlaneseq
    %v3841 = vshrl.u32 %v3840, 7
    %v3842 = vsub.s32 %v3839, %v3841
    %v3843 = vrot.slane %v3833, %v3842
    %v3845 = vunpack.c.l.s4 1966171168
    %v3846 = vunpack.c.0.s8 %v3845
    %v3847 = vlaneseq
    %v3848 = vshrl.u32 %v3847, 7
    %v3849 = vsub.s32 %v3846, %v3848
    %v3850 = vrot.slane %v3834, %v3849
    %v3852 = vunpack.c.l.s4 1966171168
    %v3853 = vunpack.c.0.s8 %v3852
    %v3854 = vlaneseq
    %v3855 = vshrl.u32 %v3854, 7
    %v3856 = vsub.s32 %v3853, %v3855
    %v3857 = vrot.slane %v3835, %v3856
    %v3859 = vunpack.c.l.s4 1966171168
    %v3860 = vunpack.c.0.s8 %v3859
    %v3861 = vlaneseq
    %v3862 = vshrl.u32 %v3861, 7
    %v3863 = vsub.s32 %v3860, %v3862
    %v3864 = vrot.slane %v3836, %v3863
    %v3865 = vcombine.low %v3843, %v3850
    %v3866 = vcombine.low %v3857, %v3864
    %v3868 = vunpack.c.l.s4 1966171168
    %v3869 = vunpack.c.0.s8 %v3868
    %v3870 = vlaneseq
    %v3871 = vshrl.u32 %v3870, 7
    %v3872 = vsub.s32 %v3869, %v3871
    %v3873 = vrot.slane %v3865, %v3872
    %v3875 = vunpack.c.l.s4 1966171168
    %v3876 = vunpack.c.0.s8 %v3875
    %v3877 = vlaneseq
    %v3878 = vshrl.u32 %v3877, 7
    %v3879 = vsub.s32 %v3876, %v3878
    %v3880 = vrot.slane %v3866, %v3879
    %v3881 = vcombine.low %v3873, %v3880
    %v3882 = vcombine.low %v1633, %v1637
    %v3883 = vcombine.low %v1641, %v1645
    %v3884 = vcombine.low %v1649, %v1653
    %v3885 = vcombine.low %v1657, %v1661
    %v3887 = vunpack.c.l.s4 1966171168
    %v3888 = vunpack.c.0.s8 %v3887
    %v3889 = vlaneseq
    %v3890 = vshrl.u32 %v3889, 7
    %v3891 = vsub.s32 %v3888, %v3890
    %v3892 = vrot.slane %v3882, %v3891
    %v3894 = vunpack.c.l.s4 1966171168
    %v3895 = vunpack.c.0.s8 %v3894
    %v3896 = vlaneseq
    %v3897 = vshrl.u32 %v3896, 7
    %v3898 = vsub.s32 %v3895, %v3897
    %v3899 = vrot.slane %v3883, %v3898
    %v3901 = vunpack.c.l.s4 1966171168
    %v3902 = vunpack.c.0.s8 %v3901
    %v3903 = vlaneseq
    %v3904 = vshrl.u32 %v3903, 7
    %v3905 = vsub.s32 %v3902, %v3904
    %v3906 = vrot.slane %v3884, %v3905
    %v3908 = vunpack.c.l.s4 1966171168
    %v3909 = vunpack.c.0.s8 %v3908
    %v3910 = vlaneseq
    %v3911 = vshrl.u32 %v3910, 7
    %v3912 = vsub.s32 %v3909, %v3911
    %v3913 = vrot.slane %v3885, %v3912
    %v3914 = vcombine.low %v3892, %v3899
    %v3915 = vcombine.low %v3906, %v3913
    %v3917 = vunpack.c.l.s4 1966171168
    %v3918 = vunpack.c.0.s8 %v3917
    %v3919 = vlaneseq
    %v3920 = vshrl.u32 %v3919, 7
    %v3921 = vsub.s32 %v3918, %v3920
    %v3922 = vrot.slane %v3914, %v3921
    %v3924 = vunpack.c.l.s4 1966171168
    %v3925 = vunpack.c.0.s8 %v3924
    %v3926 = vlaneseq
    %v3927 = vshrl.u32 %v3926, 7
    %v3928 = vsub.s32 %v3925, %v3927
    %v3929 = vrot.slane %v3915, %v3928
    %v3930 = vcombine.low %v3922, %v3929
    %v3931 = vcombine.low %v1665, %v1669
    %v3932 = vcombine.low %v1673, %v1677
    %v3933 = vcombine.low %v1681, %v1685
    %v3934 = vcombine.low %v1689, %v1693
    %v3936 = vunpack.c.l.s4 1966171168
    %v3937 = vunpack.c.0.s8 %v3936
    %v3938 = vlaneseq
    %v3939 = vshrl.u32 %v3938, 7
    %v3940 = vsub.s32 %v3937, %v3939
    %v3941 = vrot.slane %v3931, %v3940
    %v3943 = vunpack.c.l.s4 1966171168
    %v3944 = vunpack.c.0.s8 %v3943
    %v3945 = vlaneseq
    %v3946 = vshrl.u32 %v3945, 7
    %v3947 = vsub.s32 %v3944, %v3946
    %v3948 = vrot.slane %v3932, %v3947
    %v3950 = vunpack.c.l.s4 1966171168
    %v3951 = vunpack.c.0.s8 %v3950
    %v3952 = vlaneseq
    %v3953 = vshrl.u32 %v3952, 7
    %v3954 = vsub.s32 %v3951, %v3953
    %v3955 = vrot.slane %v3933, %v3954
    %v3957 = vunpack.c.l.s4 1966171168
    %v3958 = vunpack.c.0.s8 %v3957
    %v3959 = vlaneseq
    %v3960 = vshrl.u32 %v3959, 7
    %v3961 = vsub.s32 %v3958, %v3960
    %v3962 = vrot.slane %v3934, %v3961
    %v3963 = vcombine.low %v3941, %v3948
    %v3964 = vcombine.low %v3955, %v3962
    %v3966 = vunpack.c.l.s4 1966171168
    %v3967 = vunpack.c.0.s8 %v3966
    %v3968 = vlaneseq
    %v3969 = vshrl.u32 %v3968, 7
    %v3970 = vsub.s32 %v3967, %v3969
    %v3971 = vrot.slane %v3963, %v3970
    %v3973 = vunpack.c.l.s4 1966171168
    %v3974 = vunpack.c.0.s8 %v3973
    %v3975 = vlaneseq
    %v3976 = vshrl.u32 %v3975, 7
    %v3977 = vsub.s32 %v3974, %v3976
    %v3978 = vrot.slane %v3964, %v3977
    %v3979 = vcombine.low %v3971, %v3978
    %v3980 = vcombine.low %v1697, %v1701
    %v3981 = vcombine.low %v1705, %v1709
    %v3982 = vcombine.low %v1713, %v1717
    %v3983 = vcombine.low %v1721, %v1725
    %v3985 = vunpack.c.l.s4 1966171168
    %v3986 = vunpack.c.0.s8 %v3985
    %v3987 = vlaneseq
    %v3988 = vshrl.u32 %v3987, 7
    %v3989 = vsub.s32 %v3986, %v3988
    %v3990 = vrot.slane %v3980, %v3989
    %v3992 = vunpack.c.l.s4 1966171168
    %v3993 = vunpack.c.0.s8 %v3992
    %v3994 = vlaneseq
    %v3995 = vshrl.u32 %v3994, 7
    %v3996 = vsub.s32 %v3993, %v3995
    %v3997 = vrot.slane %v3981, %v3996
    %v3999 = vunpack.c.l.s4 1966171168
    %v4000 = vunpack.c.0.s8 %v3999
    %v4001 = vlaneseq
    %v4002 = vshrl.u32 %v4001, 7
    %v4003 = vsub.s32 %v4000, %v4002
    %v4004 = vrot.slane %v3982, %v4003
    %v4006 = vunpack.c.l.s4 1966171168
    %v4007 = vunpack.c.0.s8 %v4006
    %v4008 = vlaneseq
    %v4009 = vshrl.u32 %v4008, 7
    %v4010 = vsub.s32 %v4007, %v4009
    %v4011 = vrot.slane %v3983, %v4010
    %v4012 = vcombine.low %v3990, %v3997
    %v4013 = vcombine.low %v4004, %v4011
    %v4015 = vunpack.c.l.s4 1966171168
    %v4016 = vunpack.c.0.s8 %v4015
    %v4017 = vlaneseq
    %v4018 = vshrl.u32 %v4017, 7
    %v4019 = vsub.s32 %v4016, %v4018
    %v4020 = vrot.slane %v4012, %v4019
    %v4022 = vunpack.c.l.s4 1966171168
    %v4023 = vunpack.c.0.s8 %v4022
    %v4024 = vlaneseq
    %v4025 = vshrl.u32 %v4024, 7
    %v4026 = vsub.s32 %v4023, %v4025
    %v4027 = vrot.slane %v4013, %v4026
    %v4028 = vcombine.low %v4020, %v4027
    %v4029 = vcombine.low %v1729, %v1733
    %v4030 = vcombine.low %v1737, %v1741
    %v4031 = vcombine.low %v1745, %v1749
    %v4032 = vcombine.low %v1753, %v1757
    %v4034 = vunpack.c.l.s4 1966171168
    %v4035 = vunpack.c.0.s8 %v4034
    %v4036 = vlaneseq
    %v4037 = vshrl.u32 %v4036, 7
    %v4038 = vsub.s32 %v4035, %v4037
    %v4039 = vrot.slane %v4029, %v4038
    %v4041 = vunpack.c.l.s4 1966171168
    %v4042 = vunpack.c.0.s8 %v4041
    %v4043 = vlaneseq
    %v4044 = vshrl.u32 %v4043, 7
    %v4045 = vsub.s32 %v4042, %v4044
    %v4046 = vrot.slane %v4030, %v4045
    %v4048 = vunpack.c.l.s4 1966171168
    %v4049 = vunpack.c.0.s8 %v4048
    %v4050 = vlaneseq
    %v4051 = vshrl.u32 %v4050, 7
    %v4052 = vsub.s32 %v4049, %v4051
    %v4053 = vrot.slane %v4031, %v4052
    %v4055 = vunpack.c.l.s4 1966171168
    %v4056 = vunpack.c.0.s8 %v4055
    %v4057 = vlaneseq
    %v4058 = vshrl.u32 %v4057, 7
    %v4059 = vsub.s32 %v4056, %v4058
    %v4060 = vrot.slane %v4032, %v4059
    %v4061 = vcombine.low %v4039, %v4046
    %v4062 = vcombine.low %v4053, %v4060
    %v4064 = vunpack.c.l.s4 1966171168
    %v4065 = vunpack.c.0.s8 %v4064
    %v4066 = vlaneseq
    %v4067 = vshrl.u32 %v4066, 7
    %v4068 = vsub.s32 %v4065, %v4067
    %v4069 = vrot.slane %v4061, %v4068
    %v4071 = vunpack.c.l.s4 1966171168
    %v4072 = vunpack.c.0.s8 %v4071
    %v4073 = vlaneseq
    %v4074 = vshrl.u32 %v4073, 7
    %v4075 = vsub.s32 %v4072, %v4074
    %v4076 = vrot.slane %v4062, %v4075
    %v4077 = vcombine.low %v4069, %v4076
    %v4078 = vcombine.low %v1761, %v1765
    %v4079 = vcombine.low %v1769, %v1773
    %v4080 = vcombine.low %v1777, %v1781
    %v4081 = vcombine.low %v1785, %v1789
    %v4083 = vunpack.c.l.s4 1966171168
    %v4084 = vunpack.c.0.s8 %v4083
    %v4085 = vlaneseq
    %v4086 = vshrl.u32 %v4085, 7
    %v4087 = vsub.s32 %v4084, %v4086
    %v4088 = vrot.slane %v4078, %v4087
    %v4090 = vunpack.c.l.s4 1966171168
    %v4091 = vunpack.c.0.s8 %v4090
    %v4092 = vlaneseq
    %v4093 = vshrl.u32 %v4092, 7
    %v4094 = vsub.s32 %v4091, %v4093
    %v4095 = vrot.slane %v4079, %v4094
    %v4097 = vunpack.c.l.s4 1966171168
    %v4098 = vunpack.c.0.s8 %v4097
    %v4099 = vlaneseq
    %v4100 = vshrl.u32 %v4099, 7
    %v4101 = vsub.s32 %v4098, %v4100
    %v4102 = vrot.slane %v4080, %v4101
    %v4104 = vunpack.c.l.s4 1966171168
    %v4105 = vunpack.c.0.s8 %v4104
    %v4106 = vlaneseq
    %v4107 = vshrl.u32 %v4106, 7
    %v4108 = vsub.s32 %v4105, %v4107
    %v4109 = vrot.slane %v4081, %v4108
    %v4110 = vcombine.low %v4088, %v4095
    %v4111 = vcombine.low %v4102, %v4109
    %v4113 = vunpack.c.l.s4 1966171168
    %v4114 = vunpack.c.0.s8 %v4113
    %v4115 = vlaneseq
    %v4116 = vshrl.u32 %v4115, 7
    %v4117 = vsub.s32 %v4114, %v4116
    %v4118 = vrot.slane %v4110, %v4117
    %v4120 = vunpack.c.l.s4 1966171168
    %v4121 = vunpack.c.0.s8 %v4120
    %v4122 = vlaneseq
    %v4123 = vshrl.u32 %v4122, 7
    %v4124 = vsub.s32 %v4121, %v4123
    %v4125 = vrot.slane %v4111, %v4124
    %v4126 = vcombine.low %v4118, %v4125
    %v4127 = vcombine.low %v1793, %v1797
    %v4128 = vcombine.low %v1801, %v1805
    %v4129 = vcombine.low %v1809, %v1813
    %v4130 = vcombine.low %v1817, %v1821
    %v4132 = vunpack.c.l.s4 1966171168
    %v4133 = vunpack.c.0.s8 %v4132
    %v4134 = vlaneseq
    %v4135 = vshrl.u32 %v4134, 7
    %v4136 = vsub.s32 %v4133, %v4135
    %v4137 = vrot.slane %v4127, %v4136
    %v4139 = vunpack.c.l.s4 1966171168
    %v4140 = vunpack.c.0.s8 %v4139
    %v4141 = vlaneseq
    %v4142 = vshrl.u32 %v4141, 7
    %v4143 = vsub.s32 %v4140, %v4142
    %v4144 = vrot.slane %v4128, %v4143
    %v4146 = vunpack.c.l.s4 1966171168
    %v4147 = vunpack.c.0.s8 %v4146
    %v4148 = vlaneseq
    %v4149 = vshrl.u32 %v4148, 7
    %v4150 = vsub.s32 %v4147, %v4149
    %v4151 = vrot.slane %v4129, %v4150
    %v4153 = vunpack.c.l.s4 1966171168
    %v4154 = vunpack.c.0.s8 %v4153
    %v4155 = vlaneseq
    %v4156 = vshrl.u32 %v4155, 7
    %v4157 = vsub.s32 %v4154, %v4156
    %v4158 = vrot.slane %v4130, %v4157
    %v4159 = vcombine.low %v4137, %v4144
    %v4160 = vcombine.low %v4151, %v4158
    %v4162 = vunpack.c.l.s4 1966171168
    %v4163 = vunpack.c.0.s8 %v4162
    %v4164 = vlaneseq
    %v4165 = vshrl.u32 %v4164, 7
    %v4166 = vsub.s32 %v4163, %v4165
    %v4167 = vrot.slane %v4159, %v4166
    %v4169 = vunpack.c.l.s4 1966171168
    %v4170 = vunpack.c.0.s8 %v4169
    %v4171 = vlaneseq
    %v4172 = vshrl.u32 %v4171, 7
    %v4173 = vsub.s32 %v4170, %v4172
    %v4174 = vrot.slane %v4160, %v4173
    %v4175 = vcombine.low %v4167, %v4174
    %v4176 = vcombine.low %v1825, %v1829
    %v4177 = vcombine.low %v1833, %v1837
    %v4178 = vcombine.low %v1841, %v1845
    %v4179 = vcombine.low %v1849, %v1853
    %v4181 = vunpack.c.l.s4 1966171168
    %v4182 = vunpack.c.0.s8 %v4181
    %v4183 = vlaneseq
    %v4184 = vshrl.u32 %v4183, 7
    %v4185 = vsub.s32 %v4182, %v4184
    %v4186 = vrot.slane %v4176, %v4185
    %v4188 = vunpack.c.l.s4 1966171168
    %v4189 = vunpack.c.0.s8 %v4188
    %v4190 = vlaneseq
    %v4191 = vshrl.u32 %v4190, 7
    %v4192 = vsub.s32 %v4189, %v4191
    %v4193 = vrot.slane %v4177, %v4192
    %v4195 = vunpack.c.l.s4 1966171168
    %v4196 = vunpack.c.0.s8 %v4195
    %v4197 = vlaneseq
    %v4198 = vshrl.u32 %v4197, 7
    %v4199 = vsub.s32 %v4196, %v4198
    %v4200 = vrot.slane %v4178, %v4199
    %v4202 = vunpack.c.l.s4 1966171168
    %v4203 = vunpack.c.0.s8 %v4202
    %v4204 = vlaneseq
    %v4205 = vshrl.u32 %v4204, 7
    %v4206 = vsub.s32 %v4203, %v4205
    %v4207 = vrot.slane %v4179, %v4206
    %v4208 = vcombine.low %v4186, %v4193
    %v4209 = vcombine.low %v4200, %v4207
    %v4211 = vunpack.c.l.s4 1966171168
    %v4212 = vunpack.c.0.s8 %v4211
    %v4213 = vlaneseq
    %v4214 = vshrl.u32 %v4213, 7
    %v4215 = vsub.s32 %v4212, %v4214
    %v4216 = vrot.slane %v4208, %v4215
    %v4218 = vunpack.c.l.s4 1966171168
    %v4219 = vunpack.c.0.s8 %v4218
    %v4220 = vlaneseq
    %v4221 = vshrl.u32 %v4220, 7
    %v4222 = vsub.s32 %v4219, %v4221
    %v4223 = vrot.slane %v4209, %v4222
    %v4224 = vcombine.low %v4216, %v4223
    %v4225 = vcombine.low %v1857, %v1861
    %v4226 = vcombine.low %v1865, %v1869
    %v4227 = vcombine.low %v1873, %v1877
    %v4228 = vcombine.low %v1881, %v1885
    %v4230 = vunpack.c.l.s4 1966171168
    %v4231 = vunpack.c.0.s8 %v4230
    %v4232 = vlaneseq
    %v4233 = vshrl.u32 %v4232, 7
    %v4234 = vsub.s32 %v4231, %v4233
    %v4235 = vrot.slane %v4225, %v4234
    %v4237 = vunpack.c.l.s4 1966171168
    %v4238 = vunpack.c.0.s8 %v4237
    %v4239 = vlaneseq
    %v4240 = vshrl.u32 %v4239, 7
    %v4241 = vsub.s32 %v4238, %v4240
    %v4242 = vrot.slane %v4226, %v4241
    %v4244 = vunpack.c.l.s4 1966171168
    %v4245 = vunpack.c.0.s8 %v4244
    %v4246 = vlaneseq
    %v4247 = vshrl.u32 %v4246, 7
    %v4248 = vsub.s32 %v4245, %v4247
    %v4249 = vrot.slane %v4227, %v4248
    %v4251 = vunpack.c.l.s4 1966171168
    %v4252 = vunpack.c.0.s8 %v4251
    %v4253 = vlaneseq
    %v4254 = vshrl.u32 %v4253, 7
    %v4255 = vsub.s32 %v4252, %v4254
    %v4256 = vrot.slane %v4228, %v4255
    %v4257 = vcombine.low %v4235, %v4242
    %v4258 = vcombine.low %v4249, %v4256
    %v4260 = vunpack.c.l.s4 1966171168
    %v4261 = vunpack.c.0.s8 %v4260
    %v4262 = vlaneseq
    %v4263 = vshrl.u32 %v4262, 7
    %v4264 = vsub.s32 %v4261, %v4263
    %v4265 = vrot.slane %v4257, %v4264
    %v4267 = vunpack.c.l.s4 1966171168
    %v4268 = vunpack.c.0.s8 %v4267
    %v4269 = vlaneseq
    %v4270 = vshrl.u32 %v4269, 7
    %v4271 = vsub.s32 %v4268, %v4270
    %v4272 = vrot.slane %v4258, %v4271
    %v4273 = vcombine.low %v4265, %v4272
    %v4274 = vcombine.low %v1889, %v1893
    %v4275 = vcombine.low %v1897, %v1901
    %v4276 = vcombine.low %v1905, %v1909
    %v4277 = vcombine.low %v1913, %v1917
    %v4279 = vunpack.c.l.s4 1966171168
    %v4280 = vunpack.c.0.s8 %v4279
    %v4281 = vlaneseq
    %v4282 = vshrl.u32 %v4281, 7
    %v4283 = vsub.s32 %v4280, %v4282
    %v4284 = vrot.slane %v4274, %v4283
    %v4286 = vunpack.c.l.s4 1966171168
    %v4287 = vunpack.c.0.s8 %v4286
    %v4288 = vlaneseq
    %v4289 = vshrl.u32 %v4288, 7
    %v4290 = vsub.s32 %v4287, %v4289
    %v4291 = vrot.slane %v4275, %v4290
    %v4293 = vunpack.c.l.s4 1966171168
    %v4294 = vunpack.c.0.s8 %v4293
    %v4295 = vlaneseq
    %v4296 = vshrl.u32 %v4295, 7
    %v4297 = vsub.s32 %v4294, %v4296
    %v4298 = vrot.slane %v4276, %v4297
    %v4300 = vunpack.c.l.s4 1966171168
    %v4301 = vunpack.c.0.s8 %v4300
    %v4302 = vlaneseq
    %v4303 = vshrl.u32 %v4302, 7
    %v4304 = vsub.s32 %v4301, %v4303
    %v4305 = vrot.slane %v4277, %v4304
    %v4306 = vcombine.low %v4284, %v4291
    %v4307 = vcombine.low %v4298, %v4305
    %v4309 = vunpack.c.l.s4 1966171168
    %v4310 = vunpack.c.0.s8 %v4309
    %v4311 = vlaneseq
    %v4312 = vshrl.u32 %v4311, 7
    %v4313 = vsub.s32 %v4310, %v4312
    %v4314 = vrot.slane %v4306, %v4313
    %v4316 = vunpack.c.l.s4 1966171168
    %v4317 = vunpack.c.0.s8 %v4316
    %v4318 = vlaneseq
    %v4319 = vshrl.u32 %v4318, 7
    %v4320 = vsub.s32 %v4317, %v4319
    %v4321 = vrot.slane %v4307, %v4320
    %v4322 = vcombine.low %v4314, %v4321
    %v4323 = vcombine.low %v1921, %v1925
    %v4324 = vcombine.low %v1929, %v1933
    %v4325 = vcombine.low %v1937, %v1941
    %v4326 = vcombine.low %v1945, %v1949
    %v4328 = vunpack.c.l.s4 1966171168
    %v4329 = vunpack.c.0.s8 %v4328
    %v4330 = vlaneseq
    %v4331 = vshrl.u32 %v4330, 7
    %v4332 = vsub.s32 %v4329, %v4331
    %v4333 = vrot.slane %v4323, %v4332
    %v4335 = vunpack.c.l.s4 1966171168
    %v4336 = vunpack.c.0.s8 %v4335
    %v4337 = vlaneseq
    %v4338 = vshrl.u32 %v4337, 7
    %v4339 = vsub.s32 %v4336, %v4338
    %v4340 = vrot.slane %v4324, %v4339
    %v4342 = vunpack.c.l.s4 1966171168
    %v4343 = vunpack.c.0.s8 %v4342
    %v4344 = vlaneseq
    %v4345 = vshrl.u32 %v4344, 7
    %v4346 = vsub.s32 %v4343, %v4345
    %v4347 = vrot.slane %v4325, %v4346
    %v4349 = vunpack.c.l.s4 1966171168
    %v4350 = vunpack.c.0.s8 %v4349
    %v4351 = vlaneseq
    %v4352 = vshrl.u32 %v4351, 7
    %v4353 = vsub.s32 %v4350, %v4352
    %v4354 = vrot.slane %v4326, %v4353
    %v4355 = vcombine.low %v4333, %v4340
    %v4356 = vcombine.low %v4347, %v4354
    %v4358 = vunpack.c.l.s4 1966171168
    %v4359 = vunpack.c.0.s8 %v4358
    %v4360 = vlaneseq
    %v4361 = vshrl.u32 %v4360, 7
    %v4362 = vsub.s32 %v4359, %v4361
    %v4363 = vrot.slane %v4355, %v4362
    %v4365 = vunpack.c.l.s4 1966171168
    %v4366 = vunpack.c.0.s8 %v4365
    %v4367 = vlaneseq
    %v4368 = vshrl.u32 %v4367, 7
    %v4369 = vsub.s32 %v4366, %v4368
    %v4370 = vrot.slane %v4356, %v4369
    %v4371 = vcombine.low %v4363, %v4370
    %v4372 = vcombine.low %v1953, %v1957
    %v4373 = vcombine.low %v1961, %v1965
    %v4374 = vcombine.low %v1969, %v1973
    %v4375 = vcombine.low %v1977, %v1981
    %v4377 = vunpack.c.l.s4 1966171168
    %v4378 = vunpack.c.0.s8 %v4377
    %v4379 = vlaneseq
    %v4380 = vshrl.u32 %v4379, 7
    %v4381 = vsub.s32 %v4378, %v4380
    %v4382 = vrot.slane %v4372, %v4381
    %v4384 = vunpack.c.l.s4 1966171168
    %v4385 = vunpack.c.0.s8 %v4384
    %v4386 = vlaneseq
    %v4387 = vshrl.u32 %v4386, 7
    %v4388 = vsub.s32 %v4385, %v4387
    %v4389 = vrot.slane %v4373, %v4388
    %v4391 = vunpack.c.l.s4 1966171168
    %v4392 = vunpack.c.0.s8 %v4391
    %v4393 = vlaneseq
    %v4394 = vshrl.u32 %v4393, 7
    %v4395 = vsub.s32 %v4392, %v4394
    %v4396 = vrot.slane %v4374, %v4395
    %v4398 = vunpack.c.l.s4 1966171168
    %v4399 = vunpack.c.0.s8 %v4398
    %v4400 = vlaneseq
    %v4401 = vshrl.u32 %v4400, 7
    %v4402 = vsub.s32 %v4399, %v4401
    %v4403 = vrot.slane %v4375, %v4402
    %v4404 = vcombine.low %v4382, %v4389
    %v4405 = vcombine.low %v4396, %v4403
    %v4407 = vunpack.c.l.s4 1966171168
    %v4408 = vunpack.c.0.s8 %v4407
    %v4409 = vlaneseq
    %v4410 = vshrl.u32 %v4409, 7
    %v4411 = vsub.s32 %v4408, %v4410
    %v4412 = vrot.slane %v4404, %v4411
    %v4414 = vunpack.c.l.s4 1966171168
    %v4415 = vunpack.c.0.s8 %v4414
    %v4416 = vlaneseq
    %v4417 = vshrl.u32 %v4416, 7
    %v4418 = vsub.s32 %v4415, %v4417
    %v4419 = vrot.slane %v4405, %v4418
    %v4420 = vcombine.low %v4412, %v4419
    %v4421 = vcombine.low %v1985, %v1989
    %v4422 = vcombine.low %v1993, %v1997
    %v4423 = vcombine.low %v2001, %v2005
    %v4424 = vcombine.low %v2009, %v2013
    %v4426 = vunpack.c.l.s4 1966171168
    %v4427 = vunpack.c.0.s8 %v4426
    %v4428 = vlaneseq
    %v4429 = vshrl.u32 %v4428, 7
    %v4430 = vsub.s32 %v4427, %v4429
    %v4431 = vrot.slane %v4421, %v4430
    %v4433 = vunpack.c.l.s4 1966171168
    %v4434 = vunpack.c.0.s8 %v4433
    %v4435 = vlaneseq
    %v4436 = vshrl.u32 %v4435, 7
    %v4437 = vsub.s32 %v4434, %v4436
    %v4438 = vrot.slane %v4422, %v4437
    %v4440 = vunpack.c.l.s4 1966171168
    %v4441 = vunpack.c.0.s8 %v4440
    %v4442 = vlaneseq
    %v4443 = vshrl.u32 %v4442, 7
    %v4444 = vsub.s32 %v4441, %v4443
    %v4445 = vrot.slane %v4423, %v4444
    %v4447 = vunpack.c.l.s4 1966171168
    %v4448 = vunpack.c.0.s8 %v4447
    %v4449 = vlaneseq
    %v4450 = vshrl.u32 %v4449, 7
    %v4451 = vsub.s32 %v4448, %v4450
    %v4452 = vrot.slane %v4424, %v4451
    %v4453 = vcombine.low %v4431, %v4438
    %v4454 = vcombine.low %v4445, %v4452
    %v4456 = vunpack.c.l.s4 1966171168
    %v4457 = vunpack.c.0.s8 %v4456
    %v4458 = vlaneseq
    %v4459 = vshrl.u32 %v4458, 7
    %v4460 = vsub.s32 %v4457, %v4459
    %v4461 = vrot.slane %v4453, %v4460
    %v4463 = vunpack.c.l.s4 1966171168
    %v4464 = vunpack.c.0.s8 %v4463
    %v4465 = vlaneseq
    %v4466 = vshrl.u32 %v4465, 7
    %v4467 = vsub.s32 %v4464, %v4466
    %v4468 = vrot.slane %v4454, %v4467
    %v4469 = vcombine.low %v4461, %v4468
    %v4470 = vcombine.low %v2017, %v2021
    %v4471 = vcombine.low %v2025, %v2029
    %v4472 = vcombine.low %v2033, %v2037
    %v4473 = vcombine.low %v2041, %v2045
    %v4475 = vunpack.c.l.s4 1966171168
    %v4476 = vunpack.c.0.s8 %v4475
    %v4477 = vlaneseq
    %v4478 = vshrl.u32 %v4477, 7
    %v4479 = vsub.s32 %v4476, %v4478
    %v4480 = vrot.slane %v4470, %v4479
    %v4482 = vunpack.c.l.s4 1966171168
    %v4483 = vunpack.c.0.s8 %v4482
    %v4484 = vlaneseq
    %v4485 = vshrl.u32 %v4484, 7
    %v4486 = vsub.s32 %v4483, %v4485
    %v4487 = vrot.slane %v4471, %v4486
    %v4489 = vunpack.c.l.s4 1966171168
    %v4490 = vunpack.c.0.s8 %v4489
    %v4491 = vlaneseq
    %v4492 = vshrl.u32 %v4491, 7
    %v4493 = vsub.s32 %v4490, %v4492
    %v4494 = vrot.slane %v4472, %v4493
    %v4496 = vunpack.c.l.s4 1966171168
    %v4497 = vunpack.c.0.s8 %v4496
    %v4498 = vlaneseq
    %v4499 = vshrl.u32 %v4498, 7
    %v4500 = vsub.s32 %v4497, %v4499
    %v4501 = vrot.slane %v4473, %v4500
    %v4502 = vcombine.low %v4480, %v4487
    %v4503 = vcombine.low %v4494, %v4501
    %v4505 = vunpack.c.l.s4 1966171168
    %v4506 = vunpack.c.0.s8 %v4505
    %v4507 = vlaneseq
    %v4508 = vshrl.u32 %v4507, 7
    %v4509 = vsub.s32 %v4506, %v4508
    %v4510 = vrot.slane %v4502, %v4509
    %v4512 = vunpack.c.l.s4 1966171168
    %v4513 = vunpack.c.0.s8 %v4512
    %v4514 = vlaneseq
    %v4515 = vshrl.u32 %v4514, 7
    %v4516 = vsub.s32 %v4513, %v4515
    %v4517 = vrot.slane %v4503, %v4516
    %v4518 = vcombine.low %v4510, %v4517
    %v4519 = vcombine.low %v2049, %v2053
    %v4520 = vcombine.low %v2057, %v2061
    %v4521 = vcombine.low %v2065, %v2069
    %v4522 = vcombine.low %v2073, %v2077
    %v4524 = vunpack.c.l.s4 1966171168
    %v4525 = vunpack.c.0.s8 %v4524
    %v4526 = vlaneseq
    %v4527 = vshrl.u32 %v4526, 7
    %v4528 = vsub.s32 %v4525, %v4527
    %v4529 = vrot.slane %v4519, %v4528
    %v4531 = vunpack.c.l.s4 1966171168
    %v4532 = vunpack.c.0.s8 %v4531
    %v4533 = vlaneseq
    %v4534 = vshrl.u32 %v4533, 7
    %v4535 = vsub.s32 %v4532, %v4534
    %v4536 = vrot.slane %v4520, %v4535
    %v4538 = vunpack.c.l.s4 1966171168
    %v4539 = vunpack.c.0.s8 %v4538
    %v4540 = vlaneseq
    %v4541 = vshrl.u32 %v4540, 7
    %v4542 = vsub.s32 %v4539, %v4541
    %v4543 = vrot.slane %v4521, %v4542
    %v4545 = vunpack.c.l.s4 1966171168
    %v4546 = vunpack.c.0.s8 %v4545
    %v4547 = vlaneseq
    %v4548 = vshrl.u32 %v4547, 7
    %v4549 = vsub.s32 %v4546, %v4548
    %v4550 = vrot.slane %v4522, %v4549
    %v4551 = vcombine.low %v4529, %v4536
    %v4552 = vcombine.low %v4543, %v4550
    %v4554 = vunpack.c.l.s4 1966171168
    %v4555 = vunpack.c.0.s8 %v4554
    %v4556 = vlaneseq
    %v4557 = vshrl.u32 %v4556, 7
    %v4558 = vsub.s32 %v4555, %v4557
    %v4559 = vrot.slane %v4551, %v4558
    %v4561 = vunpack.c.l.s4 1966171168
    %v4562 = vunpack.c.0.s8 %v4561
    %v4563 = vlaneseq
    %v4564 = vshrl.u32 %v4563, 7
    %v4565 = vsub.s32 %v4562, %v4564
    %v4566 = vrot.slane %v4552, %v4565
    %v4567 = vcombine.low %v4559, %v4566
    %v4568 = vcombine.low %v2081, %v2085
    %v4569 = vcombine.low %v2089, %v2093
    %v4570 = vcombine.low %v2097, %v2101
    %v4571 = vcombine.low %v2105, %v2109
    %v4573 = vunpack.c.l.s4 1966171168
    %v4574 = vunpack.c.0.s8 %v4573
    %v4575 = vlaneseq
    %v4576 = vshrl.u32 %v4575, 7
    %v4577 = vsub.s32 %v4574, %v4576
    %v4578 = vrot.slane %v4568, %v4577
    %v4580 = vunpack.c.l.s4 1966171168
    %v4581 = vunpack.c.0.s8 %v4580
    %v4582 = vlaneseq
    %v4583 = vshrl.u32 %v4582, 7
    %v4584 = vsub.s32 %v4581, %v4583
    %v4585 = vrot.slane %v4569, %v4584
    %v4587 = vunpack.c.l.s4 1966171168
    %v4588 = vunpack.c.0.s8 %v4587
    %v4589 = vlaneseq
    %v4590 = vshrl.u32 %v4589, 7
    %v4591 = vsub.s32 %v4588, %v4590
    %v4592 = vrot.slane %v4570, %v4591
    %v4594 = vunpack.c.l.s4 1966171168
    %v4595 = vunpack.c.0.s8 %v4594
    %v4596 = vlaneseq
    %v4597 = vshrl.u32 %v4596, 7
    %v4598 = vsub.s32 %v4595, %v4597
    %v4599 = vrot.slane %v4571, %v4598
    %v4600 = vcombine.low %v4578, %v4585
    %v4601 = vcombine.low %v4592, %v4599
    %v4603 = vunpack.c.l.s4 1966171168
    %v4604 = vunpack.c.0.s8 %v4603
    %v4605 = vlaneseq
    %v4606 = vshrl.u32 %v4605, 7
    %v4607 = vsub.s32 %v4604, %v4606
    %v4608 = vrot.slane %v4600, %v4607
    %v4610 = vunpack.c.l.s4 1966171168
    %v4611 = vunpack.c.0.s8 %v4610
    %v4612 = vlaneseq
    %v4613 = vshrl.u32 %v4612, 7
    %v4614 = vsub.s32 %v4611, %v4613
    %v4615 = vrot.slane %v4601, %v4614
    %v4616 = vcombine.low %v4608, %v4615
    %v4617 = vcombine.low %v2113, %v2117
    %v4618 = vcombine.low %v2121, %v2125
    %v4619 = vcombine.low %v2129, %v2133
    %v4620 = vcombine.low %v2137, %v2141
    %v4622 = vunpack.c.l.s4 1966171168
    %v4623 = vunpack.c.0.s8 %v4622
    %v4624 = vlaneseq
    %v4625 = vshrl.u32 %v4624, 7
    %v4626 = vsub.s32 %v4623, %v4625
    %v4627 = vrot.slane %v4617, %v4626
    %v4629 = vunpack.c.l.s4 1966171168
    %v4630 = vunpack.c.0.s8 %v4629
    %v4631 = vlaneseq
    %v4632 = vshrl.u32 %v4631, 7
    %v4633 = vsub.s32 %v4630, %v4632
    %v4634 = vrot.slane %v4618, %v4633
    %v4636 = vunpack.c.l.s4 1966171168
    %v4637 = vunpack.c.0.s8 %v4636
    %v4638 = vlaneseq
    %v4639 = vshrl.u32 %v4638, 7
    %v4640 = vsub.s32 %v4637, %v4639
    %v4641 = vrot.slane %v4619, %v4640
    %v4643 = vunpack.c.l.s4 1966171168
    %v4644 = vunpack.c.0.s8 %v4643
    %v4645 = vlaneseq
    %v4646 = vshrl.u32 %v4645, 7
    %v4647 = vsub.s32 %v4644, %v4646
    %v4648 = vrot.slane %v4620, %v4647
    %v4649 = vcombine.low %v4627, %v4634
    %v4650 = vcombine.low %v4641, %v4648
    %v4652 = vunpack.c.l.s4 1966171168
    %v4653 = vunpack.c.0.s8 %v4652
    %v4654 = vlaneseq
    %v4655 = vshrl.u32 %v4654, 7
    %v4656 = vsub.s32 %v4653, %v4655
    %v4657 = vrot.slane %v4649, %v4656
    %v4659 = vunpack.c.l.s4 1966171168
    %v4660 = vunpack.c.0.s8 %v4659
    %v4661 = vlaneseq
    %v4662 = vshrl.u32 %v4661, 7
    %v4663 = vsub.s32 %v4660, %v4662
    %v4664 = vrot.slane %v4650, %v4663
    %v4665 = vcombine.low %v4657, %v4664
    %v4666 = vcombine.low %v2145, %v2149
    %v4667 = vcombine.low %v2153, %v2157
    %v4668 = vcombine.low %v2161, %v2165
    %v4669 = vcombine.low %v2169, %v2173
    %v4671 = vunpack.c.l.s4 1966171168
    %v4672 = vunpack.c.0.s8 %v4671
    %v4673 = vlaneseq
    %v4674 = vshrl.u32 %v4673, 7
    %v4675 = vsub.s32 %v4672, %v4674
    %v4676 = vrot.slane %v4666, %v4675
    %v4678 = vunpack.c.l.s4 1966171168
    %v4679 = vunpack.c.0.s8 %v4678
    %v4680 = vlaneseq
    %v4681 = vshrl.u32 %v4680, 7
    %v4682 = vsub.s32 %v4679, %v4681
    %v4683 = vrot.slane %v4667, %v4682
    %v4685 = vunpack.c.l.s4 1966171168
    %v4686 = vunpack.c.0.s8 %v4685
    %v4687 = vlaneseq
    %v4688 = vshrl.u32 %v4687, 7
    %v4689 = vsub.s32 %v4686, %v4688
    %v4690 = vrot.slane %v4668, %v4689
    %v4692 = vunpack.c.l.s4 1966171168
    %v4693 = vunpack.c.0.s8 %v4692
    %v4694 = vlaneseq
    %v4695 = vshrl.u32 %v4694, 7
    %v4696 = vsub.s32 %v4693, %v4695
    %v4697 = vrot.slane %v4669, %v4696
    %v4698 = vcombine.low %v4676, %v4683
    %v4699 = vcombine.low %v4690, %v4697
    %v4701 = vunpack.c.l.s4 1966171168
    %v4702 = vunpack.c.0.s8 %v4701
    %v4703 = vlaneseq
    %v4704 = vshrl.u32 %v4703, 7
    %v4705 = vsub.s32 %v4702, %v4704
    %v4706 = vrot.slane %v4698, %v4705
    %v4708 = vunpack.c.l.s4 1966171168
    %v4709 = vunpack.c.0.s8 %v4708
    %v4710 = vlaneseq
    %v4711 = vshrl.u32 %v4710, 7
    %v4712 = vsub.s32 %v4709, %v4711
    %v4713 = vrot.slane %v4699, %v4712
    %v4714 = vcombine.low %v4706, %v4713
    %v4715 = vcombine.low %v2177, %v2181
    %v4716 = vcombine.low %v2185, %v2189
    %v4717 = vcombine.low %v2193, %v2197
    %v4718 = vcombine.low %v2201, %v2205
    %v4720 = vunpack.c.l.s4 1966171168
    %v4721 = vunpack.c.0.s8 %v4720
    %v4722 = vlaneseq
    %v4723 = vshrl.u32 %v4722, 7
    %v4724 = vsub.s32 %v4721, %v4723
    %v4725 = vrot.slane %v4715, %v4724
    %v4727 = vunpack.c.l.s4 1966171168
    %v4728 = vunpack.c.0.s8 %v4727
    %v4729 = vlaneseq
    %v4730 = vshrl.u32 %v4729, 7
    %v4731 = vsub.s32 %v4728, %v4730
    %v4732 = vrot.slane %v4716, %v4731
    %v4734 = vunpack.c.l.s4 1966171168
    %v4735 = vunpack.c.0.s8 %v4734
    %v4736 = vlaneseq
    %v4737 = vshrl.u32 %v4736, 7
    %v4738 = vsub.s32 %v4735, %v4737
    %v4739 = vrot.slane %v4717, %v4738
    %v4741 = vunpack.c.l.s4 1966171168
    %v4742 = vunpack.c.0.s8 %v4741
    %v4743 = vlaneseq
    %v4744 = vshrl.u32 %v4743, 7
    %v4745 = vsub.s32 %v4742, %v4744
    %v4746 = vrot.slane %v4718, %v4745
    %v4747 = vcombine.low %v4725, %v4732
    %v4748 = vcombine.low %v4739, %v4746
    %v4750 = vunpack.c.l.s4 1966171168
    %v4751 = vunpack.c.0.s8 %v4750
    %v4752 = vlaneseq
    %v4753 = vshrl.u32 %v4752, 7
    %v4754 = vsub.s32 %v4751, %v4753
    %v4755 = vrot.slane %v4747, %v4754
    %v4757 = vunpack.c.l.s4 1966171168
    %v4758 = vunpack.c.0.s8 %v4757
    %v4759 = vlaneseq
    %v4760 = vshrl.u32 %v4759, 7
    %v4761 = vsub.s32 %v4758, %v4760
    %v4762 = vrot.slane %v4748, %v4761
    %v4763 = vcombine.low %v4755, %v4762
    %v4764 = vcombine.low %v2209, %v2213
    %v4765 = vcombine.low %v2217, %v2221
    %v4766 = vcombine.low %v2225, %v2229
    %v4767 = vcombine.low %v2233, %v2237
    %v4769 = vunpack.c.l.s4 1966171168
    %v4770 = vunpack.c.0.s8 %v4769
    %v4771 = vlaneseq
    %v4772 = vshrl.u32 %v4771, 7
    %v4773 = vsub.s32 %v4770, %v4772
    %v4774 = vrot.slane %v4764, %v4773
    %v4776 = vunpack.c.l.s4 1966171168
    %v4777 = vunpack.c.0.s8 %v4776
    %v4778 = vlaneseq
    %v4779 = vshrl.u32 %v4778, 7
    %v4780 = vsub.s32 %v4777, %v4779
    %v4781 = vrot.slane %v4765, %v4780
    %v4783 = vunpack.c.l.s4 1966171168
    %v4784 = vunpack.c.0.s8 %v4783
    %v4785 = vlaneseq
    %v4786 = vshrl.u32 %v4785, 7
    %v4787 = vsub.s32 %v4784, %v4786
    %v4788 = vrot.slane %v4766, %v4787
    %v4790 = vunpack.c.l.s4 1966171168
    %v4791 = vunpack.c.0.s8 %v4790
    %v4792 = vlaneseq
    %v4793 = vshrl.u32 %v4792, 7
    %v4794 = vsub.s32 %v4791, %v4793
    %v4795 = vrot.slane %v4767, %v4794
    %v4796 = vcombine.low %v4774, %v4781
    %v4797 = vcombine.low %v4788, %v4795
    %v4799 = vunpack.c.l.s4 1966171168
    %v4800 = vunpack.c.0.s8 %v4799
    %v4801 = vlaneseq
    %v4802 = vshrl.u32 %v4801, 7
    %v4803 = vsub.s32 %v4800, %v4802
    %v4804 = vrot.slane %v4796, %v4803
    %v4806 = vunpack.c.l.s4 1966171168
    %v4807 = vunpack.c.0.s8 %v4806
    %v4808 = vlaneseq
    %v4809 = vshrl.u32 %v4808, 7
    %v4810 = vsub.s32 %v4807, %v4809
    %v4811 = vrot.slane %v4797, %v4810
    %v4812 = vcombine.low %v4804, %v4811
    %v4813 = vcombine.low %v2241, %v2245
    %v4814 = vcombine.low %v2249, %v2253
    %v4815 = vcombine.low %v2257, %v2261
    %v4816 = vcombine.low %v2265, %v2269
    %v4818 = vunpack.c.l.s4 1966171168
    %v4819 = vunpack.c.0.s8 %v4818
    %v4820 = vlaneseq
    %v4821 = vshrl.u32 %v4820, 7
    %v4822 = vsub.s32 %v4819, %v4821
    %v4823 = vrot.slane %v4813, %v4822
    %v4825 = vunpack.c.l.s4 1966171168
    %v4826 = vunpack.c.0.s8 %v4825
    %v4827 = vlaneseq
    %v4828 = vshrl.u32 %v4827, 7
    %v4829 = vsub.s32 %v4826, %v4828
    %v4830 = vrot.slane %v4814, %v4829
    %v4832 = vunpack.c.l.s4 1966171168
    %v4833 = vunpack.c.0.s8 %v4832
    %v4834 = vlaneseq
    %v4835 = vshrl.u32 %v4834, 7
    %v4836 = vsub.s32 %v4833, %v4835
    %v4837 = vrot.slane %v4815, %v4836
    %v4839 = vunpack.c.l.s4 1966171168
    %v4840 = vunpack.c.0.s8 %v4839
    %v4841 = vlaneseq
    %v4842 = vshrl.u32 %v4841, 7
    %v4843 = vsub.s32 %v4840, %v4842
    %v4844 = vrot.slane %v4816, %v4843
    %v4845 = vcombine.low %v4823, %v4830
    %v4846 = vcombine.low %v4837, %v4844
    %v4848 = vunpack.c.l.s4 1966171168
    %v4849 = vunpack.c.0.s8 %v4848
    %v4850 = vlaneseq
    %v4851 = vshrl.u32 %v4850, 7
    %v4852 = vsub.s32 %v4849, %v4851
    %v4853 = vrot.slane %v4845, %v4852
    %v4855 = vunpack.c.l.s4 1966171168
    %v4856 = vunpack.c.0.s8 %v4855
    %v4857 = vlaneseq
    %v4858 = vshrl.u32 %v4857, 7
    %v4859 = vsub.s32 %v4856, %v4858
    %v4860 = vrot.slane %v4846, %v4859
    %v4861 = vcombine.low %v4853, %v4860
    %v4862 = vcombine.low %v2273, %v2277
    %v4863 = vcombine.low %v2281, %v2285
    %v4864 = vcombine.low %v2289, %v2293
    %v4865 = vcombine.low %v2297, %v2301
    %v4867 = vunpack.c.l.s4 1966171168
    %v4868 = vunpack.c.0.s8 %v4867
    %v4869 = vlaneseq
    %v4870 = vshrl.u32 %v4869, 7
    %v4871 = vsub.s32 %v4868, %v4870
    %v4872 = vrot.slane %v4862, %v4871
    %v4874 = vunpack.c.l.s4 1966171168
    %v4875 = vunpack.c.0.s8 %v4874
    %v4876 = vlaneseq
    %v4877 = vshrl.u32 %v4876, 7
    %v4878 = vsub.s32 %v4875, %v4877
    %v4879 = vrot.slane %v4863, %v4878
    %v4881 = vunpack.c.l.s4 1966171168
    %v4882 = vunpack.c.0.s8 %v4881
    %v4883 = vlaneseq
    %v4884 = vshrl.u32 %v4883, 7
    %v4885 = vsub.s32 %v4882, %v4884
    %v4886 = vrot.slane %v4864, %v4885
    %v4888 = vunpack.c.l.s4 1966171168
    %v4889 = vunpack.c.0.s8 %v4888
    %v4890 = vlaneseq
    %v4891 = vshrl.u32 %v4890, 7
    %v4892 = vsub.s32 %v4889, %v4891
    %v4893 = vrot.slane %v4865, %v4892
    %v4894 = vcombine.low %v4872, %v4879
    %v4895 = vcombine.low %v4886, %v4893
    %v4897 = vunpack.c.l.s4 1966171168
    %v4898 = vunpack.c.0.s8 %v4897
    %v4899 = vlaneseq
    %v4900 = vshrl.u32 %v4899, 7
    %v4901 = vsub.s32 %v4898, %v4900
    %v4902 = vrot.slane %v4894, %v4901
    %v4904 = vunpack.c.l.s4 1966171168
    %v4905 = vunpack.c.0.s8 %v4904
    %v4906 = vlaneseq
    %v4907 = vshrl.u32 %v4906, 7
    %v4908 = vsub.s32 %v4905, %v4907
    %v4909 = vrot.slane %v4895, %v4908
    %v4910 = vcombine.low %v4902, %v4909
    %v4911 = vcombine.low %v2305, %v2309
    %v4912 = vcombine.low %v2313, %v2317
    %v4913 = vcombine.low %v2321, %v2325
    %v4914 = vcombine.low %v2329, %v2333
    %v4916 = vunpack.c.l.s4 1966171168
    %v4917 = vunpack.c.0.s8 %v4916
    %v4918 = vlaneseq
    %v4919 = vshrl.u32 %v4918, 7
    %v4920 = vsub.s32 %v4917, %v4919
    %v4921 = vrot.slane %v4911, %v4920
    %v4923 = vunpack.c.l.s4 1966171168
    %v4924 = vunpack.c.0.s8 %v4923
    %v4925 = vlaneseq
    %v4926 = vshrl.u32 %v4925, 7
    %v4927 = vsub.s32 %v4924, %v4926
    %v4928 = vrot.slane %v4912, %v4927
    %v4930 = vunpack.c.l.s4 1966171168
    %v4931 = vunpack.c.0.s8 %v4930
    %v4932 = vlaneseq
    %v4933 = vshrl.u32 %v4932, 7
    %v4934 = vsub.s32 %v4931, %v4933
    %v4935 = vrot.slane %v4913, %v4934
    %v4937 = vunpack.c.l.s4 1966171168
    %v4938 = vunpack.c.0.s8 %v4937
    %v4939 = vlaneseq
    %v4940 = vshrl.u32 %v4939, 7
    %v4941 = vsub.s32 %v4938, %v4940
    %v4942 = vrot.slane %v4914, %v4941
    %v4943 = vcombine.low %v4921, %v4928
    %v4944 = vcombine.low %v4935, %v4942
    %v4946 = vunpack.c.l.s4 1966171168
    %v4947 = vunpack.c.0.s8 %v4946
    %v4948 = vlaneseq
    %v4949 = vshrl.u32 %v4948, 7
    %v4950 = vsub.s32 %v4947, %v4949
    %v4951 = vrot.slane %v4943, %v4950
    %v4953 = vunpack.c.l.s4 1966171168
    %v4954 = vunpack.c.0.s8 %v4953
    %v4955 = vlaneseq
    %v4956 = vshrl.u32 %v4955, 7
    %v4957 = vsub.s32 %v4954, %v4956
    %v4958 = vrot.slane %v4944, %v4957
    %v4959 = vcombine.low %v4951, %v4958
    %v4960 = vcombine.low %v2337, %v2341
    %v4961 = vcombine.low %v2345, %v2349
    %v4962 = vcombine.low %v2353, %v2357
    %v4963 = vcombine.low %v2361, %v2365
    %v4965 = vunpack.c.l.s4 1966171168
    %v4966 = vunpack.c.0.s8 %v4965
    %v4967 = vlaneseq
    %v4968 = vshrl.u32 %v4967, 7
    %v4969 = vsub.s32 %v4966, %v4968
    %v4970 = vrot.slane %v4960, %v4969
    %v4972 = vunpack.c.l.s4 1966171168
    %v4973 = vunpack.c.0.s8 %v4972
    %v4974 = vlaneseq
    %v4975 = vshrl.u32 %v4974, 7
    %v4976 = vsub.s32 %v4973, %v4975
    %v4977 = vrot.slane %v4961, %v4976
    %v4979 = vunpack.c.l.s4 1966171168
    %v4980 = vunpack.c.0.s8 %v4979
    %v4981 = vlaneseq
    %v4982 = vshrl.u32 %v4981, 7
    %v4983 = vsub.s32 %v4980, %v4982
    %v4984 = vrot.slane %v4962, %v4983
    %v4986 = vunpack.c.l.s4 1966171168
    %v4987 = vunpack.c.0.s8 %v4986
    %v4988 = vlaneseq
    %v4989 = vshrl.u32 %v4988, 7
    %v4990 = vsub.s32 %v4987, %v4989
    %v4991 = vrot.slane %v4963, %v4990
    %v4992 = vcombine.low %v4970, %v4977
    %v4993 = vcombine.low %v4984, %v4991
    %v4995 = vunpack.c.l.s4 1966171168
    %v4996 = vunpack.c.0.s8 %v4995
    %v4997 = vlaneseq
    %v4998 = vshrl.u32 %v4997, 7
    %v4999 = vsub.s32 %v4996, %v4998
    %v5000 = vrot.slane %v4992, %v4999
    %v5002 = vunpack.c.l.s4 1966171168
    %v5003 = vunpack.c.0.s8 %v5002
    %v5004 = vlaneseq
    %v5005 = vshrl.u32 %v5004, 7
    %v5006 = vsub.s32 %v5003, %v5005
    %v5007 = vrot.slane %v4993, %v5006
    %v5008 = vcombine.low %v5000, %v5007
    %v5009 = vcombine.low %v2369, %v2373
    %v5010 = vcombine.low %v2377, %v2381
    %v5011 = vcombine.low %v2385, %v2389
    %v5012 = vcombine.low %v2393, %v2397
    %v5014 = vunpack.c.l.s4 1966171168
    %v5015 = vunpack.c.0.s8 %v5014
    %v5016 = vlaneseq
    %v5017 = vshrl.u32 %v5016, 7
    %v5018 = vsub.s32 %v5015, %v5017
    %v5019 = vrot.slane %v5009, %v5018
    %v5021 = vunpack.c.l.s4 1966171168
    %v5022 = vunpack.c.0.s8 %v5021
    %v5023 = vlaneseq
    %v5024 = vshrl.u32 %v5023, 7
    %v5025 = vsub.s32 %v5022, %v5024
    %v5026 = vrot.slane %v5010, %v5025
    %v5028 = vunpack.c.l.s4 1966171168
    %v5029 = vunpack.c.0.s8 %v5028
    %v5030 = vlaneseq
    %v5031 = vshrl.u32 %v5030, 7
    %v5032 = vsub.s32 %v5029, %v5031
    %v5033 = vrot.slane %v5011, %v5032
    %v5035 = vunpack.c.l.s4 1966171168
    %v5036 = vunpack.c.0.s8 %v5035
    %v5037 = vlaneseq
    %v5038 = vshrl.u32 %v5037, 7
    %v5039 = vsub.s32 %v5036, %v5038
    %v5040 = vrot.slane %v5012, %v5039
    %v5041 = vcombine.low %v5019, %v5026
    %v5042 = vcombine.low %v5033, %v5040
    %v5044 = vunpack.c.l.s4 1966171168
    %v5045 = vunpack.c.0.s8 %v5044
    %v5046 = vlaneseq
    %v5047 = vshrl.u32 %v5046, 7
    %v5048 = vsub.s32 %v5045, %v5047
    %v5049 = vrot.slane %v5041, %v5048
    %v5051 = vunpack.c.l.s4 1966171168
    %v5052 = vunpack.c.0.s8 %v5051
    %v5053 = vlaneseq
    %v5054 = vshrl.u32 %v5053, 7
    %v5055 = vsub.s32 %v5052, %v5054
    %v5056 = vrot.slane %v5042, %v5055
    %v5057 = vcombine.low %v5049, %v5056
    %v5058 = vcombine.low %v2401, %v2405
    %v5059 = vcombine.low %v2409, %v2413
    %v5060 = vcombine.low %v2417, %v2421
    %v5061 = vcombine.low %v2425, %v2429
    %v5063 = vunpack.c.l.s4 1966171168
    %v5064 = vunpack.c.0.s8 %v5063
    %v5065 = vlaneseq
    %v5066 = vshrl.u32 %v5065, 7
    %v5067 = vsub.s32 %v5064, %v5066
    %v5068 = vrot.slane %v5058, %v5067
    %v5070 = vunpack.c.l.s4 1966171168
    %v5071 = vunpack.c.0.s8 %v5070
    %v5072 = vlaneseq
    %v5073 = vshrl.u32 %v5072, 7
    %v5074 = vsub.s32 %v5071, %v5073
    %v5075 = vrot.slane %v5059, %v5074
    %v5077 = vunpack.c.l.s4 1966171168
    %v5078 = vunpack.c.0.s8 %v5077
    %v5079 = vlaneseq
    %v5080 = vshrl.u32 %v5079, 7
    %v5081 = vsub.s32 %v5078, %v5080
    %v5082 = vrot.slane %v5060, %v5081
    %v5084 = vunpack.c.l.s4 1966171168
    %v5085 = vunpack.c.0.s8 %v5084
    %v5086 = vlaneseq
    %v5087 = vshrl.u32 %v5086, 7
    %v5088 = vsub.s32 %v5085, %v5087
    %v5089 = vrot.slane %v5061, %v5088
    %v5090 = vcombine.low %v5068, %v5075
    %v5091 = vcombine.low %v5082, %v5089
    %v5093 = vunpack.c.l.s4 1966171168
    %v5094 = vunpack.c.0.s8 %v5093
    %v5095 = vlaneseq
    %v5096 = vshrl.u32 %v5095, 7
    %v5097 = vsub.s32 %v5094, %v5096
    %v5098 = vrot.slane %v5090, %v5097
    %v5100 = vunpack.c.l.s4 1966171168
    %v5101 = vunpack.c.0.s8 %v5100
    %v5102 = vlaneseq
    %v5103 = vshrl.u32 %v5102, 7
    %v5104 = vsub.s32 %v5101, %v5103
    %v5105 = vrot.slane %v5091, %v5104
    %v5106 = vcombine.low %v5098, %v5105
    %v5107 = vcombine.low %v2433, %v2437
    %v5108 = vcombine.low %v2441, %v2445
    %v5109 = vcombine.low %v2449, %v2453
    %v5110 = vcombine.low %v2457, %v2461
    %v5112 = vunpack.c.l.s4 1966171168
    %v5113 = vunpack.c.0.s8 %v5112
    %v5114 = vlaneseq
    %v5115 = vshrl.u32 %v5114, 7
    %v5116 = vsub.s32 %v5113, %v5115
    %v5117 = vrot.slane %v5107, %v5116
    %v5119 = vunpack.c.l.s4 1966171168
    %v5120 = vunpack.c.0.s8 %v5119
    %v5121 = vlaneseq
    %v5122 = vshrl.u32 %v5121, 7
    %v5123 = vsub.s32 %v5120, %v5122
    %v5124 = vrot.slane %v5108, %v5123
    %v5126 = vunpack.c.l.s4 1966171168
    %v5127 = vunpack.c.0.s8 %v5126
    %v5128 = vlaneseq
    %v5129 = vshrl.u32 %v5128, 7
    %v5130 = vsub.s32 %v5127, %v5129
    %v5131 = vrot.slane %v5109, %v5130
    %v5133 = vunpack.c.l.s4 1966171168
    %v5134 = vunpack.c.0.s8 %v5133
    %v5135 = vlaneseq
    %v5136 = vshrl.u32 %v5135, 7
    %v5137 = vsub.s32 %v5134, %v5136
    %v5138 = vrot.slane %v5110, %v5137
    %v5139 = vcombine.low %v5117, %v5124
    %v5140 = vcombine.low %v5131, %v5138
    %v5142 = vunpack.c.l.s4 1966171168
    %v5143 = vunpack.c.0.s8 %v5142
    %v5144 = vlaneseq
    %v5145 = vshrl.u32 %v5144, 7
    %v5146 = vsub.s32 %v5143, %v5145
    %v5147 = vrot.slane %v5139, %v5146
    %v5149 = vunpack.c.l.s4 1966171168
    %v5150 = vunpack.c.0.s8 %v5149
    %v5151 = vlaneseq
    %v5152 = vshrl.u32 %v5151, 7
    %v5153 = vsub.s32 %v5150, %v5152
    %v5154 = vrot.slane %v5140, %v5153
    %v5155 = vcombine.low %v5147, %v5154
    %v5156 = vcombine.low %v2465, %v2469
    %v5157 = vcombine.low %v2473, %v2477
    %v5158 = vcombine.low %v2481, %v2485
    %v5159 = vcombine.low %v2489, %v2493
    %v5161 = vunpack.c.l.s4 1966171168
    %v5162 = vunpack.c.0.s8 %v5161
    %v5163 = vlaneseq
    %v5164 = vshrl.u32 %v5163, 7
    %v5165 = vsub.s32 %v5162, %v5164
    %v5166 = vrot.slane %v5156, %v5165
    %v5168 = vunpack.c.l.s4 1966171168
    %v5169 = vunpack.c.0.s8 %v5168
    %v5170 = vlaneseq
    %v5171 = vshrl.u32 %v5170, 7
    %v5172 = vsub.s32 %v5169, %v5171
    %v5173 = vrot.slane %v5157, %v5172
    %v5175 = vunpack.c.l.s4 1966171168
    %v5176 = vunpack.c.0.s8 %v5175
    %v5177 = vlaneseq
    %v5178 = vshrl.u32 %v5177, 7
    %v5179 = vsub.s32 %v5176, %v5178
    %v5180 = vrot.slane %v5158, %v5179
    %v5182 = vunpack.c.l.s4 1966171168
    %v5183 = vunpack.c.0.s8 %v5182
    %v5184 = vlaneseq
    %v5185 = vshrl.u32 %v5184, 7
    %v5186 = vsub.s32 %v5183, %v5185
    %v5187 = vrot.slane %v5159, %v5186
    %v5188 = vcombine.low %v5166, %v5173
    %v5189 = vcombine.low %v5180, %v5187
    %v5191 = vunpack.c.l.s4 1966171168
    %v5192 = vunpack.c.0.s8 %v5191
    %v5193 = vlaneseq
    %v5194 = vshrl.u32 %v5193, 7
    %v5195 = vsub.s32 %v5192, %v5194
    %v5196 = vrot.slane %v5188, %v5195
    %v5198 = vunpack.c.l.s4 1966171168
    %v5199 = vunpack.c.0.s8 %v5198
    %v5200 = vlaneseq
    %v5201 = vshrl.u32 %v5200, 7
    %v5202 = vsub.s32 %v5199, %v5201
    %v5203 = vrot.slane %v5189, %v5202
    %v5204 = vcombine.low %v5196, %v5203
    %v5205 = vcombine.low %v2497, %v2501
    %v5206 = vcombine.low %v2505, %v2509
    %v5207 = vcombine.low %v2513, %v2517
    %v5208 = vcombine.low %v2521, %v2525
    %v5210 = vunpack.c.l.s4 1966171168
    %v5211 = vunpack.c.0.s8 %v5210
    %v5212 = vlaneseq
    %v5213 = vshrl.u32 %v5212, 7
    %v5214 = vsub.s32 %v5211, %v5213
    %v5215 = vrot.slane %v5205, %v5214
    %v5217 = vunpack.c.l.s4 1966171168
    %v5218 = vunpack.c.0.s8 %v5217
    %v5219 = vlaneseq
    %v5220 = vshrl.u32 %v5219, 7
    %v5221 = vsub.s32 %v5218, %v5220
    %v5222 = vrot.slane %v5206, %v5221
    %v5224 = vunpack.c.l.s4 1966171168
    %v5225 = vunpack.c.0.s8 %v5224
    %v5226 = vlaneseq
    %v5227 = vshrl.u32 %v5226, 7
    %v5228 = vsub.s32 %v5225, %v5227
    %v5229 = vrot.slane %v5207, %v5228
    %v5231 = vunpack.c.l.s4 1966171168
    %v5232 = vunpack.c.0.s8 %v5231
    %v5233 = vlaneseq
    %v5234 = vshrl.u32 %v5233, 7
    %v5235 = vsub.s32 %v5232, %v5234
    %v5236 = vrot.slane %v5208, %v5235
    %v5237 = vcombine.low %v5215, %v5222
    %v5238 = vcombine.low %v5229, %v5236
    %v5240 = vunpack.c.l.s4 1966171168
    %v5241 = vunpack.c.0.s8 %v5240
    %v5242 = vlaneseq
    %v5243 = vshrl.u32 %v5242, 7
    %v5244 = vsub.s32 %v5241, %v5243
    %v5245 = vrot.slane %v5237, %v5244
    %v5247 = vunpack.c.l.s4 1966171168
    %v5248 = vunpack.c.0.s8 %v5247
    %v5249 = vlaneseq
    %v5250 = vshrl.u32 %v5249, 7
    %v5251 = vsub.s32 %v5248, %v5250
    %v5252 = vrot.slane %v5238, %v5251
    %v5253 = vcombine.low %v5245, %v5252
    %v5254 = vcombine.low %v2529, %v2533
    %v5255 = vcombine.low %v2537, %v2541
    %v5256 = vcombine.low %v2545, %v2549
    %v5257 = vcombine.low %v2553, %v2557
    %v5259 = vunpack.c.l.s4 1966171168
    %v5260 = vunpack.c.0.s8 %v5259
    %v5261 = vlaneseq
    %v5262 = vshrl.u32 %v5261, 7
    %v5263 = vsub.s32 %v5260, %v5262
    %v5264 = vrot.slane %v5254, %v5263
    %v5266 = vunpack.c.l.s4 1966171168
    %v5267 = vunpack.c.0.s8 %v5266
    %v5268 = vlaneseq
    %v5269 = vshrl.u32 %v5268, 7
    %v5270 = vsub.s32 %v5267, %v5269
    %v5271 = vrot.slane %v5255, %v5270
    %v5273 = vunpack.c.l.s4 1966171168
    %v5274 = vunpack.c.0.s8 %v5273
    %v5275 = vlaneseq
    %v5276 = vshrl.u32 %v5275, 7
    %v5277 = vsub.s32 %v5274, %v5276
    %v5278 = vrot.slane %v5256, %v5277
    %v5280 = vunpack.c.l.s4 1966171168
    %v5281 = vunpack.c.0.s8 %v5280
    %v5282 = vlaneseq
    %v5283 = vshrl.u32 %v5282, 7
    %v5284 = vsub.s32 %v5281, %v5283
    %v5285 = vrot.slane %v5257, %v5284
    %v5286 = vcombine.low %v5264, %v5271
    %v5287 = vcombine.low %v5278, %v5285
    %v5289 = vunpack.c.l.s4 1966171168
    %v5290 = vunpack.c.0.s8 %v5289
    %v5291 = vlaneseq
    %v5292 = vshrl.u32 %v5291, 7
    %v5293 = vsub.s32 %v5290, %v5292
    %v5294 = vrot.slane %v5286, %v5293
    %v5296 = vunpack.c.l.s4 1966171168
    %v5297 = vunpack.c.0.s8 %v5296
    %v5298 = vlaneseq
    %v5299 = vshrl.u32 %v5298, 7
    %v5300 = vsub.s32 %v5297, %v5299
    %v5301 = vrot.slane %v5287, %v5300
    %v5302 = vcombine.low %v5294, %v5301
    %v5303 = vcombine.low %v2561, %v2565
    %v5304 = vcombine.low %v2569, %v2573
    %v5305 = vcombine.low %v2577, %v2581
    %v5306 = vcombine.low %v2585, %v2589
    %v5308 = vunpack.c.l.s4 1966171168
    %v5309 = vunpack.c.0.s8 %v5308
    %v5310 = vlaneseq
    %v5311 = vshrl.u32 %v5310, 7
    %v5312 = vsub.s32 %v5309, %v5311
    %v5313 = vrot.slane %v5303, %v5312
    %v5315 = vunpack.c.l.s4 1966171168
    %v5316 = vunpack.c.0.s8 %v5315
    %v5317 = vlaneseq
    %v5318 = vshrl.u32 %v5317, 7
    %v5319 = vsub.s32 %v5316, %v5318
    %v5320 = vrot.slane %v5304, %v5319
    %v5322 = vunpack.c.l.s4 1966171168
    %v5323 = vunpack.c.0.s8 %v5322
    %v5324 = vlaneseq
    %v5325 = vshrl.u32 %v5324, 7
    %v5326 = vsub.s32 %v5323, %v5325
    %v5327 = vrot.slane %v5305, %v5326
    %v5329 = vunpack.c.l.s4 1966171168
    %v5330 = vunpack.c.0.s8 %v5329
    %v5331 = vlaneseq
    %v5332 = vshrl.u32 %v5331, 7
    %v5333 = vsub.s32 %v5330, %v5332
    %v5334 = vrot.slane %v5306, %v5333
    %v5335 = vcombine.low %v5313, %v5320
    %v5336 = vcombine.low %v5327, %v5334
    %v5338 = vunpack.c.l.s4 1966171168
    %v5339 = vunpack.c.0.s8 %v5338
    %v5340 = vlaneseq
    %v5341 = vshrl.u32 %v5340, 7
    %v5342 = vsub.s32 %v5339, %v5341
    %v5343 = vrot.slane %v5335, %v5342
    %v5345 = vunpack.c.l.s4 1966171168
    %v5346 = vunpack.c.0.s8 %v5345
    %v5347 = vlaneseq
    %v5348 = vshrl.u32 %v5347, 7
    %v5349 = vsub.s32 %v5346, %v5348
    %v5350 = vrot.slane %v5336, %v5349
    %v5351 = vcombine.low %v5343, %v5350
    %v5352 = vcombine.low %v2593, %v2597
    %v5353 = vcombine.low %v2601, %v2605
    %v5354 = vcombine.low %v2609, %v2613
    %v5355 = vcombine.low %v2617, %v2621
    %v5357 = vunpack.c.l.s4 1966171168
    %v5358 = vunpack.c.0.s8 %v5357
    %v5359 = vlaneseq
    %v5360 = vshrl.u32 %v5359, 7
    %v5361 = vsub.s32 %v5358, %v5360
    %v5362 = vrot.slane %v5352, %v5361
    %v5364 = vunpack.c.l.s4 1966171168
    %v5365 = vunpack.c.0.s8 %v5364
    %v5366 = vlaneseq
    %v5367 = vshrl.u32 %v5366, 7
    %v5368 = vsub.s32 %v5365, %v5367
    %v5369 = vrot.slane %v5353, %v5368
    %v5371 = vunpack.c.l.s4 1966171168
    %v5372 = vunpack.c.0.s8 %v5371
    %v5373 = vlaneseq
    %v5374 = vshrl.u32 %v5373, 7
    %v5375 = vsub.s32 %v5372, %v5374
    %v5376 = vrot.slane %v5354, %v5375
    %v5378 = vunpack.c.l.s4 1966171168
    %v5379 = vunpack.c.0.s8 %v5378
    %v5380 = vlaneseq
    %v5381 = vshrl.u32 %v5380, 7
    %v5382 = vsub.s32 %v5379, %v5381
    %v5383 = vrot.slane %v5355, %v5382
    %v5384 = vcombine.low %v5362, %v5369
    %v5385 = vcombine.low %v5376, %v5383
    %v5387 = vunpack.c.l.s4 1966171168
    %v5388 = vunpack.c.0.s8 %v5387
    %v5389 = vlaneseq
    %v5390 = vshrl.u32 %v5389, 7
    %v5391 = vsub.s32 %v5388, %v5390
    %v5392 = vrot.slane %v5384, %v5391
    %v5394 = vunpack.c.l.s4 1966171168
    %v5395 = vunpack.c.0.s8 %v5394
    %v5396 = vlaneseq
    %v5397 = vshrl.u32 %v5396, 7
    %v5398 = vsub.s32 %v5395, %v5397
    %v5399 = vrot.slane %v5385, %v5398
    %v5400 = vcombine.low %v5392, %v5399
    %v5401 = vcombine.low %v2625, %v2629
    %v5402 = vcombine.low %v2633, %v2637
    %v5403 = vcombine.low %v2641, %v2645
    %v5404 = vcombine.low %v2649, %v2653
    %v5406 = vunpack.c.l.s4 1966171168
    %v5407 = vunpack.c.0.s8 %v5406
    %v5408 = vlaneseq
    %v5409 = vshrl.u32 %v5408, 7
    %v5410 = vsub.s32 %v5407, %v5409
    %v5411 = vrot.slane %v5401, %v5410
    %v5413 = vunpack.c.l.s4 1966171168
    %v5414 = vunpack.c.0.s8 %v5413
    %v5415 = vlaneseq
    %v5416 = vshrl.u32 %v5415, 7
    %v5417 = vsub.s32 %v5414, %v5416
    %v5418 = vrot.slane %v5402, %v5417
    %v5420 = vunpack.c.l.s4 1966171168
    %v5421 = vunpack.c.0.s8 %v5420
    %v5422 = vlaneseq
    %v5423 = vshrl.u32 %v5422, 7
    %v5424 = vsub.s32 %v5421, %v5423
    %v5425 = vrot.slane %v5403, %v5424
    %v5427 = vunpack.c.l.s4 1966171168
    %v5428 = vunpack.c.0.s8 %v5427
    %v5429 = vlaneseq
    %v5430 = vshrl.u32 %v5429, 7
    %v5431 = vsub.s32 %v5428, %v5430
    %v5432 = vrot.slane %v5404, %v5431
    %v5433 = vcombine.low %v5411, %v5418
    %v5434 = vcombine.low %v5425, %v5432
    %v5436 = vunpack.c.l.s4 1966171168
    %v5437 = vunpack.c.0.s8 %v5436
    %v5438 = vlaneseq
    %v5439 = vshrl.u32 %v5438, 7
    %v5440 = vsub.s32 %v5437, %v5439
    %v5441 = vrot.slane %v5433, %v5440
    %v5443 = vunpack.c.l.s4 1966171168
    %v5444 = vunpack.c.0.s8 %v5443
    %v5445 = vlaneseq
    %v5446 = vshrl.u32 %v5445, 7
    %v5447 = vsub.s32 %v5444, %v5446
    %v5448 = vrot.slane %v5434, %v5447
    %v5449 = vcombine.low %v5441, %v5448
    %v5450 = vcombine.low %v2657, %v2661
    %v5451 = vcombine.low %v2665, %v2669
    %v5452 = vcombine.low %v2673, %v2677
    %v5453 = vcombine.low %v2681, %v2685
    %v5455 = vunpack.c.l.s4 1966171168
    %v5456 = vunpack.c.0.s8 %v5455
    %v5457 = vlaneseq
    %v5458 = vshrl.u32 %v5457, 7
    %v5459 = vsub.s32 %v5456, %v5458
    %v5460 = vrot.slane %v5450, %v5459
    %v5462 = vunpack.c.l.s4 1966171168
    %v5463 = vunpack.c.0.s8 %v5462
    %v5464 = vlaneseq
    %v5465 = vshrl.u32 %v5464, 7
    %v5466 = vsub.s32 %v5463, %v5465
    %v5467 = vrot.slane %v5451, %v5466
    %v5469 = vunpack.c.l.s4 1966171168
    %v5470 = vunpack.c.0.s8 %v5469
    %v5471 = vlaneseq
    %v5472 = vshrl.u32 %v5471, 7
    %v5473 = vsub.s32 %v5470, %v5472
    %v5474 = vrot.slane %v5452, %v5473
    %v5476 = vunpack.c.l.s4 1966171168
    %v5477 = vunpack.c.0.s8 %v5476
    %v5478 = vlaneseq
    %v5479 = vshrl.u32 %v5478, 7
    %v5480 = vsub.s32 %v5477, %v5479
    %v5481 = vrot.slane %v5453, %v5480
    %v5482 = vcombine.low %v5460, %v5467
    %v5483 = vcombine.low %v5474, %v5481
    %v5485 = vunpack.c.l.s4 1966171168
    %v5486 = vunpack.c.0.s8 %v5485
    %v5487 = vlaneseq
    %v5488 = vshrl.u32 %v5487, 7
    %v5489 = vsub.s32 %v5486, %v5488
    %v5490 = vrot.slane %v5482, %v5489
    %v5492 = vunpack.c.l.s4 1966171168
    %v5493 = vunpack.c.0.s8 %v5492
    %v5494 = vlaneseq
    %v5495 = vshrl.u32 %v5494, 7
    %v5496 = vsub.s32 %v5493, %v5495
    %v5497 = vrot.slane %v5483, %v5496
    %v5498 = vcombine.low %v5490, %v5497
    %v5499 = vcombine.low %v2689, %v2693
    %v5500 = vcombine.low %v2697, %v2701
    %v5501 = vcombine.low %v2705, %v2709
    %v5502 = vcombine.low %v2713, %v2717
    %v5504 = vunpack.c.l.s4 1966171168
    %v5505 = vunpack.c.0.s8 %v5504
    %v5506 = vlaneseq
    %v5507 = vshrl.u32 %v5506, 7
    %v5508 = vsub.s32 %v5505, %v5507
    %v5509 = vrot.slane %v5499, %v5508
    %v5511 = vunpack.c.l.s4 1966171168
    %v5512 = vunpack.c.0.s8 %v5511
    %v5513 = vlaneseq
    %v5514 = vshrl.u32 %v5513, 7
    %v5515 = vsub.s32 %v5512, %v5514
    %v5516 = vrot.slane %v5500, %v5515
    %v5518 = vunpack.c.l.s4 1966171168
    %v5519 = vunpack.c.0.s8 %v5518
    %v5520 = vlaneseq
    %v5521 = vshrl.u32 %v5520, 7
    %v5522 = vsub.s32 %v5519, %v5521
    %v5523 = vrot.slane %v5501, %v5522
    %v5525 = vunpack.c.l.s4 1966171168
    %v5526 = vunpack.c.0.s8 %v5525
    %v5527 = vlaneseq
    %v5528 = vshrl.u32 %v5527, 7
    %v5529 = vsub.s32 %v5526, %v5528
    %v5530 = vrot.slane %v5502, %v5529
    %v5531 = vcombine.low %v5509, %v5516
    %v5532 = vcombine.low %v5523, %v5530
    %v5534 = vunpack.c.l.s4 1966171168
    %v5535 = vunpack.c.0.s8 %v5534
    %v5536 = vlaneseq
    %v5537 = vshrl.u32 %v5536, 7
    %v5538 = vsub.s32 %v5535, %v5537
    %v5539 = vrot.slane %v5531, %v5538
    %v5541 = vunpack.c.l.s4 1966171168
    %v5542 = vunpack.c.0.s8 %v5541
    %v5543 = vlaneseq
    %v5544 = vshrl.u32 %v5543, 7
    %v5545 = vsub.s32 %v5542, %v5544
    %v5546 = vrot.slane %v5532, %v5545
    %v5547 = vcombine.low %v5539, %v5546
    %v5548 = vcombine.low %v2721, %v2725
    %v5549 = vcombine.low %v2729, %v2733
    %v5550 = vcombine.low %v2737, %v2741
    %v5551 = vcombine.low %v2745, %v2749
    %v5553 = vunpack.c.l.s4 1966171168
    %v5554 = vunpack.c.0.s8 %v5553
    %v5555 = vlaneseq
    %v5556 = vshrl.u32 %v5555, 7
    %v5557 = vsub.s32 %v5554, %v5556
    %v5558 = vrot.slane %v5548, %v5557
    %v5560 = vunpack.c.l.s4 1966171168
    %v5561 = vunpack.c.0.s8 %v5560
    %v5562 = vlaneseq
    %v5563 = vshrl.u32 %v5562, 7
    %v5564 = vsub.s32 %v5561, %v5563
    %v5565 = vrot.slane %v5549, %v5564
    %v5567 = vunpack.c.l.s4 1966171168
    %v5568 = vunpack.c.0.s8 %v5567
    %v5569 = vlaneseq
    %v5570 = vshrl.u32 %v5569, 7
    %v5571 = vsub.s32 %v5568, %v5570
    %v5572 = vrot.slane %v5550, %v5571
    %v5574 = vunpack.c.l.s4 1966171168
    %v5575 = vunpack.c.0.s8 %v5574
    %v5576 = vlaneseq
    %v5577 = vshrl.u32 %v5576, 7
    %v5578 = vsub.s32 %v5575, %v5577
    %v5579 = vrot.slane %v5551, %v5578
    %v5580 = vcombine.low %v5558, %v5565
    %v5581 = vcombine.low %v5572, %v5579
    %v5583 = vunpack.c.l.s4 1966171168
    %v5584 = vunpack.c.0.s8 %v5583
    %v5585 = vlaneseq
    %v5586 = vshrl.u32 %v5585, 7
    %v5587 = vsub.s32 %v5584, %v5586
    %v5588 = vrot.slane %v5580, %v5587
    %v5590 = vunpack.c.l.s4 1966171168
    %v5591 = vunpack.c.0.s8 %v5590
    %v5592 = vlaneseq
    %v5593 = vshrl.u32 %v5592, 7
    %v5594 = vsub.s32 %v5591, %v5593
    %v5595 = vrot.slane %v5581, %v5594
    %v5596 = vcombine.low %v5588, %v5595
    %v5597 = vcombine.low %v2753, %v2757
    %v5598 = vcombine.low %v2761, %v2765
    %v5599 = vcombine.low %v2769, %v2773
    %v5600 = vcombine.low %v2777, %v2781
    %v5602 = vunpack.c.l.s4 1966171168
    %v5603 = vunpack.c.0.s8 %v5602
    %v5604 = vlaneseq
    %v5605 = vshrl.u32 %v5604, 7
    %v5606 = vsub.s32 %v5603, %v5605
    %v5607 = vrot.slane %v5597, %v5606
    %v5609 = vunpack.c.l.s4 1966171168
    %v5610 = vunpack.c.0.s8 %v5609
    %v5611 = vlaneseq
    %v5612 = vshrl.u32 %v5611, 7
    %v5613 = vsub.s32 %v5610, %v5612
    %v5614 = vrot.slane %v5598, %v5613
    %v5616 = vunpack.c.l.s4 1966171168
    %v5617 = vunpack.c.0.s8 %v5616
    %v5618 = vlaneseq
    %v5619 = vshrl.u32 %v5618, 7
    %v5620 = vsub.s32 %v5617, %v5619
    %v5621 = vrot.slane %v5599, %v5620
    %v5623 = vunpack.c.l.s4 1966171168
    %v5624 = vunpack.c.0.s8 %v5623
    %v5625 = vlaneseq
    %v5626 = vshrl.u32 %v5625, 7
    %v5627 = vsub.s32 %v5624, %v5626
    %v5628 = vrot.slane %v5600, %v5627
    %v5629 = vcombine.low %v5607, %v5614
    %v5630 = vcombine.low %v5621, %v5628
    %v5632 = vunpack.c.l.s4 1966171168
    %v5633 = vunpack.c.0.s8 %v5632
    %v5634 = vlaneseq
    %v5635 = vshrl.u32 %v5634, 7
    %v5636 = vsub.s32 %v5633, %v5635
    %v5637 = vrot.slane %v5629, %v5636
    %v5639 = vunpack.c.l.s4 1966171168
    %v5640 = vunpack.c.0.s8 %v5639
    %v5641 = vlaneseq
    %v5642 = vshrl.u32 %v5641, 7
    %v5643 = vsub.s32 %v5640, %v5642
    %v5644 = vrot.slane %v5630, %v5643
    %v5645 = vcombine.low %v5637, %v5644
    %v5646 = vcombine.low %v2785, %v2789
    %v5647 = vcombine.low %v2793, %v2797
    %v5648 = vcombine.low %v2801, %v2805
    %v5649 = vcombine.low %v2809, %v2813
    %v5651 = vunpack.c.l.s4 1966171168
    %v5652 = vunpack.c.0.s8 %v5651
    %v5653 = vlaneseq
    %v5654 = vshrl.u32 %v5653, 7
    %v5655 = vsub.s32 %v5652, %v5654
    %v5656 = vrot.slane %v5646, %v5655
    %v5658 = vunpack.c.l.s4 1966171168
    %v5659 = vunpack.c.0.s8 %v5658
    %v5660 = vlaneseq
    %v5661 = vshrl.u32 %v5660, 7
    %v5662 = vsub.s32 %v5659, %v5661
    %v5663 = vrot.slane %v5647, %v5662
    %v5665 = vunpack.c.l.s4 1966171168
    %v5666 = vunpack.c.0.s8 %v5665
    %v5667 = vlaneseq
    %v5668 = vshrl.u32 %v5667, 7
    %v5669 = vsub.s32 %v5666, %v5668
    %v5670 = vrot.slane %v5648, %v5669
    %v5672 = vunpack.c.l.s4 1966171168
    %v5673 = vunpack.c.0.s8 %v5672
    %v5674 = vlaneseq
    %v5675 = vshrl.u32 %v5674, 7
    %v5676 = vsub.s32 %v5673, %v5675
    %v5677 = vrot.slane %v5649, %v5676
    %v5678 = vcombine.low %v5656, %v5663
    %v5679 = vcombine.low %v5670, %v5677
    %v5681 = vunpack.c.l.s4 1966171168
    %v5682 = vunpack.c.0.s8 %v5681
    %v5683 = vlaneseq
    %v5684 = vshrl.u32 %v5683, 7
    %v5685 = vsub.s32 %v5682, %v5684
    %v5686 = vrot.slane %v5678, %v5685
    %v5688 = vunpack.c.l.s4 1966171168
    %v5689 = vunpack.c.0.s8 %v5688
    %v5690 = vlaneseq
    %v5691 = vshrl.u32 %v5690, 7
    %v5692 = vsub.s32 %v5689, %v5691
    %v5693 = vrot.slane %v5679, %v5692
    %v5694 = vcombine.low %v5686, %v5693
    %v5695 = vcombine.low %v2817, %v2821
    %v5696 = vcombine.low %v2825, %v2829
    %v5697 = vcombine.low %v2833, %v2837
    %v5698 = vcombine.low %v2841, %v2845
    %v5700 = vunpack.c.l.s4 1966171168
    %v5701 = vunpack.c.0.s8 %v5700
    %v5702 = vlaneseq
    %v5703 = vshrl.u32 %v5702, 7
    %v5704 = vsub.s32 %v5701, %v5703
    %v5705 = vrot.slane %v5695, %v5704
    %v5707 = vunpack.c.l.s4 1966171168
    %v5708 = vunpack.c.0.s8 %v5707
    %v5709 = vlaneseq
    %v5710 = vshrl.u32 %v5709, 7
    %v5711 = vsub.s32 %v5708, %v5710
    %v5712 = vrot.slane %v5696, %v5711
    %v5714 = vunpack.c.l.s4 1966171168
    %v5715 = vunpack.c.0.s8 %v5714
    %v5716 = vlaneseq
    %v5717 = vshrl.u32 %v5716, 7
    %v5718 = vsub.s32 %v5715, %v5717
    %v5719 = vrot.slane %v5697, %v5718
    %v5721 = vunpack.c.l.s4 1966171168
    %v5722 = vunpack.c.0.s8 %v5721
    %v5723 = vlaneseq
    %v5724 = vshrl.u32 %v5723, 7
    %v5725 = vsub.s32 %v5722, %v5724
    %v5726 = vrot.slane %v5698, %v5725
    %v5727 = vcombine.low %v5705, %v5712
    %v5728 = vcombine.low %v5719, %v5726
    %v5730 = vunpack.c.l.s4 1966171168
    %v5731 = vunpack.c.0.s8 %v5730
    %v5732 = vlaneseq
    %v5733 = vshrl.u32 %v5732, 7
    %v5734 = vsub.s32 %v5731, %v5733
    %v5735 = vrot.slane %v5727, %v5734
    %v5737 = vunpack.c.l.s4 1966171168
    %v5738 = vunpack.c.0.s8 %v5737
    %v5739 = vlaneseq
    %v5740 = vshrl.u32 %v5739, 7
    %v5741 = vsub.s32 %v5738, %v5740
    %v5742 = vrot.slane %v5728, %v5741
    %v5743 = vcombine.low %v5735, %v5742
    %v5744 = vcombine.low %v2849, %v2853
    %v5745 = vcombine.low %v2857, %v2861
    %v5746 = vcombine.low %v2865, %v2869
    %v5747 = vcombine.low %v2873, %v2877
    %v5749 = vunpack.c.l.s4 1966171168
    %v5750 = vunpack.c.0.s8 %v5749
    %v5751 = vlaneseq
    %v5752 = vshrl.u32 %v5751, 7
    %v5753 = vsub.s32 %v5750, %v5752
    %v5754 = vrot.slane %v5744, %v5753
    %v5756 = vunpack.c.l.s4 1966171168
    %v5757 = vunpack.c.0.s8 %v5756
    %v5758 = vlaneseq
    %v5759 = vshrl.u32 %v5758, 7
    %v5760 = vsub.s32 %v5757, %v5759
    %v5761 = vrot.slane %v5745, %v5760
    %v5763 = vunpack.c.l.s4 1966171168
    %v5764 = vunpack.c.0.s8 %v5763
    %v5765 = vlaneseq
    %v5766 = vshrl.u32 %v5765, 7
    %v5767 = vsub.s32 %v5764, %v5766
    %v5768 = vrot.slane %v5746, %v5767
    %v5770 = vunpack.c.l.s4 1966171168
    %v5771 = vunpack.c.0.s8 %v5770
    %v5772 = vlaneseq
    %v5773 = vshrl.u32 %v5772, 7
    %v5774 = vsub.s32 %v5771, %v5773
    %v5775 = vrot.slane %v5747, %v5774
    %v5776 = vcombine.low %v5754, %v5761
    %v5777 = vcombine.low %v5768, %v5775
    %v5779 = vunpack.c.l.s4 1966171168
    %v5780 = vunpack.c.0.s8 %v5779
    %v5781 = vlaneseq
    %v5782 = vshrl.u32 %v5781, 7
    %v5783 = vsub.s32 %v5780, %v5782
    %v5784 = vrot.slane %v5776, %v5783
    %v5786 = vunpack.c.l.s4 1966171168
    %v5787 = vunpack.c.0.s8 %v5786
    %v5788 = vlaneseq
    %v5789 = vshrl.u32 %v5788, 7
    %v5790 = vsub.s32 %v5787, %v5789
    %v5791 = vrot.slane %v5777, %v5790
    %v5792 = vcombine.low %v5784, %v5791
    %v5793 = vcombine.low %v2881, %v2885
    %v5794 = vcombine.low %v2889, %v2893
    %v5795 = vcombine.low %v2897, %v2901
    %v5796 = vcombine.low %v2905, %v2909
    %v5798 = vunpack.c.l.s4 1966171168
    %v5799 = vunpack.c.0.s8 %v5798
    %v5800 = vlaneseq
    %v5801 = vshrl.u32 %v5800, 7
    %v5802 = vsub.s32 %v5799, %v5801
    %v5803 = vrot.slane %v5793, %v5802
    %v5805 = vunpack.c.l.s4 1966171168
    %v5806 = vunpack.c.0.s8 %v5805
    %v5807 = vlaneseq
    %v5808 = vshrl.u32 %v5807, 7
    %v5809 = vsub.s32 %v5806, %v5808
    %v5810 = vrot.slane %v5794, %v5809
    %v5812 = vunpack.c.l.s4 1966171168
    %v5813 = vunpack.c.0.s8 %v5812
    %v5814 = vlaneseq
    %v5815 = vshrl.u32 %v5814, 7
    %v5816 = vsub.s32 %v5813, %v5815
    %v5817 = vrot.slane %v5795, %v5816
    %v5819 = vunpack.c.l.s4 1966171168
    %v5820 = vunpack.c.0.s8 %v5819
    %v5821 = vlaneseq
    %v5822 = vshrl.u32 %v5821, 7
    %v5823 = vsub.s32 %v5820, %v5822
    %v5824 = vrot.slane %v5796, %v5823
    %v5825 = vcombine.low %v5803, %v5810
    %v5826 = vcombine.low %v5817, %v5824
    %v5828 = vunpack.c.l.s4 1966171168
    %v5829 = vunpack.c.0.s8 %v5828
    %v5830 = vlaneseq
    %v5831 = vshrl.u32 %v5830, 7
    %v5832 = vsub.s32 %v5829, %v5831
    %v5833 = vrot.slane %v5825, %v5832
    %v5835 = vunpack.c.l.s4 1966171168
    %v5836 = vunpack.c.0.s8 %v5835
    %v5837 = vlaneseq
    %v5838 = vshrl.u32 %v5837, 7
    %v5839 = vsub.s32 %v5836, %v5838
    %v5840 = vrot.slane %v5826, %v5839
    %v5841 = vcombine.low %v5833, %v5840
    %v5842 = vcombine.low %v2913, %v2917
    %v5843 = vcombine.low %v2921, %v2925
    %v5844 = vcombine.low %v2929, %v2933
    %v5845 = vcombine.low %v2937, %v2941
    %v5847 = vunpack.c.l.s4 1966171168
    %v5848 = vunpack.c.0.s8 %v5847
    %v5849 = vlaneseq
    %v5850 = vshrl.u32 %v5849, 7
    %v5851 = vsub.s32 %v5848, %v5850
    %v5852 = vrot.slane %v5842, %v5851
    %v5854 = vunpack.c.l.s4 1966171168
    %v5855 = vunpack.c.0.s8 %v5854
    %v5856 = vlaneseq
    %v5857 = vshrl.u32 %v5856, 7
    %v5858 = vsub.s32 %v5855, %v5857
    %v5859 = vrot.slane %v5843, %v5858
    %v5861 = vunpack.c.l.s4 1966171168
    %v5862 = vunpack.c.0.s8 %v5861
    %v5863 = vlaneseq
    %v5864 = vshrl.u32 %v5863, 7
    %v5865 = vsub.s32 %v5862, %v5864
    %v5866 = vrot.slane %v5844, %v5865
    %v5868 = vunpack.c.l.s4 1966171168
    %v5869 = vunpack.c.0.s8 %v5868
    %v5870 = vlaneseq
    %v5871 = vshrl.u32 %v5870, 7
    %v5872 = vsub.s32 %v5869, %v5871
    %v5873 = vrot.slane %v5845, %v5872
    %v5874 = vcombine.low %v5852, %v5859
    %v5875 = vcombine.low %v5866, %v5873
    %v5877 = vunpack.c.l.s4 1966171168
    %v5878 = vunpack.c.0.s8 %v5877
    %v5879 = vlaneseq
    %v5880 = vshrl.u32 %v5879, 7
    %v5881 = vsub.s32 %v5878, %v5880
    %v5882 = vrot.slane %v5874, %v5881
    %v5884 = vunpack.c.l.s4 1966171168
    %v5885 = vunpack.c.0.s8 %v5884
    %v5886 = vlaneseq
    %v5887 = vshrl.u32 %v5886, 7
    %v5888 = vsub.s32 %v5885, %v5887
    %v5889 = vrot.slane %v5875, %v5888
    %v5890 = vcombine.low %v5882, %v5889
    %v5891 = vcombine.low %v2945, %v2949
    %v5892 = vcombine.low %v2953, %v2957
    %v5893 = vcombine.low %v2961, %v2965
    %v5894 = vcombine.low %v2969, %v2973
    %v5896 = vunpack.c.l.s4 1966171168
    %v5897 = vunpack.c.0.s8 %v5896
    %v5898 = vlaneseq
    %v5899 = vshrl.u32 %v5898, 7
    %v5900 = vsub.s32 %v5897, %v5899
    %v5901 = vrot.slane %v5891, %v5900
    %v5903 = vunpack.c.l.s4 1966171168
    %v5904 = vunpack.c.0.s8 %v5903
    %v5905 = vlaneseq
    %v5906 = vshrl.u32 %v5905, 7
    %v5907 = vsub.s32 %v5904, %v5906
    %v5908 = vrot.slane %v5892, %v5907
    %v5910 = vunpack.c.l.s4 1966171168
    %v5911 = vunpack.c.0.s8 %v5910
    %v5912 = vlaneseq
    %v5913 = vshrl.u32 %v5912, 7
    %v5914 = vsub.s32 %v5911, %v5913
    %v5915 = vrot.slane %v5893, %v5914
    %v5917 = vunpack.c.l.s4 1966171168
    %v5918 = vunpack.c.0.s8 %v5917
    %v5919 = vlaneseq
    %v5920 = vshrl.u32 %v5919, 7
    %v5921 = vsub.s32 %v5918, %v5920
    %v5922 = vrot.slane %v5894, %v5921
    %v5923 = vcombine.low %v5901, %v5908
    %v5924 = vcombine.low %v5915, %v5922
    %v5926 = vunpack.c.l.s4 1966171168
    %v5927 = vunpack.c.0.s8 %v5926
    %v5928 = vlaneseq
    %v5929 = vshrl.u32 %v5928, 7
    %v5930 = vsub.s32 %v5927, %v5929
    %v5931 = vrot.slane %v5923, %v5930
    %v5933 = vunpack.c.l.s4 1966171168
    %v5934 = vunpack.c.0.s8 %v5933
    %v5935 = vlaneseq
    %v5936 = vshrl.u32 %v5935, 7
    %v5937 = vsub.s32 %v5934, %v5936
    %v5938 = vrot.slane %v5924, %v5937
    %v5939 = vcombine.low %v5931, %v5938
    %v5940 = vcombine.low %v2977, %v2981
    %v5941 = vcombine.low %v2985, %v2989
    %v5942 = vcombine.low %v2993, %v2997
    %v5943 = vcombine.low %v3001, %v3005
    %v5945 = vunpack.c.l.s4 1966171168
    %v5946 = vunpack.c.0.s8 %v5945
    %v5947 = vlaneseq
    %v5948 = vshrl.u32 %v5947, 7
    %v5949 = vsub.s32 %v5946, %v5948
    %v5950 = vrot.slane %v5940, %v5949
    %v5952 = vunpack.c.l.s4 1966171168
    %v5953 = vunpack.c.0.s8 %v5952
    %v5954 = vlaneseq
    %v5955 = vshrl.u32 %v5954, 7
    %v5956 = vsub.s32 %v5953, %v5955
    %v5957 = vrot.slane %v5941, %v5956
    %v5959 = vunpack.c.l.s4 1966171168
    %v5960 = vunpack.c.0.s8 %v5959
    %v5961 = vlaneseq
    %v5962 = vshrl.u32 %v5961, 7
    %v5963 = vsub.s32 %v5960, %v5962
    %v5964 = vrot.slane %v5942, %v5963
    %v5966 = vunpack.c.l.s4 1966171168
    %v5967 = vunpack.c.0.s8 %v5966
    %v5968 = vlaneseq
    %v5969 = vshrl.u32 %v5968, 7
    %v5970 = vsub.s32 %v5967, %v5969
    %v5971 = vrot.slane %v5943, %v5970
    %v5972 = vcombine.low %v5950, %v5957
    %v5973 = vcombine.low %v5964, %v5971
    %v5975 = vunpack.c.l.s4 1966171168
    %v5976 = vunpack.c.0.s8 %v5975
    %v5977 = vlaneseq
    %v5978 = vshrl.u32 %v5977, 7
    %v5979 = vsub.s32 %v5976, %v5978
    %v5980 = vrot.slane %v5972, %v5979
    %v5982 = vunpack.c.l.s4 1966171168
    %v5983 = vunpack.c.0.s8 %v5982
    %v5984 = vlaneseq
    %v5985 = vshrl.u32 %v5984, 7
    %v5986 = vsub.s32 %v5983, %v5985
    %v5987 = vrot.slane %v5973, %v5986
    %v5988 = vcombine.low %v5980, %v5987
    %v5989 = vcombine.low %v3009, %v3013
    %v5990 = vcombine.low %v3017, %v3021
    %v5991 = vcombine.low %v3025, %v3029
    %v5992 = vcombine.low %v3033, %v3037
    %v5994 = vunpack.c.l.s4 1966171168
    %v5995 = vunpack.c.0.s8 %v5994
    %v5996 = vlaneseq
    %v5997 = vshrl.u32 %v5996, 7
    %v5998 = vsub.s32 %v5995, %v5997
    %v5999 = vrot.slane %v5989, %v5998
    %v6001 = vunpack.c.l.s4 1966171168
    %v6002 = vunpack.c.0.s8 %v6001
    %v6003 = vlaneseq
    %v6004 = vshrl.u32 %v6003, 7
    %v6005 = vsub.s32 %v6002, %v6004
    %v6006 = vrot.slane %v5990, %v6005
    %v6008 = vunpack.c.l.s4 1966171168
    %v6009 = vunpack.c.0.s8 %v6008
    %v6010 = vlaneseq
    %v6011 = vshrl.u32 %v6010, 7
    %v6012 = vsub.s32 %v6009, %v6011
    %v6013 = vrot.slane %v5991, %v6012
    %v6015 = vunpack.c.l.s4 1966171168
    %v6016 = vunpack.c.0.s8 %v6015
    %v6017 = vlaneseq
    %v6018 = vshrl.u32 %v6017, 7
    %v6019 = vsub.s32 %v6016, %v6018
    %v6020 = vrot.slane %v5992, %v6019
    %v6021 = vcombine.low %v5999, %v6006
    %v6022 = vcombine.low %v6013, %v6020
    %v6024 = vunpack.c.l.s4 1966171168
    %v6025 = vunpack.c.0.s8 %v6024
    %v6026 = vlaneseq
    %v6027 = vshrl.u32 %v6026, 7
    %v6028 = vsub.s32 %v6025, %v6027
    %v6029 = vrot.slane %v6021, %v6028
    %v6031 = vunpack.c.l.s4 1966171168
    %v6032 = vunpack.c.0.s8 %v6031
    %v6033 = vlaneseq
    %v6034 = vshrl.u32 %v6033, 7
    %v6035 = vsub.s32 %v6032, %v6034
    %v6036 = vrot.slane %v6022, %v6035
    %v6037 = vcombine.low %v6029, %v6036
    %v6038 = vcombine.low %v3041, %v3045
    %v6039 = vcombine.low %v3049, %v3053
    %v6040 = vcombine.low %v3057, %v3061
    %v6041 = vcombine.low %v3065, %v3069
    %v6043 = vunpack.c.l.s4 1966171168
    %v6044 = vunpack.c.0.s8 %v6043
    %v6045 = vlaneseq
    %v6046 = vshrl.u32 %v6045, 7
    %v6047 = vsub.s32 %v6044, %v6046
    %v6048 = vrot.slane %v6038, %v6047
    %v6050 = vunpack.c.l.s4 1966171168
    %v6051 = vunpack.c.0.s8 %v6050
    %v6052 = vlaneseq
    %v6053 = vshrl.u32 %v6052, 7
    %v6054 = vsub.s32 %v6051, %v6053
    %v6055 = vrot.slane %v6039, %v6054
    %v6057 = vunpack.c.l.s4 1966171168
    %v6058 = vunpack.c.0.s8 %v6057
    %v6059 = vlaneseq
    %v6060 = vshrl.u32 %v6059, 7
    %v6061 = vsub.s32 %v6058, %v6060
    %v6062 = vrot.slane %v6040, %v6061
    %v6064 = vunpack.c.l.s4 1966171168
    %v6065 = vunpack.c.0.s8 %v6064
    %v6066 = vlaneseq
    %v6067 = vshrl.u32 %v6066, 7
    %v6068 = vsub.s32 %v6065, %v6067
    %v6069 = vrot.slane %v6041, %v6068
    %v6070 = vcombine.low %v6048, %v6055
    %v6071 = vcombine.low %v6062, %v6069
    %v6073 = vunpack.c.l.s4 1966171168
    %v6074 = vunpack.c.0.s8 %v6073
    %v6075 = vlaneseq
    %v6076 = vshrl.u32 %v6075, 7
    %v6077 = vsub.s32 %v6074, %v6076
    %v6078 = vrot.slane %v6070, %v6077
    %v6080 = vunpack.c.l.s4 1966171168
    %v6081 = vunpack.c.0.s8 %v6080
    %v6082 = vlaneseq
    %v6083 = vshrl.u32 %v6082, 7
    %v6084 = vsub.s32 %v6081, %v6083
    %v6085 = vrot.slane %v6071, %v6084
    %v6086 = vcombine.low %v6078, %v6085
    %v6087 = vcombine.low %v3073, %v3077
    %v6088 = vcombine.low %v3081, %v3085
    %v6089 = vcombine.low %v3089, %v3093
    %v6090 = vcombine.low %v3097, %v3101
    %v6092 = vunpack.c.l.s4 1966171168
    %v6093 = vunpack.c.0.s8 %v6092
    %v6094 = vlaneseq
    %v6095 = vshrl.u32 %v6094, 7
    %v6096 = vsub.s32 %v6093, %v6095
    %v6097 = vrot.slane %v6087, %v6096
    %v6099 = vunpack.c.l.s4 1966171168
    %v6100 = vunpack.c.0.s8 %v6099
    %v6101 = vlaneseq
    %v6102 = vshrl.u32 %v6101, 7
    %v6103 = vsub.s32 %v6100, %v6102
    %v6104 = vrot.slane %v6088, %v6103
    %v6106 = vunpack.c.l.s4 1966171168
    %v6107 = vunpack.c.0.s8 %v6106
    %v6108 = vlaneseq
    %v6109 = vshrl.u32 %v6108, 7
    %v6110 = vsub.s32 %v6107, %v6109
    %v6111 = vrot.slane %v6089, %v6110
    %v6113 = vunpack.c.l.s4 1966171168
    %v6114 = vunpack.c.0.s8 %v6113
    %v6115 = vlaneseq
    %v6116 = vshrl.u32 %v6115, 7
    %v6117 = vsub.s32 %v6114, %v6116
    %v6118 = vrot.slane %v6090, %v6117
    %v6119 = vcombine.low %v6097, %v6104
    %v6120 = vcombine.low %v6111, %v6118
    %v6122 = vunpack.c.l.s4 1966171168
    %v6123 = vunpack.c.0.s8 %v6122
    %v6124 = vlaneseq
    %v6125 = vshrl.u32 %v6124, 7
    %v6126 = vsub.s32 %v6123, %v6125
    %v6127 = vrot.slane %v6119, %v6126
    %v6129 = vunpack.c.l.s4 1966171168
    %v6130 = vunpack.c.0.s8 %v6129
    %v6131 = vlaneseq
    %v6132 = vshrl.u32 %v6131, 7
    %v6133 = vsub.s32 %v6130, %v6132
    %v6134 = vrot.slane %v6120, %v6133
    %v6135 = vcombine.low %v6127, %v6134
    %v6136 = vcombine.low %v3105, %v3109
    %v6137 = vcombine.low %v3113, %v3117
    %v6138 = vcombine.low %v3121, %v3125
    %v6139 = vcombine.low %v3129, %v3133
    %v6141 = vunpack.c.l.s4 1966171168
    %v6142 = vunpack.c.0.s8 %v6141
    %v6143 = vlaneseq
    %v6144 = vshrl.u32 %v6143, 7
    %v6145 = vsub.s32 %v6142, %v6144
    %v6146 = vrot.slane %v6136, %v6145
    %v6148 = vunpack.c.l.s4 1966171168
    %v6149 = vunpack.c.0.s8 %v6148
    %v6150 = vlaneseq
    %v6151 = vshrl.u32 %v6150, 7
    %v6152 = vsub.s32 %v6149, %v6151
    %v6153 = vrot.slane %v6137, %v6152
    %v6155 = vunpack.c.l.s4 1966171168
    %v6156 = vunpack.c.0.s8 %v6155
    %v6157 = vlaneseq
    %v6158 = vshrl.u32 %v6157, 7
    %v6159 = vsub.s32 %v6156, %v6158
    %v6160 = vrot.slane %v6138, %v6159
    %v6162 = vunpack.c.l.s4 1966171168
    %v6163 = vunpack.c.0.s8 %v6162
    %v6164 = vlaneseq
    %v6165 = vshrl.u32 %v6164, 7
    %v6166 = vsub.s32 %v6163, %v6165
    %v6167 = vrot.slane %v6139, %v6166
    %v6168 = vcombine.low %v6146, %v6153
    %v6169 = vcombine.low %v6160, %v6167
    %v6171 = vunpack.c.l.s4 1966171168
    %v6172 = vunpack.c.0.s8 %v6171
    %v6173 = vlaneseq
    %v6174 = vshrl.u32 %v6173, 7
    %v6175 = vsub.s32 %v6172, %v6174
    %v6176 = vrot.slane %v6168, %v6175
    %v6178 = vunpack.c.l.s4 1966171168
    %v6179 = vunpack.c.0.s8 %v6178
    %v6180 = vlaneseq
    %v6181 = vshrl.u32 %v6180, 7
    %v6182 = vsub.s32 %v6179, %v6181
    %v6183 = vrot.slane %v6169, %v6182
    %v6184 = vcombine.low %v6176, %v6183
    %v6185 = vcombine.low %v3137, %v3141
    %v6186 = vcombine.low %v3145, %v3149
    %v6187 = vcombine.low %v3153, %v3157
    %v6188 = vcombine.low %v3161, %v3165
    %v6190 = vunpack.c.l.s4 1966171168
    %v6191 = vunpack.c.0.s8 %v6190
    %v6192 = vlaneseq
    %v6193 = vshrl.u32 %v6192, 7
    %v6194 = vsub.s32 %v6191, %v6193
    %v6195 = vrot.slane %v6185, %v6194
    %v6197 = vunpack.c.l.s4 1966171168
    %v6198 = vunpack.c.0.s8 %v6197
    %v6199 = vlaneseq
    %v6200 = vshrl.u32 %v6199, 7
    %v6201 = vsub.s32 %v6198, %v6200
    %v6202 = vrot.slane %v6186, %v6201
    %v6204 = vunpack.c.l.s4 1966171168
    %v6205 = vunpack.c.0.s8 %v6204
    %v6206 = vlaneseq
    %v6207 = vshrl.u32 %v6206, 7
    %v6208 = vsub.s32 %v6205, %v6207
    %v6209 = vrot.slane %v6187, %v6208
    %v6211 = vunpack.c.l.s4 1966171168
    %v6212 = vunpack.c.0.s8 %v6211
    %v6213 = vlaneseq
    %v6214 = vshrl.u32 %v6213, 7
    %v6215 = vsub.s32 %v6212, %v6214
    %v6216 = vrot.slane %v6188, %v6215
    %v6217 = vcombine.low %v6195, %v6202
    %v6218 = vcombine.low %v6209, %v6216
    %v6220 = vunpack.c.l.s4 1966171168
    %v6221 = vunpack.c.0.s8 %v6220
    %v6222 = vlaneseq
    %v6223 = vshrl.u32 %v6222, 7
    %v6224 = vsub.s32 %v6221, %v6223
    %v6225 = vrot.slane %v6217, %v6224
    %v6227 = vunpack.c.l.s4 1966171168
    %v6228 = vunpack.c.0.s8 %v6227
    %v6229 = vlaneseq
    %v6230 = vshrl.u32 %v6229, 7
    %v6231 = vsub.s32 %v6228, %v6230
    %v6232 = vrot.slane %v6218, %v6231
    %v6233 = vcombine.low %v6225, %v6232
    %v6234 = vcombine.low %v3169, %v3173
    %v6235 = vcombine.low %v3177, %v3181
    %v6236 = vcombine.low %v3185, %v3189
    %v6237 = vcombine.low %v3193, %v3197
    %v6239 = vunpack.c.l.s4 1966171168
    %v6240 = vunpack.c.0.s8 %v6239
    %v6241 = vlaneseq
    %v6242 = vshrl.u32 %v6241, 7
    %v6243 = vsub.s32 %v6240, %v6242
    %v6244 = vrot.slane %v6234, %v6243
    %v6246 = vunpack.c.l.s4 1966171168
    %v6247 = vunpack.c.0.s8 %v6246
    %v6248 = vlaneseq
    %v6249 = vshrl.u32 %v6248, 7
    %v6250 = vsub.s32 %v6247, %v6249
    %v6251 = vrot.slane %v6235, %v6250
    %v6253 = vunpack.c.l.s4 1966171168
    %v6254 = vunpack.c.0.s8 %v6253
    %v6255 = vlaneseq
    %v6256 = vshrl.u32 %v6255, 7
    %v6257 = vsub.s32 %v6254, %v6256
    %v6258 = vrot.slane %v6236, %v6257
    %v6260 = vunpack.c.l.s4 1966171168
    %v6261 = vunpack.c.0.s8 %v6260
    %v6262 = vlaneseq
    %v6263 = vshrl.u32 %v6262, 7
    %v6264 = vsub.s32 %v6261, %v6263
    %v6265 = vrot.slane %v6237, %v6264
    %v6266 = vcombine.low %v6244, %v6251
    %v6267 = vcombine.low %v6258, %v6265
    %v6269 = vunpack.c.l.s4 1966171168
    %v6270 = vunpack.c.0.s8 %v6269
    %v6271 = vlaneseq
    %v6272 = vshrl.u32 %v6271, 7
    %v6273 = vsub.s32 %v6270, %v6272
    %v6274 = vrot.slane %v6266, %v6273
    %v6276 = vunpack.c.l.s4 1966171168
    %v6277 = vunpack.c.0.s8 %v6276
    %v6278 = vlaneseq
    %v6279 = vshrl.u32 %v6278, 7
    %v6280 = vsub.s32 %v6277, %v6279
    %v6281 = vrot.slane %v6267, %v6280
    %v6282 = vcombine.low %v6274, %v6281
    %v6283 = vcombine.low %v3201, %v3205
    %v6284 = vcombine.low %v3209, %v3213
    %v6285 = vcombine.low %v3217, %v3221
    %v6286 = vcombine.low %v3225, %v3229
    %v6288 = vunpack.c.l.s4 1966171168
    %v6289 = vunpack.c.0.s8 %v6288
    %v6290 = vlaneseq
    %v6291 = vshrl.u32 %v6290, 7
    %v6292 = vsub.s32 %v6289, %v6291
    %v6293 = vrot.slane %v6283, %v6292
    %v6295 = vunpack.c.l.s4 1966171168
    %v6296 = vunpack.c.0.s8 %v6295
    %v6297 = vlaneseq
    %v6298 = vshrl.u32 %v6297, 7
    %v6299 = vsub.s32 %v6296, %v6298
    %v6300 = vrot.slane %v6284, %v6299
    %v6302 = vunpack.c.l.s4 1966171168
    %v6303 = vunpack.c.0.s8 %v6302
    %v6304 = vlaneseq
    %v6305 = vshrl.u32 %v6304, 7
    %v6306 = vsub.s32 %v6303, %v6305
    %v6307 = vrot.slane %v6285, %v6306
    %v6309 = vunpack.c.l.s4 1966171168
    %v6310 = vunpack.c.0.s8 %v6309
    %v6311 = vlaneseq
    %v6312 = vshrl.u32 %v6311, 7
    %v6313 = vsub.s32 %v6310, %v6312
    %v6314 = vrot.slane %v6286, %v6313
    %v6315 = vcombine.low %v6293, %v6300
    %v6316 = vcombine.low %v6307, %v6314
    %v6318 = vunpack.c.l.s4 1966171168
    %v6319 = vunpack.c.0.s8 %v6318
    %v6320 = vlaneseq
    %v6321 = vshrl.u32 %v6320, 7
    %v6322 = vsub.s32 %v6319, %v6321
    %v6323 = vrot.slane %v6315, %v6322
    %v6325 = vunpack.c.l.s4 1966171168
    %v6326 = vunpack.c.0.s8 %v6325
    %v6327 = vlaneseq
    %v6328 = vshrl.u32 %v6327, 7
    %v6329 = vsub.s32 %v6326, %v6328
    %v6330 = vrot.slane %v6316, %v6329
    %v6331 = vcombine.low %v6323, %v6330
    %v6332 = vcombine.low %v3233, %v3237
    %v6333 = vcombine.low %v3241, %v3245
    %v6334 = vcombine.low %v3249, %v3253
    %v6335 = vcombine.low %v3257, %v3261
    %v6337 = vunpack.c.l.s4 1966171168
    %v6338 = vunpack.c.0.s8 %v6337
    %v6339 = vlaneseq
    %v6340 = vshrl.u32 %v6339, 7
    %v6341 = vsub.s32 %v6338, %v6340
    %v6342 = vrot.slane %v6332, %v6341
    %v6344 = vunpack.c.l.s4 1966171168
    %v6345 = vunpack.c.0.s8 %v6344
    %v6346 = vlaneseq
    %v6347 = vshrl.u32 %v6346, 7
    %v6348 = vsub.s32 %v6345, %v6347
    %v6349 = vrot.slane %v6333, %v6348
    %v6351 = vunpack.c.l.s4 1966171168
    %v6352 = vunpack.c.0.s8 %v6351
    %v6353 = vlaneseq
    %v6354 = vshrl.u32 %v6353, 7
    %v6355 = vsub.s32 %v6352, %v6354
    %v6356 = vrot.slane %v6334, %v6355
    %v6358 = vunpack.c.l.s4 1966171168
    %v6359 = vunpack.c.0.s8 %v6358
    %v6360 = vlaneseq
    %v6361 = vshrl.u32 %v6360, 7
    %v6362 = vsub.s32 %v6359, %v6361
    %v6363 = vrot.slane %v6335, %v6362
    %v6364 = vcombine.low %v6342, %v6349
    %v6365 = vcombine.low %v6356, %v6363
    %v6367 = vunpack.c.l.s4 1966171168
    %v6368 = vunpack.c.0.s8 %v6367
    %v6369 = vlaneseq
    %v6370 = vshrl.u32 %v6369, 7
    %v6371 = vsub.s32 %v6368, %v6370
    %v6372 = vrot.slane %v6364, %v6371
    %v6374 = vunpack.c.l.s4 1966171168
    %v6375 = vunpack.c.0.s8 %v6374
    %v6376 = vlaneseq
    %v6377 = vshrl.u32 %v6376, 7
    %v6378 = vsub.s32 %v6375, %v6377
    %v6379 = vrot.slane %v6365, %v6378
    %v6380 = vcombine.low %v6372, %v6379
    %v6381 = vcombine.low %v3265, %v3269
    %v6382 = vcombine.low %v3273, %v3277
    %v6383 = vcombine.low %v3281, %v3285
    %v6384 = vcombine.low %v3289, %v3293
    %v6386 = vunpack.c.l.s4 1966171168
    %v6387 = vunpack.c.0.s8 %v6386
    %v6388 = vlaneseq
    %v6389 = vshrl.u32 %v6388, 7
    %v6390 = vsub.s32 %v6387, %v6389
    %v6391 = vrot.slane %v6381, %v6390
    %v6393 = vunpack.c.l.s4 1966171168
    %v6394 = vunpack.c.0.s8 %v6393
    %v6395 = vlaneseq
    %v6396 = vshrl.u32 %v6395, 7
    %v6397 = vsub.s32 %v6394, %v6396
    %v6398 = vrot.slane %v6382, %v6397
    %v6400 = vunpack.c.l.s4 1966171168
    %v6401 = vunpack.c.0.s8 %v6400
    %v6402 = vlaneseq
    %v6403 = vshrl.u32 %v6402, 7
    %v6404 = vsub.s32 %v6401, %v6403
    %v6405 = vrot.slane %v6383, %v6404
    %v6407 = vunpack.c.l.s4 1966171168
    %v6408 = vunpack.c.0.s8 %v6407
    %v6409 = vlaneseq
    %v6410 = vshrl.u32 %v6409, 7
    %v6411 = vsub.s32 %v6408, %v6410
    %v6412 = vrot.slane %v6384, %v6411
    %v6413 = vcombine.low %v6391, %v6398
    %v6414 = vcombine.low %v6405, %v6412
    %v6416 = vunpack.c.l.s4 1966171168
    %v6417 = vunpack.c.0.s8 %v6416
    %v6418 = vlaneseq
    %v6419 = vshrl.u32 %v6418, 7
    %v6420 = vsub.s32 %v6417, %v6419
    %v6421 = vrot.slane %v6413, %v6420
    %v6423 = vunpack.c.l.s4 1966171168
    %v6424 = vunpack.c.0.s8 %v6423
    %v6425 = vlaneseq
    %v6426 = vshrl.u32 %v6425, 7
    %v6427 = vsub.s32 %v6424, %v6426
    %v6428 = vrot.slane %v6414, %v6427
    %v6429 = vcombine.low %v6421, %v6428
    %6430 = vset.pattern.permute.xlu0 0
    %6431 = vperm.xlu0 %6430, %v3342
    %v6432 = vpop.permute.xlu0 %6431
    %6433 = vset.pattern.permute.xlu0 0
    %6434 = vperm.xlu0 %6433, %v3391
    %v6435 = vpop.permute.xlu0 %6434
    %6436 = vset.pattern.permute.xlu0 0
    %6437 = vperm.xlu0 %6436, %v3440
    %v6438 = vpop.permute.xlu0 %6437
    %6439 = vset.pattern.permute.xlu0 0
    %6440 = vperm.xlu0 %6439, %v3489
    %v6441 = vpop.permute.xlu0 %6440
    %6442 = vset.pattern.permute.xlu0 0
    %6443 = vperm.xlu0 %6442, %v3538
    %v6444 = vpop.permute.xlu0 %6443
    %6445 = vset.pattern.permute.xlu0 0
    %6446 = vperm.xlu0 %6445, %v3587
    %v6447 = vpop.permute.xlu0 %6446
    %6448 = vset.pattern.permute.xlu0 0
    %6449 = vperm.xlu0 %6448, %v3636
    %v6450 = vpop.permute.xlu0 %6449
    %6451 = vset.pattern.permute.xlu0 0
    %6452 = vperm.xlu0 %6451, %v3685
    %v6453 = vpop.permute.xlu0 %6452
    %6454 = vset.pattern.permute.xlu0 0
    %6455 = vperm.xlu0 %6454, %v3734
    %v6456 = vpop.permute.xlu0 %6455
    %6457 = vset.pattern.permute.xlu0 0
    %6458 = vperm.xlu0 %6457, %v3783
    %v6459 = vpop.permute.xlu0 %6458
    %6460 = vset.pattern.permute.xlu0 0
    %6461 = vperm.xlu0 %6460, %v3832
    %v6462 = vpop.permute.xlu0 %6461
    %6463 = vset.pattern.permute.xlu0 0
    %6464 = vperm.xlu0 %6463, %v3881
    %v6465 = vpop.permute.xlu0 %6464
    %6466 = vset.pattern.permute.xlu0 0
    %6467 = vperm.xlu0 %6466, %v3930
    %v6468 = vpop.permute.xlu0 %6467
    %6469 = vset.pattern.permute.xlu0 0
    %6470 = vperm.xlu0 %6469, %v3979
    %v6471 = vpop.permute.xlu0 %6470
    %6472 = vset.pattern.permute.xlu0 0
    %6473 = vperm.xlu0 %6472, %v4028
    %v6474 = vpop.permute.xlu0 %6473
    %6475 = vset.pattern.permute.xlu0 0
    %6476 = vperm.xlu0 %6475, %v4077
    %v6477 = vpop.permute.xlu0 %6476
    %6478 = vset.pattern.permute.xlu0 0
    %6479 = vperm.xlu0 %6478, %v4126
    %v6480 = vpop.permute.xlu0 %6479
    %6481 = vset.pattern.permute.xlu0 0
    %6482 = vperm.xlu0 %6481, %v4175
    %v6483 = vpop.permute.xlu0 %6482
    %6484 = vset.pattern.permute.xlu0 0
    %6485 = vperm.xlu0 %6484, %v4224
    %v6486 = vpop.permute.xlu0 %6485
    %6487 = vset.pattern.permute.xlu0 0
    %6488 = vperm.xlu0 %6487, %v4273
    %v6489 = vpop.permute.xlu0 %6488
    %6490 = vset.pattern.permute.xlu0 0
    %6491 = vperm.xlu0 %6490, %v4322
    %v6492 = vpop.permute.xlu0 %6491
    %6493 = vset.pattern.permute.xlu0 0
    %6494 = vperm.xlu0 %6493, %v4371
    %v6495 = vpop.permute.xlu0 %6494
    %6496 = vset.pattern.permute.xlu0 0
    %6497 = vperm.xlu0 %6496, %v4420
    %v6498 = vpop.permute.xlu0 %6497
    %6499 = vset.pattern.permute.xlu0 0
    %6500 = vperm.xlu0 %6499, %v4469
    %v6501 = vpop.permute.xlu0 %6500
    %6502 = vset.pattern.permute.xlu0 0
    %6503 = vperm.xlu0 %6502, %v4518
    %v6504 = vpop.permute.xlu0 %6503
    %6505 = vset.pattern.permute.xlu0 0
    %6506 = vperm.xlu0 %6505, %v4567
    %v6507 = vpop.permute.xlu0 %6506
    %6508 = vset.pattern.permute.xlu0 0
    %6509 = vperm.xlu0 %6508, %v4616
    %v6510 = vpop.permute.xlu0 %6509
    %6511 = vset.pattern.permute.xlu0 0
    %6512 = vperm.xlu0 %6511, %v4665
    %v6513 = vpop.permute.xlu0 %6512
    %6514 = vset.pattern.permute.xlu0 0
    %6515 = vperm.xlu0 %6514, %v4714
    %v6516 = vpop.permute.xlu0 %6515
    %6517 = vset.pattern.permute.xlu0 0
    %6518 = vperm.xlu0 %6517, %v4763
    %v6519 = vpop.permute.xlu0 %6518
    %6520 = vset.pattern.permute.xlu0 0
    %6521 = vperm.xlu0 %6520, %v4812
    %v6522 = vpop.permute.xlu0 %6521
    %6523 = vset.pattern.permute.xlu0 0
    %6524 = vperm.xlu0 %6523, %v4861
    %v6525 = vpop.permute.xlu0 %6524
    %6526 = vset.pattern.permute.xlu0 0
    %6527 = vperm.xlu0 %6526, %v4910
    %v6528 = vpop.permute.xlu0 %6527
    %6529 = vset.pattern.permute.xlu0 0
    %6530 = vperm.xlu0 %6529, %v4959
    %v6531 = vpop.permute.xlu0 %6530
    %6532 = vset.pattern.permute.xlu0 0
    %6533 = vperm.xlu0 %6532, %v5008
    %v6534 = vpop.permute.xlu0 %6533
    %6535 = vset.pattern.permute.xlu0 0
    %6536 = vperm.xlu0 %6535, %v5057
    %v6537 = vpop.permute.xlu0 %6536
    %6538 = vset.pattern.permute.xlu0 0
    %6539 = vperm.xlu0 %6538, %v5106
    %v6540 = vpop.permute.xlu0 %6539
    %6541 = vset.pattern.permute.xlu0 0
    %6542 = vperm.xlu0 %6541, %v5155
    %v6543 = vpop.permute.xlu0 %6542
    %6544 = vset.pattern.permute.xlu0 0
    %6545 = vperm.xlu0 %6544, %v5204
    %v6546 = vpop.permute.xlu0 %6545
    %6547 = vset.pattern.permute.xlu0 0
    %6548 = vperm.xlu0 %6547, %v5253
    %v6549 = vpop.permute.xlu0 %6548
    %6550 = vset.pattern.permute.xlu0 0
    %6551 = vperm.xlu0 %6550, %v5302
    %v6552 = vpop.permute.xlu0 %6551
    %6553 = vset.pattern.permute.xlu0 0
    %6554 = vperm.xlu0 %6553, %v5351
    %v6555 = vpop.permute.xlu0 %6554
    %6556 = vset.pattern.permute.xlu0 0
    %6557 = vperm.xlu0 %6556, %v5400
    %v6558 = vpop.permute.xlu0 %6557
    %6559 = vset.pattern.permute.xlu0 0
    %6560 = vperm.xlu0 %6559, %v5449
    %v6561 = vpop.permute.xlu0 %6560
    %6562 = vset.pattern.permute.xlu0 0
    %6563 = vperm.xlu0 %6562, %v5498
    %v6564 = vpop.permute.xlu0 %6563
    %6565 = vset.pattern.permute.xlu0 0
    %6566 = vperm.xlu0 %6565, %v5547
    %v6567 = vpop.permute.xlu0 %6566
    %6568 = vset.pattern.permute.xlu0 0
    %6569 = vperm.xlu0 %6568, %v5596
    %v6570 = vpop.permute.xlu0 %6569
    %6571 = vset.pattern.permute.xlu0 0
    %6572 = vperm.xlu0 %6571, %v5645
    %v6573 = vpop.permute.xlu0 %6572
    %6574 = vset.pattern.permute.xlu0 0
    %6575 = vperm.xlu0 %6574, %v5694
    %v6576 = vpop.permute.xlu0 %6575
    %6577 = vset.pattern.permute.xlu0 0
    %6578 = vperm.xlu0 %6577, %v5743
    %v6579 = vpop.permute.xlu0 %6578
    %6580 = vset.pattern.permute.xlu0 0
    %6581 = vperm.xlu0 %6580, %v5792
    %v6582 = vpop.permute.xlu0 %6581
    %6583 = vset.pattern.permute.xlu0 0
    %6584 = vperm.xlu0 %6583, %v5841
    %v6585 = vpop.permute.xlu0 %6584
    %6586 = vset.pattern.permute.xlu0 0
    %6587 = vperm.xlu0 %6586, %v5890
    %v6588 = vpop.permute.xlu0 %6587
    %6589 = vset.pattern.permute.xlu0 0
    %6590 = vperm.xlu0 %6589, %v5939
    %v6591 = vpop.permute.xlu0 %6590
    %6592 = vset.pattern.permute.xlu0 0
    %6593 = vperm.xlu0 %6592, %v5988
    %v6594 = vpop.permute.xlu0 %6593
    %6595 = vset.pattern.permute.xlu0 0
    %6596 = vperm.xlu0 %6595, %v6037
    %v6597 = vpop.permute.xlu0 %6596
    %6598 = vset.pattern.permute.xlu0 0
    %6599 = vperm.xlu0 %6598, %v6086
    %v6600 = vpop.permute.xlu0 %6599
    %6601 = vset.pattern.permute.xlu0 0
    %6602 = vperm.xlu0 %6601, %v6135
    %v6603 = vpop.permute.xlu0 %6602
    %6604 = vset.pattern.permute.xlu0 0
    %6605 = vperm.xlu0 %6604, %v6184
    %v6606 = vpop.permute.xlu0 %6605
    %6607 = vset.pattern.permute.xlu0 0
    %6608 = vperm.xlu0 %6607, %v6233
    %v6609 = vpop.permute.xlu0 %6608
    %6610 = vset.pattern.permute.xlu0 0
    %6611 = vperm.xlu0 %6610, %v6282
    %v6612 = vpop.permute.xlu0 %6611
    %6613 = vset.pattern.permute.xlu0 0
    %6614 = vperm.xlu0 %6613, %v6331
    %v6615 = vpop.permute.xlu0 %6614
    %6616 = vset.pattern.permute.xlu0 0
    %6617 = vperm.xlu0 %6616, %v6380
    %v6618 = vpop.permute.xlu0 %6617
    %6619 = vset.pattern.permute.xlu0 0
    %6620 = vperm.xlu0 %6619, %v6429
    %v6621 = vpop.permute.xlu0 %6620
    %v6622 = vlaneseq
    %v6623 = vshrl.u32 %v6622, 7
    %v6624 = vsub.s32 %v732, %v6623
    %v6625 = vrot.slane %v6432, %v6624
    %v6626 = vadd.s32 %v732, 4294967288
    %v6627 = vlaneseq
    %v6628 = vshrl.u32 %v6627, 7
    %v6629 = vsub.s32 %v6626, %v6628
    %v6630 = vrot.slane %v6435, %v6629
    %vm6631 = vcmask 130112
    %v6632 = vsel %vm6631, %v6630, %v6625
    %v6633 = vadd.s32 %v732, 4294967280
    %v6634 = vlaneseq
    %v6635 = vshrl.u32 %v6634, 7
    %v6636 = vsub.s32 %v6633, %v6635
    %v6637 = vrot.slane %v6438, %v6636
    %vm6638 = vcmask 195712
    %v6639 = vsel %vm6638, %v6637, %v6632
    %v6640 = vadd.s32 %v732, 4294967272
    %v6641 = vlaneseq
    %v6642 = vshrl.u32 %v6641, 7
    %v6643 = vsub.s32 %v6640, %v6642
    %v6644 = vrot.slane %v6441, %v6643
    %vm6645 = vcmask 261312
    %v6646 = vsel %vm6645, %v6644, %v6639
    %v6647 = vadd.s32 %v732, 4294967264
    %v6648 = vlaneseq
    %v6649 = vshrl.u32 %v6648, 7
    %v6650 = vsub.s32 %v6647, %v6649
    %v6651 = vrot.slane %v6444, %v6650
    %vm6652 = vcmask 326912
    %v6653 = vsel %vm6652, %v6651, %v6646
    %v6654 = vadd.s32 %v732, 4294967256
    %v6655 = vlaneseq
    %v6656 = vshrl.u32 %v6655, 7
    %v6657 = vsub.s32 %v6654, %v6656
    %v6658 = vrot.slane %v6447, %v6657
    %vm6659 = vcmask 392512
    %v6660 = vsel %vm6659, %v6658, %v6653
    %v6661 = vadd.s32 %v732, 4294967248
    %v6662 = vlaneseq
    %v6663 = vshrl.u32 %v6662, 7
    %v6664 = vsub.s32 %v6661, %v6663
    %v6665 = vrot.slane %v6450, %v6664
    %vm6666 = vcmask 458112
    %v6667 = vsel %vm6666, %v6665, %v6660
    %v6668 = vadd.s32 %v732, 4294967240
    %v6669 = vlaneseq
    %v6670 = vshrl.u32 %v6669, 7
    %v6671 = vsub.s32 %v6668, %v6670
    %v6672 = vrot.slane %v6453, %v6671
    %vm6673 = vcmask 523712
    %v6674 = vsel %vm6673, %v6672, %v6667
    %v6675 = vadd.s32 %v732, 4294967232
    %v6676 = vlaneseq
    %v6677 = vshrl.u32 %v6676, 7
    %v6678 = vsub.s32 %v6675, %v6677
    %v6679 = vrot.slane %v6456, %v6678
    %vm6680 = vcmask 589312
    %v6681 = vsel %vm6680, %v6679, %v6674
    %v6682 = vadd.s32 %v732, 4294967224
    %v6683 = vlaneseq
    %v6684 = vshrl.u32 %v6683, 7
    %v6685 = vsub.s32 %v6682, %v6684
    %v6686 = vrot.slane %v6459, %v6685
    %vm6687 = vcmask 654912
    %v6688 = vsel %vm6687, %v6686, %v6681
    %v6689 = vadd.s32 %v732, 4294967216
    %v6690 = vlaneseq
    %v6691 = vshrl.u32 %v6690, 7
    %v6692 = vsub.s32 %v6689, %v6691
    %v6693 = vrot.slane %v6462, %v6692
    %vm6694 = vcmask 720512
    %v6695 = vsel %vm6694, %v6693, %v6688
    %v6696 = vadd.s32 %v732, 4294967208
    %v6697 = vlaneseq
    %v6698 = vshrl.u32 %v6697, 7
    %v6699 = vsub.s32 %v6696, %v6698
    %v6700 = vrot.slane %v6465, %v6699
    %vm6701 = vcmask 786112
    %v6702 = vsel %vm6701, %v6700, %v6695
    %v6703 = vadd.s32 %v732, 4294967200
    %v6704 = vlaneseq
    %v6705 = vshrl.u32 %v6704, 7
    %v6706 = vsub.s32 %v6703, %v6705
    %v6707 = vrot.slane %v6468, %v6706
    %vm6708 = vcmask 851712
    %v6709 = vsel %vm6708, %v6707, %v6702
    %v6710 = vadd.s32 %v732, 4294967192
    %v6711 = vlaneseq
    %v6712 = vshrl.u32 %v6711, 7
    %v6713 = vsub.s32 %v6710, %v6712
    %v6714 = vrot.slane %v6471, %v6713
    %vm6715 = vcmask 917312
    %v6716 = vsel %vm6715, %v6714, %v6709
    %v6717 = vadd.s32 %v732, 4294967184
    %v6718 = vlaneseq
    %v6719 = vshrl.u32 %v6718, 7
    %v6720 = vsub.s32 %v6717, %v6719
    %v6721 = vrot.slane %v6474, %v6720
    %vm6722 = vcmask 982912
    %v6723 = vsel %vm6722, %v6721, %v6716
    %v6724 = vadd.s32 %v732, 4294967176
    %v6725 = vlaneseq
    %v6726 = vshrl.u32 %v6725, 7
    %v6727 = vsub.s32 %v6724, %v6726
    %v6728 = vrot.slane %v6477, %v6727
    %vm6729 = vcmask 1048512
    %v6730 = vsel %vm6729, %v6728, %v6723
    %v6731 = vlaneseq
    %v6732 = vshrl.u32 %v6731, 7
    %v6733 = vsub.s32 %v732, %v6732
    %v6734 = vrot.slane %v6480, %v6733
    %v6735 = vlaneseq
    %v6736 = vshrl.u32 %v6735, 7
    %v6737 = vsub.s32 %v6626, %v6736
    %v6738 = vrot.slane %v6483, %v6737
    %v6739 = vsel %vm6631, %v6738, %v6734
    %v6740 = vlaneseq
    %v6741 = vshrl.u32 %v6740, 7
    %v6742 = vsub.s32 %v6633, %v6741
    %v6743 = vrot.slane %v6486, %v6742
    %v6744 = vsel %vm6638, %v6743, %v6739
    %v6745 = vlaneseq
    %v6746 = vshrl.u32 %v6745, 7
    %v6747 = vsub.s32 %v6640, %v6746
    %v6748 = vrot.slane %v6489, %v6747
    %v6749 = vsel %vm6645, %v6748, %v6744
    %v6750 = vlaneseq
    %v6751 = vshrl.u32 %v6750, 7
    %v6752 = vsub.s32 %v6647, %v6751
    %v6753 = vrot.slane %v6492, %v6752
    %v6754 = vsel %vm6652, %v6753, %v6749
    %v6755 = vlaneseq
    %v6756 = vshrl.u32 %v6755, 7
    %v6757 = vsub.s32 %v6654, %v6756
    %v6758 = vrot.slane %v6495, %v6757
    %v6759 = vsel %vm6659, %v6758, %v6754
    %v6760 = vlaneseq
    %v6761 = vshrl.u32 %v6760, 7
    %v6762 = vsub.s32 %v6661, %v6761
    %v6763 = vrot.slane %v6498, %v6762
    %v6764 = vsel %vm6666, %v6763, %v6759
    %v6765 = vlaneseq
    %v6766 = vshrl.u32 %v6765, 7
    %v6767 = vsub.s32 %v6668, %v6766
    %v6768 = vrot.slane %v6501, %v6767
    %v6769 = vsel %vm6673, %v6768, %v6764
    %v6770 = vlaneseq
    %v6771 = vshrl.u32 %v6770, 7
    %v6772 = vsub.s32 %v6675, %v6771
    %v6773 = vrot.slane %v6504, %v6772
    %v6774 = vsel %vm6680, %v6773, %v6769
    %v6775 = vlaneseq
    %v6776 = vshrl.u32 %v6775, 7
    %v6777 = vsub.s32 %v6682, %v6776
    %v6778 = vrot.slane %v6507, %v6777
    %v6779 = vsel %vm6687, %v6778, %v6774
    %v6780 = vlaneseq
    %v6781 = vshrl.u32 %v6780, 7
    %v6782 = vsub.s32 %v6689, %v6781
    %v6783 = vrot.slane %v6510, %v6782
    %v6784 = vsel %vm6694, %v6783, %v6779
    %v6785 = vlaneseq
    %v6786 = vshrl.u32 %v6785, 7
    %v6787 = vsub.s32 %v6696, %v6786
    %v6788 = vrot.slane %v6513, %v6787
    %v6789 = vsel %vm6701, %v6788, %v6784
    %v6790 = vlaneseq
    %v6791 = vshrl.u32 %v6790, 7
    %v6792 = vsub.s32 %v6703, %v6791
    %v6793 = vrot.slane %v6516, %v6792
    %v6794 = vsel %vm6708, %v6793, %v6789
    %v6795 = vlaneseq
    %v6796 = vshrl.u32 %v6795, 7
    %v6797 = vsub.s32 %v6710, %v6796
    %v6798 = vrot.slane %v6519, %v6797
    %v6799 = vsel %vm6715, %v6798, %v6794
    %v6800 = vlaneseq
    %v6801 = vshrl.u32 %v6800, 7
    %v6802 = vsub.s32 %v6717, %v6801
    %v6803 = vrot.slane %v6522, %v6802
    %v6804 = vsel %vm6722, %v6803, %v6799
    %v6805 = vlaneseq
    %v6806 = vshrl.u32 %v6805, 7
    %v6807 = vsub.s32 %v6724, %v6806
    %v6808 = vrot.slane %v6525, %v6807
    %v6809 = vsel %vm6729, %v6808, %v6804
    %v6810 = vlaneseq
    %v6811 = vshrl.u32 %v6810, 7
    %v6812 = vsub.s32 %v732, %v6811
    %v6813 = vrot.slane %v6528, %v6812
    %v6814 = vlaneseq
    %v6815 = vshrl.u32 %v6814, 7
    %v6816 = vsub.s32 %v6626, %v6815
    %v6817 = vrot.slane %v6531, %v6816
    %v6818 = vsel %vm6631, %v6817, %v6813
    %v6819 = vlaneseq
    %v6820 = vshrl.u32 %v6819, 7
    %v6821 = vsub.s32 %v6633, %v6820
    %v6822 = vrot.slane %v6534, %v6821
    %v6823 = vsel %vm6638, %v6822, %v6818
    %v6824 = vlaneseq
    %v6825 = vshrl.u32 %v6824, 7
    %v6826 = vsub.s32 %v6640, %v6825
    %v6827 = vrot.slane %v6537, %v6826
    %v6828 = vsel %vm6645, %v6827, %v6823
    %v6829 = vlaneseq
    %v6830 = vshrl.u32 %v6829, 7
    %v6831 = vsub.s32 %v6647, %v6830
    %v6832 = vrot.slane %v6540, %v6831
    %v6833 = vsel %vm6652, %v6832, %v6828
    %v6834 = vlaneseq
    %v6835 = vshrl.u32 %v6834, 7
    %v6836 = vsub.s32 %v6654, %v6835
    %v6837 = vrot.slane %v6543, %v6836
    %v6838 = vsel %vm6659, %v6837, %v6833
    %v6839 = vlaneseq
    %v6840 = vshrl.u32 %v6839, 7
    %v6841 = vsub.s32 %v6661, %v6840
    %v6842 = vrot.slane %v6546, %v6841
    %v6843 = vsel %vm6666, %v6842, %v6838
    %v6844 = vlaneseq
    %v6845 = vshrl.u32 %v6844, 7
    %v6846 = vsub.s32 %v6668, %v6845
    %v6847 = vrot.slane %v6549, %v6846
    %v6848 = vsel %vm6673, %v6847, %v6843
    %v6849 = vlaneseq
    %v6850 = vshrl.u32 %v6849, 7
    %v6851 = vsub.s32 %v6675, %v6850
    %v6852 = vrot.slane %v6552, %v6851
    %v6853 = vsel %vm6680, %v6852, %v6848
    %v6854 = vlaneseq
    %v6855 = vshrl.u32 %v6854, 7
    %v6856 = vsub.s32 %v6682, %v6855
    %v6857 = vrot.slane %v6555, %v6856
    %v6858 = vsel %vm6687, %v6857, %v6853
    %v6859 = vlaneseq
    %v6860 = vshrl.u32 %v6859, 7
    %v6861 = vsub.s32 %v6689, %v6860
    %v6862 = vrot.slane %v6558, %v6861
    %v6863 = vsel %vm6694, %v6862, %v6858
    %v6864 = vlaneseq
    %v6865 = vshrl.u32 %v6864, 7
    %v6866 = vsub.s32 %v6696, %v6865
    %v6867 = vrot.slane %v6561, %v6866
    %v6868 = vsel %vm6701, %v6867, %v6863
    %v6869 = vlaneseq
    %v6870 = vshrl.u32 %v6869, 7
    %v6871 = vsub.s32 %v6703, %v6870
    %v6872 = vrot.slane %v6564, %v6871
    %v6873 = vsel %vm6708, %v6872, %v6868
    %v6874 = vlaneseq
    %v6875 = vshrl.u32 %v6874, 7
    %v6876 = vsub.s32 %v6710, %v6875
    %v6877 = vrot.slane %v6567, %v6876
    %v6878 = vsel %vm6715, %v6877, %v6873
    %v6879 = vlaneseq
    %v6880 = vshrl.u32 %v6879, 7
    %v6881 = vsub.s32 %v6717, %v6880
    %v6882 = vrot.slane %v6570, %v6881
    %v6883 = vsel %vm6722, %v6882, %v6878
    %v6884 = vlaneseq
    %v6885 = vshrl.u32 %v6884, 7
    %v6886 = vsub.s32 %v6724, %v6885
    %v6887 = vrot.slane %v6573, %v6886
    %v6888 = vsel %vm6729, %v6887, %v6883
    %v6889 = vlaneseq
    %v6890 = vshrl.u32 %v6889, 7
    %v6891 = vsub.s32 %v732, %v6890
    %v6892 = vrot.slane %v6576, %v6891
    %v6893 = vlaneseq
    %v6894 = vshrl.u32 %v6893, 7
    %v6895 = vsub.s32 %v6626, %v6894
    %v6896 = vrot.slane %v6579, %v6895
    %v6897 = vsel %vm6631, %v6896, %v6892
    %v6898 = vlaneseq
    %v6899 = vshrl.u32 %v6898, 7
    %v6900 = vsub.s32 %v6633, %v6899
    %v6901 = vrot.slane %v6582, %v6900
    %v6902 = vsel %vm6638, %v6901, %v6897
    %v6903 = vlaneseq
    %v6904 = vshrl.u32 %v6903, 7
    %v6905 = vsub.s32 %v6640, %v6904
    %v6906 = vrot.slane %v6585, %v6905
    %v6907 = vsel %vm6645, %v6906, %v6902
    %v6908 = vlaneseq
    %v6909 = vshrl.u32 %v6908, 7
    %v6910 = vsub.s32 %v6647, %v6909
    %v6911 = vrot.slane %v6588, %v6910
    %v6912 = vsel %vm6652, %v6911, %v6907
    %v6913 = vlaneseq
    %v6914 = vshrl.u32 %v6913, 7
    %v6915 = vsub.s32 %v6654, %v6914
    %v6916 = vrot.slane %v6591, %v6915
    %v6917 = vsel %vm6659, %v6916, %v6912
    %v6918 = vlaneseq
    %v6919 = vshrl.u32 %v6918, 7
    %v6920 = vsub.s32 %v6661, %v6919
    %v6921 = vrot.slane %v6594, %v6920
    %v6922 = vsel %vm6666, %v6921, %v6917
    %v6923 = vlaneseq
    %v6924 = vshrl.u32 %v6923, 7
    %v6925 = vsub.s32 %v6668, %v6924
    %v6926 = vrot.slane %v6597, %v6925
    %v6927 = vsel %vm6673, %v6926, %v6922
    %v6928 = vlaneseq
    %v6929 = vshrl.u32 %v6928, 7
    %v6930 = vsub.s32 %v6675, %v6929
    %v6931 = vrot.slane %v6600, %v6930
    %v6932 = vsel %vm6680, %v6931, %v6927
    %v6933 = vlaneseq
    %v6934 = vshrl.u32 %v6933, 7
    %v6935 = vsub.s32 %v6682, %v6934
    %v6936 = vrot.slane %v6603, %v6935
    %v6937 = vsel %vm6687, %v6936, %v6932
    %v6938 = vlaneseq
    %v6939 = vshrl.u32 %v6938, 7
    %v6940 = vsub.s32 %v6689, %v6939
    %v6941 = vrot.slane %v6606, %v6940
    %v6942 = vsel %vm6694, %v6941, %v6937
    %v6943 = vlaneseq
    %v6944 = vshrl.u32 %v6943, 7
    %v6945 = vsub.s32 %v6696, %v6944
    %v6946 = vrot.slane %v6609, %v6945
    %v6947 = vsel %vm6701, %v6946, %v6942
    %v6948 = vlaneseq
    %v6949 = vshrl.u32 %v6948, 7
    %v6950 = vsub.s32 %v6703, %v6949
    %v6951 = vrot.slane %v6612, %v6950
    %v6952 = vsel %vm6708, %v6951, %v6947
    %v6953 = vlaneseq
    %v6954 = vshrl.u32 %v6953, 7
    %v6955 = vsub.s32 %v6710, %v6954
    %v6956 = vrot.slane %v6615, %v6955
    %v6957 = vsel %vm6715, %v6956, %v6952
    %v6958 = vlaneseq
    %v6959 = vshrl.u32 %v6958, 7
    %v6960 = vsub.s32 %v6717, %v6959
    %v6961 = vrot.slane %v6618, %v6960
    %v6962 = vsel %vm6722, %v6961, %v6957
    %v6963 = vlaneseq
    %v6964 = vshrl.u32 %v6963, 7
    %v6965 = vsub.s32 %v6724, %v6964
    %v6966 = vrot.slane %v6621, %v6965
    %v6967 = vsel %vm6729, %v6966, %v6962
    %v6968 = vcombine.low %v6730, %v6809
    %v6969 = vcombine.low %v6888, %v6967
    %v6971 = vunpack.c.l.s4 1966171168
    %v6972 = vunpack.c.0.s8 %v6971
    %v6973 = vlaneseq
    %v6974 = vshrl.u32 %v6973, 7
    %v6975 = vsub.s32 %v6972, %v6974
    %v6976 = vrot.slane %v6968, %v6975
    %v6978 = vunpack.c.l.s4 1966171168
    %v6979 = vunpack.c.0.s8 %v6978
    %v6980 = vlaneseq
    %v6981 = vshrl.u32 %v6980, 7
    %v6982 = vsub.s32 %v6979, %v6981
    %v6983 = vrot.slane %v6969, %v6982
    %v6984 = vcombine.low %v6976, %v6983
    %v6986 = vunpack.c.l.s4 1966171168
    %v6987 = vunpack.c.0.s8 %v6986
    %v6988 = vlaneseq
    %v6989 = vshrl.u32 %v6988, 7
    %v6990 = vsub.s32 %v6987, %v6989
    %v6991 = vrot.slane %v6984, %v6990
    %v6992 = vlaneseq
    %vm6993 = vcmp.ge.s32.totalorder %v6992, 0
    %vm6994 = vcmp.lt.s32.totalorder %v6992, 512
    %vm6995 = vmand %vm6993, %vm6994
    %6996 = vst.msk [vmem:[%s5] sm:$0xf] %vm6995, %v6991
    %vm6997 = vcmp.eq.s32.totalorder %v732, %v741
    %vm6998 = vcmp.eq.s32.totalorder %v733, %v741
    %vm6999 = vcmp.eq.s32.totalorder %v732, %v749
    %vm7000 = vcmp.eq.s32.totalorder %v733, %v749
    %vm7001 = vcmp.eq.s32.totalorder %v732, %v757
    %vm7002 = vcmp.eq.s32.totalorder %v733, %v757
    %vm7003 = vcmp.eq.s32.totalorder %v732, %v765
    %vm7004 = vcmp.eq.s32.totalorder %v733, %v765
    %vm7005 = vcmp.eq.s32.totalorder %v732, %v773
    %vm7006 = vcmp.eq.s32.totalorder %v733, %v773
    %vm7007 = vcmp.eq.s32.totalorder %v732, %v781
    %vm7008 = vcmp.eq.s32.totalorder %v733, %v781
    %vm7009 = vcmp.eq.s32.totalorder %v732, %v789
    %vm7010 = vcmp.eq.s32.totalorder %v733, %v789
    %vm7011 = vcmp.eq.s32.totalorder %v732, %v797
    %vm7012 = vcmp.eq.s32.totalorder %v733, %v797
    %vm7013 = vcmp.eq.s32.totalorder %v732, %v805
    %vm7014 = vcmp.eq.s32.totalorder %v733, %v805
    %vm7015 = vcmp.eq.s32.totalorder %v732, %v813
    %vm7016 = vcmp.eq.s32.totalorder %v733, %v813
    %vm7017 = vcmp.eq.s32.totalorder %v732, %v821
    %vm7018 = vcmp.eq.s32.totalorder %v733, %v821
    %vm7019 = vcmp.eq.s32.totalorder %v732, %v829
    %vm7020 = vcmp.eq.s32.totalorder %v733, %v829
    %vm7021 = vcmp.eq.s32.totalorder %v732, %v837
    %vm7022 = vcmp.eq.s32.totalorder %v733, %v837
    %vm7023 = vcmp.eq.s32.totalorder %v732, %v845
    %vm7024 = vcmp.eq.s32.totalorder %v733, %v845
    %vm7025 = vcmp.eq.s32.totalorder %v732, %v853
    %vm7026 = vcmp.eq.s32.totalorder %v733, %v853
    %vm7027 = vcmp.eq.s32.totalorder %v732, %v861
    %vm7028 = vcmp.eq.s32.totalorder %v733, %v861
    %vm7029 = vcmp.eq.s32.totalorder %v732, %v869
    %vm7030 = vcmp.eq.s32.totalorder %v733, %v869
    %vm7031 = vcmp.eq.s32.totalorder %v732, %v877
    %vm7032 = vcmp.eq.s32.totalorder %v733, %v877
    %vm7033 = vcmp.eq.s32.totalorder %v732, %v885
    %vm7034 = vcmp.eq.s32.totalorder %v733, %v885
    %vm7035 = vcmp.eq.s32.totalorder %v732, %v893
    %vm7036 = vcmp.eq.s32.totalorder %v733, %v893
    %vm7037 = vcmp.eq.s32.totalorder %v732, %v901
    %vm7038 = vcmp.eq.s32.totalorder %v733, %v901
    %vm7039 = vcmp.eq.s32.totalorder %v732, %v909
    %vm7040 = vcmp.eq.s32.totalorder %v733, %v909
    %vm7041 = vcmp.eq.s32.totalorder %v732, %v917
    %vm7042 = vcmp.eq.s32.totalorder %v733, %v917
    %vm7043 = vcmp.eq.s32.totalorder %v732, %v925
    %vm7044 = vcmp.eq.s32.totalorder %v733, %v925
    %vm7045 = vcmp.eq.s32.totalorder %v732, %v933
    %vm7046 = vcmp.eq.s32.totalorder %v733, %v933
    %vm7047 = vcmp.eq.s32.totalorder %v732, %v941
    %vm7048 = vcmp.eq.s32.totalorder %v733, %v941
    %vm7049 = vcmp.eq.s32.totalorder %v732, %v949
    %vm7050 = vcmp.eq.s32.totalorder %v733, %v949
    %vm7051 = vcmp.eq.s32.totalorder %v732, %v957
    %vm7052 = vcmp.eq.s32.totalorder %v733, %v957
    %vm7053 = vcmp.eq.s32.totalorder %v732, %v965
    %vm7054 = vcmp.eq.s32.totalorder %v733, %v965
    %vm7055 = vcmp.eq.s32.totalorder %v732, %v973
    %vm7056 = vcmp.eq.s32.totalorder %v733, %v973
    %vm7057 = vcmp.eq.s32.totalorder %v732, %v981
    %vm7058 = vcmp.eq.s32.totalorder %v733, %v981
    %vm7059 = vcmp.eq.s32.totalorder %v732, %v989
    %vm7060 = vcmp.eq.s32.totalorder %v733, %v989
    %vm7061 = vcmp.eq.s32.totalorder %v732, %v997
    %vm7062 = vcmp.eq.s32.totalorder %v733, %v997
    %vm7063 = vcmp.eq.s32.totalorder %v732, %v1005
    %vm7064 = vcmp.eq.s32.totalorder %v733, %v1005
    %vm7065 = vcmp.eq.s32.totalorder %v732, %v1013
    %vm7066 = vcmp.eq.s32.totalorder %v733, %v1013
    %vm7067 = vcmp.eq.s32.totalorder %v732, %v1021
    %vm7068 = vcmp.eq.s32.totalorder %v733, %v1021
    %vm7069 = vcmp.eq.s32.totalorder %v732, %v1029
    %vm7070 = vcmp.eq.s32.totalorder %v733, %v1029
    %vm7071 = vcmp.eq.s32.totalorder %v732, %v1037
    %vm7072 = vcmp.eq.s32.totalorder %v733, %v1037
    %vm7073 = vcmp.eq.s32.totalorder %v732, %v1045
    %vm7074 = vcmp.eq.s32.totalorder %v733, %v1045
    %vm7075 = vcmp.eq.s32.totalorder %v732, %v1053
    %vm7076 = vcmp.eq.s32.totalorder %v733, %v1053
    %vm7077 = vcmp.eq.s32.totalorder %v732, %v1061
    %vm7078 = vcmp.eq.s32.totalorder %v733, %v1061
    %vm7079 = vcmp.eq.s32.totalorder %v732, %v1069
    %vm7080 = vcmp.eq.s32.totalorder %v733, %v1069
    %vm7081 = vcmp.eq.s32.totalorder %v732, %v1077
    %vm7082 = vcmp.eq.s32.totalorder %v733, %v1077
    %vm7083 = vcmp.eq.s32.totalorder %v732, %v1085
    %vm7084 = vcmp.eq.s32.totalorder %v733, %v1085
    %vm7085 = vcmp.eq.s32.totalorder %v732, %v1093
    %vm7086 = vcmp.eq.s32.totalorder %v733, %v1093
    %vm7087 = vcmp.eq.s32.totalorder %v732, %v1101
    %vm7088 = vcmp.eq.s32.totalorder %v733, %v1101
    %vm7089 = vcmp.eq.s32.totalorder %v732, %v1109
    %vm7090 = vcmp.eq.s32.totalorder %v733, %v1109
    %vm7091 = vcmp.eq.s32.totalorder %v732, %v1117
    %vm7092 = vcmp.eq.s32.totalorder %v733, %v1117
    %vm7093 = vcmp.eq.s32.totalorder %v732, %v1125
    %vm7094 = vcmp.eq.s32.totalorder %v733, %v1125
    %vm7095 = vcmp.eq.s32.totalorder %v732, %v1133
    %vm7096 = vcmp.eq.s32.totalorder %v733, %v1133
    %vm7097 = vcmp.eq.s32.totalorder %v732, %v1141
    %vm7098 = vcmp.eq.s32.totalorder %v733, %v1141
    %vm7099 = vcmp.eq.s32.totalorder %v732, %v1149
    %vm7100 = vcmp.eq.s32.totalorder %v733, %v1149
    %vm7101 = vcmp.eq.s32.totalorder %v732, %v1157
    %vm7102 = vcmp.eq.s32.totalorder %v733, %v1157
    %vm7103 = vcmp.eq.s32.totalorder %v732, %v1165
    %vm7104 = vcmp.eq.s32.totalorder %v733, %v1165
    %vm7105 = vcmp.eq.s32.totalorder %v732, %v1173
    %vm7106 = vcmp.eq.s32.totalorder %v733, %v1173
    %vm7107 = vcmp.eq.s32.totalorder %v732, %v1181
    %vm7108 = vcmp.eq.s32.totalorder %v733, %v1181
    %vm7109 = vcmp.eq.s32.totalorder %v732, %v1189
    %vm7110 = vcmp.eq.s32.totalorder %v733, %v1189
    %vm7111 = vcmp.eq.s32.totalorder %v732, %v1197
    %vm7112 = vcmp.eq.s32.totalorder %v733, %v1197
    %vm7113 = vcmp.eq.s32.totalorder %v732, %v1205
    %vm7114 = vcmp.eq.s32.totalorder %v733, %v1205
    %vm7115 = vcmp.eq.s32.totalorder %v732, %v1213
    %vm7116 = vcmp.eq.s32.totalorder %v733, %v1213
    %vm7117 = vcmp.eq.s32.totalorder %v732, %v1221
    %vm7118 = vcmp.eq.s32.totalorder %v733, %v1221
    %vm7119 = vcmp.eq.s32.totalorder %v732, %v1229
    %vm7120 = vcmp.eq.s32.totalorder %v733, %v1229
    %vm7121 = vcmp.eq.s32.totalorder %v732, %v1237
    %vm7122 = vcmp.eq.s32.totalorder %v733, %v1237
    %vm7123 = vcmp.eq.s32.totalorder %v732, %v1245
    %vm7124 = vcmp.eq.s32.totalorder %v733, %v1245
    %v7125 = vsel %vm6997, 1, 0
    %v7126 = vsel %vm6998, 1, 0
    %v7127 = vsel %vm6999, 1, 0
    %v7128 = vsel %vm7000, 1, 0
    %v7129 = vsel %vm7001, 1, 0
    %v7130 = vsel %vm7002, 1, 0
    %v7131 = vsel %vm7003, 1, 0
    %v7132 = vsel %vm7004, 1, 0
    %v7133 = vsel %vm7005, 1, 0
    %v7134 = vsel %vm7006, 1, 0
    %v7135 = vsel %vm7007, 1, 0
    %v7136 = vsel %vm7008, 1, 0
    %v7137 = vsel %vm7009, 1, 0
    %v7138 = vsel %vm7010, 1, 0
    %v7139 = vsel %vm7011, 1, 0
    %v7140 = vsel %vm7012, 1, 0
    %v7141 = vsel %vm7013, 1, 0
    %v7142 = vsel %vm7014, 1, 0
    %v7143 = vsel %vm7015, 1, 0
    %v7144 = vsel %vm7016, 1, 0
    %v7145 = vsel %vm7017, 1, 0
    %v7146 = vsel %vm7018, 1, 0
    %v7147 = vsel %vm7019, 1, 0
    %v7148 = vsel %vm7020, 1, 0
    %v7149 = vsel %vm7021, 1, 0
    %v7150 = vsel %vm7022, 1, 0
    %v7151 = vsel %vm7023, 1, 0
    %v7152 = vsel %vm7024, 1, 0
    %v7153 = vsel %vm7025, 1, 0
    %v7154 = vsel %vm7026, 1, 0
    %v7155 = vsel %vm7027, 1, 0
    %v7156 = vsel %vm7028, 1, 0
    %v7157 = vsel %vm7029, 1, 0
    %v7158 = vsel %vm7030, 1, 0
    %v7159 = vsel %vm7031, 1, 0
    %v7160 = vsel %vm7032, 1, 0
    %v7161 = vsel %vm7033, 1, 0
    %v7162 = vsel %vm7034, 1, 0
    %v7163 = vsel %vm7035, 1, 0
    %v7164 = vsel %vm7036, 1, 0
    %v7165 = vsel %vm7037, 1, 0
    %v7166 = vsel %vm7038, 1, 0
    %v7167 = vsel %vm7039, 1, 0
    %v7168 = vsel %vm7040, 1, 0
    %v7169 = vsel %vm7041, 1, 0
    %v7170 = vsel %vm7042, 1, 0
    %v7171 = vsel %vm7043, 1, 0
    %v7172 = vsel %vm7044, 1, 0
    %v7173 = vsel %vm7045, 1, 0
    %v7174 = vsel %vm7046, 1, 0
    %v7175 = vsel %vm7047, 1, 0
    %v7176 = vsel %vm7048, 1, 0
    %v7177 = vsel %vm7049, 1, 0
    %v7178 = vsel %vm7050, 1, 0
    %v7179 = vsel %vm7051, 1, 0
    %v7180 = vsel %vm7052, 1, 0
    %v7181 = vsel %vm7053, 1, 0
    %v7182 = vsel %vm7054, 1, 0
    %v7183 = vsel %vm7055, 1, 0
    %v7184 = vsel %vm7056, 1, 0
    %v7185 = vsel %vm7057, 1, 0
    %v7186 = vsel %vm7058, 1, 0
    %v7187 = vsel %vm7059, 1, 0
    %v7188 = vsel %vm7060, 1, 0
    %v7189 = vsel %vm7061, 1, 0
    %v7190 = vsel %vm7062, 1, 0
    %v7191 = vsel %vm7063, 1, 0
    %v7192 = vsel %vm7064, 1, 0
    %v7193 = vsel %vm7065, 1, 0
    %v7194 = vsel %vm7066, 1, 0
    %v7195 = vsel %vm7067, 1, 0
    %v7196 = vsel %vm7068, 1, 0
    %v7197 = vsel %vm7069, 1, 0
    %v7198 = vsel %vm7070, 1, 0
    %v7199 = vsel %vm7071, 1, 0
    %v7200 = vsel %vm7072, 1, 0
    %v7201 = vsel %vm7073, 1, 0
    %v7202 = vsel %vm7074, 1, 0
    %v7203 = vsel %vm7075, 1, 0
    %v7204 = vsel %vm7076, 1, 0
    %v7205 = vsel %vm7077, 1, 0
    %v7206 = vsel %vm7078, 1, 0
    %v7207 = vsel %vm7079, 1, 0
    %v7208 = vsel %vm7080, 1, 0
    %v7209 = vsel %vm7081, 1, 0
    %v7210 = vsel %vm7082, 1, 0
    %v7211 = vsel %vm7083, 1, 0
    %v7212 = vsel %vm7084, 1, 0
    %v7213 = vsel %vm7085, 1, 0
    %v7214 = vsel %vm7086, 1, 0
    %v7215 = vsel %vm7087, 1, 0
    %v7216 = vsel %vm7088, 1, 0
    %v7217 = vsel %vm7089, 1, 0
    %v7218 = vsel %vm7090, 1, 0
    %v7219 = vsel %vm7091, 1, 0
    %v7220 = vsel %vm7092, 1, 0
    %v7221 = vsel %vm7093, 1, 0
    %v7222 = vsel %vm7094, 1, 0
    %v7223 = vsel %vm7095, 1, 0
    %v7224 = vsel %vm7096, 1, 0
    %v7225 = vsel %vm7097, 1, 0
    %v7226 = vsel %vm7098, 1, 0
    %v7227 = vsel %vm7099, 1, 0
    %v7228 = vsel %vm7100, 1, 0
    %v7229 = vsel %vm7101, 1, 0
    %v7230 = vsel %vm7102, 1, 0
    %v7231 = vsel %vm7103, 1, 0
    %v7232 = vsel %vm7104, 1, 0
    %v7233 = vsel %vm7105, 1, 0
    %v7234 = vsel %vm7106, 1, 0
    %v7235 = vsel %vm7107, 1, 0
    %v7236 = vsel %vm7108, 1, 0
    %v7237 = vsel %vm7109, 1, 0
    %v7238 = vsel %vm7110, 1, 0
    %v7239 = vsel %vm7111, 1, 0
    %v7240 = vsel %vm7112, 1, 0
    %v7241 = vsel %vm7113, 1, 0
    %v7242 = vsel %vm7114, 1, 0
    %v7243 = vsel %vm7115, 1, 0
    %v7244 = vsel %vm7116, 1, 0
    %v7245 = vsel %vm7117, 1, 0
    %v7246 = vsel %vm7118, 1, 0
    %v7247 = vsel %vm7119, 1, 0
    %v7248 = vsel %vm7120, 1, 0
    %v7249 = vsel %vm7121, 1, 0
    %v7250 = vsel %vm7122, 1, 0
    %v7251 = vsel %vm7123, 1, 0
    %v7252 = vsel %vm7124, 1, 0
    %v7253 = vcvt.s32.f32 %v7125
    %v7254 = vcvt.s32.f32 %v7126
    %v7255 = vcvt.s32.f32 %v7127
    %v7256 = vcvt.s32.f32 %v7128
    %v7257 = vcvt.s32.f32 %v7129
    %v7258 = vcvt.s32.f32 %v7130
    %v7259 = vcvt.s32.f32 %v7131
    %v7260 = vcvt.s32.f32 %v7132
    %v7261 = vcvt.s32.f32 %v7133
    %v7262 = vcvt.s32.f32 %v7134
    %v7263 = vcvt.s32.f32 %v7135
    %v7264 = vcvt.s32.f32 %v7136
    %v7265 = vcvt.s32.f32 %v7137
    %v7266 = vcvt.s32.f32 %v7138
    %v7267 = vcvt.s32.f32 %v7139
    %v7268 = vcvt.s32.f32 %v7140
    %v7269 = vcvt.s32.f32 %v7141
    %v7270 = vcvt.s32.f32 %v7142
    %v7271 = vcvt.s32.f32 %v7143
    %v7272 = vcvt.s32.f32 %v7144
    %v7273 = vcvt.s32.f32 %v7145
    %v7274 = vcvt.s32.f32 %v7146
    %v7275 = vcvt.s32.f32 %v7147
    %v7276 = vcvt.s32.f32 %v7148
    %v7277 = vcvt.s32.f32 %v7149
    %v7278 = vcvt.s32.f32 %v7150
    %v7279 = vcvt.s32.f32 %v7151
    %v7280 = vcvt.s32.f32 %v7152
    %v7281 = vcvt.s32.f32 %v7153
    %v7282 = vcvt.s32.f32 %v7154
    %v7283 = vcvt.s32.f32 %v7155
    %v7284 = vcvt.s32.f32 %v7156
    %v7285 = vcvt.s32.f32 %v7157
    %v7286 = vcvt.s32.f32 %v7158
    %v7287 = vcvt.s32.f32 %v7159
    %v7288 = vcvt.s32.f32 %v7160
    %v7289 = vcvt.s32.f32 %v7161
    %v7290 = vcvt.s32.f32 %v7162
    %v7291 = vcvt.s32.f32 %v7163
    %v7292 = vcvt.s32.f32 %v7164
    %v7293 = vcvt.s32.f32 %v7165
    %v7294 = vcvt.s32.f32 %v7166
    %v7295 = vcvt.s32.f32 %v7167
    %v7296 = vcvt.s32.f32 %v7168
    %v7297 = vcvt.s32.f32 %v7169
    %v7298 = vcvt.s32.f32 %v7170
    %v7299 = vcvt.s32.f32 %v7171
    %v7300 = vcvt.s32.f32 %v7172
    %v7301 = vcvt.s32.f32 %v7173
    %v7302 = vcvt.s32.f32 %v7174
    %v7303 = vcvt.s32.f32 %v7175
    %v7304 = vcvt.s32.f32 %v7176
    %v7305 = vcvt.s32.f32 %v7177
    %v7306 = vcvt.s32.f32 %v7178
    %v7307 = vcvt.s32.f32 %v7179
    %v7308 = vcvt.s32.f32 %v7180
    %v7309 = vcvt.s32.f32 %v7181
    %v7310 = vcvt.s32.f32 %v7182
    %v7311 = vcvt.s32.f32 %v7183
    %v7312 = vcvt.s32.f32 %v7184
    %v7313 = vcvt.s32.f32 %v7185
    %v7314 = vcvt.s32.f32 %v7186
    %v7315 = vcvt.s32.f32 %v7187
    %v7316 = vcvt.s32.f32 %v7188
    %v7317 = vcvt.s32.f32 %v7189
    %v7318 = vcvt.s32.f32 %v7190
    %v7319 = vcvt.s32.f32 %v7191
    %v7320 = vcvt.s32.f32 %v7192
    %v7321 = vcvt.s32.f32 %v7193
    %v7322 = vcvt.s32.f32 %v7194
    %v7323 = vcvt.s32.f32 %v7195
    %v7324 = vcvt.s32.f32 %v7196
    %v7325 = vcvt.s32.f32 %v7197
    %v7326 = vcvt.s32.f32 %v7198
    %v7327 = vcvt.s32.f32 %v7199
    %v7328 = vcvt.s32.f32 %v7200
    %v7329 = vcvt.s32.f32 %v7201
    %v7330 = vcvt.s32.f32 %v7202
    %v7331 = vcvt.s32.f32 %v7203
    %v7332 = vcvt.s32.f32 %v7204
    %v7333 = vcvt.s32.f32 %v7205
    %v7334 = vcvt.s32.f32 %v7206
    %v7335 = vcvt.s32.f32 %v7207
    %v7336 = vcvt.s32.f32 %v7208
    %v7337 = vcvt.s32.f32 %v7209
    %v7338 = vcvt.s32.f32 %v7210
    %v7339 = vcvt.s32.f32 %v7211
    %v7340 = vcvt.s32.f32 %v7212
    %v7341 = vcvt.s32.f32 %v7213
    %v7342 = vcvt.s32.f32 %v7214
    %v7343 = vcvt.s32.f32 %v7215
    %v7344 = vcvt.s32.f32 %v7216
    %v7345 = vcvt.s32.f32 %v7217
    %v7346 = vcvt.s32.f32 %v7218
    %v7347 = vcvt.s32.f32 %v7219
    %v7348 = vcvt.s32.f32 %v7220
    %v7349 = vcvt.s32.f32 %v7221
    %v7350 = vcvt.s32.f32 %v7222
    %v7351 = vcvt.s32.f32 %v7223
    %v7352 = vcvt.s32.f32 %v7224
    %v7353 = vcvt.s32.f32 %v7225
    %v7354 = vcvt.s32.f32 %v7226
    %v7355 = vcvt.s32.f32 %v7227
    %v7356 = vcvt.s32.f32 %v7228
    %v7357 = vcvt.s32.f32 %v7229
    %v7358 = vcvt.s32.f32 %v7230
    %v7359 = vcvt.s32.f32 %v7231
    %v7360 = vcvt.s32.f32 %v7232
    %v7361 = vcvt.s32.f32 %v7233
    %v7362 = vcvt.s32.f32 %v7234
    %v7363 = vcvt.s32.f32 %v7235
    %v7364 = vcvt.s32.f32 %v7236
    %v7365 = vcvt.s32.f32 %v7237
    %v7366 = vcvt.s32.f32 %v7238
    %v7367 = vcvt.s32.f32 %v7239
    %v7368 = vcvt.s32.f32 %v7240
    %v7369 = vcvt.s32.f32 %v7241
    %v7370 = vcvt.s32.f32 %v7242
    %v7371 = vcvt.s32.f32 %v7243
    %v7372 = vcvt.s32.f32 %v7244
    %v7373 = vcvt.s32.f32 %v7245
    %v7374 = vcvt.s32.f32 %v7246
    %v7375 = vcvt.s32.f32 %v7247
    %v7376 = vcvt.s32.f32 %v7248
    %v7377 = vcvt.s32.f32 %v7249
    %v7378 = vcvt.s32.f32 %v7250
    %v7379 = vcvt.s32.f32 %v7251
    %v7380 = vcvt.s32.f32 %v7252
    %v7381 = vpack.c.bf16 %v7255, %v7253
    %v7382 = vpack.c.bf16 %v7256, %v7254
    %v7383 = vpack.c.bf16 %v7259, %v7257
    %v7384 = vpack.c.bf16 %v7260, %v7258
    %v7385 = vpack.c.bf16 %v7263, %v7261
    %v7386 = vpack.c.bf16 %v7264, %v7262
    %v7387 = vpack.c.bf16 %v7267, %v7265
    %v7388 = vpack.c.bf16 %v7268, %v7266
    %v7389 = vpack.c.bf16 %v7271, %v7269
    %v7390 = vpack.c.bf16 %v7272, %v7270
    %v7391 = vpack.c.bf16 %v7275, %v7273
    %v7392 = vpack.c.bf16 %v7276, %v7274
    %v7393 = vpack.c.bf16 %v7279, %v7277
    %v7394 = vpack.c.bf16 %v7280, %v7278
    %v7395 = vpack.c.bf16 %v7283, %v7281
    %v7396 = vpack.c.bf16 %v7284, %v7282
    %v7397 = vpack.c.bf16 %v7287, %v7285
    %v7398 = vpack.c.bf16 %v7288, %v7286
    %v7399 = vpack.c.bf16 %v7291, %v7289
    %v7400 = vpack.c.bf16 %v7292, %v7290
    %v7401 = vpack.c.bf16 %v7295, %v7293
    %v7402 = vpack.c.bf16 %v7296, %v7294
    %v7403 = vpack.c.bf16 %v7299, %v7297
    %v7404 = vpack.c.bf16 %v7300, %v7298
    %v7405 = vpack.c.bf16 %v7303, %v7301
    %v7406 = vpack.c.bf16 %v7304, %v7302
    %v7407 = vpack.c.bf16 %v7307, %v7305
    %v7408 = vpack.c.bf16 %v7308, %v7306
    %v7409 = vpack.c.bf16 %v7311, %v7309
    %v7410 = vpack.c.bf16 %v7312, %v7310
    %v7411 = vpack.c.bf16 %v7315, %v7313
    %v7412 = vpack.c.bf16 %v7316, %v7314
    %v7413 = vpack.c.bf16 %v7319, %v7317
    %v7414 = vpack.c.bf16 %v7320, %v7318
    %v7415 = vpack.c.bf16 %v7323, %v7321
    %v7416 = vpack.c.bf16 %v7324, %v7322
    %v7417 = vpack.c.bf16 %v7327, %v7325
    %v7418 = vpack.c.bf16 %v7328, %v7326
    %v7419 = vpack.c.bf16 %v7331, %v7329
    %v7420 = vpack.c.bf16 %v7332, %v7330
    %v7421 = vpack.c.bf16 %v7335, %v7333
    %v7422 = vpack.c.bf16 %v7336, %v7334
    %v7423 = vpack.c.bf16 %v7339, %v7337
    %v7424 = vpack.c.bf16 %v7340, %v7338
    %v7425 = vpack.c.bf16 %v7343, %v7341
    %v7426 = vpack.c.bf16 %v7344, %v7342
    %v7427 = vpack.c.bf16 %v7347, %v7345
    %v7428 = vpack.c.bf16 %v7348, %v7346
    %v7429 = vpack.c.bf16 %v7351, %v7349
    %v7430 = vpack.c.bf16 %v7352, %v7350
    %v7431 = vpack.c.bf16 %v7355, %v7353
    %v7432 = vpack.c.bf16 %v7356, %v7354
    %v7433 = vpack.c.bf16 %v7359, %v7357
    %v7434 = vpack.c.bf16 %v7360, %v7358
    %v7435 = vpack.c.bf16 %v7363, %v7361
    %v7436 = vpack.c.bf16 %v7364, %v7362
    %v7437 = vpack.c.bf16 %v7367, %v7365
    %v7438 = vpack.c.bf16 %v7368, %v7366
    %v7439 = vpack.c.bf16 %v7371, %v7369
    %v7440 = vpack.c.bf16 %v7372, %v7370
    %v7441 = vpack.c.bf16 %v7375, %v7373
    %v7442 = vpack.c.bf16 %v7376, %v7374
    %v7443 = vpack.c.bf16 %v7379, %v7377
    %v7444 = vpack.c.bf16 %v7380, %v7378
    %v7445 = vld [vmem:[%s2] sm:$0xf]
    %v7446 = vld [vmem:[%s2 + $0x4] sm:$0xf]
    %v7447 = vld [vmem:[%s2 + $0x8] sm:$0xf]
    %v7448 = vld [vmem:[%s2 + $0xc] sm:$0xf]
    %v7449 = vld [vmem:[%s2 + $0x10] sm:$0xf]
    %v7450 = vld [vmem:[%s2 + $0x14] sm:$0xf]
    %v7451 = vld [vmem:[%s2 + $0x18] sm:$0xf]
    %v7452 = vld [vmem:[%s2 + $0x1c] sm:$0xf]
    %v7453 = vld [vmem:[%s2 + $0x20] sm:$0xf]
    %v7454 = vld [vmem:[%s2 + $0x24] sm:$0xf]
    %v7455 = vld [vmem:[%s2 + $0x28] sm:$0xf]
    %v7456 = vld [vmem:[%s2 + $0x2c] sm:$0xf]
    %v7457 = vld [vmem:[%s2 + $0x30] sm:$0xf]
    %v7458 = vld [vmem:[%s2 + $0x34] sm:$0xf]
    %v7459 = vld [vmem:[%s2 + $0x38] sm:$0xf]
    %v7460 = vld [vmem:[%s2 + $0x3c] sm:$0xf]
    %v7461 = vld [vmem:[%s2 + $0x40] sm:$0xf]
    %v7462 = vld [vmem:[%s2 + $0x44] sm:$0xf]
    %v7463 = vld [vmem:[%s2 + $0x48] sm:$0xf]
    %v7464 = vld [vmem:[%s2 + $0x4c] sm:$0xf]
    %v7465 = vld [vmem:[%s2 + $0x50] sm:$0xf]
    %v7466 = vld [vmem:[%s2 + $0x54] sm:$0xf]
    %v7467 = vld [vmem:[%s2 + $0x58] sm:$0xf]
    %v7468 = vld [vmem:[%s2 + $0x5c] sm:$0xf]
    %v7469 = vld [vmem:[%s2 + $0x60] sm:$0xf]
    %v7470 = vld [vmem:[%s2 + $0x64] sm:$0xf]
    %v7471 = vld [vmem:[%s2 + $0x68] sm:$0xf]
    %v7472 = vld [vmem:[%s2 + $0x6c] sm:$0xf]
    %v7473 = vld [vmem:[%s2 + $0x70] sm:$0xf]
    %v7474 = vld [vmem:[%s2 + $0x74] sm:$0xf]
    %v7475 = vld [vmem:[%s2 + $0x78] sm:$0xf]
    %v7476 = vld [vmem:[%s2 + $0x7c] sm:$0xf]
    %v7509 = vunpack.c.l.b16 %v7445
    %v7510 = vunpack.c.l.b16 %v7446
    %v7511 = vunpack.c.l.b16 %v7447
    %v7512 = vunpack.c.l.b16 %v7448
    %v7513 = vunpack.c.l.b16 %v7449
    %v7514 = vunpack.c.l.b16 %v7450
    %v7515 = vunpack.c.l.b16 %v7451
    %v7516 = vunpack.c.l.b16 %v7452
    %v7517 = vunpack.c.l.b16 %v7453
    %v7518 = vunpack.c.l.b16 %v7454
    %v7519 = vunpack.c.l.b16 %v7455
    %v7520 = vunpack.c.l.b16 %v7456
    %v7521 = vunpack.c.l.b16 %v7457
    %v7522 = vunpack.c.l.b16 %v7458
    %v7523 = vunpack.c.l.b16 %v7459
    %v7524 = vunpack.c.l.b16 %v7460
    %v7525 = vunpack.c.l.b16 %v7461
    %v7526 = vunpack.c.l.b16 %v7462
    %v7527 = vunpack.c.l.b16 %v7463
    %v7528 = vunpack.c.l.b16 %v7464
    %v7529 = vunpack.c.l.b16 %v7465
    %v7530 = vunpack.c.l.b16 %v7466
    %v7531 = vunpack.c.l.b16 %v7467
    %v7532 = vunpack.c.l.b16 %v7468
    %v7533 = vunpack.c.l.b16 %v7469
    %v7534 = vunpack.c.l.b16 %v7470
    %v7535 = vunpack.c.l.b16 %v7471
    %v7536 = vunpack.c.l.b16 %v7472
    %v7537 = vunpack.c.l.b16 %v7473
    %v7538 = vunpack.c.l.b16 %v7474
    %v7539 = vunpack.c.l.b16 %v7475
    %v7540 = vunpack.c.l.b16 %v7476
    %v7541 = vpack.c.b16 %v7510, %v7509
    %v7542 = vpack.c.b16 %v7512, %v7511
    %v7543 = vpack.c.b16 %v7514, %v7513
    %v7544 = vpack.c.b16 %v7516, %v7515
    %v7545 = vpack.c.b16 %v7518, %v7517
    %v7546 = vpack.c.b16 %v7520, %v7519
    %v7547 = vpack.c.b16 %v7522, %v7521
    %v7548 = vpack.c.b16 %v7524, %v7523
    %v7549 = vpack.c.b16 %v7526, %v7525
    %v7550 = vpack.c.b16 %v7528, %v7527
    %v7551 = vpack.c.b16 %v7530, %v7529
    %v7552 = vpack.c.b16 %v7532, %v7531
    %v7553 = vpack.c.b16 %v7534, %v7533
    %v7554 = vpack.c.b16 %v7536, %v7535
    %v7555 = vpack.c.b16 %v7538, %v7537
    %v7556 = vpack.c.b16 %v7540, %v7539
    %7573 = vmatprep.subr.bf16.mxu0 0
    %7574 = vmatpush1.bf16.msra.mxu0 %v7548
    %7575 = vmatprep.subr.bf16.mxu0 0
    %7576 = vmatpush1.bf16.msra.mxu0 %v7547
    %7577 = vmatprep.subr.bf16.mxu0 0
    %7578 = vmatpush1.bf16.msra.mxu0 %v7546
    %7579 = vmatprep.subr.bf16.mxu0 0
    %7580 = vmatpush1.bf16.msra.mxu0 %v7545
    %7581 = vmatprep.subr.bf16.mxu0 0
    %7582 = vmatpush1.bf16.msra.mxu0 %v7544
    %7583 = vmatprep.subr.bf16.mxu0 0
    %7584 = vmatpush1.bf16.msra.mxu0 %v7543
    %7585 = vmatprep.subr.bf16.mxu0 0
    %7586 = vmatpush1.bf16.msra.mxu0 %v7542
    %7587 = vmatprep.subr.bf16.mxu0 0
    %7588 = vmatpush1.bf16.msra.mxu0 %v7541
    %7589 = vmatprep.subr.bf16.mxu0 0
    %7590 = vmatpush2.bf16.msra.mxu0 %v7556
    %7591 = vmatprep.subr.bf16.mxu0 0
    %7592 = vmatpush2.bf16.msra.mxu0 %v7555
    %7593 = vmatprep.subr.bf16.mxu0 0
    %7594 = vmatpush2.bf16.msra.mxu0 %v7554
    %7595 = vmatprep.subr.bf16.mxu0 0
    %7596 = vmatpush2.bf16.msra.mxu0 %v7553
    %7597 = vmatprep.subr.bf16.mxu0 0
    %7598 = vmatpush2.bf16.msra.mxu0 %v7552
    %7599 = vmatprep.subr.bf16.mxu0 0
    %7600 = vmatpush2.bf16.msra.mxu0 %v7551
    %7601 = vmatprep.subr.bf16.mxu0 0
    %7602 = vmatpush2.bf16.msra.mxu0 %v7550
    %7603 = vmatprep.subr.bf16.mxu0 0
    %7604 = vmatpush2.bf16.msra.mxu0 %v7549
    %7605 = vmatprep.mubr.bf16.mxu0 %v7382
    %7606 = vmatmul.mubr.bf16.gmra.mxu0 %v7381
    %v7607 = vpop.f32.mrf.mxu0
    %v7608 = vadd.f32 0.0, %v7607
    %v7609 = vpop.f32.mrf.mxu0
    %v7610 = vpop.f32.mrf.mxu0
    %v7611 = vadd.f32 0.0, %v7610
    %v7612 = vpop.f32.mrf.mxu0
    %7613 = vmatprep.mubr.bf16.mxu0 %v7384
    %7614 = vmatmul.mubr.bf16.gmra.mxu0 %v7383
    %v7615 = vpop.f32.mrf.mxu0
    %v7616 = vadd.f32 0.0, %v7615
    %v7617 = vpop.f32.mrf.mxu0
    %v7618 = vpop.f32.mrf.mxu0
    %v7619 = vadd.f32 0.0, %v7618
    %v7620 = vpop.f32.mrf.mxu0
    %7621 = vmatprep.mubr.bf16.mxu0 %v7386
    %7622 = vmatmul.mubr.bf16.gmra.mxu0 %v7385
    %v7623 = vpop.f32.mrf.mxu0
    %v7624 = vadd.f32 0.0, %v7623
    %v7625 = vpop.f32.mrf.mxu0
    %v7626 = vpop.f32.mrf.mxu0
    %v7627 = vadd.f32 0.0, %v7626
    %v7628 = vpop.f32.mrf.mxu0
    %7629 = vmatprep.mubr.bf16.mxu0 %v7388
    %7630 = vmatmul.mubr.bf16.gmra.mxu0 %v7387
    %v7631 = vpop.f32.mrf.mxu0
    %v7632 = vadd.f32 0.0, %v7631
    %v7633 = vpop.f32.mrf.mxu0
    %v7634 = vpop.f32.mrf.mxu0
    %v7635 = vadd.f32 0.0, %v7634
    %v7636 = vpop.f32.mrf.mxu0
    %7637 = vmatprep.mubr.bf16.mxu0 %v7390
    %7638 = vmatmul.mubr.bf16.gmra.mxu0 %v7389
    %v7639 = vpop.f32.mrf.mxu0
    %v7640 = vadd.f32 0.0, %v7639
    %v7641 = vpop.f32.mrf.mxu0
    %v7642 = vpop.f32.mrf.mxu0
    %v7643 = vadd.f32 0.0, %v7642
    %v7644 = vpop.f32.mrf.mxu0
    %7645 = vmatprep.mubr.bf16.mxu0 %v7392
    %7646 = vmatmul.mubr.bf16.gmra.mxu0 %v7391
    %v7647 = vpop.f32.mrf.mxu0
    %v7648 = vadd.f32 0.0, %v7647
    %v7649 = vpop.f32.mrf.mxu0
    %v7650 = vpop.f32.mrf.mxu0
    %v7651 = vadd.f32 0.0, %v7650
    %v7652 = vpop.f32.mrf.mxu0
    %7653 = vmatprep.mubr.bf16.mxu0 %v7394
    %7654 = vmatmul.mubr.bf16.gmra.mxu0 %v7393
    %v7655 = vpop.f32.mrf.mxu0
    %v7656 = vadd.f32 0.0, %v7655
    %v7657 = vpop.f32.mrf.mxu0
    %v7658 = vpop.f32.mrf.mxu0
    %v7659 = vadd.f32 0.0, %v7658
    %v7660 = vpop.f32.mrf.mxu0
    %7661 = vmatprep.mubr.bf16.mxu0 %v7396
    %7662 = vmatmul.mubr.bf16.gmra.mxu0 %v7395
    %v7663 = vpop.f32.mrf.mxu0
    %v7664 = vadd.f32 0.0, %v7663
    %v7665 = vpop.f32.mrf.mxu0
    %v7666 = vpop.f32.mrf.mxu0
    %v7667 = vadd.f32 0.0, %v7666
    %v7668 = vpop.f32.mrf.mxu0
    %7669 = vmatprep.mubr.bf16.mxu0 %v7398
    %7670 = vmatmul.mubr.bf16.gmra.mxu0 %v7397
    %v7671 = vpop.f32.mrf.mxu0
    %v7672 = vadd.f32 0.0, %v7671
    %v7673 = vpop.f32.mrf.mxu0
    %v7674 = vpop.f32.mrf.mxu0
    %v7675 = vadd.f32 0.0, %v7674
    %v7676 = vpop.f32.mrf.mxu0
    %7677 = vmatprep.mubr.bf16.mxu0 %v7400
    %7678 = vmatmul.mubr.bf16.gmra.mxu0 %v7399
    %v7679 = vpop.f32.mrf.mxu0
    %v7680 = vadd.f32 0.0, %v7679
    %v7681 = vpop.f32.mrf.mxu0
    %v7682 = vpop.f32.mrf.mxu0
    %v7683 = vadd.f32 0.0, %v7682
    %v7684 = vpop.f32.mrf.mxu0
    %7685 = vmatprep.mubr.bf16.mxu0 %v7402
    %7686 = vmatmul.mubr.bf16.gmra.mxu0 %v7401
    %v7687 = vpop.f32.mrf.mxu0
    %v7688 = vadd.f32 0.0, %v7687
    %v7689 = vpop.f32.mrf.mxu0
    %v7690 = vpop.f32.mrf.mxu0
    %v7691 = vadd.f32 0.0, %v7690
    %v7692 = vpop.f32.mrf.mxu0
    %7693 = vmatprep.mubr.bf16.mxu0 %v7404
    %7694 = vmatmul.mubr.bf16.gmra.mxu0 %v7403
    %v7695 = vpop.f32.mrf.mxu0
    %v7696 = vadd.f32 0.0, %v7695
    %v7697 = vpop.f32.mrf.mxu0
    %v7698 = vpop.f32.mrf.mxu0
    %v7699 = vadd.f32 0.0, %v7698
    %v7700 = vpop.f32.mrf.mxu0
    %7701 = vmatprep.mubr.bf16.mxu0 %v7406
    %7702 = vmatmul.mubr.bf16.gmra.mxu0 %v7405
    %v7703 = vpop.f32.mrf.mxu0
    %v7704 = vadd.f32 0.0, %v7703
    %v7705 = vpop.f32.mrf.mxu0
    %v7706 = vpop.f32.mrf.mxu0
    %v7707 = vadd.f32 0.0, %v7706
    %v7708 = vpop.f32.mrf.mxu0
    %7709 = vmatprep.mubr.bf16.mxu0 %v7408
    %7710 = vmatmul.mubr.bf16.gmra.mxu0 %v7407
    %v7711 = vpop.f32.mrf.mxu0
    %v7712 = vadd.f32 0.0, %v7711
    %v7713 = vpop.f32.mrf.mxu0
    %v7714 = vpop.f32.mrf.mxu0
    %v7715 = vadd.f32 0.0, %v7714
    %v7716 = vpop.f32.mrf.mxu0
    %7717 = vmatprep.mubr.bf16.mxu0 %v7410
    %7718 = vmatmul.mubr.bf16.gmra.mxu0 %v7409
    %v7719 = vpop.f32.mrf.mxu0
    %v7720 = vadd.f32 0.0, %v7719
    %v7721 = vpop.f32.mrf.mxu0
    %v7722 = vpop.f32.mrf.mxu0
    %v7723 = vadd.f32 0.0, %v7722
    %v7724 = vpop.f32.mrf.mxu0
    %7725 = vmatprep.mubr.bf16.mxu0 %v7412
    %7726 = vmatmul.mubr.bf16.gmra.mxu0 %v7411
    %v7727 = vpop.f32.mrf.mxu0
    %v7728 = vadd.f32 0.0, %v7727
    %v7729 = vpop.f32.mrf.mxu0
    %v7730 = vpop.f32.mrf.mxu0
    %v7731 = vadd.f32 0.0, %v7730
    %v7732 = vpop.f32.mrf.mxu0
    %7733 = vmatprep.mubr.bf16.mxu0 %v7414
    %7734 = vmatmul.mubr.bf16.gmra.mxu0 %v7413
    %v7735 = vpop.f32.mrf.mxu0
    %v7736 = vadd.f32 0.0, %v7735
    %v7737 = vpop.f32.mrf.mxu0
    %v7738 = vpop.f32.mrf.mxu0
    %v7739 = vadd.f32 0.0, %v7738
    %v7740 = vpop.f32.mrf.mxu0
    %7741 = vmatprep.mubr.bf16.mxu0 %v7416
    %7742 = vmatmul.mubr.bf16.gmra.mxu0 %v7415
    %v7743 = vpop.f32.mrf.mxu0
    %v7744 = vadd.f32 0.0, %v7743
    %v7745 = vpop.f32.mrf.mxu0
    %v7746 = vpop.f32.mrf.mxu0
    %v7747 = vadd.f32 0.0, %v7746
    %v7748 = vpop.f32.mrf.mxu0
    %7749 = vmatprep.mubr.bf16.mxu0 %v7418
    %7750 = vmatmul.mubr.bf16.gmra.mxu0 %v7417
    %v7751 = vpop.f32.mrf.mxu0
    %v7752 = vadd.f32 0.0, %v7751
    %v7753 = vpop.f32.mrf.mxu0
    %v7754 = vpop.f32.mrf.mxu0
    %v7755 = vadd.f32 0.0, %v7754
    %v7756 = vpop.f32.mrf.mxu0
    %7757 = vmatprep.mubr.bf16.mxu0 %v7420
    %7758 = vmatmul.mubr.bf16.gmra.mxu0 %v7419
    %v7759 = vpop.f32.mrf.mxu0
    %v7760 = vadd.f32 0.0, %v7759
    %v7761 = vpop.f32.mrf.mxu0
    %v7762 = vpop.f32.mrf.mxu0
    %v7763 = vadd.f32 0.0, %v7762
    %v7764 = vpop.f32.mrf.mxu0
    %7765 = vmatprep.mubr.bf16.mxu0 %v7422
    %7766 = vmatmul.mubr.bf16.gmra.mxu0 %v7421
    %v7767 = vpop.f32.mrf.mxu0
    %v7768 = vadd.f32 0.0, %v7767
    %v7769 = vpop.f32.mrf.mxu0
    %v7770 = vpop.f32.mrf.mxu0
    %v7771 = vadd.f32 0.0, %v7770
    %v7772 = vpop.f32.mrf.mxu0
    %7773 = vmatprep.mubr.bf16.mxu0 %v7424
    %7774 = vmatmul.mubr.bf16.gmra.mxu0 %v7423
    %v7775 = vpop.f32.mrf.mxu0
    %v7776 = vadd.f32 0.0, %v7775
    %v7777 = vpop.f32.mrf.mxu0
    %v7778 = vpop.f32.mrf.mxu0
    %v7779 = vadd.f32 0.0, %v7778
    %v7780 = vpop.f32.mrf.mxu0
    %7781 = vmatprep.mubr.bf16.mxu0 %v7426
    %7782 = vmatmul.mubr.bf16.gmra.mxu0 %v7425
    %v7783 = vpop.f32.mrf.mxu0
    %v7784 = vadd.f32 0.0, %v7783
    %v7785 = vpop.f32.mrf.mxu0
    %v7786 = vpop.f32.mrf.mxu0
    %v7787 = vadd.f32 0.0, %v7786
    %v7788 = vpop.f32.mrf.mxu0
    %7789 = vmatprep.mubr.bf16.mxu0 %v7428
    %7790 = vmatmul.mubr.bf16.gmra.mxu0 %v7427
    %v7791 = vpop.f32.mrf.mxu0
    %v7792 = vadd.f32 0.0, %v7791
    %v7793 = vpop.f32.mrf.mxu0
    %v7794 = vpop.f32.mrf.mxu0
    %v7795 = vadd.f32 0.0, %v7794
    %v7796 = vpop.f32.mrf.mxu0
    %7797 = vmatprep.mubr.bf16.mxu0 %v7430
    %7798 = vmatmul.mubr.bf16.gmra.mxu0 %v7429
    %v7799 = vpop.f32.mrf.mxu0
    %v7800 = vadd.f32 0.0, %v7799
    %v7801 = vpop.f32.mrf.mxu0
    %v7802 = vpop.f32.mrf.mxu0
    %v7803 = vadd.f32 0.0, %v7802
    %v7804 = vpop.f32.mrf.mxu0
    %7805 = vmatprep.mubr.bf16.mxu0 %v7432
    %7806 = vmatmul.mubr.bf16.gmra.mxu0 %v7431
    %v7807 = vpop.f32.mrf.mxu0
    %v7808 = vadd.f32 0.0, %v7807
    %v7809 = vpop.f32.mrf.mxu0
    %v7810 = vpop.f32.mrf.mxu0
    %v7811 = vadd.f32 0.0, %v7810
    %v7812 = vpop.f32.mrf.mxu0
    %7813 = vmatprep.mubr.bf16.mxu0 %v7434
    %7814 = vmatmul.mubr.bf16.gmra.mxu0 %v7433
    %v7815 = vpop.f32.mrf.mxu0
    %v7816 = vadd.f32 0.0, %v7815
    %v7817 = vpop.f32.mrf.mxu0
    %v7818 = vpop.f32.mrf.mxu0
    %v7819 = vadd.f32 0.0, %v7818
    %v7820 = vpop.f32.mrf.mxu0
    %7821 = vmatprep.mubr.bf16.mxu0 %v7436
    %7822 = vmatmul.mubr.bf16.gmra.mxu0 %v7435
    %v7823 = vpop.f32.mrf.mxu0
    %v7824 = vadd.f32 0.0, %v7823
    %v7825 = vpop.f32.mrf.mxu0
    %v7826 = vpop.f32.mrf.mxu0
    %v7827 = vadd.f32 0.0, %v7826
    %v7828 = vpop.f32.mrf.mxu0
    %7829 = vmatprep.mubr.bf16.mxu0 %v7438
    %7830 = vmatmul.mubr.bf16.gmra.mxu0 %v7437
    %v7831 = vpop.f32.mrf.mxu0
    %v7832 = vadd.f32 0.0, %v7831
    %v7833 = vpop.f32.mrf.mxu0
    %v7834 = vpop.f32.mrf.mxu0
    %v7835 = vadd.f32 0.0, %v7834
    %v7836 = vpop.f32.mrf.mxu0
    %7837 = vmatprep.mubr.bf16.mxu0 %v7440
    %7838 = vmatmul.mubr.bf16.gmra.mxu0 %v7439
    %v7839 = vpop.f32.mrf.mxu0
    %v7840 = vadd.f32 0.0, %v7839
    %v7841 = vpop.f32.mrf.mxu0
    %v7842 = vpop.f32.mrf.mxu0
    %v7843 = vadd.f32 0.0, %v7842
    %v7844 = vpop.f32.mrf.mxu0
    %7845 = vmatprep.mubr.bf16.mxu0 %v7442
    %7846 = vmatmul.mubr.bf16.gmra.mxu0 %v7441
    %v7847 = vpop.f32.mrf.mxu0
    %v7848 = vadd.f32 0.0, %v7847
    %v7849 = vpop.f32.mrf.mxu0
    %v7850 = vpop.f32.mrf.mxu0
    %v7851 = vadd.f32 0.0, %v7850
    %v7852 = vpop.f32.mrf.mxu0
    %7853 = vmatprep.mubr.bf16.mxu0 %v7444
    %7854 = vmatmul.mubr.bf16.gmra.mxu0 %v7443
    %v7855 = vpop.f32.mrf.mxu0
    %v7856 = vadd.f32 0.0, %v7855
    %v7857 = vpop.f32.mrf.mxu0
    %v7858 = vpop.f32.mrf.mxu0
    %v7859 = vadd.f32 0.0, %v7858
    %v7860 = vpop.f32.mrf.mxu0
    %7861 = vdwg.mxu0
    %7926 = vrot.lane.b32.xlu0 %v7608, 96
    %v7927 = vpop.permute.xlu0 %7926
    %7928 = vrot.lane.b32.xlu0 %v7611, 96
    %v7929 = vpop.permute.xlu0 %7928
    %7930 = vrot.lane.b32.xlu0 %v7616, 96
    %v7931 = vpop.permute.xlu0 %7930
    %7932 = vrot.lane.b32.xlu0 %v7619, 96
    %v7933 = vpop.permute.xlu0 %7932
    %7934 = vrot.lane.b32.xlu0 %v7624, 96
    %v7935 = vpop.permute.xlu0 %7934
    %7936 = vrot.lane.b32.xlu0 %v7627, 96
    %v7937 = vpop.permute.xlu0 %7936
    %7938 = vrot.lane.b32.xlu0 %v7632, 96
    %v7939 = vpop.permute.xlu0 %7938
    %7940 = vrot.lane.b32.xlu0 %v7635, 96
    %v7941 = vpop.permute.xlu0 %7940
    %7942 = vrot.lane.b32.xlu0 %v7640, 96
    %v7943 = vpop.permute.xlu0 %7942
    %7944 = vrot.lane.b32.xlu0 %v7643, 96
    %v7945 = vpop.permute.xlu0 %7944
    %7946 = vrot.lane.b32.xlu0 %v7648, 96
    %v7947 = vpop.permute.xlu0 %7946
    %7948 = vrot.lane.b32.xlu0 %v7651, 96
    %v7949 = vpop.permute.xlu0 %7948
    %7950 = vrot.lane.b32.xlu0 %v7656, 96
    %v7951 = vpop.permute.xlu0 %7950
    %7952 = vrot.lane.b32.xlu0 %v7659, 96
    %v7953 = vpop.permute.xlu0 %7952
    %7954 = vrot.lane.b32.xlu0 %v7664, 96
    %v7955 = vpop.permute.xlu0 %7954
    %7956 = vrot.lane.b32.xlu0 %v7667, 96
    %v7957 = vpop.permute.xlu0 %7956
    %7958 = vrot.lane.b32.xlu0 %v7672, 96
    %v7959 = vpop.permute.xlu0 %7958
    %7960 = vrot.lane.b32.xlu0 %v7675, 96
    %v7961 = vpop.permute.xlu0 %7960
    %7962 = vrot.lane.b32.xlu0 %v7680, 96
    %v7963 = vpop.permute.xlu0 %7962
    %7964 = vrot.lane.b32.xlu0 %v7683, 96
    %v7965 = vpop.permute.xlu0 %7964
    %7966 = vrot.lane.b32.xlu0 %v7688, 96
    %v7967 = vpop.permute.xlu0 %7966
    %7968 = vrot.lane.b32.xlu0 %v7691, 96
    %v7969 = vpop.permute.xlu0 %7968
    %7970 = vrot.lane.b32.xlu0 %v7696, 96
    %v7971 = vpop.permute.xlu0 %7970
    %7972 = vrot.lane.b32.xlu0 %v7699, 96
    %v7973 = vpop.permute.xlu0 %7972
    %7974 = vrot.lane.b32.xlu0 %v7704, 96
    %v7975 = vpop.permute.xlu0 %7974
    %7976 = vrot.lane.b32.xlu0 %v7707, 96
    %v7977 = vpop.permute.xlu0 %7976
    %7978 = vrot.lane.b32.xlu0 %v7712, 96
    %v7979 = vpop.permute.xlu0 %7978
    %7980 = vrot.lane.b32.xlu0 %v7715, 96
    %v7981 = vpop.permute.xlu0 %7980
    %7982 = vrot.lane.b32.xlu0 %v7720, 96
    %v7983 = vpop.permute.xlu0 %7982
    %7984 = vrot.lane.b32.xlu0 %v7723, 96
    %v7985 = vpop.permute.xlu0 %7984
    %7986 = vrot.lane.b32.xlu0 %v7728, 96
    %v7987 = vpop.permute.xlu0 %7986
    %7988 = vrot.lane.b32.xlu0 %v7731, 96
    %v7989 = vpop.permute.xlu0 %7988
    %7990 = vrot.lane.b32.xlu0 %v7736, 96
    %v7991 = vpop.permute.xlu0 %7990
    %7992 = vrot.lane.b32.xlu0 %v7739, 96
    %v7993 = vpop.permute.xlu0 %7992
    %7994 = vrot.lane.b32.xlu0 %v7744, 96
    %v7995 = vpop.permute.xlu0 %7994
    %7996 = vrot.lane.b32.xlu0 %v7747, 96
    %v7997 = vpop.permute.xlu0 %7996
    %7998 = vrot.lane.b32.xlu0 %v7752, 96
    %v7999 = vpop.permute.xlu0 %7998
    %8000 = vrot.lane.b32.xlu0 %v7755, 96
    %v8001 = vpop.permute.xlu0 %8000
    %8002 = vrot.lane.b32.xlu0 %v7760, 96
    %v8003 = vpop.permute.xlu0 %8002
    %8004 = vrot.lane.b32.xlu0 %v7763, 96
    %v8005 = vpop.permute.xlu0 %8004
    %8006 = vrot.lane.b32.xlu0 %v7768, 96
    %v8007 = vpop.permute.xlu0 %8006
    %8008 = vrot.lane.b32.xlu0 %v7771, 96
    %v8009 = vpop.permute.xlu0 %8008
    %8010 = vrot.lane.b32.xlu0 %v7776, 96
    %v8011 = vpop.permute.xlu0 %8010
    %8012 = vrot.lane.b32.xlu0 %v7779, 96
    %v8013 = vpop.permute.xlu0 %8012
    %8014 = vrot.lane.b32.xlu0 %v7784, 96
    %v8015 = vpop.permute.xlu0 %8014
    %8016 = vrot.lane.b32.xlu0 %v7787, 96
    %v8017 = vpop.permute.xlu0 %8016
    %8018 = vrot.lane.b32.xlu0 %v7792, 96
    %v8019 = vpop.permute.xlu0 %8018
    %8020 = vrot.lane.b32.xlu0 %v7795, 96
    %v8021 = vpop.permute.xlu0 %8020
    %8022 = vrot.lane.b32.xlu0 %v7800, 96
    %v8023 = vpop.permute.xlu0 %8022
    %8024 = vrot.lane.b32.xlu0 %v7803, 96
    %v8025 = vpop.permute.xlu0 %8024
    %8026 = vrot.lane.b32.xlu0 %v7808, 96
    %v8027 = vpop.permute.xlu0 %8026
    %8028 = vrot.lane.b32.xlu0 %v7811, 96
    %v8029 = vpop.permute.xlu0 %8028
    %8030 = vrot.lane.b32.xlu0 %v7816, 96
    %v8031 = vpop.permute.xlu0 %8030
    %8032 = vrot.lane.b32.xlu0 %v7819, 96
    %v8033 = vpop.permute.xlu0 %8032
    %8034 = vrot.lane.b32.xlu0 %v7824, 96
    %v8035 = vpop.permute.xlu0 %8034
    %8036 = vrot.lane.b32.xlu0 %v7827, 96
    %v8037 = vpop.permute.xlu0 %8036
    %8038 = vrot.lane.b32.xlu0 %v7832, 96
    %v8039 = vpop.permute.xlu0 %8038
    %8040 = vrot.lane.b32.xlu0 %v7835, 96
    %v8041 = vpop.permute.xlu0 %8040
    %8042 = vrot.lane.b32.xlu0 %v7840, 96
    %v8043 = vpop.permute.xlu0 %8042
    %8044 = vrot.lane.b32.xlu0 %v7843, 96
    %v8045 = vpop.permute.xlu0 %8044
    %8046 = vrot.lane.b32.xlu0 %v7848, 96
    %v8047 = vpop.permute.xlu0 %8046
    %8048 = vrot.lane.b32.xlu0 %v7851, 96
    %v8049 = vpop.permute.xlu0 %8048
    %8050 = vrot.lane.b32.xlu0 %v7856, 96
    %v8051 = vpop.permute.xlu0 %8050
    %8052 = vrot.lane.b32.xlu0 %v7859, 96
    %v8053 = vpop.permute.xlu0 %8052
    %v8118 = vadd.f32 %v7608, %v7927
    %v8119 = vadd.f32 %v7611, %v7929
    %v8120 = vadd.f32 %v7616, %v7931
    %v8121 = vadd.f32 %v7619, %v7933
    %v8122 = vadd.f32 %v7624, %v7935
    %v8123 = vadd.f32 %v7627, %v7937
    %v8124 = vadd.f32 %v7632, %v7939
    %v8125 = vadd.f32 %v7635, %v7941
    %v8126 = vadd.f32 %v7640, %v7943
    %v8127 = vadd.f32 %v7643, %v7945
    %v8128 = vadd.f32 %v7648, %v7947
    %v8129 = vadd.f32 %v7651, %v7949
    %v8130 = vadd.f32 %v7656, %v7951
    %v8131 = vadd.f32 %v7659, %v7953
    %v8132 = vadd.f32 %v7664, %v7955
    %v8133 = vadd.f32 %v7667, %v7957
    %v8134 = vadd.f32 %v7672, %v7959
    %v8135 = vadd.f32 %v7675, %v7961
    %v8136 = vadd.f32 %v7680, %v7963
    %v8137 = vadd.f32 %v7683, %v7965
    %v8138 = vadd.f32 %v7688, %v7967
    %v8139 = vadd.f32 %v7691, %v7969
    %v8140 = vadd.f32 %v7696, %v7971
    %v8141 = vadd.f32 %v7699, %v7973
    %v8142 = vadd.f32 %v7704, %v7975
    %v8143 = vadd.f32 %v7707, %v7977
    %v8144 = vadd.f32 %v7712, %v7979
    %v8145 = vadd.f32 %v7715, %v7981
    %v8146 = vadd.f32 %v7720, %v7983
    %v8147 = vadd.f32 %v7723, %v7985
    %v8148 = vadd.f32 %v7728, %v7987
    %v8149 = vadd.f32 %v7731, %v7989
    %v8150 = vadd.f32 %v7736, %v7991
    %v8151 = vadd.f32 %v7739, %v7993
    %v8152 = vadd.f32 %v7744, %v7995
    %v8153 = vadd.f32 %v7747, %v7997
    %v8154 = vadd.f32 %v7752, %v7999
    %v8155 = vadd.f32 %v7755, %v8001
    %v8156 = vadd.f32 %v7760, %v8003
    %v8157 = vadd.f32 %v7763, %v8005
    %v8158 = vadd.f32 %v7768, %v8007
    %v8159 = vadd.f32 %v7771, %v8009
    %v8160 = vadd.f32 %v7776, %v8011
    %v8161 = vadd.f32 %v7779, %v8013
    %v8162 = vadd.f32 %v7784, %v8015
    %v8163 = vadd.f32 %v7787, %v8017
    %v8164 = vadd.f32 %v7792, %v8019
    %v8165 = vadd.f32 %v7795, %v8021
    %v8166 = vadd.f32 %v7800, %v8023
    %v8167 = vadd.f32 %v7803, %v8025
    %v8168 = vadd.f32 %v7808, %v8027
    %v8169 = vadd.f32 %v7811, %v8029
    %v8170 = vadd.f32 %v7816, %v8031
    %v8171 = vadd.f32 %v7819, %v8033
    %v8172 = vadd.f32 %v7824, %v8035
    %v8173 = vadd.f32 %v7827, %v8037
    %v8174 = vadd.f32 %v7832, %v8039
    %v8175 = vadd.f32 %v7835, %v8041
    %v8176 = vadd.f32 %v7840, %v8043
    %v8177 = vadd.f32 %v7843, %v8045
    %v8178 = vadd.f32 %v7848, %v8047
    %v8179 = vadd.f32 %v7851, %v8049
    %v8180 = vadd.f32 %v7856, %v8051
    %v8181 = vadd.f32 %v7859, %v8053
    %8182 = vst.msk [vmem:[#allocation2] sm:$0xff] %vm141, %v8118
    %8183 = vst.msk [vmem:[#allocation2 + $0x8] sm:$0xff] %vm141, %v8119
    %8184 = vst.msk [vmem:[#allocation2 + $0x10] sm:$0xff] %vm141, %v8120
    %8185 = vst.msk [vmem:[#allocation2 + $0x18] sm:$0xff] %vm141, %v8121
    %8186 = vst.msk [vmem:[#allocation2 + $0x20] sm:$0xff] %vm141, %v8122
    %8187 = vst.msk [vmem:[#allocation2 + $0x28] sm:$0xff] %vm141, %v8123
    %8188 = vst.msk [vmem:[#allocation2 + $0x30] sm:$0xff] %vm141, %v8124
    %8189 = vst.msk [vmem:[#allocation2 + $0x38] sm:$0xff] %vm141, %v8125
    %8190 = vst.msk [vmem:[#allocation2 + $0x40] sm:$0xff] %vm141, %v8126
    %8191 = vst.msk [vmem:[#allocation2 + $0x48] sm:$0xff] %vm141, %v8127
    %8192 = vst.msk [vmem:[#allocation2 + $0x50] sm:$0xff] %vm141, %v8128
    %8193 = vst.msk [vmem:[#allocation2 + $0x58] sm:$0xff] %vm141, %v8129
    %8194 = vst.msk [vmem:[#allocation2 + $0x60] sm:$0xff] %vm141, %v8130
    %8195 = vst.msk [vmem:[#allocation2 + $0x68] sm:$0xff] %vm141, %v8131
    %8196 = vst.msk [vmem:[#allocation2 + $0x70] sm:$0xff] %vm141, %v8132
    %8197 = vst.msk [vmem:[#allocation2 + $0x78] sm:$0xff] %vm141, %v8133
    %8198 = vst.msk [vmem:[#allocation2 + $0x80] sm:$0xff] %vm141, %v8134
    %8199 = vst.msk [vmem:[#allocation2 + $0x88] sm:$0xff] %vm141, %v8135
    %8200 = vst.msk [vmem:[#allocation2 + $0x90] sm:$0xff] %vm141, %v8136
    %8201 = vst.msk [vmem:[#allocation2 + $0x98] sm:$0xff] %vm141, %v8137
    %8202 = vst.msk [vmem:[#allocation2 + $0xa0] sm:$0xff] %vm141, %v8138
    %8203 = vst.msk [vmem:[#allocation2 + $0xa8] sm:$0xff] %vm141, %v8139
    %8204 = vst.msk [vmem:[#allocation2 + $0xb0] sm:$0xff] %vm141, %v8140
    %8205 = vst.msk [vmem:[#allocation2 + $0xb8] sm:$0xff] %vm141, %v8141
    %8206 = vst.msk [vmem:[#allocation2 + $0xc0] sm:$0xff] %vm141, %v8142
    %8207 = vst.msk [vmem:[#allocation2 + $0xc8] sm:$0xff] %vm141, %v8143
    %8208 = vst.msk [vmem:[#allocation2 + $0xd0] sm:$0xff] %vm141, %v8144
    %8209 = vst.msk [vmem:[#allocation2 + $0xd8] sm:$0xff] %vm141, %v8145
    %8210 = vst.msk [vmem:[#allocation2 + $0xe0] sm:$0xff] %vm141, %v8146
    %8211 = vst.msk [vmem:[#allocation2 + $0xe8] sm:$0xff] %vm141, %v8147
    %8212 = vst.msk [vmem:[#allocation2 + $0xf0] sm:$0xff] %vm141, %v8148
    %8213 = vst.msk [vmem:[#allocation2 + $0xf8] sm:$0xff] %vm141, %v8149
    %8214 = vst.msk [vmem:[#allocation2 + $0x100] sm:$0xff] %vm141, %v8150
    %8215 = vst.msk [vmem:[#allocation2 + $0x108] sm:$0xff] %vm141, %v8151
    %8216 = vst.msk [vmem:[#allocation2 + $0x110] sm:$0xff] %vm141, %v8152
    %8217 = vst.msk [vmem:[#allocation2 + $0x118] sm:$0xff] %vm141, %v8153
    %8218 = vst.msk [vmem:[#allocation2 + $0x120] sm:$0xff] %vm141, %v8154
    %8219 = vst.msk [vmem:[#allocation2 + $0x128] sm:$0xff] %vm141, %v8155
    %8220 = vst.msk [vmem:[#allocation2 + $0x130] sm:$0xff] %vm141, %v8156
    %8221 = vst.msk [vmem:[#allocation2 + $0x138] sm:$0xff] %vm141, %v8157
    %8222 = vst.msk [vmem:[#allocation2 + $0x140] sm:$0xff] %vm141, %v8158
    %8223 = vst.msk [vmem:[#allocation2 + $0x148] sm:$0xff] %vm141, %v8159
    %8224 = vst.msk [vmem:[#allocation2 + $0x150] sm:$0xff] %vm141, %v8160
    %8225 = vst.msk [vmem:[#allocation2 + $0x158] sm:$0xff] %vm141, %v8161
    %8226 = vst.msk [vmem:[#allocation2 + $0x160] sm:$0xff] %vm141, %v8162
    %8227 = vst.msk [vmem:[#allocation2 + $0x168] sm:$0xff] %vm141, %v8163
    %8228 = vst.msk [vmem:[#allocation2 + $0x170] sm:$0xff] %vm141, %v8164
    %8229 = vst.msk [vmem:[#allocation2 + $0x178] sm:$0xff] %vm141, %v8165
    %8230 = vst.msk [vmem:[#allocation2 + $0x180] sm:$0xff] %vm141, %v8166
    %8231 = vst.msk [vmem:[#allocation2 + $0x188] sm:$0xff] %vm141, %v8167
    %8232 = vst.msk [vmem:[#allocation2 + $0x190] sm:$0xff] %vm141, %v8168
    %8233 = vst.msk [vmem:[#allocation2 + $0x198] sm:$0xff] %vm141, %v8169
    %8234 = vst.msk [vmem:[#allocation2 + $0x1a0] sm:$0xff] %vm141, %v8170
    %8235 = vst.msk [vmem:[#allocation2 + $0x1a8] sm:$0xff] %vm141, %v8171
    %8236 = vst.msk [vmem:[#allocation2 + $0x1b0] sm:$0xff] %vm141, %v8172
    %8237 = vst.msk [vmem:[#allocation2 + $0x1b8] sm:$0xff] %vm141, %v8173
    %8238 = vst.msk [vmem:[#allocation2 + $0x1c0] sm:$0xff] %vm141, %v8174
    %8239 = vst.msk [vmem:[#allocation2 + $0x1c8] sm:$0xff] %vm141, %v8175
    %8240 = vst.msk [vmem:[#allocation2 + $0x1d0] sm:$0xff] %vm141, %v8176
    %8241 = vst.msk [vmem:[#allocation2 + $0x1d8] sm:$0xff] %vm141, %v8177
    %8242 = vst.msk [vmem:[#allocation2 + $0x1e0] sm:$0xff] %vm141, %v8178
    %8243 = vst.msk [vmem:[#allocation2 + $0x1e8] sm:$0xff] %vm141, %v8179
    %8244 = vst.msk [vmem:[#allocation2 + $0x1f0] sm:$0xff] %vm141, %v8180
    %8245 = vst.msk [vmem:[#allocation2 + $0x1f8] sm:$0xff] %vm141, %v8181
    // Predicated region
    $region18: #{_codebook_forward_impl.1} parent=1 // pred_check
      _
    $region19: #{_codebook_forward_impl.1} parent=1 // pred_check_branch
      %8247 = sbr.rel (0) target = $region21
    $region20: #{_codebook_forward_impl.1} parent=1 // pred_region
      %s8249 = ssub.s32 8192, 8192
      %8250 = vsyncadd [#allocation3], %s8249
      %s8251 = sshll.u32 [#allocation2], 4
      %s8252 = int_to_ptr.vmem [resolvable:$true] %s8251
      %8257 = dma.vmem_to_hbm [thread:$0]  %s8252, 8192, %s4, [#allocation3], 128, 128, 8
    $region21: #{_codebook_forward_impl.1} parent=1 // pred_fallthru
      _
    // Predicated region
    $region22: #{_codebook_forward_impl.1} parent=1 // pred_check
      _
    $region23: #{_codebook_forward_impl.1} parent=1 // pred_check_branch
      %8259 = sbr.rel (0) target = $region25
    $region24: #{_codebook_forward_impl.1} parent=1 // pred_region
      _
    $region25: #{_codebook_forward_impl.1} parent=1 // pred_fallthru
      _
    // Predicated region
    $region26: #{_codebook_forward_impl.1} parent=1 // pred_check
      _
    $region27: #{_codebook_forward_impl.1} parent=1 // pred_check_branch
      %8261 = sbr.rel (0) target = $region29
    $region28: #{_codebook_forward_impl.1} parent=1 // pred_region
      %8262 = dma.done [#allocation3], 8192
    $region29: #{_codebook_forward_impl.1} parent=1 // pred_fallthru
      _
    // Predicated region
    $region30: #{_codebook_forward_impl.1} parent=1 // pred_check
      _
    $region31: #{_codebook_forward_impl.1} parent=1 // pred_check_branch
      %8264 = sbr.rel (0) target = $region33
    $region32: #{_codebook_forward_impl.1} parent=1 // pred_region
      _
    $region33: #{_codebook_forward_impl.1} parent=1 // pred_fallthru
      _
    %8265 = vsyncpa [#allocation3], 1

</llo_original>
